<compile_context>
chip_gen: v6e
topology: v6e:2x2x1
jax: 0.10.0
libtpu: 0.0.40
codegen_flags: <defaults>
</compile_context>

<pallas_src>
import functools

import jax
import jax.numpy as jnp
import numpy as np
from jax.experimental import pallas as pl
from jax.experimental.pallas import tpu as pltpu

EPS = 1e-5
LANE = 128


# ----------------------------------------------------------------------------
# Helpers (plain JAX, run once at parameter-preparation time)
# ----------------------------------------------------------------------------
def _round_up(n, m):
    return ((n + m - 1) // m) * m


def _bn_fold(gamma, beta, mean, var):
    scale = gamma / jnp.sqrt(var + EPS)
    shift = beta - mean * scale
    return scale.reshape(1, -1), shift.reshape(1, -1)


def _grouped_to_dense(w, G):
    """Torch grouped conv weight (C, C//G, 3, 3) -> dense block-diagonal
    (3, 3, C_in, C_out)."""
    C, Cg = w.shape[0], w.shape[1]
    w_r = w.reshape(G, Cg, Cg, 3, 3)                 # (g, co_in_g, ci_in_g, ky, kx)
    eye = jnp.eye(G, dtype=w.dtype)
    wd = jnp.einsum('ab,bqpyx->yxapbq', eye, w_r)    # (3,3,G,ci,G,co)
    return wd.reshape(3, 3, C, C)


# ----------------------------------------------------------------------------
# Kernel 1: fused conv1 + shortcut 1x1 conv (single matmul, two outputs)
# ----------------------------------------------------------------------------
def _stem_kernel(split, x_ref, w_ref, b_ref, o1_ref, os_ref):
    acc = jnp.dot(x_ref[...], w_ref[...], preferred_element_type=jnp.float32)
    acc = acc + b_ref[...]
    o1_ref[...] = jnp.maximum(acc[:, :split], 0.0).astype(o1_ref.dtype)   # conv1 + BN + ReLU
    os_ref[...] = acc[:, split:].astype(os_ref.dtype)                     # shortcut + BN


def stem_conv(x, wcat, bcat, Cp, Op, row_tile=256):
    """x: (N, Cin); wcat: (Cin, Cp+Op) = [w1|wshort] with BN scales folded;
    bcat: (1, Cp+Op).  Returns (out1 (N,Cp) relu'd, shortcut (N,Op))."""
    N, Cin = x.shape
    rt = row_tile if N >= row_tile else _round_up(N, 8)
    Np = _round_up(N, rt)
    if Np != N:
        x = jnp.pad(x, ((0, Np - N), (0, 0)))
    Ctot = Cp + Op
    out1, short = pl.pallas_call(
        functools.partial(_stem_kernel, Cp),
        out_shape=(jax.ShapeDtypeStruct((Np, Cp), x.dtype),
                   jax.ShapeDtypeStruct((Np, Op), x.dtype)),
        grid=(Np // rt,),
        in_specs=[
            pl.BlockSpec((rt, Cin), lambda i: (i, 0)),
            pl.BlockSpec((Cin, Ctot), lambda i: (0, 0)),
            pl.BlockSpec((1, Ctot), lambda i: (0, 0)),
        ],
        out_specs=(pl.BlockSpec((rt, Cp), lambda i: (i, 0)),
                   pl.BlockSpec((rt, Op), lambda i: (i, 0))),
        compiler_params=pltpu.CompilerParams(dimension_semantics=("parallel",)),
    )(x, wcat, bcat)
    if Np != N:
        out1, short = out1[:N], short[:N]
    return out1, short


def _pw_kernel(relu, x_ref, w_ref, b_ref, o_ref):
    acc = jnp.dot(x_ref[...], w_ref[...], preferred_element_type=jnp.float32)
    acc = acc + b_ref[...]
    if relu:
        acc = jnp.maximum(acc, 0.0)
    o_ref[...] = acc.astype(o_ref.dtype)


def pointwise_conv(x, w, bias, relu=False, row_tile=256):
    """1x1 conv as row-tiled matmul (used only for the identity-shortcut case)."""
    N, Cin = x.shape
    Cout = w.shape[1]
    rt = row_tile if N >= row_tile else _round_up(N, 8)
    Np = _round_up(N, rt)
    if Np != N:
        x = jnp.pad(x, ((0, Np - N), (0, 0)))
    out = pl.pallas_call(
        functools.partial(_pw_kernel, relu),
        out_shape=jax.ShapeDtypeStruct((Np, Cout), x.dtype),
        grid=(Np // rt,),
        in_specs=[
            pl.BlockSpec((rt, Cin), lambda i: (i, 0)),
            pl.BlockSpec((Cin, Cout), lambda i: (0, 0)),
            pl.BlockSpec((1, Cout), lambda i: (0, 0)),
        ],
        out_specs=pl.BlockSpec((rt, Cout), lambda i: (i, 0)),
        compiler_params=pltpu.CompilerParams(dimension_semantics=("parallel",)),
    )(x, w, bias)
    return out[:N] if Np != N else out


# ----------------------------------------------------------------------------
# Kernel 2: fully fused SK layer + conv2 + residual + ReLU (per batch element)
# ----------------------------------------------------------------------------
def _sk_mega_kernel(H, W, M, dmax,
                    xp_ref, wsk_ref, bsk_ref, wfc_ref, bfc_ref,
                    wfcs_ref, bfcs_ref, w2_ref, b2_ref, short_ref,
                    o_ref, feats_ref):
    HW = H * W
    Cp = feats_ref.shape[-1]
    inv_hw = 1.0 / float(HW)

    # --- M dilated 3x3 branches: im2col + one big-K matmul each, fused GAP ---
    total = jnp.zeros((1, Cp), jnp.float32)
    for m in range(M):                       # static unroll (M is tiny)
        d = m + 1
        off = dmax - d                       # align branch-m padding inside dmax pad
        windows = []
        for ky in range(3):
            y0 = off + ky * d
            slab = xp_ref[0, y0:y0 + H, :, :]            # (H, Wp, Cp)
            for kx in range(3):
                x0 = off + kx * d
                windows.append(slab[:, x0:x0 + W, :])    # (H, W, Cp)
        patches = jnp.concatenate(windows, axis=-1)      # (H, W, 9*Cp) lane-concat
        patches = patches.reshape(HW, 9 * Cp)            # single flatten per branch
        acc = jnp.dot(patches, wsk_ref[m], preferred_element_type=jnp.float32)
        acc = jnp.maximum(acc + bsk_ref[m], 0.0)         # folded-BN shift + ReLU
        feats_ref[m, :, :] = acc                         # stays in VMEM scratch
        total = total + jnp.sum(acc, axis=0, keepdims=True)

    # --- attention head: GAP -> fc(+BN,ReLU) -> M fcs(+bias) -> softmax(M) ---
    gap = total * inv_hw                                             # (1, Cp)
    z = jnp.dot(gap, wfc_ref[...], preferred_element_type=jnp.float32)
    z = jnp.maximum(z + bfc_ref[...], 0.0)                           # (1, d)
    logits = [jnp.dot(z, wfcs_ref[m], preferred_element_type=jnp.float32)
              + bfcs_ref[m] for m in range(M)]                       # M x (1, Cp)
    mx = logits[0]
    for l in logits[1:]:
        mx = jnp.maximum(mx, l)
    exps = [jnp.exp(l - mx) for l in logits]
    den = exps[0]
    for e in exps[1:]:
        den = den + e
    inv_den = 1.0 / den

    # --- attention-weighted selection, one branch at a time (no (M,HW,C) temp) ---
    sel = feats_ref[0, :, :] * (exps[0] * inv_den)
    for m in range(1, M):
        sel = sel + feats_ref[m, :, :] * (exps[m] * inv_den)         # (HW, Cp)

    # --- conv2 (folded BN) + residual shortcut + final ReLU ---
    out = jnp.dot(sel, w2_ref[...], preferred_element_type=jnp.float32)
    out = out + b2_ref[...] + short_ref[0, :, :].astype(jnp.float32)
    o_ref[0, :, :] = jnp.maximum(out, 0.0).astype(o_ref.dtype)


def sk_mega(out1_nhwc, short, prep, M):
    """out1_nhwc: (B,H,W,Cp); short: (B,HW,Op).  Returns (B,HW,Op)."""
    B, H, W, Cp = out1_nhwc.shape
    Op = prep['w2'].shape[1]
    d = prep['wfc'].shape[1]
    HW = H * W
    dmax = M
    xp = jnp.pad(out1_nhwc, ((0, 0), (dmax, dmax), (dmax, dmax), (0, 0)))
    Hp, Wp = H + 2 * dmax, W + 2 * dmax
    kernel = functools.partial(_sk_mega_kernel, H, W, M, dmax)
    return pl.pallas_call(
        kernel,
        out_shape=jax.ShapeDtypeStruct((B, HW, Op), out1_nhwc.dtype),
        grid=(B,),
        in_specs=[
            pl.BlockSpec((1, Hp, Wp, Cp), lambda b: (b, 0, 0, 0)),
            pl.BlockSpec((M, 9 * Cp, Cp), lambda b: (0, 0, 0)),
            pl.BlockSpec((M, 1, Cp), lambda b: (0, 0, 0)),
            pl.BlockSpec((Cp, d), lambda b: (0, 0)),
            pl.BlockSpec((1, d), lambda b: (0, 0)),
            pl.BlockSpec((M, d, Cp), lambda b: (0, 0, 0)),
            pl.BlockSpec((M, 1, Cp), lambda b: (0, 0, 0)),
            pl.BlockSpec((Cp, Op), lambda b: (0, 0)),
            pl.BlockSpec((1, Op), lambda b: (0, 0)),
            pl.BlockSpec((1, HW, Op), lambda b: (b, 0, 0)),
        ],
        out_specs=pl.BlockSpec((1, HW, Op), lambda b: (b, 0, 0)),
        scratch_shapes=[pltpu.VMEM((M, HW, Cp), jnp.float32)],
        compiler_params=pltpu.CompilerParams(dimension_semantics=("parallel",)),
    )(xp, prep['wsk'], prep['bsk'], prep['wfc'], prep['bfc'],
      prep['wfcs'], prep['bfcs'], prep['w2'], prep['b2'], short)


# ----------------------------------------------------------------------------
# Parameters
# ----------------------------------------------------------------------------
def _bn_init(key, c):
    k1, k2, k3, k4 = jax.random.split(key, 4)
    return dict(
        gamma=jax.random.uniform(k1, (c,), jnp.float32, 0.5, 1.5),
        beta=jax.random.normal(k2, (c,), jnp.float32) * 0.1,
        mean=jax.random.normal(k3, (c,), jnp.float32) * 0.1,
        var=jax.random.uniform(k4, (c,), jnp.float32, 0.5, 1.5),
    )


def init_params(key, Cin, Cmid, Cout, M=2, G=4, r=16):
    d = max(int(Cmid / r), 32)
    keys = iter(jax.random.split(key, 64))

    def w(shape, scale=0.1):
        return jax.random.normal(next(keys), shape, jnp.float32) * scale

    p = {
        'conv1_w': w((Cin, Cmid)),
        'bn1': _bn_init(next(keys), Cmid),
        'sk_conv_w': [w((Cmid, Cmid // G, 3, 3)) for _ in range(M)],
        'sk_bn': [_bn_init(next(keys), Cmid) for _ in range(M)],
        'sk_fc_w': w((Cmid, d)),
        'sk_fc_bn': _bn_init(next(keys), d),
        'sk_fcs_w': [w((d, Cmid)) for _ in range(M)],
        'sk_fcs_b': [w((Cmid,)) for _ in range(M)],     # fcs convs have bias=True
        'conv2_w': w((Cmid, Cout)),
        'bn2': _bn_init(next(keys), Cout),
    }
    if Cin != Cout:
        p['short_w'] = w((Cin, Cout))
        p['bn_short'] = _bn_init(next(keys), Cout)
    return p


def prepare_params(params, M, G):
    """Hoisted once: fold BN scales, expand grouped weights to im2col layout,
    zero-pad all working channel dims to a multiple of 128 lanes."""
    Cmid = params['conv1_w'].shape[1]
    Cout = params['conv2_w'].shape[1]
    Cp = _round_up(Cmid, LANE)
    Op = _round_up(Cout, LANE)

    def pad_cols(a, n):
        return jnp.pad(a, ((0, 0), (0, n - a.shape[1])))

    def pad_rows(a, n):
        return jnp.pad(a, ((0, n - a.shape[0]), (0, 0)))

    prep = {}

    s1, b1 = _bn_fold(**params['bn1'])
    w1 = pad_cols(params['conv1_w'] * s1, Cp)                 # (Cin, Cp)
    b1 = pad_cols(b1, Cp)
    if 'short_w' in params:
        ss, bs = _bn_fold(**params['bn_short'])
        ws = pad_cols(params['short_w'] * ss, Op)             # (Cin, Op)
        bs = pad_cols(bs, Op)
        prep['wcat'] = jnp.concatenate([w1, ws], axis=1)      # (Cin, Cp+Op)
        prep['bcat'] = jnp.concatenate([b1, bs], axis=1)
    else:
        prep['w1'] = w1
        prep['b1'] = b1

    wsk, bsk = [], []
    for m in range(M):
        sm, bm = _bn_fold(**params['sk_bn'][m])
        wd = _grouped_to_dense(params['sk_conv_w'][m], G) * sm.reshape(1, 1, 1, -1)
        wd = jnp.pad(wd, ((0, 0), (0, 0), (0, Cp - Cmid), (0, Cp - Cmid)))
        wsk.append(wd.reshape(9 * Cp, Cp))                    # im2col K layout (tap-major)
        bsk.append(pad_cols(bm, Cp))
    prep['wsk'] = jnp.stack(wsk, axis=0)                      # (M, 9*Cp, Cp)
    prep['bsk'] = jnp.stack(bsk, axis=0)                      # (M, 1, Cp)

    sf, bf = _bn_fold(**params['sk_fc_bn'])
    prep['wfc'] = pad_rows(params['sk_fc_w'] * sf, Cp)        # (Cp, d)
    prep['bfc'] = bf                                          # (1, d)
    prep['wfcs'] = jnp.stack([pad_cols(w, Cp) for w in params['sk_fcs_w']], axis=0)  # (M,d,Cp)
    prep['bfcs'] = jnp.stack([pad_cols(b.reshape(1, -1), Cp)
                              for b in params['sk_fcs_b']], axis=0)                  # (M,1,Cp)

    s2, b2 = _bn_fold(**params['bn2'])
    prep['w2'] = pad_rows(pad_cols(params['conv2_w'] * s2, Op), Cp)   # (Cp, Op)
    prep['b2'] = pad_cols(b2, Op)                                     # (1, Op)
    return prep


# ----------------------------------------------------------------------------
# SKBlock forward (Pallas)
# ----------------------------------------------------------------------------
def sk_block_forward(x_nchw, prep, M=2, Cout=None, stride=1):
    assert stride == 1, "only stride=1 implemented"
    B, Cin, H, W = x_nchw.shape
    Cp = prep['wsk'].shape[-1]
    Op = prep['w2'].shape[1]
    if Cout is None:
        Cout = Op
    N = B * H * W

    x = jnp.transpose(x_nchw, (0, 2, 3, 1))                   # NHWC
    x_flat = x.reshape(N, Cin)

    # conv1 (+BN+ReLU) and shortcut (+BN) fused into one matmul kernel
    if 'wcat' in prep:
        out1, short = stem_conv(x_flat, prep['wcat'], prep['bcat'], Cp, Op)
    else:
        out1 = pointwise_conv(x_flat, prep['w1'], prep['b1'], relu=True)
        short = jnp.pad(x_flat, ((0, 0), (0, Op - Cin)))      # identity shortcut

    out1_nhwc = out1.reshape(B, H, W, Cp)
    short = short.reshape(B, H * W, Op)

    # SK branches + GAP + attention + softmax-select + conv2 + residual + ReLU,
    # all in one kernel (feats never touches HBM).
    out = sk_mega(out1_nhwc, short, prep, M)                  # (B, HW, Op)
    out = out.reshape(B, H, W, Op)[..., :Cout]                # drop lane padding
    return jnp.transpose(out, (0, 3, 1, 2))                   # back to NCHW


# ----------------------------------------------------------------------------
# Pure-JAX reference (mirrors the PyTorch forward, inference-mode BN)
# ----------------------------------------------------------------------------
def reference_forward(x, params, M=2, G=4):
    def bn(t, p):
        s = p['gamma'] / jnp.sqrt(p['var'] + EPS)
        sh = p['beta'] - p['mean'] * s
        return t * s[None, :, None, None] + sh[None, :, None, None]

    def conv1x1(t, w):  # w: (Cin, Cout)
        return jnp.einsum('bihw,io->bohw', t, w,
                          precision=jax.lax.Precision.HIGHEST)

    out = jax.nn.relu(bn(conv1x1(x, params['conv1_w']), params['bn1']))
    feats = []
    for m in range(M):
        dil = m + 1
        f = jax.lax.conv_general_dilated(
            out, params['sk_conv_w'][m], window_strides=(1, 1),
            padding=((dil, dil), (dil, dil)), rhs_dilation=(dil, dil),
            dimension_numbers=('NCHW', 'OIHW', 'NCHW'),
            feature_group_count=G, precision=jax.lax.Precision.HIGHEST)
        feats.append(jax.nn.relu(bn(f, params['sk_bn'][m])))
    feats = jnp.stack(feats, axis=1)                          # (B,M,C,H,W)
    feats_U = jnp.sum(feats, axis=1)
    feats_S = jnp.mean(feats_U, axis=(2, 3), keepdims=True)   # (B,C,1,1)
    feats_Z = jax.nn.relu(bn(conv1x1(feats_S, params['sk_fc_w']),
                             params['sk_fc_bn']))
    attn = jnp.stack(
        [conv1x1(feats_Z, wf) + bf.reshape(1, -1, 1, 1)
         for wf, bf in zip(params['sk_fcs_w'], params['sk_fcs_b'])],
        axis=1)                                               # (B,M,C,1,1)
    attn = jax.nn.softmax(attn, axis=1)
    feats_V = jnp.sum(feats * attn, axis=1)
    out2 = bn(conv1x1(feats_V, params['conv2_w']), params['bn2'])
    if 'short_w' in params:
        sc = bn(conv1x1(x, params['short_w']), params['bn_short'])
    else:
        sc = x
    return jax.nn.relu(out2 + sc)


# ----------------------------------------------------------------------------
if __name__ == "__main__":
    key = jax.random.PRNGKey(0)
    B, Cin, H, W = 2, 16, 16, 16
    Cmid, Cout = 32, 64          # SKBlock(in=16, middle=32, out=64)
    M, G, r = 2, 4, 16

    kx_, kp = jax.random.split(key)
    x = jax.random.normal(kx_, (B, Cin, H, W), jnp.float32)
    params = init_params(kp, Cin, Cmid, Cout, M=M, G=G, r=r)
    prep = prepare_params(params, M, G)

    fwd = jax.jit(lambda xx, pp: sk_block_forward(xx, pp, M=M, Cout=Cout, stride=1))
    out = fwd(x, prep)
    out = jax.block_until_ready(out)

    ref = reference_forward(x, params, M=M, G=G)
    np.testing.assert_allclose(np.asarray(out), np.asarray(ref),
                               rtol=1e-3, atol=1e-3)
    print("KERNEL_OK")
</pallas_src>

<mosaic_0001>
module attributes {stable_mosaic.version = 11 : i64} {
  func.func @_stem_kernel(%arg0: i32, %arg1: memref<256x16xf32, #tpu.memory_space<vmem>>, %arg2: memref<16x256xf32, #tpu.memory_space<vmem>>, %arg3: memref<1x256xf32, #tpu.memory_space<vmem>>, %arg4: memref<256x128xf32, #tpu.memory_space<vmem>>, %arg5: memref<256x128xf32, #tpu.memory_space<vmem>>) attributes {dimension_semantics = [#tpu.dimension_semantics<parallel>], iteration_bounds = array<i64: 2>, scalar_prefetch = 0 : i64, scratch_operands = 0 : i64, tpu.core_type = #tpu.core_type<tc>, window_params = [{transform_indices = @transform_0, window_bounds = array<i64: 256, 16>}, {pipeline_mode = #tpu.pipeline_mode<synchronous>, transform_indices = @transform_1, window_bounds = array<i64: 16, 256>}, {pipeline_mode = #tpu.pipeline_mode<synchronous>, transform_indices = @transform_2, window_bounds = array<i64: 1, 256>}, {transform_indices = @transform_3, window_bounds = array<i64: 256, 128>}, {transform_indices = @transform_4, window_bounds = array<i64: 256, 128>}]} {
    %c0 = arith.constant 0 : index
    %c0_0 = arith.constant 0 : index
    %0 = vector.load %arg1[%c0, %c0_0] : memref<256x16xf32, #tpu.memory_space<vmem>>, vector<256x16xf32>
    %c0_1 = arith.constant 0 : index
    %c0_2 = arith.constant 0 : index
    %1 = vector.load %arg2[%c0_1, %c0_2] : memref<16x256xf32, #tpu.memory_space<vmem>>, vector<16x256xf32>
    %cst = arith.constant dense<0.000000e+00> : vector<256x256xf32>
    %2 = tpu.matmul %0, %1, %cst {dimension_numbers = #tpu.dot_dimension_numbers<[1], [0], [0], [1], [0, 0, 1, 1], [], []>} : vector<256x16xf32>, vector<16x256xf32>, vector<256x256xf32> -> vector<256x256xf32>
    %c0_3 = arith.constant 0 : index
    %c0_4 = arith.constant 0 : index
    %3 = vector.load %arg3[%c0_3, %c0_4] : memref<1x256xf32, #tpu.memory_space<vmem>>, vector<1x256xf32>
    %4 = vector.broadcast %3 : vector<1x256xf32> to vector<256x256xf32>
    %5 = arith.addf %2, %4 : vector<256x256xf32>
    %6 = vector.extract_strided_slice %5 {offsets = [0, 0], sizes = [256, 128], strides = [1, 1]} : vector<256x256xf32> to vector<256x128xf32>
    %cst_5 = arith.constant 0.000000e+00 : f32
    %7 = vector.broadcast %cst_5 : f32 to vector<256x128xf32>
    %8 = arith.maximumf %6, %7 : vector<256x128xf32>
    %c0_6 = arith.constant 0 : index
    %c0_7 = arith.constant 0 : index
    %9 = vector.load %arg4[%c0_6, %c0_7] : memref<256x128xf32, #tpu.memory_space<vmem>>, vector<256x128xf32>
    tpu.vector_store %arg4[%c0_6, %c0_7], %8 {strides = array<i32>} : memref<256x128xf32, #tpu.memory_space<vmem>>, vector<256x128xf32>,
    %10 = vector.extract_strided_slice %5 {offsets = [0, 128], sizes = [256, 128], strides = [1, 1]} : vector<256x256xf32> to vector<256x128xf32>
    %c0_8 = arith.constant 0 : index
    %c0_9 = arith.constant 0 : index
    %11 = vector.load %arg5[%c0_8, %c0_9] : memref<256x128xf32, #tpu.memory_space<vmem>>, vector<256x128xf32>
    tpu.vector_store %arg5[%c0_8, %c0_9], %10 {strides = array<i32>} : memref<256x128xf32, #tpu.memory_space<vmem>>, vector<256x128xf32>,
    return
  }
  func.func @transform_0(%arg0: i32) -> (i32, i32) {
    %c0_i32 = arith.constant 0 : i32
    %c0_i32_0 = arith.constant 0 : i32
    return %arg0, %c0_i32 : i32, i32
  }
  func.func @transform_1(%arg0: i32) -> (i32, i32) {
    %c0_i32 = arith.constant 0 : i32
    %c0_i32_0 = arith.constant 0 : i32
    %c0_i32_1 = arith.constant 0 : i32
    return %c0_i32, %c0_i32_0 : i32, i32
  }
  func.func @transform_2(%arg0: i32) -> (i32, i32) {
    %c0_i32 = arith.constant 0 : i32
    %c0_i32_0 = arith.constant 0 : i32
    %c0_i32_1 = arith.constant 0 : i32
    return %c0_i32, %c0_i32_0 : i32, i32
  }
  func.func @transform_3(%arg0: i32) -> (i32, i32) {
    %c0_i32 = arith.constant 0 : i32
    %c0_i32_0 = arith.constant 0 : i32
    return %arg0, %c0_i32 : i32, i32
  }
  func.func @transform_4(%arg0: i32) -> (i32, i32) {
    %c0_i32 = arith.constant 0 : i32
    %c0_i32_0 = arith.constant 0 : i32
    return %arg0, %c0_i32 : i32, i32
  }
}

module attributes {stable_mosaic.version = 11 : i64} {
  func.func @_sk_mega_kernel(%arg0: i32, %arg1: memref<1x20x20x128xf32, #tpu.memory_space<vmem>>, %arg2: memref<2x1152x128xf32, #tpu.memory_space<vmem>>, %arg3: memref<2x1x128xf32, #tpu.memory_space<vmem>>, %arg4: memref<128x32xf32, #tpu.memory_space<vmem>>, %arg5: memref<1x32xf32, #tpu.memory_space<vmem>>, %arg6: memref<2x32x128xf32, #tpu.memory_space<vmem>>, %arg7: memref<2x1x128xf32, #tpu.memory_space<vmem>>, %arg8: memref<128x128xf32, #tpu.memory_space<vmem>>, %arg9: memref<1x128xf32, #tpu.memory_space<vmem>>, %arg10: memref<1x256x128xf32, #tpu.memory_space<vmem>>, %arg11: memref<1x256x128xf32, #tpu.memory_space<vmem>>, %arg12: memref<2x256x128xf32, #tpu.memory_space<vmem>>) attributes {dimension_semantics = [#tpu.dimension_semantics<parallel>], iteration_bounds = array<i64: 2>, scalar_prefetch = 0 : i64, scratch_operands = 1 : i64, tpu.core_type = #tpu.core_type<tc>, window_params = [{transform_indices = @transform_0, window_bounds = array<i64: 1, 20, 20, 128>}, {pipeline_mode = #tpu.pipeline_mode<synchronous>, transform_indices = @transform_1, window_bounds = array<i64: 2, 1152, 128>}, {pipeline_mode = #tpu.pipeline_mode<synchronous>, transform_indices = @transform_2, window_bounds = array<i64: 2, 1, 128>}, {pipeline_mode = #tpu.pipeline_mode<synchronous>, transform_indices = @transform_3, window_bounds = array<i64: 128, 32>}, {pipeline_mode = #tpu.pipeline_mode<synchronous>, transform_indices = @transform_4, window_bounds = array<i64: 1, 32>}, {pipeline_mode = #tpu.pipeline_mode<synchronous>, transform_indices = @transform_5, window_bounds = array<i64: 2, 32, 128>}, {pipeline_mode = #tpu.pipeline_mode<synchronous>, transform_indices = @transform_6, window_bounds = array<i64: 2, 1, 128>}, {pipeline_mode = #tpu.pipeline_mode<synchronous>, transform_indices = @transform_7, window_bounds = array<i64: 128, 128>}, {pipeline_mode = #tpu.pipeline_mode<synchronous>, transform_indices = @transform_8, window_bounds = array<i64: 1, 128>}, {transform_indices = @transform_9, window_bounds = array<i64: 1, 256, 128>}, {transform_indices = @transform_10, window_bounds = array<i64: 1, 256, 128>}]} {
    %cst = arith.constant 0.000000e+00 : f32
    %0 = vector.broadcast %cst : f32 to vector<1x128xf32>
    %c0 = arith.constant 0 : index
    %c1 = arith.constant 1 : index
    %c0_0 = arith.constant 0 : index
    %c0_1 = arith.constant 0 : index
    %1 = vector.load %arg1[%c0, %c1, %c0_0, %c0_1] : memref<1x20x20x128xf32, #tpu.memory_space<vmem>>, vector<1x16x20x128xf32>
    %2 = vector.shape_cast %1 : vector<1x16x20x128xf32> to vector<16x20x128xf32>
    %3 = vector.extract_strided_slice %2 {offsets = [0, 1, 0], sizes = [16, 16, 128], strides = [1, 1, 1]} : vector<16x20x128xf32> to vector<16x16x128xf32>
    %4 = vector.extract_strided_slice %2 {offsets = [0, 2, 0], sizes = [16, 16, 128], strides = [1, 1, 1]} : vector<16x20x128xf32> to vector<16x16x128xf32>
    %5 = vector.extract_strided_slice %2 {offsets = [0, 3, 0], sizes = [16, 16, 128], strides = [1, 1, 1]} : vector<16x20x128xf32> to vector<16x16x128xf32>
    %c0_2 = arith.constant 0 : index
    %c2 = arith.constant 2 : index
    %c0_3 = arith.constant 0 : index
    %c0_4 = arith.constant 0 : index
    %6 = vector.load %arg1[%c0_2, %c2, %c0_3, %c0_4] : memref<1x20x20x128xf32, #tpu.memory_space<vmem>>, vector<1x16x20x128xf32>
    %7 = vector.shape_cast %6 : vector<1x16x20x128xf32> to vector<16x20x128xf32>
    %8 = vector.extract_strided_slice %7 {offsets = [0, 1, 0], sizes = [16, 16, 128], strides = [1, 1, 1]} : vector<16x20x128xf32> to vector<16x16x128xf32>
    %9 = vector.extract_strided_slice %7 {offsets = [0, 2, 0], sizes = [16, 16, 128], strides = [1, 1, 1]} : vector<16x20x128xf32> to vector<16x16x128xf32>
    %10 = vector.extract_strided_slice %7 {offsets = [0, 3, 0], sizes = [16, 16, 128], strides = [1, 1, 1]} : vector<16x20x128xf32> to vector<16x16x128xf32>
    %c0_5 = arith.constant 0 : index
    %c3 = arith.constant 3 : index
    %c0_6 = arith.constant 0 : index
    %c0_7 = arith.constant 0 : index
    %11 = vector.load %arg1[%c0_5, %c3, %c0_6, %c0_7] : memref<1x20x20x128xf32, #tpu.memory_space<vmem>>, vector<1x16x20x128xf32>
    %12 = vector.shape_cast %11 : vector<1x16x20x128xf32> to vector<16x20x128xf32>
    %13 = vector.extract_strided_slice %12 {offsets = [0, 1, 0], sizes = [16, 16, 128], strides = [1, 1, 1]} : vector<16x20x128xf32> to vector<16x16x128xf32>
    %14 = vector.extract_strided_slice %12 {offsets = [0, 2, 0], sizes = [16, 16, 128], strides = [1, 1, 1]} : vector<16x20x128xf32> to vector<16x16x128xf32>
    %15 = vector.extract_strided_slice %12 {offsets = [0, 3, 0], sizes = [16, 16, 128], strides = [1, 1, 1]} : vector<16x20x128xf32> to vector<16x16x128xf32>
    %16 = tpu.concatenate %3, %4, %5, %8, %9, %10, %13, %14, %15 in 2 : vector<16x16x128xf32>, vector<16x16x128xf32>, vector<16x16x128xf32>, vector<16x16x128xf32>, vector<16x16x128xf32>, vector<16x16x128xf32>, vector<16x16x128xf32>, vector<16x16x128xf32>, vector<16x16x128xf32> -> vector<16x16x1152xf32>
    %17 = vector.shape_cast %16 : vector<16x16x1152xf32> to vector<256x1152xf32>
    %c0_8 = arith.constant 0 : index
    %c0_9 = arith.constant 0 : index
    %c0_10 = arith.constant 0 : index
    %18 = vector.load %arg2[%c0_8, %c0_9, %c0_10] : memref<2x1152x128xf32, #tpu.memory_space<vmem>>, vector<1x1152x128xf32>
    %19 = vector.shape_cast %18 : vector<1x1152x128xf32> to vector<1152x128xf32>
    %cst_11 = arith.constant dense<0.000000e+00> : vector<256x128xf32>
    %20 = tpu.matmul %17, %19, %cst_11 {dimension_numbers = #tpu.dot_dimension_numbers<[1], [0], [0], [1], [0, 0, 1, 1], [], []>} : vector<256x1152xf32>, vector<1152x128xf32>, vector<256x128xf32> -> vector<256x128xf32>
    %c0_12 = arith.constant 0 : index
    %c0_13 = arith.constant 0 : index
    %c0_14 = arith.constant 0 : index
    %21 = vector.load %arg3[%c0_12, %c0_13, %c0_14] : memref<2x1x128xf32, #tpu.memory_space<vmem>>, vector<1x1x128xf32>
    %22 = vector.shape_cast %21 : vector<1x1x128xf32> to vector<1x128xf32>
    %23 = vector.broadcast %22 : vector<1x128xf32> to vector<256x128xf32>
    %24 = arith.addf %20, %23 : vector<256x128xf32>
    %cst_15 = arith.constant 0.000000e+00 : f32
    %25 = vector.broadcast %cst_15 : f32 to vector<256x128xf32>
    %26 = arith.maximumf %24, %25 : vector<256x128xf32>
    %c0_16 = arith.constant 0 : index
    %c0_17 = arith.constant 0 : index
    %c0_18 = arith.constant 0 : index
    %27 = vector.load %arg12[%c0_16, %c0_17, %c0_18] : memref<2x256x128xf32, #tpu.memory_space<vmem>>, vector<1x256x128xf32>
    %28 = vector.shape_cast %27 : vector<1x256x128xf32> to vector<256x128xf32>
    %29 = vector.shape_cast %26 : vector<256x128xf32> to vector<1x256x128xf32>
    tpu.vector_store %arg12[%c0_16, %c0_17, %c0_18], %29 {strides = array<i32>} : memref<2x256x128xf32, #tpu.memory_space<vmem>>, vector<1x256x128xf32>,
    %cst_19 = arith.constant dense<0.000000e+00> : vector<128xf32>
    %30 = vector.multi_reduction <add>, %26, %cst_19 [0] : vector<256x128xf32> to vector<128xf32>
    %31 = vector.shape_cast %30 : vector<128xf32> to vector<1x128xf32>
    %32 = arith.addf %0, %31 : vector<1x128xf32>
    %c0_20 = arith.constant 0 : index
    %c0_21 = arith.constant 0 : index
    %c0_22 = arith.constant 0 : index
    %c0_23 = arith.constant 0 : index
    %33 = vector.load %arg1[%c0_20, %c0_21, %c0_22, %c0_23] : memref<1x20x20x128xf32, #tpu.memory_space<vmem>>, vector<1x16x20x128xf32>
    %34 = vector.shape_cast %33 : vector<1x16x20x128xf32> to vector<16x20x128xf32>
    %35 = vector.extract_strided_slice %34 {offsets = [0, 0, 0], sizes = [16, 16, 128], strides = [1, 1, 1]} : vector<16x20x128xf32> to vector<16x16x128xf32>
    %36 = vector.extract_strided_slice %34 {offsets = [0, 2, 0], sizes = [16, 16, 128], strides = [1, 1, 1]} : vector<16x20x128xf32> to vector<16x16x128xf32>
    %37 = vector.extract_strided_slice %34 {offsets = [0, 4, 0], sizes = [16, 16, 128], strides = [1, 1, 1]} : vector<16x20x128xf32> to vector<16x16x128xf32>
    %c0_24 = arith.constant 0 : index
    %c2_25 = arith.constant 2 : index
    %c0_26 = arith.constant 0 : index
    %c0_27 = arith.constant 0 : index
    %38 = vector.load %arg1[%c0_24, %c2_25, %c0_26, %c0_27] : memref<1x20x20x128xf32, #tpu.memory_space<vmem>>, vector<1x16x20x128xf32>
    %39 = vector.shape_cast %38 : vector<1x16x20x128xf32> to vector<16x20x128xf32>
    %40 = vector.extract_strided_slice %39 {offsets = [0, 0, 0], sizes = [16, 16, 128], strides = [1, 1, 1]} : vector<16x20x128xf32> to vector<16x16x128xf32>
    %41 = vector.extract_strided_slice %39 {offsets = [0, 2, 0], sizes = [16, 16, 128], strides = [1, 1, 1]} : vector<16x20x128xf32> to vector<16x16x128xf32>
    %42 = vector.extract_strided_slice %39 {offsets = [0, 4, 0], sizes = [16, 16, 128], strides = [1, 1, 1]} : vector<16x20x128xf32> to vector<16x16x128xf32>
    %c0_28 = arith.constant 0 : index
    %c4 = arith.constant 4 : index
    %c0_29 = arith.constant 0 : index
    %c0_30 = arith.constant 0 : index
    %43 = vector.load %arg1[%c0_28, %c4, %c0_29, %c0_30] : memref<1x20x20x128xf32, #tpu.memory_space<vmem>>, vector<1x16x20x128xf32>
    %44 = vector.shape_cast %43 : vector<1x16x20x128xf32> to vector<16x20x128xf32>
    %45 = vector.extract_strided_slice %44 {offsets = [0, 0, 0], sizes = [16, 16, 128], strides = [1, 1, 1]} : vector<16x20x128xf32> to vector<16x16x128xf32>
    %46 = vector.extract_strided_slice %44 {offsets = [0, 2, 0], sizes = [16, 16, 128], strides = [1, 1, 1]} : vector<16x20x128xf32> to vector<16x16x128xf32>
    %47 = vector.extract_strided_slice %44 {offsets = [0, 4, 0], sizes = [16, 16, 128], strides = [1, 1, 1]} : vector<16x20x128xf32> to vector<16x16x128xf32>
    %48 = tpu.concatenate %35, %36, %37, %40, %41, %42, %45, %46, %47 in 2 : vector<16x16x128xf32>, vector<16x16x128xf32>, vector<16x16x128xf32>, vector<16x16x128xf32>, vector<16x16x128xf32>, vector<16x16x128xf32>, vector<16x16x128xf32>, vector<16x16x128xf32>, vector<16x16x128xf32> -> vector<16x16x1152xf32>
    %49 = vector.shape_cast %48 : vector<16x16x1152xf32> to vector<256x1152xf32>
    %c1_31 = arith.constant 1 : index
    %c0_32 = arith.constant 0 : index
    %c0_33 = arith.constant 0 : index
    %50 = vector.load %arg2[%c1_31, %c0_32, %c0_33] : memref<2x1152x128xf32, #tpu.memory_space<vmem>>, vector<1x1152x128xf32>
    %51 = vector.shape_cast %50 : vector<1x1152x128xf32> to vector<1152x128xf32>
    %cst_34 = arith.constant dense<0.000000e+00> : vector<256x128xf32>
    %52 = tpu.matmul %49, %51, %cst_34 {dimension_numbers = #tpu.dot_dimension_numbers<[1], [0], [0], [1], [0, 0, 1, 1], [], []>} : vector<256x1152xf32>, vector<1152x128xf32>, vector<256x128xf32> -> vector<256x128xf32>
    %c1_35 = arith.constant 1 : index
    %c0_36 = arith.constant 0 : index
    %c0_37 = arith.constant 0 : index
    %53 = vector.load %arg3[%c1_35, %c0_36, %c0_37] : memref<2x1x128xf32, #tpu.memory_space<vmem>>, vector<1x1x128xf32>
    %54 = vector.shape_cast %53 : vector<1x1x128xf32> to vector<1x128xf32>
    %55 = vector.broadcast %54 : vector<1x128xf32> to vector<256x128xf32>
    %56 = arith.addf %52, %55 : vector<256x128xf32>
    %cst_38 = arith.constant 0.000000e+00 : f32
    %57 = vector.broadcast %cst_38 : f32 to vector<256x128xf32>
    %58 = arith.maximumf %56, %57 : vector<256x128xf32>
    %c1_39 = arith.constant 1 : index
    %c0_40 = arith.constant 0 : index
    %c0_41 = arith.constant 0 : index
    %59 = vector.load %arg12[%c1_39, %c0_40, %c0_41] : memref<2x256x128xf32, #tpu.memory_space<vmem>>, vector<1x256x128xf32>
    %60 = vector.shape_cast %59 : vector<1x256x128xf32> to vector<256x128xf32>
    %61 = vector.shape_cast %58 : vector<256x128xf32> to vector<1x256x128xf32>
    tpu.vector_store %arg12[%c1_39, %c0_40, %c0_41], %61 {strides = array<i32>} : memref<2x256x128xf32, #tpu.memory_space<vmem>>, vector<1x256x128xf32>,
    %cst_42 = arith.constant dense<0.000000e+00> : vector<128xf32>
    %62 = vector.multi_reduction <add>, %58, %cst_42 [0] : vector<256x128xf32> to vector<128xf32>
    %63 = vector.shape_cast %62 : vector<128xf32> to vector<1x128xf32>
    %64 = arith.addf %32, %63 : vector<1x128xf32>
    %cst_43 = arith.constant 3.906250e-03 : f32
    %65 = vector.broadcast %cst_43 : f32 to vector<1x128xf32>
    %66 = arith.mulf %64, %65 : vector<1x128xf32>
    %c0_44 = arith.constant 0 : index
    %c0_45 = arith.constant 0 : index
    %67 = vector.load %arg4[%c0_44, %c0_45] : memref<128x32xf32, #tpu.memory_space<vmem>>, vector<128x32xf32>
    %cst_46 = arith.constant dense<0.000000e+00> : vector<1x32xf32>
    %68 = tpu.matmul %66, %67, %cst_46 {dimension_numbers = #tpu.dot_dimension_numbers<[1], [0], [0], [1], [0, 0, 1, 1], [], []>} : vector<1x128xf32>, vector<128x32xf32>, vector<1x32xf32> -> vector<1x32xf32>
    %c0_47 = arith.constant 0 : index
    %c0_48 = arith.constant 0 : index
    %69 = vector.load %arg5[%c0_47, %c0_48] : memref<1x32xf32, #tpu.memory_space<vmem>>, vector<1x32xf32>
    %70 = arith.addf %68, %69 : vector<1x32xf32>
    %cst_49 = arith.constant 0.000000e+00 : f32
    %71 = vector.broadcast %cst_49 : f32 to vector<1x32xf32>
    %72 = arith.maximumf %70, %71 : vector<1x32xf32>
    %c0_50 = arith.constant 0 : index
    %c0_51 = arith.constant 0 : index
    %c0_52 = arith.constant 0 : index
    %73 = vector.load %arg6[%c0_50, %c0_51, %c0_52] : memref<2x32x128xf32, #tpu.memory_space<vmem>>, vector<1x32x128xf32>
    %74 = vector.shape_cast %73 : vector<1x32x128xf32> to vector<32x128xf32>
    %cst_53 = arith.constant dense<0.000000e+00> : vector<1x128xf32>
    %75 = tpu.matmul %72, %74, %cst_53 {dimension_numbers = #tpu.dot_dimension_numbers<[1], [0], [0], [1], [0, 0, 1, 1], [], []>} : vector<1x32xf32>, vector<32x128xf32>, vector<1x128xf32> -> vector<1x128xf32>
    %c0_54 = arith.constant 0 : index
    %c0_55 = arith.constant 0 : index
    %c0_56 = arith.constant 0 : index
    %76 = vector.load %arg7[%c0_54, %c0_55, %c0_56] : memref<2x1x128xf32, #tpu.memory_space<vmem>>, vector<1x1x128xf32>
    %77 = vector.shape_cast %76 : vector<1x1x128xf32> to vector<1x128xf32>
    %78 = arith.addf %75, %77 : vector<1x128xf32>
    %c1_57 = arith.constant 1 : index
    %c0_58 = arith.constant 0 : index
    %c0_59 = arith.constant 0 : index
    %79 = vector.load %arg6[%c1_57, %c0_58, %c0_59] : memref<2x32x128xf32, #tpu.memory_space<vmem>>, vector<1x32x128xf32>
    %80 = vector.shape_cast %79 : vector<1x32x128xf32> to vector<32x128xf32>
    %cst_60 = arith.constant dense<0.000000e+00> : vector<1x128xf32>
    %81 = tpu.matmul %72, %80, %cst_60 {dimension_numbers = #tpu.dot_dimension_numbers<[1], [0], [0], [1], [0, 0, 1, 1], [], []>} : vector<1x32xf32>, vector<32x128xf32>, vector<1x128xf32> -> vector<1x128xf32>
    %c1_61 = arith.constant 1 : index
    %c0_62 = arith.constant 0 : index
    %c0_63 = arith.constant 0 : index
    %82 = vector.load %arg7[%c1_61, %c0_62, %c0_63] : memref<2x1x128xf32, #tpu.memory_space<vmem>>, vector<1x1x128xf32>
    %83 = vector.shape_cast %82 : vector<1x1x128xf32> to vector<1x128xf32>
    %84 = arith.addf %81, %83 : vector<1x128xf32>
    %85 = arith.maximumf %78, %84 : vector<1x128xf32>
    %86 = arith.subf %78, %85 : vector<1x128xf32>
    %87 = math.exp %86 : vector<1x128xf32>
    %88 = arith.subf %84, %85 : vector<1x128xf32>
    %89 = math.exp %88 : vector<1x128xf32>
    %90 = arith.addf %87, %89 : vector<1x128xf32>
    %cst_64 = arith.constant 1.000000e+00 : f32
    %91 = vector.broadcast %cst_64 : f32 to vector<1x128xf32>
    %92 = arith.divf %91, %90 : vector<1x128xf32>
    %c0_65 = arith.constant 0 : index
    %c0_66 = arith.constant 0 : index
    %c0_67 = arith.constant 0 : index
    %93 = vector.load %arg12[%c0_65, %c0_66, %c0_67] : memref<2x256x128xf32, #tpu.memory_space<vmem>>, vector<1x256x128xf32>
    %94 = vector.shape_cast %93 : vector<1x256x128xf32> to vector<256x128xf32>
    %95 = arith.mulf %87, %92 : vector<1x128xf32>
    %96 = vector.broadcast %95 : vector<1x128xf32> to vector<256x128xf32>
    %97 = arith.mulf %94, %96 : vector<256x128xf32>
    %c1_68 = arith.constant 1 : index
    %c0_69 = arith.constant 0 : index
    %c0_70 = arith.constant 0 : index
    %98 = vector.load %arg12[%c1_68, %c0_69, %c0_70] : memref<2x256x128xf32, #tpu.memory_space<vmem>>, vector<1x256x128xf32>
    %99 = vector.shape_cast %98 : vector<1x256x128xf32> to vector<256x128xf32>
    %100 = arith.mulf %89, %92 : vector<1x128xf32>
    %101 = vector.broadcast %100 : vector<1x128xf32> to vector<256x128xf32>
    %102 = arith.mulf %99, %101 : vector<256x128xf32>
    %103 = arith.addf %97, %102 : vector<256x128xf32>
    %c0_71 = arith.constant 0 : index
    %c0_72 = arith.constant 0 : index
    %104 = vector.load %arg8[%c0_71, %c0_72] : memref<128x128xf32, #tpu.memory_space<vmem>>, vector<128x128xf32>
    %cst_73 = arith.constant dense<0.000000e+00> : vector<256x128xf32>
    %105 = tpu.matmul %103, %104, %cst_73 {dimension_numbers = #tpu.dot_dimension_numbers<[1], [0], [0], [1], [0, 0, 1, 1], [], []>} : vector<256x128xf32>, vector<128x128xf32>, vector<256x128xf32> -> vector<256x128xf32>
    %c0_74 = arith.constant 0 : index
    %c0_75 = arith.constant 0 : index
    %106 = vector.load %arg9[%c0_74, %c0_75] : memref<1x128xf32, #tpu.memory_space<vmem>>, vector<1x128xf32>
    %107 = vector.broadcast %106 : vector<1x128xf32> to vector<256x128xf32>
    %108 = arith.addf %105, %107 : vector<256x128xf32>
    %c0_76 = arith.constant 0 : index
    %c0_77 = arith.constant 0 : index
    %c0_78 = arith.constant 0 : index
    %109 = vector.load %arg10[%c0_76, %c0_77, %c0_78] : memref<1x256x128xf32, #tpu.memory_space<vmem>>, vector<1x256x128xf32>
    %110 = vector.shape_cast %109 : vector<1x256x128xf32> to vector<256x128xf32>
    %111 = arith.addf %108, %110 : vector<256x128xf32>
    %cst_79 = arith.constant 0.000000e+00 : f32
    %112 = vector.broadcast %cst_79 : f32 to vector<256x128xf32>
    %113 = arith.maximumf %111, %112 : vector<256x128xf32>
    %c0_80 = arith.constant 0 : index
    %c0_81 = arith.constant 0 : index
    %c0_82 = arith.constant 0 : index
    %114 = vector.load %arg11[%c0_80, %c0_81, %c0_82] : memref<1x256x128xf32, #tpu.memory_space<vmem>>, vector<1x256x128xf32>
    %115 = vector.shape_cast %114 : vector<1x256x128xf32> to vector<256x128xf32>
    %116 = vector.shape_cast %113 : vector<256x128xf32> to vector<1x256x128xf32>
    tpu.vector_store %arg11[%c0_80, %c0_81, %c0_82], %116 {strides = array<i32>} : memref<1x256x128xf32, #tpu.memory_space<vmem>>, vector<1x256x128xf32>,
    return
  }
  func.func @transform_0(%arg0: i32) -> (i32, i32, i32, i32) {
    %c0_i32 = arith.constant 0 : i32
    %c0_i32_0 = arith.constant 0 : i32
    %c0_i32_1 = arith.constant 0 : i32
    %c0_i32_2 = arith.constant 0 : i32
    return %arg0, %c0_i32, %c0_i32_0, %c0_i32_1 : i32, i32, i32, i32
  }
  func.func @transform_1(%arg0: i32) -> (i32, i32, i32) {
    %c0_i32 = arith.constant 0 : i32
    %c0_i32_0 = arith.constant 0 : i32
    %c0_i32_1 = arith.constant 0 : i32
    %c0_i32_2 = arith.constant 0 : i32
    return %c0_i32, %c0_i32_0, %c0_i32_1 : i32, i32, i32
  }
  func.func @transform_2(%arg0: i32) -> (i32, i32, i32) {
    %c0_i32 = arith.constant 0 : i32
    %c0_i32_0 = arith.constant 0 : i32
    %c0_i32_1 = arith.constant 0 : i32
    %c0_i32_2 = arith.constant 0 : i32
    return %c0_i32, %c0_i32_0, %c0_i32_1 : i32, i32, i32
  }
  func.func @transform_3(%arg0: i32) -> (i32, i32) {
    %c0_i32 = arith.constant 0 : i32
    %c0_i32_0 = arith.constant 0 : i32
    %c0_i32_1 = arith.constant 0 : i32
    return %c0_i32, %c0_i32_0 : i32, i32
  }
  func.func @transform_4(%arg0: i32) -> (i32, i32) {
    %c0_i32 = arith.constant 0 : i32
    %c0_i32_0 = arith.constant 0 : i32
    %c0_i32_1 = arith.constant 0 : i32
    return %c0_i32, %c0_i32_0 : i32, i32
  }
  func.func @transform_5(%arg0: i32) -> (i32, i32, i32) {
    %c0_i32 = arith.constant 0 : i32
    %c0_i32_0 = arith.constant 0 : i32
    %c0_i32_1 = arith.constant 0 : i32
    %c0_i32_2 = arith.constant 0 : i32
    return %c0_i32, %c0_i32_0, %c0_i32_1 : i32, i32, i32
  }
  func.func @transform_6(%arg0: i32) -> (i32, i32, i32) {
    %c0_i32 = arith.constant 0 : i32
    %c0_i32_0 = arith.constant 0 : i32
    %c0_i32_1 = arith.constant 0 : i32
    %c0_i32_2 = arith.constant 0 : i32
    return %c0_i32, %c0_i32_0, %c0_i32_1 : i32, i32, i32
  }
  func.func @transform_7(%arg0: i32) -> (i32, i32) {
    %c0_i32 = arith.constant 0 : i32
    %c0_i32_0 = arith.constant 0 : i32
    %c0_i32_1 = arith.constant 0 : i32
    return %c0_i32, %c0_i32_0 : i32, i32
  }
  func.func @transform_8(%arg0: i32) -> (i32, i32) {
    %c0_i32 = arith.constant 0 : i32
    %c0_i32_0 = arith.constant 0 : i32
    %c0_i32_1 = arith.constant 0 : i32
    return %c0_i32, %c0_i32_0 : i32, i32
  }
  func.func @transform_9(%arg0: i32) -> (i32, i32, i32) {
    %c0_i32 = arith.constant 0 : i32
    %c0_i32_0 = arith.constant 0 : i32
    %c0_i32_1 = arith.constant 0 : i32
    return %arg0, %c0_i32, %c0_i32_0 : i32, i32, i32
  }
  func.func @transform_10(%arg0: i32) -> (i32, i32, i32) {
    %c0_i32 = arith.constant 0 : i32
    %c0_i32_0 = arith.constant 0 : i32
    %c0_i32_1 = arith.constant 0 : i32
    return %arg0, %c0_i32, %c0_i32_0 : i32, i32, i32
  }
}

</mosaic_0001>

<llo_original>
// kernel: _lambda_.2
$region0: #{_lambda_.2}
  #allocation0 [shape = 'u32[]', space=smem, size = 0x4, offset = 0x4, fixed_abs, tag = 'smem constant byte address 0x4 - core index']
  #allocation1 [shape = 'u32[144,128]{1,0:T(1,128)}', space=vmem, size = 0x12000, scoped, tag = 'internal scratch']
  %s0 = inlined_call_operand.vmem [shape: f32[512,16], index: 0, kind: input, shape index: {}]
  %s1 = inlined_call_operand.hbm [shape: f32[16,256], index: 1, kind: input, shape index: {}]
  %s2 = inlined_call_operand.hbm [shape: f32[1,256], index: 2, kind: input, shape index: {}]
  %s3 = inlined_call_operand.vmem [shape: f32[512,128], index: 3, kind: output, shape index: {0}]
  %s4 = inlined_call_operand.vmem [shape: f32[512,128], index: 4, kind: output, shape index: {1}]
  %5 = xla_tuple %s3, %s4
  %s6 = sld [smem:[#allocation0]]
  $region61: #{_lambda_.2} parent=0
    _
  %s8 = ssub.s32 1, %s6
  %s9 = scalar_select 0, %s8, %s6
  $region1: #{_lambda_.2} parent=0
    #allocation2 [shape = 'u8[16384]{0}', space=vmem, size = 0x4000, scoped, tag = 'input window, operand 1, single buffered']
    #allocation3 [shape = 's32[2]{0}', space=sflag, size = 0x8, scoped, tag = 'scoped memory for _lambda_.2']
    #allocation4 [shape = 'u8[1024]{0}', space=vmem, size = 0x400, scoped, tag = 'input window, operand 2, single buffered']
    #allocation5 [shape = 's32[1]{0}', space=sflag, size = 0x4, scoped, tag = 'scoped memory for _lambda_.2']
    %10 = vsyncpa [#allocation3], 0
    %11 = vsyncpa [#allocation5], 0
    loop: start=0, step=1, limit=4
    $region2: #{_lambda_.2} parent=1 // loop_pre_header
      _
    $region3: #{_lambda_.2} parent=1 // loop_header
      %s13 = sphi 0, %s17
      %p14 = scmp.ge.s32.totalorder %s13, 4
      %s23 = sphi 0, %s25
      %s26 = sphi 0, %s23
      %s27 = sphi 0, %s26
      %s43 = sphi 0, %s27
      %s47 = sphi 0, %s47
      %s49 = sphi 0, %s47
      %s50 = sphi 0, %s49
      %s64 = sphi 0, %s50
      %s68 = sphi 0, %s68
      %s70 = sphi 0, %s68
      %s71 = sphi 0, %s70
      %s85 = sphi 0, %s71
      %s91 = sphi 0, %s93
      %s94 = sphi 0, %s91
      %s95 = sphi 0, %s94
      %s111 = sphi 0, %s95
      %s117 = sphi 0, %s119
      %s120 = sphi 0, %s117
      %s121 = sphi 0, %s120
      %s137 = sphi 0, %s121
    $region4: #{_lambda_.2} parent=1 // loop_header_branch
      %16 = sbr.rel (%p14) target = $region8
    $region5: #{_lambda_.2} parent=1 // loop_body
      %s18 = ssub.s32 %s13, 1
      %s19 = ssub.s32 %s13, 2
      %s20 = sadd.s32 %s13, 1
      %s21 = ssub.s32 %s13, %s20
      %p22 = scmp.eq.s32.totalorder %s21, 0
      %s24 = sadd.s32 %s23, 1
      %s25 = scalar_select %p22, %s23, %s24
      %p28 = pneg %p22
      %p29 = scmp.eq.s32.totalorder %s13, 1
      %p30 = por %p28, %p29
      %p31 = scmp.ne.s32.totalorder %s23, %s26
      %p32 = scmp.eq.s32.totalorder %s13, 0
      %p33 = por %p31, %p32
      %p34 = scmp.ne.s32.totalorder %s23, %s26
      %p35 = scmp.eq.s32.totalorder %s18, 1
      %p36 = por %p34, %p35
      %p37 = scmp.ne.s32.totalorder %s26, %s27
      %p38 = scmp.eq.s32.totalorder %s18, 0
      %p39 = por %p37, %p38
      %p40 = scmp.ne.s32.totalorder %s26, %s27
      %p41 = scmp.eq.s32.totalorder %s19, 1
      %p42 = por %p40, %p41
      %p44 = scmp.ne.s32.totalorder %s27, %s43
      %p45 = scmp.eq.s32.totalorder %s19, 0
      %p46 = por %p44, %p45
      %s48 = sadd.s32 %s47, 1
      %p51 = scmp.eq.s32.totalorder %s13, 1
      %p52 = scmp.ne.s32.totalorder %s47, %s49
      %p53 = scmp.eq.s32.totalorder %s13, 0
      %p54 = por %p52, %p53
      %p55 = scmp.ne.s32.totalorder %s47, %s49
      %p56 = scmp.eq.s32.totalorder %s18, 1
      %p57 = por %p55, %p56
      %p58 = scmp.ne.s32.totalorder %s49, %s50
      %p59 = scmp.eq.s32.totalorder %s18, 0
      %p60 = por %p58, %p59
      %p61 = scmp.ne.s32.totalorder %s49, %s50
      %p62 = scmp.eq.s32.totalorder %s19, 1
      %p63 = por %p61, %p62
      %p65 = scmp.ne.s32.totalorder %s50, %s64
      %p66 = scmp.eq.s32.totalorder %s19, 0
      %p67 = por %p65, %p66
      %s69 = sadd.s32 %s68, 1
      %p72 = scmp.eq.s32.totalorder %s13, 1
      %p73 = scmp.ne.s32.totalorder %s68, %s70
      %p74 = scmp.eq.s32.totalorder %s13, 0
      %p75 = por %p73, %p74
      %p76 = scmp.ne.s32.totalorder %s68, %s70
      %p77 = scmp.eq.s32.totalorder %s18, 1
      %p78 = por %p76, %p77
      %p79 = scmp.ne.s32.totalorder %s70, %s71
      %p80 = scmp.eq.s32.totalorder %s18, 0
      %p81 = por %p79, %p80
      %p82 = scmp.ne.s32.totalorder %s70, %s71
      %p83 = scmp.eq.s32.totalorder %s19, 1
      %p84 = por %p82, %p83
      %p86 = scmp.ne.s32.totalorder %s71, %s85
      %p87 = scmp.eq.s32.totalorder %s19, 0
      %p88 = por %p86, %p87
      %s89 = ssub.s32 %s13, %s20
      %p90 = scmp.eq.s32.totalorder %s89, 0
      %s92 = sadd.s32 %s91, 1
      %s93 = scalar_select %p90, %s91, %s92
      %p96 = pneg %p90
      %p97 = scmp.eq.s32.totalorder %s13, 1
      %p98 = por %p96, %p97
      %p99 = scmp.ne.s32.totalorder %s91, %s94
      %p100 = scmp.eq.s32.totalorder %s13, 0
      %p101 = por %p99, %p100
      %p102 = scmp.ne.s32.totalorder %s91, %s94
      %p103 = scmp.eq.s32.totalorder %s18, 1
      %p104 = por %p102, %p103
      %p105 = scmp.ne.s32.totalorder %s94, %s95
      %p106 = scmp.eq.s32.totalorder %s18, 0
      %p107 = por %p105, %p106
      %p108 = scmp.ne.s32.totalorder %s94, %s95
      %p109 = scmp.eq.s32.totalorder %s19, 1
      %p110 = por %p108, %p109
      %p112 = scmp.ne.s32.totalorder %s95, %s111
      %p113 = scmp.eq.s32.totalorder %s19, 0
      %p114 = por %p112, %p113
      %s115 = ssub.s32 %s13, %s20
      %p116 = scmp.eq.s32.totalorder %s115, 0
      %s118 = sadd.s32 %s117, 1
      %s119 = scalar_select %p116, %s117, %s118
      %p122 = pneg %p116
      %p123 = scmp.eq.s32.totalorder %s13, 1
      %p124 = por %p122, %p123
      %p125 = scmp.ne.s32.totalorder %s117, %s120
      %p126 = scmp.eq.s32.totalorder %s13, 0
      %p127 = por %p125, %p126
      %p128 = scmp.ne.s32.totalorder %s117, %s120
      %p129 = scmp.eq.s32.totalorder %s18, 1
      %p130 = por %p128, %p129
      %p131 = scmp.ne.s32.totalorder %s120, %s121
      %p132 = scmp.eq.s32.totalorder %s18, 0
      %p133 = por %p131, %p132
      %p134 = scmp.ne.s32.totalorder %s120, %s121
      %p135 = scmp.eq.s32.totalorder %s19, 1
      %p136 = por %p134, %p135
      %p138 = scmp.ne.s32.totalorder %s121, %s137
      %p139 = scmp.eq.s32.totalorder %s19, 0
      %p140 = por %p138, %p139
      %p141 = scmp.le.s32.totalorder 1, %s13
      %p142 = scmp.lt.s32.totalorder %s13, 3
      %p143 = pnand %p141, %p142
      %p144 = pneg %p143
      // Predicated region
      $region9: #{_lambda_.2} parent=5 // pred_check
        _
      $region10: #{_lambda_.2} parent=5 // pred_check_branch
        %146 = sbr.rel (%p143) target = $region12
      $region11: #{_lambda_.2} parent=5 // pred_region
        %s147 = ssub.s32 %s13, 1
        // Predicated region
        $region13: #{_lambda_.2} parent=11 // pred_check
          %p148 = pneg %p60
        $region14: #{_lambda_.2} parent=11 // pred_check_branch
          %150 = sbr.rel (%p148) target = $region16
        $region15: #{_lambda_.2} parent=11 // pred_region
          %s152 = ssub.s32 512, 512
          %153 = vsyncadd [#allocation3], %s152
          %s154 = sshll.u32 [#allocation2], 4
          %s155 = int_to_ptr.vmem [resolvable:$true] %s154
          %160 = dma.hbm_to_vmem [thread:$0]  %s1, 512, %s155, [#allocation3], 256, 256, 16
        $region16: #{_lambda_.2} parent=11 // pred_fallthru
          _
        // Predicated region
        $region17: #{_lambda_.2} parent=11 // pred_check
          %p161 = pneg %p81
        $region18: #{_lambda_.2} parent=11 // pred_check_branch
          %163 = sbr.rel (%p161) target = $region20
        $region19: #{_lambda_.2} parent=11 // pred_region
          %s165 = ssub.s32 32, 32
          %166 = vsyncadd [#allocation5], %s165
          %s168 = sshll.u32 [#allocation4], 4
          %s169 = int_to_ptr.vmem [resolvable:$true] %s168
          %171 = dma.hbm_to_vmem [thread:$0]  %s2, 32, %s169, [#allocation5]
        $region20: #{_lambda_.2} parent=11 // pred_fallthru
          _
      $region12: #{_lambda_.2} parent=5 // pred_fallthru
        _
      %p172 = scmp.lt.s32.totalorder %s13, 2
      // Predicated region
      $region21: #{_lambda_.2} parent=5 // pred_check
        %p173 = pneg %p172
      $region22: #{_lambda_.2} parent=5 // pred_check_branch
        %175 = sbr.rel (%p173) target = $region24
      $region23: #{_lambda_.2} parent=5 // pred_region
        // Predicated region
        $region25: #{_lambda_.2} parent=23 // pred_check
          %p176 = pneg %p33
        $region26: #{_lambda_.2} parent=23 // pred_check_branch
          %178 = sbr.rel (%p176) target = $region28
        $region27: #{_lambda_.2} parent=23 // pred_region
          %s179 = smul.u32 32, %s13
          %p180 = scmp.lt.s32.totalorder %s179, 63
          %s181 = scalar_select %p180, %s179, 63
          %s182 = smul.addr %s181, 8
          %s183 = scalar_lea.vmem %s0, %s182
          %s184 = smul.u32 32, %s13
        $region28: #{_lambda_.2} parent=23 // pred_fallthru
          _
      $region24: #{_lambda_.2} parent=5 // pred_fallthru
        _
      %p185 = scmp.le.s32.totalorder 1, %s13
      %p186 = scmp.lt.s32.totalorder %s13, 3
      %p187 = pnand %p185, %p186
      %p188 = pneg %p187
      // Predicated region
      $region29: #{_lambda_.2} parent=5 // pred_check
        _
      $region30: #{_lambda_.2} parent=5 // pred_check_branch
        %190 = sbr.rel (%p187) target = $region32
      $region31: #{_lambda_.2} parent=5 // pred_region
        %s191 = ssub.s32 %s13, 1
        // Predicated region
        $region33: #{_lambda_.2} parent=31 // pred_check
          %p192 = pneg %p60
        $region34: #{_lambda_.2} parent=31 // pred_check_branch
          %194 = sbr.rel (%p192) target = $region36
        $region35: #{_lambda_.2} parent=31 // pred_region
          %195 = dma.done [#allocation3], 512
        $region36: #{_lambda_.2} parent=31 // pred_fallthru
          _
        // Predicated region
        $region37: #{_lambda_.2} parent=31 // pred_check
          %p196 = pneg %p81
        $region38: #{_lambda_.2} parent=31 // pred_check_branch
          %198 = sbr.rel (%p196) target = $region40
        $region39: #{_lambda_.2} parent=31 // pred_region
          %199 = dma.done [#allocation5], 32
        $region40: #{_lambda_.2} parent=31 // pred_fallthru
          _
        %s200 = smul.u32 32, %s18
        %p201 = scmp.lt.s32.totalorder %s200, 63
        %s202 = scalar_select %p201, %s200, 63
        %s203 = smul.addr %s202, 8
        %s204 = scalar_lea.vmem %s0, %s203
        %p205 = pneg %p39
        %p206 = pneg %p36
        %p207 = pneg %p60
        %p208 = pneg %p57
        %p209 = pneg %p81
        %p210 = pneg %p78
        %p211 = pneg %p107
        %p212 = pneg %p104
        %s213 = smul.u32 32, %s18
        %p214 = scmp.lt.s32.totalorder %s213, 63
        %s215 = scalar_select %p214, %s213, 63
        %s216 = smul.addr %s215, 8
        %s217 = scalar_lea.vmem %s3, %s216
        %p218 = pneg %p133
        %p219 = pneg %p130
        %s220 = smul.u32 32, %s18
        %p221 = scmp.lt.s32.totalorder %s220, 63
        %s222 = scalar_select %p221, %s220, 63
        %s223 = smul.addr %s222, 8
        %s224 = scalar_lea.vmem %s4, %s223
        %s225 = smul.u32 32, %s18
        %p226 = scmp.lt.s32.totalorder %s225, 63
        %s227 = scalar_select %p226, %s225, 63
        %s228 = smul.addr %s227, 8
        %s229 = scalar_lea.vmem %s0, %s228
        %s230 = smul.u32 32, %s18
        %s231 = smul.u32 32, %s18
        %p232 = scmp.lt.s32.totalorder %s231, 63
        %s233 = scalar_select %p232, %s231, 63
        %s234 = smul.addr %s233, 8
        %s235 = scalar_lea.vmem %s3, %s234
        %s236 = smul.u32 32, %s18
        %s237 = smul.u32 32, %s18
        %p238 = scmp.lt.s32.totalorder %s237, 63
        %s239 = scalar_select %p238, %s237, 63
        %s240 = smul.addr %s239, 8
        %s241 = scalar_lea.vmem %s4, %s240
        %s242 = smul.u32 32, %s18
        %v243 = vld [vmem:[%s229] sm:$0xff]
        %v244 = vld [vmem:[%s229 + $0x8] sm:$0xff]
        %v245 = vld [vmem:[%s229 + $0x10] sm:$0xff]
        %v246 = vld [vmem:[%s229 + $0x18] sm:$0xff]
        %v247 = vld [vmem:[%s229 + $0x20] sm:$0xff]
        %v248 = vld [vmem:[%s229 + $0x28] sm:$0xff]
        %v249 = vld [vmem:[%s229 + $0x30] sm:$0xff]
        %v250 = vld [vmem:[%s229 + $0x38] sm:$0xff]
        %v251 = vld [vmem:[%s229 + $0x40] sm:$0xff]
        %v252 = vld [vmem:[%s229 + $0x48] sm:$0xff]
        %v253 = vld [vmem:[%s229 + $0x50] sm:$0xff]
        %v254 = vld [vmem:[%s229 + $0x58] sm:$0xff]
        %v255 = vld [vmem:[%s229 + $0x60] sm:$0xff]
        %v256 = vld [vmem:[%s229 + $0x68] sm:$0xff]
        %v257 = vld [vmem:[%s229 + $0x70] sm:$0xff]
        %v258 = vld [vmem:[%s229 + $0x78] sm:$0xff]
        %v259 = vld [vmem:[%s229 + $0x80] sm:$0xff]
        %v260 = vld [vmem:[%s229 + $0x88] sm:$0xff]
        %v261 = vld [vmem:[%s229 + $0x90] sm:$0xff]
        %v262 = vld [vmem:[%s229 + $0x98] sm:$0xff]
        %v263 = vld [vmem:[%s229 + $0xa0] sm:$0xff]
        %v264 = vld [vmem:[%s229 + $0xa8] sm:$0xff]
        %v265 = vld [vmem:[%s229 + $0xb0] sm:$0xff]
        %v266 = vld [vmem:[%s229 + $0xb8] sm:$0xff]
        %v267 = vld [vmem:[%s229 + $0xc0] sm:$0xff]
        %v268 = vld [vmem:[%s229 + $0xc8] sm:$0xff]
        %v269 = vld [vmem:[%s229 + $0xd0] sm:$0xff]
        %v270 = vld [vmem:[%s229 + $0xd8] sm:$0xff]
        %v271 = vld [vmem:[%s229 + $0xe0] sm:$0xff]
        %v272 = vld [vmem:[%s229 + $0xe8] sm:$0xff]
        %v273 = vld [vmem:[%s229 + $0xf0] sm:$0xff]
        %v274 = vld [vmem:[%s229 + $0xf8] sm:$0xff]
        %v275 = vld [vmem:[#allocation2] sm:$0xff]
        %v276 = vld [vmem:[#allocation2 + $0x8] sm:$0xff]
        %v277 = vld [vmem:[#allocation2 + $0x10] sm:$0xff]
        %v278 = vld [vmem:[#allocation2 + $0x18] sm:$0xff]
        %v279 = vld [vmem:[#allocation4] sm:$0x3]
        %v281 = vlaneseq
        %v282 = vshrl.u32 %v281, 7
        %v283 = vsub.s32 0, %v282
        %v284 = vrot.slane %v279, %v283
        %v285 = vlaneseq
        %v286 = vshrl.u32 %v285, 7
        %v287 = vsub.s32 1, %v286
        %v288 = vrot.slane %v279, %v287
        %vm291 = vcmask 130048
        %v293 = vsel %vm291, %v243, 0
        %v296 = vsel %vm291, %v244, 0
        %v299 = vsel %vm291, %v245, 0
        %v302 = vsel %vm291, %v246, 0
        %v305 = vsel %vm291, %v247, 0
        %v308 = vsel %vm291, %v248, 0
        %v311 = vsel %vm291, %v249, 0
        %v314 = vsel %vm291, %v250, 0
        %v317 = vsel %vm291, %v251, 0
        %v320 = vsel %vm291, %v252, 0
        %v323 = vsel %vm291, %v253, 0
        %v326 = vsel %vm291, %v254, 0
        %v329 = vsel %vm291, %v255, 0
        %v332 = vsel %vm291, %v256, 0
        %v335 = vsel %vm291, %v257, 0
        %v338 = vsel %vm291, %v258, 0
        %v341 = vsel %vm291, %v259, 0
        %v344 = vsel %vm291, %v260, 0
        %v347 = vsel %vm291, %v261, 0
        %v350 = vsel %vm291, %v262, 0
        %v353 = vsel %vm291, %v263, 0
        %v356 = vsel %vm291, %v264, 0
        %v359 = vsel %vm291, %v265, 0
        %v362 = vsel %vm291, %v266, 0
        %v365 = vsel %vm291, %v267, 0
        %v368 = vsel %vm291, %v268, 0
        %v371 = vsel %vm291, %v269, 0
        %v374 = vsel %vm291, %v270, 0
        %v377 = vsel %vm291, %v271, 0
        %v380 = vsel %vm291, %v272, 0
        %v383 = vsel %vm291, %v273, 0
        %v386 = vsel %vm291, %v274, 0
        %388 = vmatprep.subr.mxu0 0.0
        %389 = vmatpush1.msra.mxu0 0.0
        %390 = vmatprep.subr.mxu0 0.0
        %391 = vmatpush1.msra.mxu0 0.0
        %392 = vmatprep.subr.mxu0 0.0
        %393 = vmatpush1.msra.mxu0 0.0
        %394 = vmatprep.subr.mxu0 0.0
        %395 = vmatpush1.msra.mxu0 0.0
        %396 = vmatprep.subr.mxu0 0.0
        %397 = vmatpush1.msra.mxu0 0.0
        %398 = vmatprep.subr.mxu0 0.0
        %399 = vmatpush1.msra.mxu0 0.0
        %400 = vmatprep.subr.mxu0 0.0
        %401 = vmatpush1.msra.mxu0 0.0
        %402 = vmatprep.subr.mxu0 0.0
        %403 = vmatpush1.msra.mxu0 0.0
        %404 = vmatprep.subr.mxu0 0.0
        %405 = vmatpush1.msra.mxu0 0.0
        %406 = vmatprep.subr.mxu0 0.0
        %407 = vmatpush1.msra.mxu0 0.0
        %408 = vmatprep.subr.mxu0 0.0
        %409 = vmatpush1.msra.mxu0 0.0
        %410 = vmatprep.subr.mxu0 0.0
        %411 = vmatpush1.msra.mxu0 0.0
        %412 = vmatprep.subr.mxu0 0.0
        %413 = vmatpush1.msra.mxu0 0.0
        %414 = vmatprep.subr.mxu0 0.0
        %415 = vmatpush1.msra.mxu0 0.0
        %416 = vmatprep.subr.mxu0 %v278
        %417 = vmatpush1.msra.mxu0 %v277
        %418 = vmatprep.subr.mxu0 %v276
        %419 = vmatpush1.msra.mxu0 %v275
        %420 = vmatprep.subr.mxu0 0.0
        %421 = vmatpush2.msra.mxu0 0.0
        %422 = vmatprep.subr.mxu0 0.0
        %423 = vmatpush2.msra.mxu0 0.0
        %424 = vmatprep.subr.mxu0 0.0
        %425 = vmatpush2.msra.mxu0 0.0
        %426 = vmatprep.subr.mxu0 0.0
        %427 = vmatpush2.msra.mxu0 0.0
        %428 = vmatprep.subr.mxu0 0.0
        %429 = vmatpush2.msra.mxu0 0.0
        %430 = vmatprep.subr.mxu0 0.0
        %431 = vmatpush2.msra.mxu0 0.0
        %432 = vmatprep.subr.mxu0 0.0
        %433 = vmatpush2.msra.mxu0 0.0
        %434 = vmatprep.subr.mxu0 0.0
        %435 = vmatpush2.msra.mxu0 0.0
        %436 = vmatprep.subr.mxu0 0.0
        %437 = vmatpush2.msra.mxu0 0.0
        %438 = vmatprep.subr.mxu0 0.0
        %439 = vmatpush2.msra.mxu0 0.0
        %440 = vmatprep.subr.mxu0 0.0
        %441 = vmatpush2.msra.mxu0 0.0
        %442 = vmatprep.subr.mxu0 0.0
        %443 = vmatpush2.msra.mxu0 0.0
        %444 = vmatprep.subr.mxu0 0.0
        %445 = vmatpush2.msra.mxu0 0.0
        %446 = vmatprep.subr.mxu0 0.0
        %447 = vmatpush2.msra.mxu0 0.0
        %448 = vmatprep.subr.mxu0 0.0
        %449 = vmatpush2.msra.mxu0 0.0
        %450 = vmatprep.subr.mxu0 0.0
        %451 = vmatpush2.msra.mxu0 0.0
        %452 = vmatprep.mubr.f32.mxu0 0.0
        %453 = vmatmul.mubr.f32.gmra.mxu0 %v293
        %v454 = vpop.f32.mrf.mxu0
        %v455 = vadd.f32 %v284, %v454
        %v456 = vpop.f32.mrf.mxu0
        %v457 = vadd.f32 %v288, %v456
        %458 = vmatprep.mubr.f32.mxu0 0.0
        %459 = vmatmul.mubr.f32.gmra.mxu0 %v296
        %v460 = vpop.f32.mrf.mxu0
        %v461 = vadd.f32 %v284, %v460
        %v462 = vpop.f32.mrf.mxu0
        %v463 = vadd.f32 %v288, %v462
        %464 = vmatprep.mubr.f32.mxu0 0.0
        %465 = vmatmul.mubr.f32.gmra.mxu0 %v299
        %v466 = vpop.f32.mrf.mxu0
        %v467 = vadd.f32 %v284, %v466
        %v468 = vpop.f32.mrf.mxu0
        %v469 = vadd.f32 %v288, %v468
        %470 = vmatprep.mubr.f32.mxu0 0.0
        %471 = vmatmul.mubr.f32.gmra.mxu0 %v302
        %v472 = vpop.f32.mrf.mxu0
        %v473 = vadd.f32 %v284, %v472
        %v474 = vpop.f32.mrf.mxu0
        %v475 = vadd.f32 %v288, %v474
        %476 = vmatprep.mubr.f32.mxu0 0.0
        %477 = vmatmul.mubr.f32.gmra.mxu0 %v305
        %v478 = vpop.f32.mrf.mxu0
        %v479 = vadd.f32 %v284, %v478
        %v480 = vpop.f32.mrf.mxu0
        %v481 = vadd.f32 %v288, %v480
        %482 = vmatprep.mubr.f32.mxu0 0.0
        %483 = vmatmul.mubr.f32.gmra.mxu0 %v308
        %v484 = vpop.f32.mrf.mxu0
        %v485 = vadd.f32 %v284, %v484
        %v486 = vpop.f32.mrf.mxu0
        %v487 = vadd.f32 %v288, %v486
        %488 = vmatprep.mubr.f32.mxu0 0.0
        %489 = vmatmul.mubr.f32.gmra.mxu0 %v311
        %v490 = vpop.f32.mrf.mxu0
        %v491 = vadd.f32 %v284, %v490
        %v492 = vpop.f32.mrf.mxu0
        %v493 = vadd.f32 %v288, %v492
        %494 = vmatprep.mubr.f32.mxu0 0.0
        %495 = vmatmul.mubr.f32.gmra.mxu0 %v314
        %v496 = vpop.f32.mrf.mxu0
        %v497 = vadd.f32 %v284, %v496
        %v498 = vpop.f32.mrf.mxu0
        %v499 = vadd.f32 %v288, %v498
        %500 = vmatprep.mubr.f32.mxu0 0.0
        %501 = vmatmul.mubr.f32.gmra.mxu0 %v317
        %v502 = vpop.f32.mrf.mxu0
        %v503 = vadd.f32 %v284, %v502
        %v504 = vpop.f32.mrf.mxu0
        %v505 = vadd.f32 %v288, %v504
        %506 = vmatprep.mubr.f32.mxu0 0.0
        %507 = vmatmul.mubr.f32.gmra.mxu0 %v320
        %v508 = vpop.f32.mrf.mxu0
        %v509 = vadd.f32 %v284, %v508
        %v510 = vpop.f32.mrf.mxu0
        %v511 = vadd.f32 %v288, %v510
        %512 = vmatprep.mubr.f32.mxu0 0.0
        %513 = vmatmul.mubr.f32.gmra.mxu0 %v323
        %v514 = vpop.f32.mrf.mxu0
        %v515 = vadd.f32 %v284, %v514
        %v516 = vpop.f32.mrf.mxu0
        %v517 = vadd.f32 %v288, %v516
        %518 = vmatprep.mubr.f32.mxu0 0.0
        %519 = vmatmul.mubr.f32.gmra.mxu0 %v326
        %v520 = vpop.f32.mrf.mxu0
        %v521 = vadd.f32 %v284, %v520
        %v522 = vpop.f32.mrf.mxu0
        %v523 = vadd.f32 %v288, %v522
        %524 = vmatprep.mubr.f32.mxu0 0.0
        %525 = vmatmul.mubr.f32.gmra.mxu0 %v329
        %v526 = vpop.f32.mrf.mxu0
        %v527 = vadd.f32 %v284, %v526
        %v528 = vpop.f32.mrf.mxu0
        %v529 = vadd.f32 %v288, %v528
        %530 = vmatprep.mubr.f32.mxu0 0.0
        %531 = vmatmul.mubr.f32.gmra.mxu0 %v332
        %v532 = vpop.f32.mrf.mxu0
        %v533 = vadd.f32 %v284, %v532
        %v534 = vpop.f32.mrf.mxu0
        %v535 = vadd.f32 %v288, %v534
        %536 = vmatprep.mubr.f32.mxu0 0.0
        %537 = vmatmul.mubr.f32.gmra.mxu0 %v335
        %v538 = vpop.f32.mrf.mxu0
        %v539 = vadd.f32 %v284, %v538
        %v540 = vpop.f32.mrf.mxu0
        %v541 = vadd.f32 %v288, %v540
        %542 = vmatprep.mubr.f32.mxu0 0.0
        %543 = vmatmul.mubr.f32.gmra.mxu0 %v338
        %v544 = vpop.f32.mrf.mxu0
        %v545 = vadd.f32 %v284, %v544
        %v546 = vpop.f32.mrf.mxu0
        %v547 = vadd.f32 %v288, %v546
        %548 = vmatprep.mubr.f32.mxu0 0.0
        %549 = vmatmul.mubr.f32.gmra.mxu0 %v341
        %v550 = vpop.f32.mrf.mxu0
        %v551 = vadd.f32 %v284, %v550
        %v552 = vpop.f32.mrf.mxu0
        %v553 = vadd.f32 %v288, %v552
        %554 = vmatprep.mubr.f32.mxu0 0.0
        %555 = vmatmul.mubr.f32.gmra.mxu0 %v344
        %v556 = vpop.f32.mrf.mxu0
        %v557 = vadd.f32 %v284, %v556
        %v558 = vpop.f32.mrf.mxu0
        %v559 = vadd.f32 %v288, %v558
        %560 = vmatprep.mubr.f32.mxu0 0.0
        %561 = vmatmul.mubr.f32.gmra.mxu0 %v347
        %v562 = vpop.f32.mrf.mxu0
        %v563 = vadd.f32 %v284, %v562
        %v564 = vpop.f32.mrf.mxu0
        %v565 = vadd.f32 %v288, %v564
        %566 = vmatprep.mubr.f32.mxu0 0.0
        %567 = vmatmul.mubr.f32.gmra.mxu0 %v350
        %v568 = vpop.f32.mrf.mxu0
        %v569 = vadd.f32 %v284, %v568
        %v570 = vpop.f32.mrf.mxu0
        %v571 = vadd.f32 %v288, %v570
        %572 = vmatprep.mubr.f32.mxu0 0.0
        %573 = vmatmul.mubr.f32.gmra.mxu0 %v353
        %v574 = vpop.f32.mrf.mxu0
        %v575 = vadd.f32 %v284, %v574
        %v576 = vpop.f32.mrf.mxu0
        %v577 = vadd.f32 %v288, %v576
        %578 = vmatprep.mubr.f32.mxu0 0.0
        %579 = vmatmul.mubr.f32.gmra.mxu0 %v356
        %v580 = vpop.f32.mrf.mxu0
        %v581 = vadd.f32 %v284, %v580
        %v582 = vpop.f32.mrf.mxu0
        %v583 = vadd.f32 %v288, %v582
        %584 = vmatprep.mubr.f32.mxu0 0.0
        %585 = vmatmul.mubr.f32.gmra.mxu0 %v359
        %v586 = vpop.f32.mrf.mxu0
        %v587 = vadd.f32 %v284, %v586
        %v588 = vpop.f32.mrf.mxu0
        %v589 = vadd.f32 %v288, %v588
        %590 = vmatprep.mubr.f32.mxu0 0.0
        %591 = vmatmul.mubr.f32.gmra.mxu0 %v362
        %v592 = vpop.f32.mrf.mxu0
        %v593 = vadd.f32 %v284, %v592
        %v594 = vpop.f32.mrf.mxu0
        %v595 = vadd.f32 %v288, %v594
        %596 = vmatprep.mubr.f32.mxu0 0.0
        %597 = vmatmul.mubr.f32.gmra.mxu0 %v365
        %v598 = vpop.f32.mrf.mxu0
        %v599 = vadd.f32 %v284, %v598
        %v600 = vpop.f32.mrf.mxu0
        %v601 = vadd.f32 %v288, %v600
        %602 = vmatprep.mubr.f32.mxu0 0.0
        %603 = vmatmul.mubr.f32.gmra.mxu0 %v368
        %v604 = vpop.f32.mrf.mxu0
        %v605 = vadd.f32 %v284, %v604
        %v606 = vpop.f32.mrf.mxu0
        %v607 = vadd.f32 %v288, %v606
        %608 = vmatprep.mubr.f32.mxu0 0.0
        %609 = vmatmul.mubr.f32.gmra.mxu0 %v371
        %v610 = vpop.f32.mrf.mxu0
        %v611 = vadd.f32 %v284, %v610
        %v612 = vpop.f32.mrf.mxu0
        %v613 = vadd.f32 %v288, %v612
        %614 = vmatprep.mubr.f32.mxu0 0.0
        %615 = vmatmul.mubr.f32.gmra.mxu0 %v374
        %v616 = vpop.f32.mrf.mxu0
        %v617 = vadd.f32 %v284, %v616
        %v618 = vpop.f32.mrf.mxu0
        %v619 = vadd.f32 %v288, %v618
        %620 = vmatprep.mubr.f32.mxu0 0.0
        %621 = vmatmul.mubr.f32.gmra.mxu0 %v377
        %v622 = vpop.f32.mrf.mxu0
        %v623 = vadd.f32 %v284, %v622
        %v624 = vpop.f32.mrf.mxu0
        %v625 = vadd.f32 %v288, %v624
        %626 = vmatprep.mubr.f32.mxu0 0.0
        %627 = vmatmul.mubr.f32.gmra.mxu0 %v380
        %v628 = vpop.f32.mrf.mxu0
        %v629 = vadd.f32 %v284, %v628
        %v630 = vpop.f32.mrf.mxu0
        %v631 = vadd.f32 %v288, %v630
        %632 = vmatprep.mubr.f32.mxu0 0.0
        %633 = vmatmul.mubr.f32.gmra.mxu0 %v383
        %v634 = vpop.f32.mrf.mxu0
        %v635 = vadd.f32 %v284, %v634
        %v636 = vpop.f32.mrf.mxu0
        %v637 = vadd.f32 %v288, %v636
        %638 = vmatprep.mubr.f32.mxu0 0.0
        %639 = vmatmul.mubr.f32.gmra.mxu0 %v386
        %v640 = vpop.f32.mrf.mxu0
        %v641 = vadd.f32 %v284, %v640
        %v642 = vpop.f32.mrf.mxu0
        %v643 = vadd.f32 %v288, %v642
        %644 = vdwg.mxu0
        %v645 = vmax.f32 %v455, 0.0
        %v646 = vmax.f32 %v461, 0.0
        %v647 = vmax.f32 %v467, 0.0
        %v648 = vmax.f32 %v473, 0.0
        %v649 = vmax.f32 %v479, 0.0
        %v650 = vmax.f32 %v485, 0.0
        %v651 = vmax.f32 %v491, 0.0
        %v652 = vmax.f32 %v497, 0.0
        %v653 = vmax.f32 %v503, 0.0
        %v654 = vmax.f32 %v509, 0.0
        %v655 = vmax.f32 %v515, 0.0
        %v656 = vmax.f32 %v521, 0.0
        %v657 = vmax.f32 %v527, 0.0
        %v658 = vmax.f32 %v533, 0.0
        %v659 = vmax.f32 %v539, 0.0
        %v660 = vmax.f32 %v545, 0.0
        %v661 = vmax.f32 %v551, 0.0
        %v662 = vmax.f32 %v557, 0.0
        %v663 = vmax.f32 %v563, 0.0
        %v664 = vmax.f32 %v569, 0.0
        %v665 = vmax.f32 %v575, 0.0
        %v666 = vmax.f32 %v581, 0.0
        %v667 = vmax.f32 %v587, 0.0
        %v668 = vmax.f32 %v593, 0.0
        %v669 = vmax.f32 %v599, 0.0
        %v670 = vmax.f32 %v605, 0.0
        %v671 = vmax.f32 %v611, 0.0
        %v672 = vmax.f32 %v617, 0.0
        %v673 = vmax.f32 %v623, 0.0
        %v674 = vmax.f32 %v629, 0.0
        %v675 = vmax.f32 %v635, 0.0
        %v676 = vmax.f32 %v641, 0.0
        %677 = vst [vmem:[%s235] sm:$0xff] %v645
        %678 = vst [vmem:[%s235 + $0x8] sm:$0xff] %v646
        %679 = vst [vmem:[%s235 + $0x10] sm:$0xff] %v647
        %680 = vst [vmem:[%s235 + $0x18] sm:$0xff] %v648
        %681 = vst [vmem:[%s235 + $0x20] sm:$0xff] %v649
        %682 = vst [vmem:[%s235 + $0x28] sm:$0xff] %v650
        %683 = vst [vmem:[%s235 + $0x30] sm:$0xff] %v651
        %684 = vst [vmem:[%s235 + $0x38] sm:$0xff] %v652
        %685 = vst [vmem:[%s235 + $0x40] sm:$0xff] %v653
        %686 = vst [vmem:[%s235 + $0x48] sm:$0xff] %v654
        %687 = vst [vmem:[%s235 + $0x50] sm:$0xff] %v655
        %688 = vst [vmem:[%s235 + $0x58] sm:$0xff] %v656
        %689 = vst [vmem:[%s235 + $0x60] sm:$0xff] %v657
        %690 = vst [vmem:[%s235 + $0x68] sm:$0xff] %v658
        %691 = vst [vmem:[%s235 + $0x70] sm:$0xff] %v659
        %692 = vst [vmem:[%s235 + $0x78] sm:$0xff] %v660
        %693 = vst [vmem:[%s235 + $0x80] sm:$0xff] %v661
        %694 = vst [vmem:[%s235 + $0x88] sm:$0xff] %v662
        %695 = vst [vmem:[%s235 + $0x90] sm:$0xff] %v663
        %696 = vst [vmem:[%s235 + $0x98] sm:$0xff] %v664
        %697 = vst [vmem:[%s235 + $0xa0] sm:$0xff] %v665
        %698 = vst [vmem:[%s235 + $0xa8] sm:$0xff] %v666
        %699 = vst [vmem:[%s235 + $0xb0] sm:$0xff] %v667
        %700 = vst [vmem:[%s235 + $0xb8] sm:$0xff] %v668
        %701 = vst [vmem:[%s235 + $0xc0] sm:$0xff] %v669
        %702 = vst [vmem:[%s235 + $0xc8] sm:$0xff] %v670
        %703 = vst [vmem:[%s235 + $0xd0] sm:$0xff] %v671
        %704 = vst [vmem:[%s235 + $0xd8] sm:$0xff] %v672
        %705 = vst [vmem:[%s235 + $0xe0] sm:$0xff] %v673
        %706 = vst [vmem:[%s235 + $0xe8] sm:$0xff] %v674
        %707 = vst [vmem:[%s235 + $0xf0] sm:$0xff] %v675
        %708 = vst [vmem:[%s235 + $0xf8] sm:$0xff] %v676
        %709 = vst [vmem:[%s241] sm:$0xff] %v457
        %710 = vst [vmem:[%s241 + $0x8] sm:$0xff] %v463
        %711 = vst [vmem:[%s241 + $0x10] sm:$0xff] %v469
        %712 = vst [vmem:[%s241 + $0x18] sm:$0xff] %v475
        %713 = vst [vmem:[%s241 + $0x20] sm:$0xff] %v481
        %714 = vst [vmem:[%s241 + $0x28] sm:$0xff] %v487
        %715 = vst [vmem:[%s241 + $0x30] sm:$0xff] %v493
        %716 = vst [vmem:[%s241 + $0x38] sm:$0xff] %v499
        %717 = vst [vmem:[%s241 + $0x40] sm:$0xff] %v505
        %718 = vst [vmem:[%s241 + $0x48] sm:$0xff] %v511
        %719 = vst [vmem:[%s241 + $0x50] sm:$0xff] %v517
        %720 = vst [vmem:[%s241 + $0x58] sm:$0xff] %v523
        %721 = vst [vmem:[%s241 + $0x60] sm:$0xff] %v529
        %722 = vst [vmem:[%s241 + $0x68] sm:$0xff] %v535
        %723 = vst [vmem:[%s241 + $0x70] sm:$0xff] %v541
        %724 = vst [vmem:[%s241 + $0x78] sm:$0xff] %v547
        %725 = vst [vmem:[%s241 + $0x80] sm:$0xff] %v553
        %726 = vst [vmem:[%s241 + $0x88] sm:$0xff] %v559
        %727 = vst [vmem:[%s241 + $0x90] sm:$0xff] %v565
        %728 = vst [vmem:[%s241 + $0x98] sm:$0xff] %v571
        %729 = vst [vmem:[%s241 + $0xa0] sm:$0xff] %v577
        %730 = vst [vmem:[%s241 + $0xa8] sm:$0xff] %v583
        %731 = vst [vmem:[%s241 + $0xb0] sm:$0xff] %v589
        %732 = vst [vmem:[%s241 + $0xb8] sm:$0xff] %v595
        %733 = vst [vmem:[%s241 + $0xc0] sm:$0xff] %v601
        %734 = vst [vmem:[%s241 + $0xc8] sm:$0xff] %v607
        %735 = vst [vmem:[%s241 + $0xd0] sm:$0xff] %v613
        %736 = vst [vmem:[%s241 + $0xd8] sm:$0xff] %v619
        %737 = vst [vmem:[%s241 + $0xe0] sm:$0xff] %v625
        %738 = vst [vmem:[%s241 + $0xe8] sm:$0xff] %v631
        %739 = vst [vmem:[%s241 + $0xf0] sm:$0xff] %v637
        %740 = vst [vmem:[%s241 + $0xf8] sm:$0xff] %v643
        %s741 = smul.u32 32, %s18
        %p742 = scmp.lt.s32.totalorder %s741, 63
        %s743 = scalar_select %p742, %s741, 63
        %s744 = smul.addr %s743, 8
        %s745 = scalar_lea.vmem %s3, %s744
        %s746 = smul.u32 32, %s18
        %p747 = scmp.lt.s32.totalorder %s746, 63
        %s748 = scalar_select %p747, %s746, 63
        %s749 = smul.addr %s748, 8
        %s750 = scalar_lea.vmem %s4, %s749
        // Predicated region
        $region41: #{_lambda_.2} parent=31 // pred_check
          %p751 = pneg %p104
        $region42: #{_lambda_.2} parent=31 // pred_check_branch
          %753 = sbr.rel (%p751) target = $region44
        $region43: #{_lambda_.2} parent=31 // pred_region
          %s754 = smul.u32 32, %s18
        $region44: #{_lambda_.2} parent=31 // pred_fallthru
          _
        // Predicated region
        $region45: #{_lambda_.2} parent=31 // pred_check
          %p755 = pneg %p130
        $region46: #{_lambda_.2} parent=31 // pred_check_branch
          %757 = sbr.rel (%p755) target = $region48
        $region47: #{_lambda_.2} parent=31 // pred_region
          %s758 = smul.u32 32, %s18
        $region48: #{_lambda_.2} parent=31 // pred_fallthru
          _
      $region32: #{_lambda_.2} parent=5 // pred_fallthru
        _
      %p759 = scmp.le.s32.totalorder 2, %s13
      // Predicated region
      $region49: #{_lambda_.2} parent=5 // pred_check
        %p760 = pneg %p759
      $region50: #{_lambda_.2} parent=5 // pred_check_branch
        %762 = sbr.rel (%p760) target = $region52
      $region51: #{_lambda_.2} parent=5 // pred_region
        %s763 = ssub.s32 %s13, 2
        // Predicated region
        $region53: #{_lambda_.2} parent=51 // pred_check
          %p764 = pneg %p110
        $region54: #{_lambda_.2} parent=51 // pred_check_branch
          %766 = sbr.rel (%p764) target = $region56
        $region55: #{_lambda_.2} parent=51 // pred_region
          %s767 = smul.u32 32, %s19
          %p768 = scmp.lt.s32.totalorder %s767, 63
          %s769 = scalar_select %p768, %s767, 63
          %s770 = smul.addr %s769, 8
          %s771 = scalar_lea.vmem %s3, %s770
        $region56: #{_lambda_.2} parent=51 // pred_fallthru
          _
        // Predicated region
        $region57: #{_lambda_.2} parent=51 // pred_check
          %p772 = pneg %p136
        $region58: #{_lambda_.2} parent=51 // pred_check_branch
          %774 = sbr.rel (%p772) target = $region60
        $region59: #{_lambda_.2} parent=51 // pred_region
          %s775 = smul.u32 32, %s19
          %p776 = scmp.lt.s32.totalorder %s775, 63
          %s777 = scalar_select %p776, %s775, 63
          %s778 = smul.addr %s777, 8
          %s779 = scalar_lea.vmem %s4, %s778
        $region60: #{_lambda_.2} parent=51 // pred_fallthru
          _
      $region52: #{_lambda_.2} parent=5 // pred_fallthru
        _
    $region6: #{_lambda_.2} parent=1 // loop_footer
      %s17 = sadd.s32 1, %s13
    $region7: #{_lambda_.2} parent=1 // loop_footer_branch
      %12 = sbr.rel target = $region3
    $region8: #{_lambda_.2} parent=1 // loop_exit
      _
    %780 = vsyncpa [#allocation3], 1
    %s781 = scalar_lea.sflag [#allocation3], 1
    %782 = vsyncpa %s781, 1
    %783 = vsyncpa [#allocation5], 1

// kernel: _lambda_.3
$region0: #{_lambda_.3}
  #allocation0 [shape = 'u32[]', space=smem, size = 0x4, offset = 0x4, fixed_abs, tag = 'smem constant byte address 0x4 - core index']
  #allocation1 [shape = 'u32[144,128]{1,0:T(1,128)}', space=vmem, size = 0x12000, scoped, tag = 'internal scratch']
  #allocation2 [shape = 'f32[2,256,128]{2,1,0:T(8,128)}', space=vmem, size = 0x40000, scoped, tag = 'scratch operand']
  %s0 = inlined_call_operand.vmem [shape: f32[2,20,20,128], index: 0, kind: input, shape index: {}]
  %s1 = inlined_call_operand.vmem [shape: f32[2,1152,128], index: 1, kind: input, shape index: {}]
  %s2 = inlined_call_operand.vmem [shape: f32[2,1,128], index: 2, kind: input, shape index: {}]
  %s3 = inlined_call_operand.vmem [shape: f32[128,32], index: 3, kind: input, shape index: {}]
  %s4 = inlined_call_operand.vmem [shape: f32[1,32], index: 4, kind: input, shape index: {}]
  %s5 = inlined_call_operand.vmem [shape: f32[2,32,128], index: 5, kind: input, shape index: {}]
  %s6 = inlined_call_operand.vmem [shape: f32[2,1,128], index: 6, kind: input, shape index: {}]
  %s7 = inlined_call_operand.vmem [shape: f32[128,128], index: 7, kind: input, shape index: {}]
  %s8 = inlined_call_operand.vmem [shape: f32[1,128], index: 8, kind: input, shape index: {}]
  %s9 = inlined_call_operand.vmem [shape: f32[2,256,128], index: 9, kind: input, shape index: {}]
  %s10 = inlined_call_operand.vmem [shape: f32[2,256,128], index: 10, kind: output, shape index: {}]
  %s11 = sld [smem:[#allocation0]]
  $region73: #{_lambda_.3} parent=0
    _
  %s13 = ssub.s32 1, %s11
  %s14 = scalar_select 0, %s13, %s11
  loop: start=0, step=1, limit=4
  $region2: #{_lambda_.3} parent=0 // loop_pre_header
    _
  $region3: #{_lambda_.3} parent=0 // loop_header
    %s16 = sphi 0, %s20
    %p17 = scmp.ge.s32.totalorder %s16, 4
    %s26 = sphi 0, %s28
    %s29 = sphi 0, %s26
    %s30 = sphi 0, %s29
    %s46 = sphi 0, %s30
    %s50 = sphi 0, %s50
    %s52 = sphi 0, %s50
    %s53 = sphi 0, %s52
    %s67 = sphi 0, %s53
    %s71 = sphi 0, %s71
    %s73 = sphi 0, %s71
    %s74 = sphi 0, %s73
    %s88 = sphi 0, %s74
    %s92 = sphi 0, %s92
    %s94 = sphi 0, %s92
    %s95 = sphi 0, %s94
    %s109 = sphi 0, %s95
    %s113 = sphi 0, %s113
    %s115 = sphi 0, %s113
    %s116 = sphi 0, %s115
    %s130 = sphi 0, %s116
    %s134 = sphi 0, %s134
    %s136 = sphi 0, %s134
    %s137 = sphi 0, %s136
    %s151 = sphi 0, %s137
    %s155 = sphi 0, %s155
    %s157 = sphi 0, %s155
    %s158 = sphi 0, %s157
    %s172 = sphi 0, %s158
    %s176 = sphi 0, %s176
    %s178 = sphi 0, %s176
    %s179 = sphi 0, %s178
    %s193 = sphi 0, %s179
    %s197 = sphi 0, %s197
    %s199 = sphi 0, %s197
    %s200 = sphi 0, %s199
    %s214 = sphi 0, %s200
    %s220 = sphi 0, %s222
    %s223 = sphi 0, %s220
    %s224 = sphi 0, %s223
    %s240 = sphi 0, %s224
    %s246 = sphi 0, %s248
    %s249 = sphi 0, %s246
    %s250 = sphi 0, %s249
    %s266 = sphi 0, %s250
  $region4: #{_lambda_.3} parent=0 // loop_header_branch
    %19 = sbr.rel (%p17) target = $region8
  $region5: #{_lambda_.3} parent=0 // loop_body
    %s21 = ssub.s32 %s16, 1
    %s22 = ssub.s32 %s16, 2
    %s23 = sadd.s32 %s16, 1
    %s24 = ssub.s32 %s16, %s23
    %p25 = scmp.eq.s32.totalorder %s24, 0
    %s27 = sadd.s32 %s26, 1
    %s28 = scalar_select %p25, %s26, %s27
    %p31 = pneg %p25
    %p32 = scmp.eq.s32.totalorder %s16, 1
    %p33 = por %p31, %p32
    %p34 = scmp.ne.s32.totalorder %s26, %s29
    %p35 = scmp.eq.s32.totalorder %s16, 0
    %p36 = por %p34, %p35
    %p37 = scmp.ne.s32.totalorder %s26, %s29
    %p38 = scmp.eq.s32.totalorder %s21, 1
    %p39 = por %p37, %p38
    %p40 = scmp.ne.s32.totalorder %s29, %s30
    %p41 = scmp.eq.s32.totalorder %s21, 0
    %p42 = por %p40, %p41
    %p43 = scmp.ne.s32.totalorder %s29, %s30
    %p44 = scmp.eq.s32.totalorder %s22, 1
    %p45 = por %p43, %p44
    %p47 = scmp.ne.s32.totalorder %s30, %s46
    %p48 = scmp.eq.s32.totalorder %s22, 0
    %p49 = por %p47, %p48
    %s51 = sadd.s32 %s50, 1
    %p54 = scmp.eq.s32.totalorder %s16, 1
    %p55 = scmp.ne.s32.totalorder %s50, %s52
    %p56 = scmp.eq.s32.totalorder %s16, 0
    %p57 = por %p55, %p56
    %p58 = scmp.ne.s32.totalorder %s50, %s52
    %p59 = scmp.eq.s32.totalorder %s21, 1
    %p60 = por %p58, %p59
    %p61 = scmp.ne.s32.totalorder %s52, %s53
    %p62 = scmp.eq.s32.totalorder %s21, 0
    %p63 = por %p61, %p62
    %p64 = scmp.ne.s32.totalorder %s52, %s53
    %p65 = scmp.eq.s32.totalorder %s22, 1
    %p66 = por %p64, %p65
    %p68 = scmp.ne.s32.totalorder %s53, %s67
    %p69 = scmp.eq.s32.totalorder %s22, 0
    %p70 = por %p68, %p69
    %s72 = sadd.s32 %s71, 1
    %p75 = scmp.eq.s32.totalorder %s16, 1
    %p76 = scmp.ne.s32.totalorder %s71, %s73
    %p77 = scmp.eq.s32.totalorder %s16, 0
    %p78 = por %p76, %p77
    %p79 = scmp.ne.s32.totalorder %s71, %s73
    %p80 = scmp.eq.s32.totalorder %s21, 1
    %p81 = por %p79, %p80
    %p82 = scmp.ne.s32.totalorder %s73, %s74
    %p83 = scmp.eq.s32.totalorder %s21, 0
    %p84 = por %p82, %p83
    %p85 = scmp.ne.s32.totalorder %s73, %s74
    %p86 = scmp.eq.s32.totalorder %s22, 1
    %p87 = por %p85, %p86
    %p89 = scmp.ne.s32.totalorder %s74, %s88
    %p90 = scmp.eq.s32.totalorder %s22, 0
    %p91 = por %p89, %p90
    %s93 = sadd.s32 %s92, 1
    %p96 = scmp.eq.s32.totalorder %s16, 1
    %p97 = scmp.ne.s32.totalorder %s92, %s94
    %p98 = scmp.eq.s32.totalorder %s16, 0
    %p99 = por %p97, %p98
    %p100 = scmp.ne.s32.totalorder %s92, %s94
    %p101 = scmp.eq.s32.totalorder %s21, 1
    %p102 = por %p100, %p101
    %p103 = scmp.ne.s32.totalorder %s94, %s95
    %p104 = scmp.eq.s32.totalorder %s21, 0
    %p105 = por %p103, %p104
    %p106 = scmp.ne.s32.totalorder %s94, %s95
    %p107 = scmp.eq.s32.totalorder %s22, 1
    %p108 = por %p106, %p107
    %p110 = scmp.ne.s32.totalorder %s95, %s109
    %p111 = scmp.eq.s32.totalorder %s22, 0
    %p112 = por %p110, %p111
    %s114 = sadd.s32 %s113, 1
    %p117 = scmp.eq.s32.totalorder %s16, 1
    %p118 = scmp.ne.s32.totalorder %s113, %s115
    %p119 = scmp.eq.s32.totalorder %s16, 0
    %p120 = por %p118, %p119
    %p121 = scmp.ne.s32.totalorder %s113, %s115
    %p122 = scmp.eq.s32.totalorder %s21, 1
    %p123 = por %p121, %p122
    %p124 = scmp.ne.s32.totalorder %s115, %s116
    %p125 = scmp.eq.s32.totalorder %s21, 0
    %p126 = por %p124, %p125
    %p127 = scmp.ne.s32.totalorder %s115, %s116
    %p128 = scmp.eq.s32.totalorder %s22, 1
    %p129 = por %p127, %p128
    %p131 = scmp.ne.s32.totalorder %s116, %s130
    %p132 = scmp.eq.s32.totalorder %s22, 0
    %p133 = por %p131, %p132
    %s135 = sadd.s32 %s134, 1
    %p138 = scmp.eq.s32.totalorder %s16, 1
    %p139 = scmp.ne.s32.totalorder %s134, %s136
    %p140 = scmp.eq.s32.totalorder %s16, 0
    %p141 = por %p139, %p140
    %p142 = scmp.ne.s32.totalorder %s134, %s136
    %p143 = scmp.eq.s32.totalorder %s21, 1
    %p144 = por %p142, %p143
    %p145 = scmp.ne.s32.totalorder %s136, %s137
    %p146 = scmp.eq.s32.totalorder %s21, 0
    %p147 = por %p145, %p146
    %p148 = scmp.ne.s32.totalorder %s136, %s137
    %p149 = scmp.eq.s32.totalorder %s22, 1
    %p150 = por %p148, %p149
    %p152 = scmp.ne.s32.totalorder %s137, %s151
    %p153 = scmp.eq.s32.totalorder %s22, 0
    %p154 = por %p152, %p153
    %s156 = sadd.s32 %s155, 1
    %p159 = scmp.eq.s32.totalorder %s16, 1
    %p160 = scmp.ne.s32.totalorder %s155, %s157
    %p161 = scmp.eq.s32.totalorder %s16, 0
    %p162 = por %p160, %p161
    %p163 = scmp.ne.s32.totalorder %s155, %s157
    %p164 = scmp.eq.s32.totalorder %s21, 1
    %p165 = por %p163, %p164
    %p166 = scmp.ne.s32.totalorder %s157, %s158
    %p167 = scmp.eq.s32.totalorder %s21, 0
    %p168 = por %p166, %p167
    %p169 = scmp.ne.s32.totalorder %s157, %s158
    %p170 = scmp.eq.s32.totalorder %s22, 1
    %p171 = por %p169, %p170
    %p173 = scmp.ne.s32.totalorder %s158, %s172
    %p174 = scmp.eq.s32.totalorder %s22, 0
    %p175 = por %p173, %p174
    %s177 = sadd.s32 %s176, 1
    %p180 = scmp.eq.s32.totalorder %s16, 1
    %p181 = scmp.ne.s32.totalorder %s176, %s178
    %p182 = scmp.eq.s32.totalorder %s16, 0
    %p183 = por %p181, %p182
    %p184 = scmp.ne.s32.totalorder %s176, %s178
    %p185 = scmp.eq.s32.totalorder %s21, 1
    %p186 = por %p184, %p185
    %p187 = scmp.ne.s32.totalorder %s178, %s179
    %p188 = scmp.eq.s32.totalorder %s21, 0
    %p189 = por %p187, %p188
    %p190 = scmp.ne.s32.totalorder %s178, %s179
    %p191 = scmp.eq.s32.totalorder %s22, 1
    %p192 = por %p190, %p191
    %p194 = scmp.ne.s32.totalorder %s179, %s193
    %p195 = scmp.eq.s32.totalorder %s22, 0
    %p196 = por %p194, %p195
    %s198 = sadd.s32 %s197, 1
    %p201 = scmp.eq.s32.totalorder %s16, 1
    %p202 = scmp.ne.s32.totalorder %s197, %s199
    %p203 = scmp.eq.s32.totalorder %s16, 0
    %p204 = por %p202, %p203
    %p205 = scmp.ne.s32.totalorder %s197, %s199
    %p206 = scmp.eq.s32.totalorder %s21, 1
    %p207 = por %p205, %p206
    %p208 = scmp.ne.s32.totalorder %s199, %s200
    %p209 = scmp.eq.s32.totalorder %s21, 0
    %p210 = por %p208, %p209
    %p211 = scmp.ne.s32.totalorder %s199, %s200
    %p212 = scmp.eq.s32.totalorder %s22, 1
    %p213 = por %p211, %p212
    %p215 = scmp.ne.s32.totalorder %s200, %s214
    %p216 = scmp.eq.s32.totalorder %s22, 0
    %p217 = por %p215, %p216
    %s218 = ssub.s32 %s16, %s23
    %p219 = scmp.eq.s32.totalorder %s218, 0
    %s221 = sadd.s32 %s220, 1
    %s222 = scalar_select %p219, %s220, %s221
    %p225 = pneg %p219
    %p226 = scmp.eq.s32.totalorder %s16, 1
    %p227 = por %p225, %p226
    %p228 = scmp.ne.s32.totalorder %s220, %s223
    %p229 = scmp.eq.s32.totalorder %s16, 0
    %p230 = por %p228, %p229
    %p231 = scmp.ne.s32.totalorder %s220, %s223
    %p232 = scmp.eq.s32.totalorder %s21, 1
    %p233 = por %p231, %p232
    %p234 = scmp.ne.s32.totalorder %s223, %s224
    %p235 = scmp.eq.s32.totalorder %s21, 0
    %p236 = por %p234, %p235
    %p237 = scmp.ne.s32.totalorder %s223, %s224
    %p238 = scmp.eq.s32.totalorder %s22, 1
    %p239 = por %p237, %p238
    %p241 = scmp.ne.s32.totalorder %s224, %s240
    %p242 = scmp.eq.s32.totalorder %s22, 0
    %p243 = por %p241, %p242
    %s244 = ssub.s32 %s16, %s23
    %p245 = scmp.eq.s32.totalorder %s244, 0
    %s247 = sadd.s32 %s246, 1
    %s248 = scalar_select %p245, %s246, %s247
    %p251 = pneg %p245
    %p252 = scmp.eq.s32.totalorder %s16, 1
    %p253 = por %p251, %p252
    %p254 = scmp.ne.s32.totalorder %s246, %s249
    %p255 = scmp.eq.s32.totalorder %s16, 0
    %p256 = por %p254, %p255
    %p257 = scmp.ne.s32.totalorder %s246, %s249
    %p258 = scmp.eq.s32.totalorder %s21, 1
    %p259 = por %p257, %p258
    %p260 = scmp.ne.s32.totalorder %s249, %s250
    %p261 = scmp.eq.s32.totalorder %s21, 0
    %p262 = por %p260, %p261
    %p263 = scmp.ne.s32.totalorder %s249, %s250
    %p264 = scmp.eq.s32.totalorder %s22, 1
    %p265 = por %p263, %p264
    %p267 = scmp.ne.s32.totalorder %s250, %s266
    %p268 = scmp.eq.s32.totalorder %s22, 0
    %p269 = por %p267, %p268
    %p270 = scmp.le.s32.totalorder 1, %s16
    %p271 = scmp.lt.s32.totalorder %s16, 3
    %p272 = pnand %p270, %p271
    %p273 = pneg %p272
    // Predicated region
    $region9: #{_lambda_.3} parent=5 // pred_check
      _
    $region10: #{_lambda_.3} parent=5 // pred_check_branch
      %275 = sbr.rel (%p272) target = $region12
    $region11: #{_lambda_.3} parent=5 // pred_region
      %s276 = ssub.s32 %s16, 1
      // Predicated region
      $region13: #{_lambda_.3} parent=11 // pred_check
        %p277 = pneg %p63
      $region14: #{_lambda_.3} parent=11 // pred_check_branch
        %279 = sbr.rel (%p277) target = $region16
      $region15: #{_lambda_.3} parent=11 // pred_region
        _
      $region16: #{_lambda_.3} parent=11 // pred_fallthru
        _
      // Predicated region
      $region17: #{_lambda_.3} parent=11 // pred_check
        %p280 = pneg %p84
      $region18: #{_lambda_.3} parent=11 // pred_check_branch
        %282 = sbr.rel (%p280) target = $region20
      $region19: #{_lambda_.3} parent=11 // pred_region
        _
      $region20: #{_lambda_.3} parent=11 // pred_fallthru
        _
      // Predicated region
      $region21: #{_lambda_.3} parent=11 // pred_check
        %p283 = pneg %p105
      $region22: #{_lambda_.3} parent=11 // pred_check_branch
        %285 = sbr.rel (%p283) target = $region24
      $region23: #{_lambda_.3} parent=11 // pred_region
        _
      $region24: #{_lambda_.3} parent=11 // pred_fallthru
        _
      // Predicated region
      $region25: #{_lambda_.3} parent=11 // pred_check
        %p286 = pneg %p126
      $region26: #{_lambda_.3} parent=11 // pred_check_branch
        %288 = sbr.rel (%p286) target = $region28
      $region27: #{_lambda_.3} parent=11 // pred_region
        _
      $region28: #{_lambda_.3} parent=11 // pred_fallthru
        _
      // Predicated region
      $region29: #{_lambda_.3} parent=11 // pred_check
        %p289 = pneg %p147
      $region30: #{_lambda_.3} parent=11 // pred_check_branch
        %291 = sbr.rel (%p289) target = $region32
      $region31: #{_lambda_.3} parent=11 // pred_region
        _
      $region32: #{_lambda_.3} parent=11 // pred_fallthru
        _
      // Predicated region
      $region33: #{_lambda_.3} parent=11 // pred_check
        %p292 = pneg %p168
      $region34: #{_lambda_.3} parent=11 // pred_check_branch
        %294 = sbr.rel (%p292) target = $region36
      $region35: #{_lambda_.3} parent=11 // pred_region
        _
      $region36: #{_lambda_.3} parent=11 // pred_fallthru
        _
      // Predicated region
      $region37: #{_lambda_.3} parent=11 // pred_check
        %p295 = pneg %p189
      $region38: #{_lambda_.3} parent=11 // pred_check_branch
        %297 = sbr.rel (%p295) target = $region40
      $region39: #{_lambda_.3} parent=11 // pred_region
        _
      $region40: #{_lambda_.3} parent=11 // pred_fallthru
        _
      // Predicated region
      $region41: #{_lambda_.3} parent=11 // pred_check
        %p298 = pneg %p210
      $region42: #{_lambda_.3} parent=11 // pred_check_branch
        %300 = sbr.rel (%p298) target = $region44
      $region43: #{_lambda_.3} parent=11 // pred_region
        _
      $region44: #{_lambda_.3} parent=11 // pred_fallthru
        _
    $region12: #{_lambda_.3} parent=5 // pred_fallthru
      _
    %p301 = scmp.lt.s32.totalorder %s16, 2
    // Predicated region
    $region45: #{_lambda_.3} parent=5 // pred_check
      %p302 = pneg %p301
    $region46: #{_lambda_.3} parent=5 // pred_check_branch
      %304 = sbr.rel (%p302) target = $region48
    $region47: #{_lambda_.3} parent=5 // pred_region
      // Predicated region
      $region49: #{_lambda_.3} parent=47 // pred_check
        %p305 = pneg %p36
      $region50: #{_lambda_.3} parent=47 // pred_check_branch
        %307 = sbr.rel (%p305) target = $region52
      $region51: #{_lambda_.3} parent=47 // pred_region
        %p308 = scmp.lt.s32.totalorder %s16, 1
        %s309 = scalar_select %p308, %s16, 1
        %s310 = smul.addr %s309, 60
        %s311 = smul.addr %s310, 8
        %s312 = scalar_lea.vmem %s0, %s311
      $region52: #{_lambda_.3} parent=47 // pred_fallthru
        _
      // Predicated region
      $region53: #{_lambda_.3} parent=47 // pred_check
        %p313 = pneg %p230
      $region54: #{_lambda_.3} parent=47 // pred_check_branch
        %315 = sbr.rel (%p313) target = $region56
      $region55: #{_lambda_.3} parent=47 // pred_region
        %p316 = scmp.lt.s32.totalorder %s16, 1
        %s317 = scalar_select %p316, %s16, 1
        %s318 = smul.addr %s317, 32
        %s319 = smul.addr %s318, 8
        %s320 = scalar_lea.vmem %s9, %s319
      $region56: #{_lambda_.3} parent=47 // pred_fallthru
        _
    $region48: #{_lambda_.3} parent=5 // pred_fallthru
      _
    %p321 = scmp.le.s32.totalorder 1, %s16
    %p322 = scmp.lt.s32.totalorder %s16, 3
    %p323 = pnand %p321, %p322
    %p324 = pneg %p323
    // Predicated region
    $region57: #{_lambda_.3} parent=5 // pred_check
      _
    $region58: #{_lambda_.3} parent=5 // pred_check_branch
      %326 = sbr.rel (%p323) target = $region60
    $region59: #{_lambda_.3} parent=5 // pred_region
      %s327 = ssub.s32 %s16, 1
      %p328 = scmp.lt.s32.totalorder %s21, 1
      %s329 = scalar_select %p328, %s21, 1
      %s330 = smul.addr %s329, 60
      %s331 = smul.addr %s330, 8
      %s332 = scalar_lea.vmem %s0, %s331
      %p333 = pneg %p42
      %p334 = pneg %p39
      %p335 = pneg %p63
      %p336 = pneg %p60
      %p337 = pneg %p84
      %p338 = pneg %p81
      %p339 = pneg %p105
      %p340 = pneg %p102
      %p341 = pneg %p126
      %p342 = pneg %p123
      %p343 = pneg %p147
      %p344 = pneg %p144
      %p345 = pneg %p168
      %p346 = pneg %p165
      %p347 = pneg %p189
      %p348 = pneg %p186
      %p349 = pneg %p210
      %p350 = pneg %p207
      %p351 = scmp.lt.s32.totalorder %s21, 1
      %s352 = scalar_select %p351, %s21, 1
      %s353 = smul.addr %s352, 32
      %s354 = smul.addr %s353, 8
      %s355 = scalar_lea.vmem %s9, %s354
      %p356 = pneg %p236
      %p357 = pneg %p233
      %p358 = pneg %p262
      %p359 = pneg %p259
      %p360 = scmp.lt.s32.totalorder %s21, 1
      %s361 = scalar_select %p360, %s21, 1
      %s362 = smul.addr %s361, 32
      %s363 = smul.addr %s362, 8
      %s364 = scalar_lea.vmem %s10, %s363
      %p365 = scmp.lt.s32.totalorder %s21, 1
      %s366 = scalar_select %p365, %s21, 1
      %s367 = smul.addr %s366, 60
      %s368 = smul.addr %s367, 8
      %s369 = scalar_lea.vmem %s0, %s368
      %p370 = scmp.lt.s32.totalorder %s21, 1
      %s371 = scalar_select %p370, %s21, 1
      %s372 = smul.addr %s371, 32
      %s373 = smul.addr %s372, 8
      %s374 = scalar_lea.vmem %s9, %s373
      %p375 = scmp.lt.s32.totalorder %s21, 1
      %s376 = scalar_select %p375, %s21, 1
      %s377 = smul.addr %s376, 32
      %s378 = smul.addr %s377, 8
      %s379 = scalar_lea.vmem %s10, %s378
      %s380 = scalar_lea.vmem %s369, 24
      %v381 = vld [vmem:[%s380] sm:$0xff]
      %v382 = vld [vmem:[%s380 + $0x8] sm:$0xff]
      %v383 = vld [vmem:[%s380 + $0x10] sm:$0xf]
      %v384 = vld [vmem:[%s380 + $0x18] sm:$0xff]
      %v385 = vld [vmem:[%s380 + $0x20] sm:$0xff]
      %v386 = vld [vmem:[%s380 + $0x28] sm:$0xf]
      %v387 = vld [vmem:[%s380 + $0x30] sm:$0xff]
      %v388 = vld [vmem:[%s380 + $0x38] sm:$0xff]
      %v389 = vld [vmem:[%s380 + $0x40] sm:$0xf]
      %v390 = vld [vmem:[%s380 + $0x48] sm:$0xff]
      %v391 = vld [vmem:[%s380 + $0x50] sm:$0xff]
      %v392 = vld [vmem:[%s380 + $0x58] sm:$0xf]
      %v393 = vld [vmem:[%s380 + $0x60] sm:$0xff]
      %v394 = vld [vmem:[%s380 + $0x68] sm:$0xff]
      %v395 = vld [vmem:[%s380 + $0x70] sm:$0xf]
      %v396 = vld [vmem:[%s380 + $0x78] sm:$0xff]
      %v397 = vld [vmem:[%s380 + $0x80] sm:$0xff]
      %v398 = vld [vmem:[%s380 + $0x88] sm:$0xf]
      %v399 = vld [vmem:[%s380 + $0x90] sm:$0xff]
      %v400 = vld [vmem:[%s380 + $0x98] sm:$0xff]
      %v401 = vld [vmem:[%s380 + $0xa0] sm:$0xf]
      %v402 = vld [vmem:[%s380 + $0xa8] sm:$0xff]
      %v403 = vld [vmem:[%s380 + $0xb0] sm:$0xff]
      %v404 = vld [vmem:[%s380 + $0xb8] sm:$0xf]
      %v405 = vld [vmem:[%s380 + $0xc0] sm:$0xff]
      %v406 = vld [vmem:[%s380 + $0xc8] sm:$0xff]
      %v407 = vld [vmem:[%s380 + $0xd0] sm:$0xf]
      %v408 = vld [vmem:[%s380 + $0xd8] sm:$0xff]
      %v409 = vld [vmem:[%s380 + $0xe0] sm:$0xff]
      %v410 = vld [vmem:[%s380 + $0xe8] sm:$0xf]
      %v411 = vld [vmem:[%s380 + $0xf0] sm:$0xff]
      %v412 = vld [vmem:[%s380 + $0xf8] sm:$0xff]
      %v413 = vld [vmem:[%s380 + $0x100] sm:$0xf]
      %v414 = vld [vmem:[%s380 + $0x108] sm:$0xff]
      %v415 = vld [vmem:[%s380 + $0x110] sm:$0xff]
      %v416 = vld [vmem:[%s380 + $0x118] sm:$0xf]
      %v417 = vld [vmem:[%s380 + $0x120] sm:$0xff]
      %v418 = vld [vmem:[%s380 + $0x128] sm:$0xff]
      %v419 = vld [vmem:[%s380 + $0x130] sm:$0xf]
      %v420 = vld [vmem:[%s380 + $0x138] sm:$0xff]
      %v421 = vld [vmem:[%s380 + $0x140] sm:$0xff]
      %v422 = vld [vmem:[%s380 + $0x148] sm:$0xf]
      %v423 = vld [vmem:[%s380 + $0x150] sm:$0xff]
      %v424 = vld [vmem:[%s380 + $0x158] sm:$0xff]
      %v425 = vld [vmem:[%s380 + $0x160] sm:$0xf]
      %v426 = vld [vmem:[%s380 + $0x168] sm:$0xff]
      %v427 = vld [vmem:[%s380 + $0x170] sm:$0xff]
      %v428 = vld [vmem:[%s380 + $0x178] sm:$0xf]
      %s429 = scalar_lea.vmem %s369, 48
      %v430 = vld [vmem:[%s429] sm:$0xff]
      %v431 = vld [vmem:[%s429 + $0x8] sm:$0xff]
      %v432 = vld [vmem:[%s429 + $0x10] sm:$0xf]
      %v433 = vld [vmem:[%s429 + $0x18] sm:$0xff]
      %v434 = vld [vmem:[%s429 + $0x20] sm:$0xff]
      %v435 = vld [vmem:[%s429 + $0x28] sm:$0xf]
      %v436 = vld [vmem:[%s429 + $0x30] sm:$0xff]
      %v437 = vld [vmem:[%s429 + $0x38] sm:$0xff]
      %v438 = vld [vmem:[%s429 + $0x40] sm:$0xf]
      %v439 = vld [vmem:[%s429 + $0x48] sm:$0xff]
      %v440 = vld [vmem:[%s429 + $0x50] sm:$0xff]
      %v441 = vld [vmem:[%s429 + $0x58] sm:$0xf]
      %v442 = vld [vmem:[%s429 + $0x60] sm:$0xff]
      %v443 = vld [vmem:[%s429 + $0x68] sm:$0xff]
      %v444 = vld [vmem:[%s429 + $0x70] sm:$0xf]
      %v445 = vld [vmem:[%s429 + $0x78] sm:$0xff]
      %v446 = vld [vmem:[%s429 + $0x80] sm:$0xff]
      %v447 = vld [vmem:[%s429 + $0x88] sm:$0xf]
      %v448 = vld [vmem:[%s429 + $0x90] sm:$0xff]
      %v449 = vld [vmem:[%s429 + $0x98] sm:$0xff]
      %v450 = vld [vmem:[%s429 + $0xa0] sm:$0xf]
      %v451 = vld [vmem:[%s429 + $0xa8] sm:$0xff]
      %v452 = vld [vmem:[%s429 + $0xb0] sm:$0xff]
      %v453 = vld [vmem:[%s429 + $0xb8] sm:$0xf]
      %v454 = vld [vmem:[%s429 + $0xc0] sm:$0xff]
      %v455 = vld [vmem:[%s429 + $0xc8] sm:$0xff]
      %v456 = vld [vmem:[%s429 + $0xd0] sm:$0xf]
      %v457 = vld [vmem:[%s429 + $0xd8] sm:$0xff]
      %v458 = vld [vmem:[%s429 + $0xe0] sm:$0xff]
      %v459 = vld [vmem:[%s429 + $0xe8] sm:$0xf]
      %v460 = vld [vmem:[%s429 + $0xf0] sm:$0xff]
      %v461 = vld [vmem:[%s429 + $0xf8] sm:$0xff]
      %v462 = vld [vmem:[%s429 + $0x100] sm:$0xf]
      %v463 = vld [vmem:[%s429 + $0x108] sm:$0xff]
      %v464 = vld [vmem:[%s429 + $0x110] sm:$0xff]
      %v465 = vld [vmem:[%s429 + $0x118] sm:$0xf]
      %v466 = vld [vmem:[%s429 + $0x120] sm:$0xff]
      %v467 = vld [vmem:[%s429 + $0x128] sm:$0xff]
      %v468 = vld [vmem:[%s429 + $0x130] sm:$0xf]
      %v469 = vld [vmem:[%s429 + $0x138] sm:$0xff]
      %v470 = vld [vmem:[%s429 + $0x140] sm:$0xff]
      %v471 = vld [vmem:[%s429 + $0x148] sm:$0xf]
      %v472 = vld [vmem:[%s429 + $0x150] sm:$0xff]
      %v473 = vld [vmem:[%s429 + $0x158] sm:$0xff]
      %v474 = vld [vmem:[%s429 + $0x160] sm:$0xf]
      %v475 = vld [vmem:[%s429 + $0x168] sm:$0xff]
      %v476 = vld [vmem:[%s429 + $0x170] sm:$0xff]
      %v477 = vld [vmem:[%s429 + $0x178] sm:$0xf]
      %s478 = scalar_lea.vmem %s369, 72
      %v479 = vld [vmem:[%s478] sm:$0xff]
      %v480 = vld [vmem:[%s478 + $0x8] sm:$0xff]
      %v481 = vld [vmem:[%s478 + $0x10] sm:$0xf]
      %v482 = vld [vmem:[%s478 + $0x18] sm:$0xff]
      %v483 = vld [vmem:[%s478 + $0x20] sm:$0xff]
      %v484 = vld [vmem:[%s478 + $0x28] sm:$0xf]
      %v485 = vld [vmem:[%s478 + $0x30] sm:$0xff]
      %v486 = vld [vmem:[%s478 + $0x38] sm:$0xff]
      %v487 = vld [vmem:[%s478 + $0x40] sm:$0xf]
      %v488 = vld [vmem:[%s478 + $0x48] sm:$0xff]
      %v489 = vld [vmem:[%s478 + $0x50] sm:$0xff]
      %v490 = vld [vmem:[%s478 + $0x58] sm:$0xf]
      %v491 = vld [vmem:[%s478 + $0x60] sm:$0xff]
      %v492 = vld [vmem:[%s478 + $0x68] sm:$0xff]
      %v493 = vld [vmem:[%s478 + $0x70] sm:$0xf]
      %v494 = vld [vmem:[%s478 + $0x78] sm:$0xff]
      %v495 = vld [vmem:[%s478 + $0x80] sm:$0xff]
      %v496 = vld [vmem:[%s478 + $0x88] sm:$0xf]
      %v497 = vld [vmem:[%s478 + $0x90] sm:$0xff]
      %v498 = vld [vmem:[%s478 + $0x98] sm:$0xff]
      %v499 = vld [vmem:[%s478 + $0xa0] sm:$0xf]
      %v500 = vld [vmem:[%s478 + $0xa8] sm:$0xff]
      %v501 = vld [vmem:[%s478 + $0xb0] sm:$0xff]
      %v502 = vld [vmem:[%s478 + $0xb8] sm:$0xf]
      %v503 = vld [vmem:[%s478 + $0xc0] sm:$0xff]
      %v504 = vld [vmem:[%s478 + $0xc8] sm:$0xff]
      %v505 = vld [vmem:[%s478 + $0xd0] sm:$0xf]
      %v506 = vld [vmem:[%s478 + $0xd8] sm:$0xff]
      %v507 = vld [vmem:[%s478 + $0xe0] sm:$0xff]
      %v508 = vld [vmem:[%s478 + $0xe8] sm:$0xf]
      %v509 = vld [vmem:[%s478 + $0xf0] sm:$0xff]
      %v510 = vld [vmem:[%s478 + $0xf8] sm:$0xff]
      %v511 = vld [vmem:[%s478 + $0x100] sm:$0xf]
      %v512 = vld [vmem:[%s478 + $0x108] sm:$0xff]
      %v513 = vld [vmem:[%s478 + $0x110] sm:$0xff]
      %v514 = vld [vmem:[%s478 + $0x118] sm:$0xf]
      %v515 = vld [vmem:[%s478 + $0x120] sm:$0xff]
      %v516 = vld [vmem:[%s478 + $0x128] sm:$0xff]
      %v517 = vld [vmem:[%s478 + $0x130] sm:$0xf]
      %v518 = vld [vmem:[%s478 + $0x138] sm:$0xff]
      %v519 = vld [vmem:[%s478 + $0x140] sm:$0xff]
      %v520 = vld [vmem:[%s478 + $0x148] sm:$0xf]
      %v521 = vld [vmem:[%s478 + $0x150] sm:$0xff]
      %v522 = vld [vmem:[%s478 + $0x158] sm:$0xff]
      %v523 = vld [vmem:[%s478 + $0x160] sm:$0xf]
      %v524 = vld [vmem:[%s478 + $0x168] sm:$0xff]
      %v525 = vld [vmem:[%s478 + $0x170] sm:$0xff]
      %v526 = vld [vmem:[%s478 + $0x178] sm:$0xf]
      %vm575 = vcmask 1046528
      %v576 = vrot.slane %v381, 1
      %v577 = vrot.slane %v382, 1
      %v578 = vsel %vm575, %v576, %v577
      %v579 = vrot.slane %v383, 1
      %v580 = vsel %vm575, %v577, %v579
      %v581 = vrot.slane %v384, 1
      %v582 = vrot.slane %v385, 1
      %v583 = vsel %vm575, %v581, %v582
      %v584 = vrot.slane %v386, 1
      %v585 = vsel %vm575, %v582, %v584
      %v586 = vrot.slane %v387, 1
      %v587 = vrot.slane %v388, 1
      %v588 = vsel %vm575, %v586, %v587
      %v589 = vrot.slane %v389, 1
      %v590 = vsel %vm575, %v587, %v589
      %v591 = vrot.slane %v390, 1
      %v592 = vrot.slane %v391, 1
      %v593 = vsel %vm575, %v591, %v592
      %v594 = vrot.slane %v392, 1
      %v595 = vsel %vm575, %v592, %v594
      %v596 = vrot.slane %v393, 1
      %v597 = vrot.slane %v394, 1
      %v598 = vsel %vm575, %v596, %v597
      %v599 = vrot.slane %v395, 1
      %v600 = vsel %vm575, %v597, %v599
      %v601 = vrot.slane %v396, 1
      %v602 = vrot.slane %v397, 1
      %v603 = vsel %vm575, %v601, %v602
      %v604 = vrot.slane %v398, 1
      %v605 = vsel %vm575, %v602, %v604
      %v606 = vrot.slane %v399, 1
      %v607 = vrot.slane %v400, 1
      %v608 = vsel %vm575, %v606, %v607
      %v609 = vrot.slane %v401, 1
      %v610 = vsel %vm575, %v607, %v609
      %v611 = vrot.slane %v402, 1
      %v612 = vrot.slane %v403, 1
      %v613 = vsel %vm575, %v611, %v612
      %v614 = vrot.slane %v404, 1
      %v615 = vsel %vm575, %v612, %v614
      %v616 = vrot.slane %v405, 1
      %v617 = vrot.slane %v406, 1
      %v618 = vsel %vm575, %v616, %v617
      %v619 = vrot.slane %v407, 1
      %v620 = vsel %vm575, %v617, %v619
      %v621 = vrot.slane %v408, 1
      %v622 = vrot.slane %v409, 1
      %v623 = vsel %vm575, %v621, %v622
      %v624 = vrot.slane %v410, 1
      %v625 = vsel %vm575, %v622, %v624
      %v626 = vrot.slane %v411, 1
      %v627 = vrot.slane %v412, 1
      %v628 = vsel %vm575, %v626, %v627
      %v629 = vrot.slane %v413, 1
      %v630 = vsel %vm575, %v627, %v629
      %v631 = vrot.slane %v414, 1
      %v632 = vrot.slane %v415, 1
      %v633 = vsel %vm575, %v631, %v632
      %v634 = vrot.slane %v416, 1
      %v635 = vsel %vm575, %v632, %v634
      %v636 = vrot.slane %v417, 1
      %v637 = vrot.slane %v418, 1
      %v638 = vsel %vm575, %v636, %v637
      %v639 = vrot.slane %v419, 1
      %v640 = vsel %vm575, %v637, %v639
      %v641 = vrot.slane %v420, 1
      %v642 = vrot.slane %v421, 1
      %v643 = vsel %vm575, %v641, %v642
      %v644 = vrot.slane %v422, 1
      %v645 = vsel %vm575, %v642, %v644
      %v646 = vrot.slane %v423, 1
      %v647 = vrot.slane %v424, 1
      %v648 = vsel %vm575, %v646, %v647
      %v649 = vrot.slane %v425, 1
      %v650 = vsel %vm575, %v647, %v649
      %v651 = vrot.slane %v426, 1
      %v652 = vrot.slane %v427, 1
      %v653 = vsel %vm575, %v651, %v652
      %v654 = vrot.slane %v428, 1
      %v655 = vsel %vm575, %v652, %v654
      %vm656 = vcmask 1045504
      %v657 = vrot.slane %v381, 2
      %v658 = vrot.slane %v382, 2
      %v659 = vsel %vm656, %v657, %v658
      %v660 = vrot.slane %v383, 2
      %v661 = vsel %vm656, %v658, %v660
      %v662 = vrot.slane %v384, 2
      %v663 = vrot.slane %v385, 2
      %v664 = vsel %vm656, %v662, %v663
      %v665 = vrot.slane %v386, 2
      %v666 = vsel %vm656, %v663, %v665
      %v667 = vrot.slane %v387, 2
      %v668 = vrot.slane %v388, 2
      %v669 = vsel %vm656, %v667, %v668
      %v670 = vrot.slane %v389, 2
      %v671 = vsel %vm656, %v668, %v670
      %v672 = vrot.slane %v390, 2
      %v673 = vrot.slane %v391, 2
      %v674 = vsel %vm656, %v672, %v673
      %v675 = vrot.slane %v392, 2
      %v676 = vsel %vm656, %v673, %v675
      %v677 = vrot.slane %v393, 2
      %v678 = vrot.slane %v394, 2
      %v679 = vsel %vm656, %v677, %v678
      %v680 = vrot.slane %v395, 2
      %v681 = vsel %vm656, %v678, %v680
      %v682 = vrot.slane %v396, 2
      %v683 = vrot.slane %v397, 2
      %v684 = vsel %vm656, %v682, %v683
      %v685 = vrot.slane %v398, 2
      %v686 = vsel %vm656, %v683, %v685
      %v687 = vrot.slane %v399, 2
      %v688 = vrot.slane %v400, 2
      %v689 = vsel %vm656, %v687, %v688
      %v690 = vrot.slane %v401, 2
      %v691 = vsel %vm656, %v688, %v690
      %v692 = vrot.slane %v402, 2
      %v693 = vrot.slane %v403, 2
      %v694 = vsel %vm656, %v692, %v693
      %v695 = vrot.slane %v404, 2
      %v696 = vsel %vm656, %v693, %v695
      %v697 = vrot.slane %v405, 2
      %v698 = vrot.slane %v406, 2
      %v699 = vsel %vm656, %v697, %v698
      %v700 = vrot.slane %v407, 2
      %v701 = vsel %vm656, %v698, %v700
      %v702 = vrot.slane %v408, 2
      %v703 = vrot.slane %v409, 2
      %v704 = vsel %vm656, %v702, %v703
      %v705 = vrot.slane %v410, 2
      %v706 = vsel %vm656, %v703, %v705
      %v707 = vrot.slane %v411, 2
      %v708 = vrot.slane %v412, 2
      %v709 = vsel %vm656, %v707, %v708
      %v710 = vrot.slane %v413, 2
      %v711 = vsel %vm656, %v708, %v710
      %v712 = vrot.slane %v414, 2
      %v713 = vrot.slane %v415, 2
      %v714 = vsel %vm656, %v712, %v713
      %v715 = vrot.slane %v416, 2
      %v716 = vsel %vm656, %v713, %v715
      %v717 = vrot.slane %v417, 2
      %v718 = vrot.slane %v418, 2
      %v719 = vsel %vm656, %v717, %v718
      %v720 = vrot.slane %v419, 2
      %v721 = vsel %vm656, %v718, %v720
      %v722 = vrot.slane %v420, 2
      %v723 = vrot.slane %v421, 2
      %v724 = vsel %vm656, %v722, %v723
      %v725 = vrot.slane %v422, 2
      %v726 = vsel %vm656, %v723, %v725
      %v727 = vrot.slane %v423, 2
      %v728 = vrot.slane %v424, 2
      %v729 = vsel %vm656, %v727, %v728
      %v730 = vrot.slane %v425, 2
      %v731 = vsel %vm656, %v728, %v730
      %v732 = vrot.slane %v426, 2
      %v733 = vrot.slane %v427, 2
      %v734 = vsel %vm656, %v732, %v733
      %v735 = vrot.slane %v428, 2
      %v736 = vsel %vm656, %v733, %v735
      %v785 = vrot.slane %v430, 1
      %v786 = vrot.slane %v431, 1
      %v787 = vsel %vm575, %v785, %v786
      %v788 = vrot.slane %v432, 1
      %v789 = vsel %vm575, %v786, %v788
      %v790 = vrot.slane %v433, 1
      %v791 = vrot.slane %v434, 1
      %v792 = vsel %vm575, %v790, %v791
      %v793 = vrot.slane %v435, 1
      %v794 = vsel %vm575, %v791, %v793
      %v795 = vrot.slane %v436, 1
      %v796 = vrot.slane %v437, 1
      %v797 = vsel %vm575, %v795, %v796
      %v798 = vrot.slane %v438, 1
      %v799 = vsel %vm575, %v796, %v798
      %v800 = vrot.slane %v439, 1
      %v801 = vrot.slane %v440, 1
      %v802 = vsel %vm575, %v800, %v801
      %v803 = vrot.slane %v441, 1
      %v804 = vsel %vm575, %v801, %v803
      %v805 = vrot.slane %v442, 1
      %v806 = vrot.slane %v443, 1
      %v807 = vsel %vm575, %v805, %v806
      %v808 = vrot.slane %v444, 1
      %v809 = vsel %vm575, %v806, %v808
      %v810 = vrot.slane %v445, 1
      %v811 = vrot.slane %v446, 1
      %v812 = vsel %vm575, %v810, %v811
      %v813 = vrot.slane %v447, 1
      %v814 = vsel %vm575, %v811, %v813
      %v815 = vrot.slane %v448, 1
      %v816 = vrot.slane %v449, 1
      %v817 = vsel %vm575, %v815, %v816
      %v818 = vrot.slane %v450, 1
      %v819 = vsel %vm575, %v816, %v818
      %v820 = vrot.slane %v451, 1
      %v821 = vrot.slane %v452, 1
      %v822 = vsel %vm575, %v820, %v821
      %v823 = vrot.slane %v453, 1
      %v824 = vsel %vm575, %v821, %v823
      %v825 = vrot.slane %v454, 1
      %v826 = vrot.slane %v455, 1
      %v827 = vsel %vm575, %v825, %v826
      %v828 = vrot.slane %v456, 1
      %v829 = vsel %vm575, %v826, %v828
      %v830 = vrot.slane %v457, 1
      %v831 = vrot.slane %v458, 1
      %v832 = vsel %vm575, %v830, %v831
      %v833 = vrot.slane %v459, 1
      %v834 = vsel %vm575, %v831, %v833
      %v835 = vrot.slane %v460, 1
      %v836 = vrot.slane %v461, 1
      %v837 = vsel %vm575, %v835, %v836
      %v838 = vrot.slane %v462, 1
      %v839 = vsel %vm575, %v836, %v838
      %v840 = vrot.slane %v463, 1
      %v841 = vrot.slane %v464, 1
      %v842 = vsel %vm575, %v840, %v841
      %v843 = vrot.slane %v465, 1
      %v844 = vsel %vm575, %v841, %v843
      %v845 = vrot.slane %v466, 1
      %v846 = vrot.slane %v467, 1
      %v847 = vsel %vm575, %v845, %v846
      %v848 = vrot.slane %v468, 1
      %v849 = vsel %vm575, %v846, %v848
      %v850 = vrot.slane %v469, 1
      %v851 = vrot.slane %v470, 1
      %v852 = vsel %vm575, %v850, %v851
      %v853 = vrot.slane %v471, 1
      %v854 = vsel %vm575, %v851, %v853
      %v855 = vrot.slane %v472, 1
      %v856 = vrot.slane %v473, 1
      %v857 = vsel %vm575, %v855, %v856
      %v858 = vrot.slane %v474, 1
      %v859 = vsel %vm575, %v856, %v858
      %v860 = vrot.slane %v475, 1
      %v861 = vrot.slane %v476, 1
      %v862 = vsel %vm575, %v860, %v861
      %v863 = vrot.slane %v477, 1
      %v864 = vsel %vm575, %v861, %v863
      %v865 = vrot.slane %v430, 2
      %v866 = vrot.slane %v431, 2
      %v867 = vsel %vm656, %v865, %v866
      %v868 = vrot.slane %v432, 2
      %v869 = vsel %vm656, %v866, %v868
      %v870 = vrot.slane %v433, 2
      %v871 = vrot.slane %v434, 2
      %v872 = vsel %vm656, %v870, %v871
      %v873 = vrot.slane %v435, 2
      %v874 = vsel %vm656, %v871, %v873
      %v875 = vrot.slane %v436, 2
      %v876 = vrot.slane %v437, 2
      %v877 = vsel %vm656, %v875, %v876
      %v878 = vrot.slane %v438, 2
      %v879 = vsel %vm656, %v876, %v878
      %v880 = vrot.slane %v439, 2
      %v881 = vrot.slane %v440, 2
      %v882 = vsel %vm656, %v880, %v881
      %v883 = vrot.slane %v441, 2
      %v884 = vsel %vm656, %v881, %v883
      %v885 = vrot.slane %v442, 2
      %v886 = vrot.slane %v443, 2
      %v887 = vsel %vm656, %v885, %v886
      %v888 = vrot.slane %v444, 2
      %v889 = vsel %vm656, %v886, %v888
      %v890 = vrot.slane %v445, 2
      %v891 = vrot.slane %v446, 2
      %v892 = vsel %vm656, %v890, %v891
      %v893 = vrot.slane %v447, 2
      %v894 = vsel %vm656, %v891, %v893
      %v895 = vrot.slane %v448, 2
      %v896 = vrot.slane %v449, 2
      %v897 = vsel %vm656, %v895, %v896
      %v898 = vrot.slane %v450, 2
      %v899 = vsel %vm656, %v896, %v898
      %v900 = vrot.slane %v451, 2
      %v901 = vrot.slane %v452, 2
      %v902 = vsel %vm656, %v900, %v901
      %v903 = vrot.slane %v453, 2
      %v904 = vsel %vm656, %v901, %v903
      %v905 = vrot.slane %v454, 2
      %v906 = vrot.slane %v455, 2
      %v907 = vsel %vm656, %v905, %v906
      %v908 = vrot.slane %v456, 2
      %v909 = vsel %vm656, %v906, %v908
      %v910 = vrot.slane %v457, 2
      %v911 = vrot.slane %v458, 2
      %v912 = vsel %vm656, %v910, %v911
      %v913 = vrot.slane %v459, 2
      %v914 = vsel %vm656, %v911, %v913
      %v915 = vrot.slane %v460, 2
      %v916 = vrot.slane %v461, 2
      %v917 = vsel %vm656, %v915, %v916
      %v918 = vrot.slane %v462, 2
      %v919 = vsel %vm656, %v916, %v918
      %v920 = vrot.slane %v463, 2
      %v921 = vrot.slane %v464, 2
      %v922 = vsel %vm656, %v920, %v921
      %v923 = vrot.slane %v465, 2
      %v924 = vsel %vm656, %v921, %v923
      %v925 = vrot.slane %v466, 2
      %v926 = vrot.slane %v467, 2
      %v927 = vsel %vm656, %v925, %v926
      %v928 = vrot.slane %v468, 2
      %v929 = vsel %vm656, %v926, %v928
      %v930 = vrot.slane %v469, 2
      %v931 = vrot.slane %v470, 2
      %v932 = vsel %vm656, %v930, %v931
      %v933 = vrot.slane %v471, 2
      %v934 = vsel %vm656, %v931, %v933
      %v935 = vrot.slane %v472, 2
      %v936 = vrot.slane %v473, 2
      %v937 = vsel %vm656, %v935, %v936
      %v938 = vrot.slane %v474, 2
      %v939 = vsel %vm656, %v936, %v938
      %v940 = vrot.slane %v475, 2
      %v941 = vrot.slane %v476, 2
      %v942 = vsel %vm656, %v940, %v941
      %v943 = vrot.slane %v477, 2
      %v944 = vsel %vm656, %v941, %v943
      %v993 = vrot.slane %v479, 1
      %v994 = vrot.slane %v480, 1
      %v995 = vsel %vm575, %v993, %v994
      %v996 = vrot.slane %v481, 1
      %v997 = vsel %vm575, %v994, %v996
      %v998 = vrot.slane %v482, 1
      %v999 = vrot.slane %v483, 1
      %v1000 = vsel %vm575, %v998, %v999
      %v1001 = vrot.slane %v484, 1
      %v1002 = vsel %vm575, %v999, %v1001
      %v1003 = vrot.slane %v485, 1
      %v1004 = vrot.slane %v486, 1
      %v1005 = vsel %vm575, %v1003, %v1004
      %v1006 = vrot.slane %v487, 1
      %v1007 = vsel %vm575, %v1004, %v1006
      %v1008 = vrot.slane %v488, 1
      %v1009 = vrot.slane %v489, 1
      %v1010 = vsel %vm575, %v1008, %v1009
      %v1011 = vrot.slane %v490, 1
      %v1012 = vsel %vm575, %v1009, %v1011
      %v1013 = vrot.slane %v491, 1
      %v1014 = vrot.slane %v492, 1
      %v1015 = vsel %vm575, %v1013, %v1014
      %v1016 = vrot.slane %v493, 1
      %v1017 = vsel %vm575, %v1014, %v1016
      %v1018 = vrot.slane %v494, 1
      %v1019 = vrot.slane %v495, 1
      %v1020 = vsel %vm575, %v1018, %v1019
      %v1021 = vrot.slane %v496, 1
      %v1022 = vsel %vm575, %v1019, %v1021
      %v1023 = vrot.slane %v497, 1
      %v1024 = vrot.slane %v498, 1
      %v1025 = vsel %vm575, %v1023, %v1024
      %v1026 = vrot.slane %v499, 1
      %v1027 = vsel %vm575, %v1024, %v1026
      %v1028 = vrot.slane %v500, 1
      %v1029 = vrot.slane %v501, 1
      %v1030 = vsel %vm575, %v1028, %v1029
      %v1031 = vrot.slane %v502, 1
      %v1032 = vsel %vm575, %v1029, %v1031
      %v1033 = vrot.slane %v503, 1
      %v1034 = vrot.slane %v504, 1
      %v1035 = vsel %vm575, %v1033, %v1034
      %v1036 = vrot.slane %v505, 1
      %v1037 = vsel %vm575, %v1034, %v1036
      %v1038 = vrot.slane %v506, 1
      %v1039 = vrot.slane %v507, 1
      %v1040 = vsel %vm575, %v1038, %v1039
      %v1041 = vrot.slane %v508, 1
      %v1042 = vsel %vm575, %v1039, %v1041
      %v1043 = vrot.slane %v509, 1
      %v1044 = vrot.slane %v510, 1
      %v1045 = vsel %vm575, %v1043, %v1044
      %v1046 = vrot.slane %v511, 1
      %v1047 = vsel %vm575, %v1044, %v1046
      %v1048 = vrot.slane %v512, 1
      %v1049 = vrot.slane %v513, 1
      %v1050 = vsel %vm575, %v1048, %v1049
      %v1051 = vrot.slane %v514, 1
      %v1052 = vsel %vm575, %v1049, %v1051
      %v1053 = vrot.slane %v515, 1
      %v1054 = vrot.slane %v516, 1
      %v1055 = vsel %vm575, %v1053, %v1054
      %v1056 = vrot.slane %v517, 1
      %v1057 = vsel %vm575, %v1054, %v1056
      %v1058 = vrot.slane %v518, 1
      %v1059 = vrot.slane %v519, 1
      %v1060 = vsel %vm575, %v1058, %v1059
      %v1061 = vrot.slane %v520, 1
      %v1062 = vsel %vm575, %v1059, %v1061
      %v1063 = vrot.slane %v521, 1
      %v1064 = vrot.slane %v522, 1
      %v1065 = vsel %vm575, %v1063, %v1064
      %v1066 = vrot.slane %v523, 1
      %v1067 = vsel %vm575, %v1064, %v1066
      %v1068 = vrot.slane %v524, 1
      %v1069 = vrot.slane %v525, 1
      %v1070 = vsel %vm575, %v1068, %v1069
      %v1071 = vrot.slane %v526, 1
      %v1072 = vsel %vm575, %v1069, %v1071
      %v1073 = vrot.slane %v479, 2
      %v1074 = vrot.slane %v480, 2
      %v1075 = vsel %vm656, %v1073, %v1074
      %v1076 = vrot.slane %v481, 2
      %v1077 = vsel %vm656, %v1074, %v1076
      %v1078 = vrot.slane %v482, 2
      %v1079 = vrot.slane %v483, 2
      %v1080 = vsel %vm656, %v1078, %v1079
      %v1081 = vrot.slane %v484, 2
      %v1082 = vsel %vm656, %v1079, %v1081
      %v1083 = vrot.slane %v485, 2
      %v1084 = vrot.slane %v486, 2
      %v1085 = vsel %vm656, %v1083, %v1084
      %v1086 = vrot.slane %v487, 2
      %v1087 = vsel %vm656, %v1084, %v1086
      %v1088 = vrot.slane %v488, 2
      %v1089 = vrot.slane %v489, 2
      %v1090 = vsel %vm656, %v1088, %v1089
      %v1091 = vrot.slane %v490, 2
      %v1092 = vsel %vm656, %v1089, %v1091
      %v1093 = vrot.slane %v491, 2
      %v1094 = vrot.slane %v492, 2
      %v1095 = vsel %vm656, %v1093, %v1094
      %v1096 = vrot.slane %v493, 2
      %v1097 = vsel %vm656, %v1094, %v1096
      %v1098 = vrot.slane %v494, 2
      %v1099 = vrot.slane %v495, 2
      %v1100 = vsel %vm656, %v1098, %v1099
      %v1101 = vrot.slane %v496, 2
      %v1102 = vsel %vm656, %v1099, %v1101
      %v1103 = vrot.slane %v497, 2
      %v1104 = vrot.slane %v498, 2
      %v1105 = vsel %vm656, %v1103, %v1104
      %v1106 = vrot.slane %v499, 2
      %v1107 = vsel %vm656, %v1104, %v1106
      %v1108 = vrot.slane %v500, 2
      %v1109 = vrot.slane %v501, 2
      %v1110 = vsel %vm656, %v1108, %v1109
      %v1111 = vrot.slane %v502, 2
      %v1112 = vsel %vm656, %v1109, %v1111
      %v1113 = vrot.slane %v503, 2
      %v1114 = vrot.slane %v504, 2
      %v1115 = vsel %vm656, %v1113, %v1114
      %v1116 = vrot.slane %v505, 2
      %v1117 = vsel %vm656, %v1114, %v1116
      %v1118 = vrot.slane %v506, 2
      %v1119 = vrot.slane %v507, 2
      %v1120 = vsel %vm656, %v1118, %v1119
      %v1121 = vrot.slane %v508, 2
      %v1122 = vsel %vm656, %v1119, %v1121
      %v1123 = vrot.slane %v509, 2
      %v1124 = vrot.slane %v510, 2
      %v1125 = vsel %vm656, %v1123, %v1124
      %v1126 = vrot.slane %v511, 2
      %v1127 = vsel %vm656, %v1124, %v1126
      %v1128 = vrot.slane %v512, 2
      %v1129 = vrot.slane %v513, 2
      %v1130 = vsel %vm656, %v1128, %v1129
      %v1131 = vrot.slane %v514, 2
      %v1132 = vsel %vm656, %v1129, %v1131
      %v1133 = vrot.slane %v515, 2
      %v1134 = vrot.slane %v516, 2
      %v1135 = vsel %vm656, %v1133, %v1134
      %v1136 = vrot.slane %v517, 2
      %v1137 = vsel %vm656, %v1134, %v1136
      %v1138 = vrot.slane %v518, 2
      %v1139 = vrot.slane %v519, 2
      %v1140 = vsel %vm656, %v1138, %v1139
      %v1141 = vrot.slane %v520, 2
      %v1142 = vsel %vm656, %v1139, %v1141
      %v1143 = vrot.slane %v521, 2
      %v1144 = vrot.slane %v522, 2
      %v1145 = vsel %vm656, %v1143, %v1144
      %v1146 = vrot.slane %v523, 2
      %v1147 = vsel %vm656, %v1144, %v1146
      %v1148 = vrot.slane %v524, 2
      %v1149 = vrot.slane %v525, 2
      %v1150 = vsel %vm656, %v1148, %v1149
      %v1151 = vrot.slane %v526, 2
      %v1152 = vsel %vm656, %v1149, %v1151
      %v1153 = vrot.slane %v578, 1
      %v1154 = vrot.slane %v580, 1
      %v1155 = vsel %vm575, %v1153, %v1154
      %v1156 = vrot.slane %v659, 1
      %v1157 = vrot.slane %v661, 1
      %v1158 = vsel %vm575, %v1156, %v1157
      %v1159 = vrot.slane %v787, 1
      %v1160 = vrot.slane %v789, 1
      %v1161 = vsel %vm575, %v1159, %v1160
      %v1162 = vrot.slane %v867, 1
      %v1163 = vrot.slane %v869, 1
      %v1164 = vsel %vm575, %v1162, %v1163
      %v1165 = vrot.slane %v995, 1
      %v1166 = vrot.slane %v997, 1
      %v1167 = vsel %vm575, %v1165, %v1166
      %v1168 = vrot.slane %v1075, 1
      %v1169 = vrot.slane %v1077, 1
      %v1170 = vsel %vm575, %v1168, %v1169
      %v1171 = vrot.slane %v579, 1
      %v1172 = vsel %vm575, %v1154, %v1171
      %v1173 = vrot.slane %v660, 1
      %v1174 = vsel %vm575, %v1157, %v1173
      %v1175 = vrot.slane %v788, 1
      %v1176 = vsel %vm575, %v1160, %v1175
      %v1177 = vrot.slane %v868, 1
      %v1178 = vsel %vm575, %v1163, %v1177
      %v1179 = vrot.slane %v996, 1
      %v1180 = vsel %vm575, %v1166, %v1179
      %v1181 = vrot.slane %v1076, 1
      %v1182 = vsel %vm575, %v1169, %v1181
      %v1183 = vrot.slane %v583, 1
      %v1184 = vrot.slane %v585, 1
      %v1185 = vsel %vm575, %v1183, %v1184
      %v1186 = vrot.slane %v664, 1
      %v1187 = vrot.slane %v666, 1
      %v1188 = vsel %vm575, %v1186, %v1187
      %v1189 = vrot.slane %v792, 1
      %v1190 = vrot.slane %v794, 1
      %v1191 = vsel %vm575, %v1189, %v1190
      %v1192 = vrot.slane %v872, 1
      %v1193 = vrot.slane %v874, 1
      %v1194 = vsel %vm575, %v1192, %v1193
      %v1195 = vrot.slane %v1000, 1
      %v1196 = vrot.slane %v1002, 1
      %v1197 = vsel %vm575, %v1195, %v1196
      %v1198 = vrot.slane %v1080, 1
      %v1199 = vrot.slane %v1082, 1
      %v1200 = vsel %vm575, %v1198, %v1199
      %v1201 = vrot.slane %v584, 1
      %v1202 = vsel %vm575, %v1184, %v1201
      %v1203 = vrot.slane %v665, 1
      %v1204 = vsel %vm575, %v1187, %v1203
      %v1205 = vrot.slane %v793, 1
      %v1206 = vsel %vm575, %v1190, %v1205
      %v1207 = vrot.slane %v873, 1
      %v1208 = vsel %vm575, %v1193, %v1207
      %v1209 = vrot.slane %v1001, 1
      %v1210 = vsel %vm575, %v1196, %v1209
      %v1211 = vrot.slane %v1081, 1
      %v1212 = vsel %vm575, %v1199, %v1211
      %v1213 = vrot.slane %v588, 1
      %v1214 = vrot.slane %v590, 1
      %v1215 = vsel %vm575, %v1213, %v1214
      %v1216 = vrot.slane %v669, 1
      %v1217 = vrot.slane %v671, 1
      %v1218 = vsel %vm575, %v1216, %v1217
      %v1219 = vrot.slane %v797, 1
      %v1220 = vrot.slane %v799, 1
      %v1221 = vsel %vm575, %v1219, %v1220
      %v1222 = vrot.slane %v877, 1
      %v1223 = vrot.slane %v879, 1
      %v1224 = vsel %vm575, %v1222, %v1223
      %v1225 = vrot.slane %v1005, 1
      %v1226 = vrot.slane %v1007, 1
      %v1227 = vsel %vm575, %v1225, %v1226
      %v1228 = vrot.slane %v1085, 1
      %v1229 = vrot.slane %v1087, 1
      %v1230 = vsel %vm575, %v1228, %v1229
      %v1231 = vrot.slane %v589, 1
      %v1232 = vsel %vm575, %v1214, %v1231
      %v1233 = vrot.slane %v670, 1
      %v1234 = vsel %vm575, %v1217, %v1233
      %v1235 = vrot.slane %v798, 1
      %v1236 = vsel %vm575, %v1220, %v1235
      %v1237 = vrot.slane %v878, 1
      %v1238 = vsel %vm575, %v1223, %v1237
      %v1239 = vrot.slane %v1006, 1
      %v1240 = vsel %vm575, %v1226, %v1239
      %v1241 = vrot.slane %v1086, 1
      %v1242 = vsel %vm575, %v1229, %v1241
      %v1243 = vrot.slane %v593, 1
      %v1244 = vrot.slane %v595, 1
      %v1245 = vsel %vm575, %v1243, %v1244
      %v1246 = vrot.slane %v674, 1
      %v1247 = vrot.slane %v676, 1
      %v1248 = vsel %vm575, %v1246, %v1247
      %v1249 = vrot.slane %v802, 1
      %v1250 = vrot.slane %v804, 1
      %v1251 = vsel %vm575, %v1249, %v1250
      %v1252 = vrot.slane %v882, 1
      %v1253 = vrot.slane %v884, 1
      %v1254 = vsel %vm575, %v1252, %v1253
      %v1255 = vrot.slane %v1010, 1
      %v1256 = vrot.slane %v1012, 1
      %v1257 = vsel %vm575, %v1255, %v1256
      %v1258 = vrot.slane %v1090, 1
      %v1259 = vrot.slane %v1092, 1
      %v1260 = vsel %vm575, %v1258, %v1259
      %v1261 = vrot.slane %v594, 1
      %v1262 = vsel %vm575, %v1244, %v1261
      %v1263 = vrot.slane %v675, 1
      %v1264 = vsel %vm575, %v1247, %v1263
      %v1265 = vrot.slane %v803, 1
      %v1266 = vsel %vm575, %v1250, %v1265
      %v1267 = vrot.slane %v883, 1
      %v1268 = vsel %vm575, %v1253, %v1267
      %v1269 = vrot.slane %v1011, 1
      %v1270 = vsel %vm575, %v1256, %v1269
      %v1271 = vrot.slane %v1091, 1
      %v1272 = vsel %vm575, %v1259, %v1271
      %v1273 = vrot.slane %v598, 1
      %v1274 = vrot.slane %v600, 1
      %v1275 = vsel %vm575, %v1273, %v1274
      %v1276 = vrot.slane %v679, 1
      %v1277 = vrot.slane %v681, 1
      %v1278 = vsel %vm575, %v1276, %v1277
      %v1279 = vrot.slane %v807, 1
      %v1280 = vrot.slane %v809, 1
      %v1281 = vsel %vm575, %v1279, %v1280
      %v1282 = vrot.slane %v887, 1
      %v1283 = vrot.slane %v889, 1
      %v1284 = vsel %vm575, %v1282, %v1283
      %v1285 = vrot.slane %v1015, 1
      %v1286 = vrot.slane %v1017, 1
      %v1287 = vsel %vm575, %v1285, %v1286
      %v1288 = vrot.slane %v1095, 1
      %v1289 = vrot.slane %v1097, 1
      %v1290 = vsel %vm575, %v1288, %v1289
      %v1291 = vrot.slane %v599, 1
      %v1292 = vsel %vm575, %v1274, %v1291
      %v1293 = vrot.slane %v680, 1
      %v1294 = vsel %vm575, %v1277, %v1293
      %v1295 = vrot.slane %v808, 1
      %v1296 = vsel %vm575, %v1280, %v1295
      %v1297 = vrot.slane %v888, 1
      %v1298 = vsel %vm575, %v1283, %v1297
      %v1299 = vrot.slane %v1016, 1
      %v1300 = vsel %vm575, %v1286, %v1299
      %v1301 = vrot.slane %v1096, 1
      %v1302 = vsel %vm575, %v1289, %v1301
      %v1303 = vrot.slane %v603, 1
      %v1304 = vrot.slane %v605, 1
      %v1305 = vsel %vm575, %v1303, %v1304
      %v1306 = vrot.slane %v684, 1
      %v1307 = vrot.slane %v686, 1
      %v1308 = vsel %vm575, %v1306, %v1307
      %v1309 = vrot.slane %v812, 1
      %v1310 = vrot.slane %v814, 1
      %v1311 = vsel %vm575, %v1309, %v1310
      %v1312 = vrot.slane %v892, 1
      %v1313 = vrot.slane %v894, 1
      %v1314 = vsel %vm575, %v1312, %v1313
      %v1315 = vrot.slane %v1020, 1
      %v1316 = vrot.slane %v1022, 1
      %v1317 = vsel %vm575, %v1315, %v1316
      %v1318 = vrot.slane %v1100, 1
      %v1319 = vrot.slane %v1102, 1
      %v1320 = vsel %vm575, %v1318, %v1319
      %v1321 = vrot.slane %v604, 1
      %v1322 = vsel %vm575, %v1304, %v1321
      %v1323 = vrot.slane %v685, 1
      %v1324 = vsel %vm575, %v1307, %v1323
      %v1325 = vrot.slane %v813, 1
      %v1326 = vsel %vm575, %v1310, %v1325
      %v1327 = vrot.slane %v893, 1
      %v1328 = vsel %vm575, %v1313, %v1327
      %v1329 = vrot.slane %v1021, 1
      %v1330 = vsel %vm575, %v1316, %v1329
      %v1331 = vrot.slane %v1101, 1
      %v1332 = vsel %vm575, %v1319, %v1331
      %v1333 = vrot.slane %v608, 1
      %v1334 = vrot.slane %v610, 1
      %v1335 = vsel %vm575, %v1333, %v1334
      %v1336 = vrot.slane %v689, 1
      %v1337 = vrot.slane %v691, 1
      %v1338 = vsel %vm575, %v1336, %v1337
      %v1339 = vrot.slane %v817, 1
      %v1340 = vrot.slane %v819, 1
      %v1341 = vsel %vm575, %v1339, %v1340
      %v1342 = vrot.slane %v897, 1
      %v1343 = vrot.slane %v899, 1
      %v1344 = vsel %vm575, %v1342, %v1343
      %v1345 = vrot.slane %v1025, 1
      %v1346 = vrot.slane %v1027, 1
      %v1347 = vsel %vm575, %v1345, %v1346
      %v1348 = vrot.slane %v1105, 1
      %v1349 = vrot.slane %v1107, 1
      %v1350 = vsel %vm575, %v1348, %v1349
      %v1351 = vrot.slane %v609, 1
      %v1352 = vsel %vm575, %v1334, %v1351
      %v1353 = vrot.slane %v690, 1
      %v1354 = vsel %vm575, %v1337, %v1353
      %v1355 = vrot.slane %v818, 1
      %v1356 = vsel %vm575, %v1340, %v1355
      %v1357 = vrot.slane %v898, 1
      %v1358 = vsel %vm575, %v1343, %v1357
      %v1359 = vrot.slane %v1026, 1
      %v1360 = vsel %vm575, %v1346, %v1359
      %v1361 = vrot.slane %v1106, 1
      %v1362 = vsel %vm575, %v1349, %v1361
      %v1363 = vrot.slane %v613, 1
      %v1364 = vrot.slane %v615, 1
      %v1365 = vsel %vm575, %v1363, %v1364
      %v1366 = vrot.slane %v694, 1
      %v1367 = vrot.slane %v696, 1
      %v1368 = vsel %vm575, %v1366, %v1367
      %v1369 = vrot.slane %v822, 1
      %v1370 = vrot.slane %v824, 1
      %v1371 = vsel %vm575, %v1369, %v1370
      %v1372 = vrot.slane %v902, 1
      %v1373 = vrot.slane %v904, 1
      %v1374 = vsel %vm575, %v1372, %v1373
      %v1375 = vrot.slane %v1030, 1
      %v1376 = vrot.slane %v1032, 1
      %v1377 = vsel %vm575, %v1375, %v1376
      %v1378 = vrot.slane %v1110, 1
      %v1379 = vrot.slane %v1112, 1
      %v1380 = vsel %vm575, %v1378, %v1379
      %v1381 = vrot.slane %v614, 1
      %v1382 = vsel %vm575, %v1364, %v1381
      %v1383 = vrot.slane %v695, 1
      %v1384 = vsel %vm575, %v1367, %v1383
      %v1385 = vrot.slane %v823, 1
      %v1386 = vsel %vm575, %v1370, %v1385
      %v1387 = vrot.slane %v903, 1
      %v1388 = vsel %vm575, %v1373, %v1387
      %v1389 = vrot.slane %v1031, 1
      %v1390 = vsel %vm575, %v1376, %v1389
      %v1391 = vrot.slane %v1111, 1
      %v1392 = vsel %vm575, %v1379, %v1391
      %v1393 = vrot.slane %v618, 1
      %v1394 = vrot.slane %v620, 1
      %v1395 = vsel %vm575, %v1393, %v1394
      %v1396 = vrot.slane %v699, 1
      %v1397 = vrot.slane %v701, 1
      %v1398 = vsel %vm575, %v1396, %v1397
      %v1399 = vrot.slane %v827, 1
      %v1400 = vrot.slane %v829, 1
      %v1401 = vsel %vm575, %v1399, %v1400
      %v1402 = vrot.slane %v907, 1
      %v1403 = vrot.slane %v909, 1
      %v1404 = vsel %vm575, %v1402, %v1403
      %v1405 = vrot.slane %v1035, 1
      %v1406 = vrot.slane %v1037, 1
      %v1407 = vsel %vm575, %v1405, %v1406
      %v1408 = vrot.slane %v1115, 1
      %v1409 = vrot.slane %v1117, 1
      %v1410 = vsel %vm575, %v1408, %v1409
      %v1411 = vrot.slane %v619, 1
      %v1412 = vsel %vm575, %v1394, %v1411
      %v1413 = vrot.slane %v700, 1
      %v1414 = vsel %vm575, %v1397, %v1413
      %v1415 = vrot.slane %v828, 1
      %v1416 = vsel %vm575, %v1400, %v1415
      %v1417 = vrot.slane %v908, 1
      %v1418 = vsel %vm575, %v1403, %v1417
      %v1419 = vrot.slane %v1036, 1
      %v1420 = vsel %vm575, %v1406, %v1419
      %v1421 = vrot.slane %v1116, 1
      %v1422 = vsel %vm575, %v1409, %v1421
      %v1423 = vrot.slane %v623, 1
      %v1424 = vrot.slane %v625, 1
      %v1425 = vsel %vm575, %v1423, %v1424
      %v1426 = vrot.slane %v704, 1
      %v1427 = vrot.slane %v706, 1
      %v1428 = vsel %vm575, %v1426, %v1427
      %v1429 = vrot.slane %v832, 1
      %v1430 = vrot.slane %v834, 1
      %v1431 = vsel %vm575, %v1429, %v1430
      %v1432 = vrot.slane %v912, 1
      %v1433 = vrot.slane %v914, 1
      %v1434 = vsel %vm575, %v1432, %v1433
      %v1435 = vrot.slane %v1040, 1
      %v1436 = vrot.slane %v1042, 1
      %v1437 = vsel %vm575, %v1435, %v1436
      %v1438 = vrot.slane %v1120, 1
      %v1439 = vrot.slane %v1122, 1
      %v1440 = vsel %vm575, %v1438, %v1439
      %v1441 = vrot.slane %v624, 1
      %v1442 = vsel %vm575, %v1424, %v1441
      %v1443 = vrot.slane %v705, 1
      %v1444 = vsel %vm575, %v1427, %v1443
      %v1445 = vrot.slane %v833, 1
      %v1446 = vsel %vm575, %v1430, %v1445
      %v1447 = vrot.slane %v913, 1
      %v1448 = vsel %vm575, %v1433, %v1447
      %v1449 = vrot.slane %v1041, 1
      %v1450 = vsel %vm575, %v1436, %v1449
      %v1451 = vrot.slane %v1121, 1
      %v1452 = vsel %vm575, %v1439, %v1451
      %v1453 = vrot.slane %v628, 1
      %v1454 = vrot.slane %v630, 1
      %v1455 = vsel %vm575, %v1453, %v1454
      %v1456 = vrot.slane %v709, 1
      %v1457 = vrot.slane %v711, 1
      %v1458 = vsel %vm575, %v1456, %v1457
      %v1459 = vrot.slane %v837, 1
      %v1460 = vrot.slane %v839, 1
      %v1461 = vsel %vm575, %v1459, %v1460
      %v1462 = vrot.slane %v917, 1
      %v1463 = vrot.slane %v919, 1
      %v1464 = vsel %vm575, %v1462, %v1463
      %v1465 = vrot.slane %v1045, 1
      %v1466 = vrot.slane %v1047, 1
      %v1467 = vsel %vm575, %v1465, %v1466
      %v1468 = vrot.slane %v1125, 1
      %v1469 = vrot.slane %v1127, 1
      %v1470 = vsel %vm575, %v1468, %v1469
      %v1471 = vrot.slane %v629, 1
      %v1472 = vsel %vm575, %v1454, %v1471
      %v1473 = vrot.slane %v710, 1
      %v1474 = vsel %vm575, %v1457, %v1473
      %v1475 = vrot.slane %v838, 1
      %v1476 = vsel %vm575, %v1460, %v1475
      %v1477 = vrot.slane %v918, 1
      %v1478 = vsel %vm575, %v1463, %v1477
      %v1479 = vrot.slane %v1046, 1
      %v1480 = vsel %vm575, %v1466, %v1479
      %v1481 = vrot.slane %v1126, 1
      %v1482 = vsel %vm575, %v1469, %v1481
      %v1483 = vrot.slane %v633, 1
      %v1484 = vrot.slane %v635, 1
      %v1485 = vsel %vm575, %v1483, %v1484
      %v1486 = vrot.slane %v714, 1
      %v1487 = vrot.slane %v716, 1
      %v1488 = vsel %vm575, %v1486, %v1487
      %v1489 = vrot.slane %v842, 1
      %v1490 = vrot.slane %v844, 1
      %v1491 = vsel %vm575, %v1489, %v1490
      %v1492 = vrot.slane %v922, 1
      %v1493 = vrot.slane %v924, 1
      %v1494 = vsel %vm575, %v1492, %v1493
      %v1495 = vrot.slane %v1050, 1
      %v1496 = vrot.slane %v1052, 1
      %v1497 = vsel %vm575, %v1495, %v1496
      %v1498 = vrot.slane %v1130, 1
      %v1499 = vrot.slane %v1132, 1
      %v1500 = vsel %vm575, %v1498, %v1499
      %v1501 = vrot.slane %v634, 1
      %v1502 = vsel %vm575, %v1484, %v1501
      %v1503 = vrot.slane %v715, 1
      %v1504 = vsel %vm575, %v1487, %v1503
      %v1505 = vrot.slane %v843, 1
      %v1506 = vsel %vm575, %v1490, %v1505
      %v1507 = vrot.slane %v923, 1
      %v1508 = vsel %vm575, %v1493, %v1507
      %v1509 = vrot.slane %v1051, 1
      %v1510 = vsel %vm575, %v1496, %v1509
      %v1511 = vrot.slane %v1131, 1
      %v1512 = vsel %vm575, %v1499, %v1511
      %v1513 = vrot.slane %v638, 1
      %v1514 = vrot.slane %v640, 1
      %v1515 = vsel %vm575, %v1513, %v1514
      %v1516 = vrot.slane %v719, 1
      %v1517 = vrot.slane %v721, 1
      %v1518 = vsel %vm575, %v1516, %v1517
      %v1519 = vrot.slane %v847, 1
      %v1520 = vrot.slane %v849, 1
      %v1521 = vsel %vm575, %v1519, %v1520
      %v1522 = vrot.slane %v927, 1
      %v1523 = vrot.slane %v929, 1
      %v1524 = vsel %vm575, %v1522, %v1523
      %v1525 = vrot.slane %v1055, 1
      %v1526 = vrot.slane %v1057, 1
      %v1527 = vsel %vm575, %v1525, %v1526
      %v1528 = vrot.slane %v1135, 1
      %v1529 = vrot.slane %v1137, 1
      %v1530 = vsel %vm575, %v1528, %v1529
      %v1531 = vrot.slane %v639, 1
      %v1532 = vsel %vm575, %v1514, %v1531
      %v1533 = vrot.slane %v720, 1
      %v1534 = vsel %vm575, %v1517, %v1533
      %v1535 = vrot.slane %v848, 1
      %v1536 = vsel %vm575, %v1520, %v1535
      %v1537 = vrot.slane %v928, 1
      %v1538 = vsel %vm575, %v1523, %v1537
      %v1539 = vrot.slane %v1056, 1
      %v1540 = vsel %vm575, %v1526, %v1539
      %v1541 = vrot.slane %v1136, 1
      %v1542 = vsel %vm575, %v1529, %v1541
      %v1543 = vrot.slane %v643, 1
      %v1544 = vrot.slane %v645, 1
      %v1545 = vsel %vm575, %v1543, %v1544
      %v1546 = vrot.slane %v724, 1
      %v1547 = vrot.slane %v726, 1
      %v1548 = vsel %vm575, %v1546, %v1547
      %v1549 = vrot.slane %v852, 1
      %v1550 = vrot.slane %v854, 1
      %v1551 = vsel %vm575, %v1549, %v1550
      %v1552 = vrot.slane %v932, 1
      %v1553 = vrot.slane %v934, 1
      %v1554 = vsel %vm575, %v1552, %v1553
      %v1555 = vrot.slane %v1060, 1
      %v1556 = vrot.slane %v1062, 1
      %v1557 = vsel %vm575, %v1555, %v1556
      %v1558 = vrot.slane %v1140, 1
      %v1559 = vrot.slane %v1142, 1
      %v1560 = vsel %vm575, %v1558, %v1559
      %v1561 = vrot.slane %v644, 1
      %v1562 = vsel %vm575, %v1544, %v1561
      %v1563 = vrot.slane %v725, 1
      %v1564 = vsel %vm575, %v1547, %v1563
      %v1565 = vrot.slane %v853, 1
      %v1566 = vsel %vm575, %v1550, %v1565
      %v1567 = vrot.slane %v933, 1
      %v1568 = vsel %vm575, %v1553, %v1567
      %v1569 = vrot.slane %v1061, 1
      %v1570 = vsel %vm575, %v1556, %v1569
      %v1571 = vrot.slane %v1141, 1
      %v1572 = vsel %vm575, %v1559, %v1571
      %v1573 = vrot.slane %v648, 1
      %v1574 = vrot.slane %v650, 1
      %v1575 = vsel %vm575, %v1573, %v1574
      %v1576 = vrot.slane %v729, 1
      %v1577 = vrot.slane %v731, 1
      %v1578 = vsel %vm575, %v1576, %v1577
      %v1579 = vrot.slane %v857, 1
      %v1580 = vrot.slane %v859, 1
      %v1581 = vsel %vm575, %v1579, %v1580
      %v1582 = vrot.slane %v937, 1
      %v1583 = vrot.slane %v939, 1
      %v1584 = vsel %vm575, %v1582, %v1583
      %v1585 = vrot.slane %v1065, 1
      %v1586 = vrot.slane %v1067, 1
      %v1587 = vsel %vm575, %v1585, %v1586
      %v1588 = vrot.slane %v1145, 1
      %v1589 = vrot.slane %v1147, 1
      %v1590 = vsel %vm575, %v1588, %v1589
      %v1591 = vrot.slane %v649, 1
      %v1592 = vsel %vm575, %v1574, %v1591
      %v1593 = vrot.slane %v730, 1
      %v1594 = vsel %vm575, %v1577, %v1593
      %v1595 = vrot.slane %v858, 1
      %v1596 = vsel %vm575, %v1580, %v1595
      %v1597 = vrot.slane %v938, 1
      %v1598 = vsel %vm575, %v1583, %v1597
      %v1599 = vrot.slane %v1066, 1
      %v1600 = vsel %vm575, %v1586, %v1599
      %v1601 = vrot.slane %v1146, 1
      %v1602 = vsel %vm575, %v1589, %v1601
      %v1603 = vrot.slane %v653, 1
      %v1604 = vrot.slane %v655, 1
      %v1605 = vsel %vm575, %v1603, %v1604
      %v1606 = vrot.slane %v734, 1
      %v1607 = vrot.slane %v736, 1
      %v1608 = vsel %vm575, %v1606, %v1607
      %v1609 = vrot.slane %v862, 1
      %v1610 = vrot.slane %v864, 1
      %v1611 = vsel %vm575, %v1609, %v1610
      %v1612 = vrot.slane %v942, 1
      %v1613 = vrot.slane %v944, 1
      %v1614 = vsel %vm575, %v1612, %v1613
      %v1615 = vrot.slane %v1070, 1
      %v1616 = vrot.slane %v1072, 1
      %v1617 = vsel %vm575, %v1615, %v1616
      %v1618 = vrot.slane %v1150, 1
      %v1619 = vrot.slane %v1152, 1
      %v1620 = vsel %vm575, %v1618, %v1619
      %v1621 = vrot.slane %v654, 1
      %v1622 = vsel %vm575, %v1604, %v1621
      %v1623 = vrot.slane %v735, 1
      %v1624 = vsel %vm575, %v1607, %v1623
      %v1625 = vrot.slane %v863, 1
      %v1626 = vsel %vm575, %v1610, %v1625
      %v1627 = vrot.slane %v943, 1
      %v1628 = vsel %vm575, %v1613, %v1627
      %v1629 = vrot.slane %v1071, 1
      %v1630 = vsel %vm575, %v1616, %v1629
      %v1631 = vrot.slane %v1151, 1
      %v1632 = vsel %vm575, %v1619, %v1631
      %v1921 = vld [vmem:[%s1] sm:$0xff]
      %v1922 = vld [vmem:[%s1 + $0x8] sm:$0xff]
      %v1923 = vld [vmem:[%s1 + $0x10] sm:$0xff]
      %v1924 = vld [vmem:[%s1 + $0x18] sm:$0xff]
      %v1925 = vld [vmem:[%s1 + $0x20] sm:$0xff]
      %v1926 = vld [vmem:[%s1 + $0x28] sm:$0xff]
      %v1927 = vld [vmem:[%s1 + $0x30] sm:$0xff]
      %v1928 = vld [vmem:[%s1 + $0x38] sm:$0xff]
      %v1929 = vld [vmem:[%s1 + $0x40] sm:$0xff]
      %v1930 = vld [vmem:[%s1 + $0x48] sm:$0xff]
      %v1931 = vld [vmem:[%s1 + $0x50] sm:$0xff]
      %v1932 = vld [vmem:[%s1 + $0x58] sm:$0xff]
      %v1933 = vld [vmem:[%s1 + $0x60] sm:$0xff]
      %v1934 = vld [vmem:[%s1 + $0x68] sm:$0xff]
      %v1935 = vld [vmem:[%s1 + $0x70] sm:$0xff]
      %v1936 = vld [vmem:[%s1 + $0x78] sm:$0xff]
      %v1937 = vld [vmem:[%s1 + $0x80] sm:$0xff]
      %v1938 = vld [vmem:[%s1 + $0x88] sm:$0xff]
      %v1939 = vld [vmem:[%s1 + $0x90] sm:$0xff]
      %v1940 = vld [vmem:[%s1 + $0x98] sm:$0xff]
      %v1941 = vld [vmem:[%s1 + $0xa0] sm:$0xff]
      %v1942 = vld [vmem:[%s1 + $0xa8] sm:$0xff]
      %v1943 = vld [vmem:[%s1 + $0xb0] sm:$0xff]
      %v1944 = vld [vmem:[%s1 + $0xb8] sm:$0xff]
      %v1945 = vld [vmem:[%s1 + $0xc0] sm:$0xff]
      %v1946 = vld [vmem:[%s1 + $0xc8] sm:$0xff]
      %v1947 = vld [vmem:[%s1 + $0xd0] sm:$0xff]
      %v1948 = vld [vmem:[%s1 + $0xd8] sm:$0xff]
      %v1949 = vld [vmem:[%s1 + $0xe0] sm:$0xff]
      %v1950 = vld [vmem:[%s1 + $0xe8] sm:$0xff]
      %v1951 = vld [vmem:[%s1 + $0xf0] sm:$0xff]
      %v1952 = vld [vmem:[%s1 + $0xf8] sm:$0xff]
      %v1953 = vld [vmem:[%s1 + $0x100] sm:$0xff]
      %v1954 = vld [vmem:[%s1 + $0x108] sm:$0xff]
      %v1955 = vld [vmem:[%s1 + $0x110] sm:$0xff]
      %v1956 = vld [vmem:[%s1 + $0x118] sm:$0xff]
      %v1957 = vld [vmem:[%s1 + $0x120] sm:$0xff]
      %v1958 = vld [vmem:[%s1 + $0x128] sm:$0xff]
      %v1959 = vld [vmem:[%s1 + $0x130] sm:$0xff]
      %v1960 = vld [vmem:[%s1 + $0x138] sm:$0xff]
      %v1961 = vld [vmem:[%s1 + $0x140] sm:$0xff]
      %v1962 = vld [vmem:[%s1 + $0x148] sm:$0xff]
      %v1963 = vld [vmem:[%s1 + $0x150] sm:$0xff]
      %v1964 = vld [vmem:[%s1 + $0x158] sm:$0xff]
      %v1965 = vld [vmem:[%s1 + $0x160] sm:$0xff]
      %v1966 = vld [vmem:[%s1 + $0x168] sm:$0xff]
      %v1967 = vld [vmem:[%s1 + $0x170] sm:$0xff]
      %v1968 = vld [vmem:[%s1 + $0x178] sm:$0xff]
      %v1969 = vld [vmem:[%s1 + $0x180] sm:$0xff]
      %v1970 = vld [vmem:[%s1 + $0x188] sm:$0xff]
      %v1971 = vld [vmem:[%s1 + $0x190] sm:$0xff]
      %v1972 = vld [vmem:[%s1 + $0x198] sm:$0xff]
      %v1973 = vld [vmem:[%s1 + $0x1a0] sm:$0xff]
      %v1974 = vld [vmem:[%s1 + $0x1a8] sm:$0xff]
      %v1975 = vld [vmem:[%s1 + $0x1b0] sm:$0xff]
      %v1976 = vld [vmem:[%s1 + $0x1b8] sm:$0xff]
      %v1977 = vld [vmem:[%s1 + $0x1c0] sm:$0xff]
      %v1978 = vld [vmem:[%s1 + $0x1c8] sm:$0xff]
      %v1979 = vld [vmem:[%s1 + $0x1d0] sm:$0xff]
      %v1980 = vld [vmem:[%s1 + $0x1d8] sm:$0xff]
      %v1981 = vld [vmem:[%s1 + $0x1e0] sm:$0xff]
      %v1982 = vld [vmem:[%s1 + $0x1e8] sm:$0xff]
      %v1983 = vld [vmem:[%s1 + $0x1f0] sm:$0xff]
      %v1984 = vld [vmem:[%s1 + $0x1f8] sm:$0xff]
      %v1985 = vld [vmem:[%s1 + $0x200] sm:$0xff]
      %v1986 = vld [vmem:[%s1 + $0x208] sm:$0xff]
      %v1987 = vld [vmem:[%s1 + $0x210] sm:$0xff]
      %v1988 = vld [vmem:[%s1 + $0x218] sm:$0xff]
      %v1989 = vld [vmem:[%s1 + $0x220] sm:$0xff]
      %v1990 = vld [vmem:[%s1 + $0x228] sm:$0xff]
      %v1991 = vld [vmem:[%s1 + $0x230] sm:$0xff]
      %v1992 = vld [vmem:[%s1 + $0x238] sm:$0xff]
      %v1993 = vld [vmem:[%s1 + $0x240] sm:$0xff]
      %v1994 = vld [vmem:[%s1 + $0x248] sm:$0xff]
      %v1995 = vld [vmem:[%s1 + $0x250] sm:$0xff]
      %v1996 = vld [vmem:[%s1 + $0x258] sm:$0xff]
      %v1997 = vld [vmem:[%s1 + $0x260] sm:$0xff]
      %v1998 = vld [vmem:[%s1 + $0x268] sm:$0xff]
      %v1999 = vld [vmem:[%s1 + $0x270] sm:$0xff]
      %v2000 = vld [vmem:[%s1 + $0x278] sm:$0xff]
      %v2001 = vld [vmem:[%s1 + $0x280] sm:$0xff]
      %v2002 = vld [vmem:[%s1 + $0x288] sm:$0xff]
      %v2003 = vld [vmem:[%s1 + $0x290] sm:$0xff]
      %v2004 = vld [vmem:[%s1 + $0x298] sm:$0xff]
      %v2005 = vld [vmem:[%s1 + $0x2a0] sm:$0xff]
      %v2006 = vld [vmem:[%s1 + $0x2a8] sm:$0xff]
      %v2007 = vld [vmem:[%s1 + $0x2b0] sm:$0xff]
      %v2008 = vld [vmem:[%s1 + $0x2b8] sm:$0xff]
      %v2009 = vld [vmem:[%s1 + $0x2c0] sm:$0xff]
      %v2010 = vld [vmem:[%s1 + $0x2c8] sm:$0xff]
      %v2011 = vld [vmem:[%s1 + $0x2d0] sm:$0xff]
      %v2012 = vld [vmem:[%s1 + $0x2d8] sm:$0xff]
      %v2013 = vld [vmem:[%s1 + $0x2e0] sm:$0xff]
      %v2014 = vld [vmem:[%s1 + $0x2e8] sm:$0xff]
      %v2015 = vld [vmem:[%s1 + $0x2f0] sm:$0xff]
      %v2016 = vld [vmem:[%s1 + $0x2f8] sm:$0xff]
      %v2017 = vld [vmem:[%s1 + $0x300] sm:$0xff]
      %v2018 = vld [vmem:[%s1 + $0x308] sm:$0xff]
      %v2019 = vld [vmem:[%s1 + $0x310] sm:$0xff]
      %v2020 = vld [vmem:[%s1 + $0x318] sm:$0xff]
      %v2021 = vld [vmem:[%s1 + $0x320] sm:$0xff]
      %v2022 = vld [vmem:[%s1 + $0x328] sm:$0xff]
      %v2023 = vld [vmem:[%s1 + $0x330] sm:$0xff]
      %v2024 = vld [vmem:[%s1 + $0x338] sm:$0xff]
      %v2025 = vld [vmem:[%s1 + $0x340] sm:$0xff]
      %v2026 = vld [vmem:[%s1 + $0x348] sm:$0xff]
      %v2027 = vld [vmem:[%s1 + $0x350] sm:$0xff]
      %v2028 = vld [vmem:[%s1 + $0x358] sm:$0xff]
      %v2029 = vld [vmem:[%s1 + $0x360] sm:$0xff]
      %v2030 = vld [vmem:[%s1 + $0x368] sm:$0xff]
      %v2031 = vld [vmem:[%s1 + $0x370] sm:$0xff]
      %v2032 = vld [vmem:[%s1 + $0x378] sm:$0xff]
      %v2033 = vld [vmem:[%s1 + $0x380] sm:$0xff]
      %v2034 = vld [vmem:[%s1 + $0x388] sm:$0xff]
      %v2035 = vld [vmem:[%s1 + $0x390] sm:$0xff]
      %v2036 = vld [vmem:[%s1 + $0x398] sm:$0xff]
      %v2037 = vld [vmem:[%s1 + $0x3a0] sm:$0xff]
      %v2038 = vld [vmem:[%s1 + $0x3a8] sm:$0xff]
      %v2039 = vld [vmem:[%s1 + $0x3b0] sm:$0xff]
      %v2040 = vld [vmem:[%s1 + $0x3b8] sm:$0xff]
      %v2041 = vld [vmem:[%s1 + $0x3c0] sm:$0xff]
      %v2042 = vld [vmem:[%s1 + $0x3c8] sm:$0xff]
      %v2043 = vld [vmem:[%s1 + $0x3d0] sm:$0xff]
      %v2044 = vld [vmem:[%s1 + $0x3d8] sm:$0xff]
      %v2045 = vld [vmem:[%s1 + $0x3e0] sm:$0xff]
      %v2046 = vld [vmem:[%s1 + $0x3e8] sm:$0xff]
      %v2047 = vld [vmem:[%s1 + $0x3f0] sm:$0xff]
      %v2048 = vld [vmem:[%s1 + $0x3f8] sm:$0xff]
      %v2049 = vld [vmem:[%s1 + $0x400] sm:$0xff]
      %v2050 = vld [vmem:[%s1 + $0x408] sm:$0xff]
      %v2051 = vld [vmem:[%s1 + $0x410] sm:$0xff]
      %v2052 = vld [vmem:[%s1 + $0x418] sm:$0xff]
      %v2053 = vld [vmem:[%s1 + $0x420] sm:$0xff]
      %v2054 = vld [vmem:[%s1 + $0x428] sm:$0xff]
      %v2055 = vld [vmem:[%s1 + $0x430] sm:$0xff]
      %v2056 = vld [vmem:[%s1 + $0x438] sm:$0xff]
      %v2057 = vld [vmem:[%s1 + $0x440] sm:$0xff]
      %v2058 = vld [vmem:[%s1 + $0x448] sm:$0xff]
      %v2059 = vld [vmem:[%s1 + $0x450] sm:$0xff]
      %v2060 = vld [vmem:[%s1 + $0x458] sm:$0xff]
      %v2061 = vld [vmem:[%s1 + $0x460] sm:$0xff]
      %v2062 = vld [vmem:[%s1 + $0x468] sm:$0xff]
      %v2063 = vld [vmem:[%s1 + $0x470] sm:$0xff]
      %v2064 = vld [vmem:[%s1 + $0x478] sm:$0xff]
      %v2065 = vld [vmem:[%s2] sm:$0x1]
      %v2067 = vlaneseq
      %v2068 = vshrl.u32 %v2067, 7
      %v2069 = vsub.s32 0, %v2068
      %v2070 = vrot.slane %v2065, %v2069
      %2072 = vmatprep.subr.mxu0 0.0
      %2073 = vmatpush1.msra.mxu0 %v1936
      %2074 = vmatprep.subr.mxu0 0.0
      %2075 = vmatpush1.msra.mxu0 %v1935
      %2076 = vmatprep.subr.mxu0 0.0
      %2077 = vmatpush1.msra.mxu0 %v1934
      %2078 = vmatprep.subr.mxu0 0.0
      %2079 = vmatpush1.msra.mxu0 %v1933
      %2080 = vmatprep.subr.mxu0 0.0
      %2081 = vmatpush1.msra.mxu0 %v1932
      %2082 = vmatprep.subr.mxu0 0.0
      %2083 = vmatpush1.msra.mxu0 %v1931
      %2084 = vmatprep.subr.mxu0 0.0
      %2085 = vmatpush1.msra.mxu0 %v1930
      %2086 = vmatprep.subr.mxu0 0.0
      %2087 = vmatpush1.msra.mxu0 %v1929
      %2088 = vmatprep.subr.mxu0 0.0
      %2089 = vmatpush1.msra.mxu0 %v1928
      %2090 = vmatprep.subr.mxu0 0.0
      %2091 = vmatpush1.msra.mxu0 %v1927
      %2092 = vmatprep.subr.mxu0 0.0
      %2093 = vmatpush1.msra.mxu0 %v1926
      %2094 = vmatprep.subr.mxu0 0.0
      %2095 = vmatpush1.msra.mxu0 %v1925
      %2096 = vmatprep.subr.mxu0 0.0
      %2097 = vmatpush1.msra.mxu0 %v1924
      %2098 = vmatprep.subr.mxu0 0.0
      %2099 = vmatpush1.msra.mxu0 %v1923
      %2100 = vmatprep.subr.mxu0 0.0
      %2101 = vmatpush1.msra.mxu0 %v1922
      %2102 = vmatprep.subr.mxu0 0.0
      %2103 = vmatpush1.msra.mxu0 %v1921
      %2104 = vmatprep.subr.mxu0 0.0
      %2105 = vmatpush2.msra.mxu0 %v1952
      %2106 = vmatprep.subr.mxu0 0.0
      %2107 = vmatpush2.msra.mxu0 %v1951
      %2108 = vmatprep.subr.mxu0 0.0
      %2109 = vmatpush2.msra.mxu0 %v1950
      %2110 = vmatprep.subr.mxu0 0.0
      %2111 = vmatpush2.msra.mxu0 %v1949
      %2112 = vmatprep.subr.mxu0 0.0
      %2113 = vmatpush2.msra.mxu0 %v1948
      %2114 = vmatprep.subr.mxu0 0.0
      %2115 = vmatpush2.msra.mxu0 %v1947
      %2116 = vmatprep.subr.mxu0 0.0
      %2117 = vmatpush2.msra.mxu0 %v1946
      %2118 = vmatprep.subr.mxu0 0.0
      %2119 = vmatpush2.msra.mxu0 %v1945
      %2120 = vmatprep.subr.mxu0 0.0
      %2121 = vmatpush2.msra.mxu0 %v1944
      %2122 = vmatprep.subr.mxu0 0.0
      %2123 = vmatpush2.msra.mxu0 %v1943
      %2124 = vmatprep.subr.mxu0 0.0
      %2125 = vmatpush2.msra.mxu0 %v1942
      %2126 = vmatprep.subr.mxu0 0.0
      %2127 = vmatpush2.msra.mxu0 %v1941
      %2128 = vmatprep.subr.mxu0 0.0
      %2129 = vmatpush2.msra.mxu0 %v1940
      %2130 = vmatprep.subr.mxu0 0.0
      %2131 = vmatpush2.msra.mxu0 %v1939
      %2132 = vmatprep.subr.mxu0 0.0
      %2133 = vmatpush2.msra.mxu0 %v1938
      %2134 = vmatprep.subr.mxu0 0.0
      %2135 = vmatpush2.msra.mxu0 %v1937
      %2136 = vmatprep.mubr.f32.mxu0 %v1155
      %2137 = vmatmul.mubr.f32.gmra.mxu0 %v578
      %v2138 = vpop.f32.mrf.mxu0
      %v2139 = vadd.f32 %v2070, %v2138
      %v2140 = vpop.f32.mrf.mxu0
      %2141 = vmatprep.mubr.f32.mxu0 %v1172
      %2142 = vmatmul.mubr.f32.gmra.mxu0 %v580
      %v2143 = vpop.f32.mrf.mxu0
      %v2144 = vadd.f32 %v2070, %v2143
      %v2145 = vpop.f32.mrf.mxu0
      %2146 = vmatprep.mubr.f32.mxu0 %v1185
      %2147 = vmatmul.mubr.f32.gmra.mxu0 %v583
      %v2148 = vpop.f32.mrf.mxu0
      %v2149 = vadd.f32 %v2070, %v2148
      %v2150 = vpop.f32.mrf.mxu0
      %2151 = vmatprep.mubr.f32.mxu0 %v1202
      %2152 = vmatmul.mubr.f32.gmra.mxu0 %v585
      %v2153 = vpop.f32.mrf.mxu0
      %v2154 = vadd.f32 %v2070, %v2153
      %v2155 = vpop.f32.mrf.mxu0
      %2156 = vmatprep.mubr.f32.mxu0 %v1215
      %2157 = vmatmul.mubr.f32.gmra.mxu0 %v588
      %v2158 = vpop.f32.mrf.mxu0
      %v2159 = vadd.f32 %v2070, %v2158
      %v2160 = vpop.f32.mrf.mxu0
      %2161 = vmatprep.mubr.f32.mxu0 %v1232
      %2162 = vmatmul.mubr.f32.gmra.mxu0 %v590
      %v2163 = vpop.f32.mrf.mxu0
      %v2164 = vadd.f32 %v2070, %v2163
      %v2165 = vpop.f32.mrf.mxu0
      %2166 = vmatprep.mubr.f32.mxu0 %v1245
      %2167 = vmatmul.mubr.f32.gmra.mxu0 %v593
      %v2168 = vpop.f32.mrf.mxu0
      %v2169 = vadd.f32 %v2070, %v2168
      %v2170 = vpop.f32.mrf.mxu0
      %2171 = vmatprep.mubr.f32.mxu0 %v1262
      %2172 = vmatmul.mubr.f32.gmra.mxu0 %v595
      %v2173 = vpop.f32.mrf.mxu0
      %v2174 = vadd.f32 %v2070, %v2173
      %v2175 = vpop.f32.mrf.mxu0
      %2176 = vmatprep.mubr.f32.mxu0 %v1275
      %2177 = vmatmul.mubr.f32.gmra.mxu0 %v598
      %v2178 = vpop.f32.mrf.mxu0
      %v2179 = vadd.f32 %v2070, %v2178
      %v2180 = vpop.f32.mrf.mxu0
      %2181 = vmatprep.mubr.f32.mxu0 %v1292
      %2182 = vmatmul.mubr.f32.gmra.mxu0 %v600
      %v2183 = vpop.f32.mrf.mxu0
      %v2184 = vadd.f32 %v2070, %v2183
      %v2185 = vpop.f32.mrf.mxu0
      %2186 = vmatprep.mubr.f32.mxu0 %v1305
      %2187 = vmatmul.mubr.f32.gmra.mxu0 %v603
      %v2188 = vpop.f32.mrf.mxu0
      %v2189 = vadd.f32 %v2070, %v2188
      %v2190 = vpop.f32.mrf.mxu0
      %2191 = vmatprep.mubr.f32.mxu0 %v1322
      %2192 = vmatmul.mubr.f32.gmra.mxu0 %v605
      %v2193 = vpop.f32.mrf.mxu0
      %v2194 = vadd.f32 %v2070, %v2193
      %v2195 = vpop.f32.mrf.mxu0
      %2196 = vmatprep.mubr.f32.mxu0 %v1335
      %2197 = vmatmul.mubr.f32.gmra.mxu0 %v608
      %v2198 = vpop.f32.mrf.mxu0
      %v2199 = vadd.f32 %v2070, %v2198
      %v2200 = vpop.f32.mrf.mxu0
      %2201 = vmatprep.mubr.f32.mxu0 %v1352
      %2202 = vmatmul.mubr.f32.gmra.mxu0 %v610
      %v2203 = vpop.f32.mrf.mxu0
      %v2204 = vadd.f32 %v2070, %v2203
      %v2205 = vpop.f32.mrf.mxu0
      %2206 = vmatprep.mubr.f32.mxu0 %v1365
      %2207 = vmatmul.mubr.f32.gmra.mxu0 %v613
      %v2208 = vpop.f32.mrf.mxu0
      %v2209 = vadd.f32 %v2070, %v2208
      %v2210 = vpop.f32.mrf.mxu0
      %2211 = vmatprep.mubr.f32.mxu0 %v1382
      %2212 = vmatmul.mubr.f32.gmra.mxu0 %v615
      %v2213 = vpop.f32.mrf.mxu0
      %v2214 = vadd.f32 %v2070, %v2213
      %v2215 = vpop.f32.mrf.mxu0
      %2216 = vmatprep.mubr.f32.mxu0 %v1395
      %2217 = vmatmul.mubr.f32.gmra.mxu0 %v618
      %v2218 = vpop.f32.mrf.mxu0
      %v2219 = vadd.f32 %v2070, %v2218
      %v2220 = vpop.f32.mrf.mxu0
      %2221 = vmatprep.mubr.f32.mxu0 %v1412
      %2222 = vmatmul.mubr.f32.gmra.mxu0 %v620
      %v2223 = vpop.f32.mrf.mxu0
      %v2224 = vadd.f32 %v2070, %v2223
      %v2225 = vpop.f32.mrf.mxu0
      %2226 = vmatprep.mubr.f32.mxu0 %v1425
      %2227 = vmatmul.mubr.f32.gmra.mxu0 %v623
      %v2228 = vpop.f32.mrf.mxu0
      %v2229 = vadd.f32 %v2070, %v2228
      %v2230 = vpop.f32.mrf.mxu0
      %2231 = vmatprep.mubr.f32.mxu0 %v1442
      %2232 = vmatmul.mubr.f32.gmra.mxu0 %v625
      %v2233 = vpop.f32.mrf.mxu0
      %v2234 = vadd.f32 %v2070, %v2233
      %v2235 = vpop.f32.mrf.mxu0
      %2236 = vmatprep.mubr.f32.mxu0 %v1455
      %2237 = vmatmul.mubr.f32.gmra.mxu0 %v628
      %v2238 = vpop.f32.mrf.mxu0
      %v2239 = vadd.f32 %v2070, %v2238
      %v2240 = vpop.f32.mrf.mxu0
      %2241 = vmatprep.mubr.f32.mxu0 %v1472
      %2242 = vmatmul.mubr.f32.gmra.mxu0 %v630
      %v2243 = vpop.f32.mrf.mxu0
      %v2244 = vadd.f32 %v2070, %v2243
      %v2245 = vpop.f32.mrf.mxu0
      %2246 = vmatprep.mubr.f32.mxu0 %v1485
      %2247 = vmatmul.mubr.f32.gmra.mxu0 %v633
      %v2248 = vpop.f32.mrf.mxu0
      %v2249 = vadd.f32 %v2070, %v2248
      %v2250 = vpop.f32.mrf.mxu0
      %2251 = vmatprep.mubr.f32.mxu0 %v1502
      %2252 = vmatmul.mubr.f32.gmra.mxu0 %v635
      %v2253 = vpop.f32.mrf.mxu0
      %v2254 = vadd.f32 %v2070, %v2253
      %v2255 = vpop.f32.mrf.mxu0
      %2256 = vmatprep.mubr.f32.mxu0 %v1515
      %2257 = vmatmul.mubr.f32.gmra.mxu0 %v638
      %v2258 = vpop.f32.mrf.mxu0
      %v2259 = vadd.f32 %v2070, %v2258
      %v2260 = vpop.f32.mrf.mxu0
      %2261 = vmatprep.mubr.f32.mxu0 %v1532
      %2262 = vmatmul.mubr.f32.gmra.mxu0 %v640
      %v2263 = vpop.f32.mrf.mxu0
      %v2264 = vadd.f32 %v2070, %v2263
      %v2265 = vpop.f32.mrf.mxu0
      %2266 = vmatprep.mubr.f32.mxu0 %v1545
      %2267 = vmatmul.mubr.f32.gmra.mxu0 %v643
      %v2268 = vpop.f32.mrf.mxu0
      %v2269 = vadd.f32 %v2070, %v2268
      %v2270 = vpop.f32.mrf.mxu0
      %2271 = vmatprep.mubr.f32.mxu0 %v1562
      %2272 = vmatmul.mubr.f32.gmra.mxu0 %v645
      %v2273 = vpop.f32.mrf.mxu0
      %v2274 = vadd.f32 %v2070, %v2273
      %v2275 = vpop.f32.mrf.mxu0
      %2276 = vmatprep.mubr.f32.mxu0 %v1575
      %2277 = vmatmul.mubr.f32.gmra.mxu0 %v648
      %v2278 = vpop.f32.mrf.mxu0
      %v2279 = vadd.f32 %v2070, %v2278
      %v2280 = vpop.f32.mrf.mxu0
      %2281 = vmatprep.mubr.f32.mxu0 %v1592
      %2282 = vmatmul.mubr.f32.gmra.mxu0 %v650
      %v2283 = vpop.f32.mrf.mxu0
      %v2284 = vadd.f32 %v2070, %v2283
      %v2285 = vpop.f32.mrf.mxu0
      %2286 = vmatprep.mubr.f32.mxu0 %v1605
      %2287 = vmatmul.mubr.f32.gmra.mxu0 %v653
      %v2288 = vpop.f32.mrf.mxu0
      %v2289 = vadd.f32 %v2070, %v2288
      %v2290 = vpop.f32.mrf.mxu0
      %2291 = vmatprep.mubr.f32.mxu0 %v1622
      %2292 = vmatmul.mubr.f32.gmra.mxu0 %v655
      %v2293 = vpop.f32.mrf.mxu0
      %v2294 = vadd.f32 %v2070, %v2293
      %v2295 = vpop.f32.mrf.mxu0
      %2296 = vdwg.mxu0
      %2297 = vmatprep.subr.mxu0 0.0
      %2298 = vmatpush1.msra.mxu0 %v1968
      %2299 = vmatprep.subr.mxu0 0.0
      %2300 = vmatpush1.msra.mxu0 %v1967
      %2301 = vmatprep.subr.mxu0 0.0
      %2302 = vmatpush1.msra.mxu0 %v1966
      %2303 = vmatprep.subr.mxu0 0.0
      %2304 = vmatpush1.msra.mxu0 %v1965
      %2305 = vmatprep.subr.mxu0 0.0
      %2306 = vmatpush1.msra.mxu0 %v1964
      %2307 = vmatprep.subr.mxu0 0.0
      %2308 = vmatpush1.msra.mxu0 %v1963
      %2309 = vmatprep.subr.mxu0 0.0
      %2310 = vmatpush1.msra.mxu0 %v1962
      %2311 = vmatprep.subr.mxu0 0.0
      %2312 = vmatpush1.msra.mxu0 %v1961
      %2313 = vmatprep.subr.mxu0 0.0
      %2314 = vmatpush1.msra.mxu0 %v1960
      %2315 = vmatprep.subr.mxu0 0.0
      %2316 = vmatpush1.msra.mxu0 %v1959
      %2317 = vmatprep.subr.mxu0 0.0
      %2318 = vmatpush1.msra.mxu0 %v1958
      %2319 = vmatprep.subr.mxu0 0.0
      %2320 = vmatpush1.msra.mxu0 %v1957
      %2321 = vmatprep.subr.mxu0 0.0
      %2322 = vmatpush1.msra.mxu0 %v1956
      %2323 = vmatprep.subr.mxu0 0.0
      %2324 = vmatpush1.msra.mxu0 %v1955
      %2325 = vmatprep.subr.mxu0 0.0
      %2326 = vmatpush1.msra.mxu0 %v1954
      %2327 = vmatprep.subr.mxu0 0.0
      %2328 = vmatpush1.msra.mxu0 %v1953
      %2329 = vmatprep.subr.mxu0 0.0
      %2330 = vmatpush2.msra.mxu0 %v1984
      %2331 = vmatprep.subr.mxu0 0.0
      %2332 = vmatpush2.msra.mxu0 %v1983
      %2333 = vmatprep.subr.mxu0 0.0
      %2334 = vmatpush2.msra.mxu0 %v1982
      %2335 = vmatprep.subr.mxu0 0.0
      %2336 = vmatpush2.msra.mxu0 %v1981
      %2337 = vmatprep.subr.mxu0 0.0
      %2338 = vmatpush2.msra.mxu0 %v1980
      %2339 = vmatprep.subr.mxu0 0.0
      %2340 = vmatpush2.msra.mxu0 %v1979
      %2341 = vmatprep.subr.mxu0 0.0
      %2342 = vmatpush2.msra.mxu0 %v1978
      %2343 = vmatprep.subr.mxu0 0.0
      %2344 = vmatpush2.msra.mxu0 %v1977
      %2345 = vmatprep.subr.mxu0 0.0
      %2346 = vmatpush2.msra.mxu0 %v1976
      %2347 = vmatprep.subr.mxu0 0.0
      %2348 = vmatpush2.msra.mxu0 %v1975
      %2349 = vmatprep.subr.mxu0 0.0
      %2350 = vmatpush2.msra.mxu0 %v1974
      %2351 = vmatprep.subr.mxu0 0.0
      %2352 = vmatpush2.msra.mxu0 %v1973
      %2353 = vmatprep.subr.mxu0 0.0
      %2354 = vmatpush2.msra.mxu0 %v1972
      %2355 = vmatprep.subr.mxu0 0.0
      %2356 = vmatpush2.msra.mxu0 %v1971
      %2357 = vmatprep.subr.mxu0 0.0
      %2358 = vmatpush2.msra.mxu0 %v1970
      %2359 = vmatprep.subr.mxu0 0.0
      %2360 = vmatpush2.msra.mxu0 %v1969
      %2361 = vmatprep.mubr.f32.mxu0 %v787
      %2362 = vmatmul.mubr.f32.gmra.mxu0 %v1158
      %v2363 = vpop.f32.mrf.mxu0
      %v2364 = vadd.f32 %v2139, %v2363
      %v2365 = vpop.f32.mrf.mxu0
      %2366 = vmatprep.mubr.f32.mxu0 %v789
      %2367 = vmatmul.mubr.f32.gmra.mxu0 %v1174
      %v2368 = vpop.f32.mrf.mxu0
      %v2369 = vadd.f32 %v2144, %v2368
      %v2370 = vpop.f32.mrf.mxu0
      %2371 = vmatprep.mubr.f32.mxu0 %v792
      %2372 = vmatmul.mubr.f32.gmra.mxu0 %v1188
      %v2373 = vpop.f32.mrf.mxu0
      %v2374 = vadd.f32 %v2149, %v2373
      %v2375 = vpop.f32.mrf.mxu0
      %2376 = vmatprep.mubr.f32.mxu0 %v794
      %2377 = vmatmul.mubr.f32.gmra.mxu0 %v1204
      %v2378 = vpop.f32.mrf.mxu0
      %v2379 = vadd.f32 %v2154, %v2378
      %v2380 = vpop.f32.mrf.mxu0
      %2381 = vmatprep.mubr.f32.mxu0 %v797
      %2382 = vmatmul.mubr.f32.gmra.mxu0 %v1218
      %v2383 = vpop.f32.mrf.mxu0
      %v2384 = vadd.f32 %v2159, %v2383
      %v2385 = vpop.f32.mrf.mxu0
      %2386 = vmatprep.mubr.f32.mxu0 %v799
      %2387 = vmatmul.mubr.f32.gmra.mxu0 %v1234
      %v2388 = vpop.f32.mrf.mxu0
      %v2389 = vadd.f32 %v2164, %v2388
      %v2390 = vpop.f32.mrf.mxu0
      %2391 = vmatprep.mubr.f32.mxu0 %v802
      %2392 = vmatmul.mubr.f32.gmra.mxu0 %v1248
      %v2393 = vpop.f32.mrf.mxu0
      %v2394 = vadd.f32 %v2169, %v2393
      %v2395 = vpop.f32.mrf.mxu0
      %2396 = vmatprep.mubr.f32.mxu0 %v804
      %2397 = vmatmul.mubr.f32.gmra.mxu0 %v1264
      %v2398 = vpop.f32.mrf.mxu0
      %v2399 = vadd.f32 %v2174, %v2398
      %v2400 = vpop.f32.mrf.mxu0
      %2401 = vmatprep.mubr.f32.mxu0 %v807
      %2402 = vmatmul.mubr.f32.gmra.mxu0 %v1278
      %v2403 = vpop.f32.mrf.mxu0
      %v2404 = vadd.f32 %v2179, %v2403
      %v2405 = vpop.f32.mrf.mxu0
      %2406 = vmatprep.mubr.f32.mxu0 %v809
      %2407 = vmatmul.mubr.f32.gmra.mxu0 %v1294
      %v2408 = vpop.f32.mrf.mxu0
      %v2409 = vadd.f32 %v2184, %v2408
      %v2410 = vpop.f32.mrf.mxu0
      %2411 = vmatprep.mubr.f32.mxu0 %v812
      %2412 = vmatmul.mubr.f32.gmra.mxu0 %v1308
      %v2413 = vpop.f32.mrf.mxu0
      %v2414 = vadd.f32 %v2189, %v2413
      %v2415 = vpop.f32.mrf.mxu0
      %2416 = vmatprep.mubr.f32.mxu0 %v814
      %2417 = vmatmul.mubr.f32.gmra.mxu0 %v1324
      %v2418 = vpop.f32.mrf.mxu0
      %v2419 = vadd.f32 %v2194, %v2418
      %v2420 = vpop.f32.mrf.mxu0
      %2421 = vmatprep.mubr.f32.mxu0 %v817
      %2422 = vmatmul.mubr.f32.gmra.mxu0 %v1338
      %v2423 = vpop.f32.mrf.mxu0
      %v2424 = vadd.f32 %v2199, %v2423
      %v2425 = vpop.f32.mrf.mxu0
      %2426 = vmatprep.mubr.f32.mxu0 %v819
      %2427 = vmatmul.mubr.f32.gmra.mxu0 %v1354
      %v2428 = vpop.f32.mrf.mxu0
      %v2429 = vadd.f32 %v2204, %v2428
      %v2430 = vpop.f32.mrf.mxu0
      %2431 = vmatprep.mubr.f32.mxu0 %v822
      %2432 = vmatmul.mubr.f32.gmra.mxu0 %v1368
      %v2433 = vpop.f32.mrf.mxu0
      %v2434 = vadd.f32 %v2209, %v2433
      %v2435 = vpop.f32.mrf.mxu0
      %2436 = vmatprep.mubr.f32.mxu0 %v824
      %2437 = vmatmul.mubr.f32.gmra.mxu0 %v1384
      %v2438 = vpop.f32.mrf.mxu0
      %v2439 = vadd.f32 %v2214, %v2438
      %v2440 = vpop.f32.mrf.mxu0
      %2441 = vmatprep.mubr.f32.mxu0 %v827
      %2442 = vmatmul.mubr.f32.gmra.mxu0 %v1398
      %v2443 = vpop.f32.mrf.mxu0
      %v2444 = vadd.f32 %v2219, %v2443
      %v2445 = vpop.f32.mrf.mxu0
      %2446 = vmatprep.mubr.f32.mxu0 %v829
      %2447 = vmatmul.mubr.f32.gmra.mxu0 %v1414
      %v2448 = vpop.f32.mrf.mxu0
      %v2449 = vadd.f32 %v2224, %v2448
      %v2450 = vpop.f32.mrf.mxu0
      %2451 = vmatprep.mubr.f32.mxu0 %v832
      %2452 = vmatmul.mubr.f32.gmra.mxu0 %v1428
      %v2453 = vpop.f32.mrf.mxu0
      %v2454 = vadd.f32 %v2229, %v2453
      %v2455 = vpop.f32.mrf.mxu0
      %2456 = vmatprep.mubr.f32.mxu0 %v834
      %2457 = vmatmul.mubr.f32.gmra.mxu0 %v1444
      %v2458 = vpop.f32.mrf.mxu0
      %v2459 = vadd.f32 %v2234, %v2458
      %v2460 = vpop.f32.mrf.mxu0
      %2461 = vmatprep.mubr.f32.mxu0 %v837
      %2462 = vmatmul.mubr.f32.gmra.mxu0 %v1458
      %v2463 = vpop.f32.mrf.mxu0
      %v2464 = vadd.f32 %v2239, %v2463
      %v2465 = vpop.f32.mrf.mxu0
      %2466 = vmatprep.mubr.f32.mxu0 %v839
      %2467 = vmatmul.mubr.f32.gmra.mxu0 %v1474
      %v2468 = vpop.f32.mrf.mxu0
      %v2469 = vadd.f32 %v2244, %v2468
      %v2470 = vpop.f32.mrf.mxu0
      %2471 = vmatprep.mubr.f32.mxu0 %v842
      %2472 = vmatmul.mubr.f32.gmra.mxu0 %v1488
      %v2473 = vpop.f32.mrf.mxu0
      %v2474 = vadd.f32 %v2249, %v2473
      %v2475 = vpop.f32.mrf.mxu0
      %2476 = vmatprep.mubr.f32.mxu0 %v844
      %2477 = vmatmul.mubr.f32.gmra.mxu0 %v1504
      %v2478 = vpop.f32.mrf.mxu0
      %v2479 = vadd.f32 %v2254, %v2478
      %v2480 = vpop.f32.mrf.mxu0
      %2481 = vmatprep.mubr.f32.mxu0 %v847
      %2482 = vmatmul.mubr.f32.gmra.mxu0 %v1518
      %v2483 = vpop.f32.mrf.mxu0
      %v2484 = vadd.f32 %v2259, %v2483
      %v2485 = vpop.f32.mrf.mxu0
      %2486 = vmatprep.mubr.f32.mxu0 %v849
      %2487 = vmatmul.mubr.f32.gmra.mxu0 %v1534
      %v2488 = vpop.f32.mrf.mxu0
      %v2489 = vadd.f32 %v2264, %v2488
      %v2490 = vpop.f32.mrf.mxu0
      %2491 = vmatprep.mubr.f32.mxu0 %v852
      %2492 = vmatmul.mubr.f32.gmra.mxu0 %v1548
      %v2493 = vpop.f32.mrf.mxu0
      %v2494 = vadd.f32 %v2269, %v2493
      %v2495 = vpop.f32.mrf.mxu0
      %2496 = vmatprep.mubr.f32.mxu0 %v854
      %2497 = vmatmul.mubr.f32.gmra.mxu0 %v1564
      %v2498 = vpop.f32.mrf.mxu0
      %v2499 = vadd.f32 %v2274, %v2498
      %v2500 = vpop.f32.mrf.mxu0
      %2501 = vmatprep.mubr.f32.mxu0 %v857
      %2502 = vmatmul.mubr.f32.gmra.mxu0 %v1578
      %v2503 = vpop.f32.mrf.mxu0
      %v2504 = vadd.f32 %v2279, %v2503
      %v2505 = vpop.f32.mrf.mxu0
      %2506 = vmatprep.mubr.f32.mxu0 %v859
      %2507 = vmatmul.mubr.f32.gmra.mxu0 %v1594
      %v2508 = vpop.f32.mrf.mxu0
      %v2509 = vadd.f32 %v2284, %v2508
      %v2510 = vpop.f32.mrf.mxu0
      %2511 = vmatprep.mubr.f32.mxu0 %v862
      %2512 = vmatmul.mubr.f32.gmra.mxu0 %v1608
      %v2513 = vpop.f32.mrf.mxu0
      %v2514 = vadd.f32 %v2289, %v2513
      %v2515 = vpop.f32.mrf.mxu0
      %2516 = vmatprep.mubr.f32.mxu0 %v864
      %2517 = vmatmul.mubr.f32.gmra.mxu0 %v1624
      %v2518 = vpop.f32.mrf.mxu0
      %v2519 = vadd.f32 %v2294, %v2518
      %v2520 = vpop.f32.mrf.mxu0
      %2521 = vdwg.mxu0
      %2522 = vmatprep.subr.mxu0 0.0
      %2523 = vmatpush1.msra.mxu0 %v2000
      %2524 = vmatprep.subr.mxu0 0.0
      %2525 = vmatpush1.msra.mxu0 %v1999
      %2526 = vmatprep.subr.mxu0 0.0
      %2527 = vmatpush1.msra.mxu0 %v1998
      %2528 = vmatprep.subr.mxu0 0.0
      %2529 = vmatpush1.msra.mxu0 %v1997
      %2530 = vmatprep.subr.mxu0 0.0
      %2531 = vmatpush1.msra.mxu0 %v1996
      %2532 = vmatprep.subr.mxu0 0.0
      %2533 = vmatpush1.msra.mxu0 %v1995
      %2534 = vmatprep.subr.mxu0 0.0
      %2535 = vmatpush1.msra.mxu0 %v1994
      %2536 = vmatprep.subr.mxu0 0.0
      %2537 = vmatpush1.msra.mxu0 %v1993
      %2538 = vmatprep.subr.mxu0 0.0
      %2539 = vmatpush1.msra.mxu0 %v1992
      %2540 = vmatprep.subr.mxu0 0.0
      %2541 = vmatpush1.msra.mxu0 %v1991
      %2542 = vmatprep.subr.mxu0 0.0
      %2543 = vmatpush1.msra.mxu0 %v1990
      %2544 = vmatprep.subr.mxu0 0.0
      %2545 = vmatpush1.msra.mxu0 %v1989
      %2546 = vmatprep.subr.mxu0 0.0
      %2547 = vmatpush1.msra.mxu0 %v1988
      %2548 = vmatprep.subr.mxu0 0.0
      %2549 = vmatpush1.msra.mxu0 %v1987
      %2550 = vmatprep.subr.mxu0 0.0
      %2551 = vmatpush1.msra.mxu0 %v1986
      %2552 = vmatprep.subr.mxu0 0.0
      %2553 = vmatpush1.msra.mxu0 %v1985
      %2554 = vmatprep.subr.mxu0 0.0
      %2555 = vmatpush2.msra.mxu0 %v2016
      %2556 = vmatprep.subr.mxu0 0.0
      %2557 = vmatpush2.msra.mxu0 %v2015
      %2558 = vmatprep.subr.mxu0 0.0
      %2559 = vmatpush2.msra.mxu0 %v2014
      %2560 = vmatprep.subr.mxu0 0.0
      %2561 = vmatpush2.msra.mxu0 %v2013
      %2562 = vmatprep.subr.mxu0 0.0
      %2563 = vmatpush2.msra.mxu0 %v2012
      %2564 = vmatprep.subr.mxu0 0.0
      %2565 = vmatpush2.msra.mxu0 %v2011
      %2566 = vmatprep.subr.mxu0 0.0
      %2567 = vmatpush2.msra.mxu0 %v2010
      %2568 = vmatprep.subr.mxu0 0.0
      %2569 = vmatpush2.msra.mxu0 %v2009
      %2570 = vmatprep.subr.mxu0 0.0
      %2571 = vmatpush2.msra.mxu0 %v2008
      %2572 = vmatprep.subr.mxu0 0.0
      %2573 = vmatpush2.msra.mxu0 %v2007
      %2574 = vmatprep.subr.mxu0 0.0
      %2575 = vmatpush2.msra.mxu0 %v2006
      %2576 = vmatprep.subr.mxu0 0.0
      %2577 = vmatpush2.msra.mxu0 %v2005
      %2578 = vmatprep.subr.mxu0 0.0
      %2579 = vmatpush2.msra.mxu0 %v2004
      %2580 = vmatprep.subr.mxu0 0.0
      %2581 = vmatpush2.msra.mxu0 %v2003
      %2582 = vmatprep.subr.mxu0 0.0
      %2583 = vmatpush2.msra.mxu0 %v2002
      %2584 = vmatprep.subr.mxu0 0.0
      %2585 = vmatpush2.msra.mxu0 %v2001
      %2586 = vmatprep.mubr.f32.mxu0 %v1164
      %2587 = vmatmul.mubr.f32.gmra.mxu0 %v1161
      %v2588 = vpop.f32.mrf.mxu0
      %v2589 = vadd.f32 %v2364, %v2588
      %v2590 = vpop.f32.mrf.mxu0
      %2591 = vmatprep.mubr.f32.mxu0 %v1178
      %2592 = vmatmul.mubr.f32.gmra.mxu0 %v1176
      %v2593 = vpop.f32.mrf.mxu0
      %v2594 = vadd.f32 %v2369, %v2593
      %v2595 = vpop.f32.mrf.mxu0
      %2596 = vmatprep.mubr.f32.mxu0 %v1194
      %2597 = vmatmul.mubr.f32.gmra.mxu0 %v1191
      %v2598 = vpop.f32.mrf.mxu0
      %v2599 = vadd.f32 %v2374, %v2598
      %v2600 = vpop.f32.mrf.mxu0
      %2601 = vmatprep.mubr.f32.mxu0 %v1208
      %2602 = vmatmul.mubr.f32.gmra.mxu0 %v1206
      %v2603 = vpop.f32.mrf.mxu0
      %v2604 = vadd.f32 %v2379, %v2603
      %v2605 = vpop.f32.mrf.mxu0
      %2606 = vmatprep.mubr.f32.mxu0 %v1224
      %2607 = vmatmul.mubr.f32.gmra.mxu0 %v1221
      %v2608 = vpop.f32.mrf.mxu0
      %v2609 = vadd.f32 %v2384, %v2608
      %v2610 = vpop.f32.mrf.mxu0
      %2611 = vmatprep.mubr.f32.mxu0 %v1238
      %2612 = vmatmul.mubr.f32.gmra.mxu0 %v1236
      %v2613 = vpop.f32.mrf.mxu0
      %v2614 = vadd.f32 %v2389, %v2613
      %v2615 = vpop.f32.mrf.mxu0
      %2616 = vmatprep.mubr.f32.mxu0 %v1254
      %2617 = vmatmul.mubr.f32.gmra.mxu0 %v1251
      %v2618 = vpop.f32.mrf.mxu0
      %v2619 = vadd.f32 %v2394, %v2618
      %v2620 = vpop.f32.mrf.mxu0
      %2621 = vmatprep.mubr.f32.mxu0 %v1268
      %2622 = vmatmul.mubr.f32.gmra.mxu0 %v1266
      %v2623 = vpop.f32.mrf.mxu0
      %v2624 = vadd.f32 %v2399, %v2623
      %v2625 = vpop.f32.mrf.mxu0
      %2626 = vmatprep.mubr.f32.mxu0 %v1284
      %2627 = vmatmul.mubr.f32.gmra.mxu0 %v1281
      %v2628 = vpop.f32.mrf.mxu0
      %v2629 = vadd.f32 %v2404, %v2628
      %v2630 = vpop.f32.mrf.mxu0
      %2631 = vmatprep.mubr.f32.mxu0 %v1298
      %2632 = vmatmul.mubr.f32.gmra.mxu0 %v1296
      %v2633 = vpop.f32.mrf.mxu0
      %v2634 = vadd.f32 %v2409, %v2633
      %v2635 = vpop.f32.mrf.mxu0
      %2636 = vmatprep.mubr.f32.mxu0 %v1314
      %2637 = vmatmul.mubr.f32.gmra.mxu0 %v1311
      %v2638 = vpop.f32.mrf.mxu0
      %v2639 = vadd.f32 %v2414, %v2638
      %v2640 = vpop.f32.mrf.mxu0
      %2641 = vmatprep.mubr.f32.mxu0 %v1328
      %2642 = vmatmul.mubr.f32.gmra.mxu0 %v1326
      %v2643 = vpop.f32.mrf.mxu0
      %v2644 = vadd.f32 %v2419, %v2643
      %v2645 = vpop.f32.mrf.mxu0
      %2646 = vmatprep.mubr.f32.mxu0 %v1344
      %2647 = vmatmul.mubr.f32.gmra.mxu0 %v1341
      %v2648 = vpop.f32.mrf.mxu0
      %v2649 = vadd.f32 %v2424, %v2648
      %v2650 = vpop.f32.mrf.mxu0
      %2651 = vmatprep.mubr.f32.mxu0 %v1358
      %2652 = vmatmul.mubr.f32.gmra.mxu0 %v1356
      %v2653 = vpop.f32.mrf.mxu0
      %v2654 = vadd.f32 %v2429, %v2653
      %v2655 = vpop.f32.mrf.mxu0
      %2656 = vmatprep.mubr.f32.mxu0 %v1374
      %2657 = vmatmul.mubr.f32.gmra.mxu0 %v1371
      %v2658 = vpop.f32.mrf.mxu0
      %v2659 = vadd.f32 %v2434, %v2658
      %v2660 = vpop.f32.mrf.mxu0
      %2661 = vmatprep.mubr.f32.mxu0 %v1388
      %2662 = vmatmul.mubr.f32.gmra.mxu0 %v1386
      %v2663 = vpop.f32.mrf.mxu0
      %v2664 = vadd.f32 %v2439, %v2663
      %v2665 = vpop.f32.mrf.mxu0
      %2666 = vmatprep.mubr.f32.mxu0 %v1404
      %2667 = vmatmul.mubr.f32.gmra.mxu0 %v1401
      %v2668 = vpop.f32.mrf.mxu0
      %v2669 = vadd.f32 %v2444, %v2668
      %v2670 = vpop.f32.mrf.mxu0
      %2671 = vmatprep.mubr.f32.mxu0 %v1418
      %2672 = vmatmul.mubr.f32.gmra.mxu0 %v1416
      %v2673 = vpop.f32.mrf.mxu0
      %v2674 = vadd.f32 %v2449, %v2673
      %v2675 = vpop.f32.mrf.mxu0
      %2676 = vmatprep.mubr.f32.mxu0 %v1434
      %2677 = vmatmul.mubr.f32.gmra.mxu0 %v1431
      %v2678 = vpop.f32.mrf.mxu0
      %v2679 = vadd.f32 %v2454, %v2678
      %v2680 = vpop.f32.mrf.mxu0
      %2681 = vmatprep.mubr.f32.mxu0 %v1448
      %2682 = vmatmul.mubr.f32.gmra.mxu0 %v1446
      %v2683 = vpop.f32.mrf.mxu0
      %v2684 = vadd.f32 %v2459, %v2683
      %v2685 = vpop.f32.mrf.mxu0
      %2686 = vmatprep.mubr.f32.mxu0 %v1464
      %2687 = vmatmul.mubr.f32.gmra.mxu0 %v1461
      %v2688 = vpop.f32.mrf.mxu0
      %v2689 = vadd.f32 %v2464, %v2688
      %v2690 = vpop.f32.mrf.mxu0
      %2691 = vmatprep.mubr.f32.mxu0 %v1478
      %2692 = vmatmul.mubr.f32.gmra.mxu0 %v1476
      %v2693 = vpop.f32.mrf.mxu0
      %v2694 = vadd.f32 %v2469, %v2693
      %v2695 = vpop.f32.mrf.mxu0
      %2696 = vmatprep.mubr.f32.mxu0 %v1494
      %2697 = vmatmul.mubr.f32.gmra.mxu0 %v1491
      %v2698 = vpop.f32.mrf.mxu0
      %v2699 = vadd.f32 %v2474, %v2698
      %v2700 = vpop.f32.mrf.mxu0
      %2701 = vmatprep.mubr.f32.mxu0 %v1508
      %2702 = vmatmul.mubr.f32.gmra.mxu0 %v1506
      %v2703 = vpop.f32.mrf.mxu0
      %v2704 = vadd.f32 %v2479, %v2703
      %v2705 = vpop.f32.mrf.mxu0
      %2706 = vmatprep.mubr.f32.mxu0 %v1524
      %2707 = vmatmul.mubr.f32.gmra.mxu0 %v1521
      %v2708 = vpop.f32.mrf.mxu0
      %v2709 = vadd.f32 %v2484, %v2708
      %v2710 = vpop.f32.mrf.mxu0
      %2711 = vmatprep.mubr.f32.mxu0 %v1538
      %2712 = vmatmul.mubr.f32.gmra.mxu0 %v1536
      %v2713 = vpop.f32.mrf.mxu0
      %v2714 = vadd.f32 %v2489, %v2713
      %v2715 = vpop.f32.mrf.mxu0
      %2716 = vmatprep.mubr.f32.mxu0 %v1554
      %2717 = vmatmul.mubr.f32.gmra.mxu0 %v1551
      %v2718 = vpop.f32.mrf.mxu0
      %v2719 = vadd.f32 %v2494, %v2718
      %v2720 = vpop.f32.mrf.mxu0
      %2721 = vmatprep.mubr.f32.mxu0 %v1568
      %2722 = vmatmul.mubr.f32.gmra.mxu0 %v1566
      %v2723 = vpop.f32.mrf.mxu0
      %v2724 = vadd.f32 %v2499, %v2723
      %v2725 = vpop.f32.mrf.mxu0
      %2726 = vmatprep.mubr.f32.mxu0 %v1584
      %2727 = vmatmul.mubr.f32.gmra.mxu0 %v1581
      %v2728 = vpop.f32.mrf.mxu0
      %v2729 = vadd.f32 %v2504, %v2728
      %v2730 = vpop.f32.mrf.mxu0
      %2731 = vmatprep.mubr.f32.mxu0 %v1598
      %2732 = vmatmul.mubr.f32.gmra.mxu0 %v1596
      %v2733 = vpop.f32.mrf.mxu0
      %v2734 = vadd.f32 %v2509, %v2733
      %v2735 = vpop.f32.mrf.mxu0
      %2736 = vmatprep.mubr.f32.mxu0 %v1614
      %2737 = vmatmul.mubr.f32.gmra.mxu0 %v1611
      %v2738 = vpop.f32.mrf.mxu0
      %v2739 = vadd.f32 %v2514, %v2738
      %v2740 = vpop.f32.mrf.mxu0
      %2741 = vmatprep.mubr.f32.mxu0 %v1628
      %2742 = vmatmul.mubr.f32.gmra.mxu0 %v1626
      %v2743 = vpop.f32.mrf.mxu0
      %v2744 = vadd.f32 %v2519, %v2743
      %v2745 = vpop.f32.mrf.mxu0
      %2746 = vdwg.mxu0
      %2747 = vmatprep.subr.mxu0 0.0
      %2748 = vmatpush1.msra.mxu0 %v2032
      %2749 = vmatprep.subr.mxu0 0.0
      %2750 = vmatpush1.msra.mxu0 %v2031
      %2751 = vmatprep.subr.mxu0 0.0
      %2752 = vmatpush1.msra.mxu0 %v2030
      %2753 = vmatprep.subr.mxu0 0.0
      %2754 = vmatpush1.msra.mxu0 %v2029
      %2755 = vmatprep.subr.mxu0 0.0
      %2756 = vmatpush1.msra.mxu0 %v2028
      %2757 = vmatprep.subr.mxu0 0.0
      %2758 = vmatpush1.msra.mxu0 %v2027
      %2759 = vmatprep.subr.mxu0 0.0
      %2760 = vmatpush1.msra.mxu0 %v2026
      %2761 = vmatprep.subr.mxu0 0.0
      %2762 = vmatpush1.msra.mxu0 %v2025
      %2763 = vmatprep.subr.mxu0 0.0
      %2764 = vmatpush1.msra.mxu0 %v2024
      %2765 = vmatprep.subr.mxu0 0.0
      %2766 = vmatpush1.msra.mxu0 %v2023
      %2767 = vmatprep.subr.mxu0 0.0
      %2768 = vmatpush1.msra.mxu0 %v2022
      %2769 = vmatprep.subr.mxu0 0.0
      %2770 = vmatpush1.msra.mxu0 %v2021
      %2771 = vmatprep.subr.mxu0 0.0
      %2772 = vmatpush1.msra.mxu0 %v2020
      %2773 = vmatprep.subr.mxu0 0.0
      %2774 = vmatpush1.msra.mxu0 %v2019
      %2775 = vmatprep.subr.mxu0 0.0
      %2776 = vmatpush1.msra.mxu0 %v2018
      %2777 = vmatprep.subr.mxu0 0.0
      %2778 = vmatpush1.msra.mxu0 %v2017
      %2779 = vmatprep.subr.mxu0 0.0
      %2780 = vmatpush2.msra.mxu0 %v2048
      %2781 = vmatprep.subr.mxu0 0.0
      %2782 = vmatpush2.msra.mxu0 %v2047
      %2783 = vmatprep.subr.mxu0 0.0
      %2784 = vmatpush2.msra.mxu0 %v2046
      %2785 = vmatprep.subr.mxu0 0.0
      %2786 = vmatpush2.msra.mxu0 %v2045
      %2787 = vmatprep.subr.mxu0 0.0
      %2788 = vmatpush2.msra.mxu0 %v2044
      %2789 = vmatprep.subr.mxu0 0.0
      %2790 = vmatpush2.msra.mxu0 %v2043
      %2791 = vmatprep.subr.mxu0 0.0
      %2792 = vmatpush2.msra.mxu0 %v2042
      %2793 = vmatprep.subr.mxu0 0.0
      %2794 = vmatpush2.msra.mxu0 %v2041
      %2795 = vmatprep.subr.mxu0 0.0
      %2796 = vmatpush2.msra.mxu0 %v2040
      %2797 = vmatprep.subr.mxu0 0.0
      %2798 = vmatpush2.msra.mxu0 %v2039
      %2799 = vmatprep.subr.mxu0 0.0
      %2800 = vmatpush2.msra.mxu0 %v2038
      %2801 = vmatprep.subr.mxu0 0.0
      %2802 = vmatpush2.msra.mxu0 %v2037
      %2803 = vmatprep.subr.mxu0 0.0
      %2804 = vmatpush2.msra.mxu0 %v2036
      %2805 = vmatprep.subr.mxu0 0.0
      %2806 = vmatpush2.msra.mxu0 %v2035
      %2807 = vmatprep.subr.mxu0 0.0
      %2808 = vmatpush2.msra.mxu0 %v2034
      %2809 = vmatprep.subr.mxu0 0.0
      %2810 = vmatpush2.msra.mxu0 %v2033
      %2811 = vmatprep.mubr.f32.mxu0 %v1167
      %2812 = vmatmul.mubr.f32.gmra.mxu0 %v995
      %v2813 = vpop.f32.mrf.mxu0
      %v2814 = vadd.f32 %v2589, %v2813
      %v2815 = vpop.f32.mrf.mxu0
      %2816 = vmatprep.mubr.f32.mxu0 %v1180
      %2817 = vmatmul.mubr.f32.gmra.mxu0 %v997
      %v2818 = vpop.f32.mrf.mxu0
      %v2819 = vadd.f32 %v2594, %v2818
      %v2820 = vpop.f32.mrf.mxu0
      %2821 = vmatprep.mubr.f32.mxu0 %v1197
      %2822 = vmatmul.mubr.f32.gmra.mxu0 %v1000
      %v2823 = vpop.f32.mrf.mxu0
      %v2824 = vadd.f32 %v2599, %v2823
      %v2825 = vpop.f32.mrf.mxu0
      %2826 = vmatprep.mubr.f32.mxu0 %v1210
      %2827 = vmatmul.mubr.f32.gmra.mxu0 %v1002
      %v2828 = vpop.f32.mrf.mxu0
      %v2829 = vadd.f32 %v2604, %v2828
      %v2830 = vpop.f32.mrf.mxu0
      %2831 = vmatprep.mubr.f32.mxu0 %v1227
      %2832 = vmatmul.mubr.f32.gmra.mxu0 %v1005
      %v2833 = vpop.f32.mrf.mxu0
      %v2834 = vadd.f32 %v2609, %v2833
      %v2835 = vpop.f32.mrf.mxu0
      %2836 = vmatprep.mubr.f32.mxu0 %v1240
      %2837 = vmatmul.mubr.f32.gmra.mxu0 %v1007
      %v2838 = vpop.f32.mrf.mxu0
      %v2839 = vadd.f32 %v2614, %v2838
      %v2840 = vpop.f32.mrf.mxu0
      %2841 = vmatprep.mubr.f32.mxu0 %v1257
      %2842 = vmatmul.mubr.f32.gmra.mxu0 %v1010
      %v2843 = vpop.f32.mrf.mxu0
      %v2844 = vadd.f32 %v2619, %v2843
      %v2845 = vpop.f32.mrf.mxu0
      %2846 = vmatprep.mubr.f32.mxu0 %v1270
      %2847 = vmatmul.mubr.f32.gmra.mxu0 %v1012
      %v2848 = vpop.f32.mrf.mxu0
      %v2849 = vadd.f32 %v2624, %v2848
      %v2850 = vpop.f32.mrf.mxu0
      %2851 = vmatprep.mubr.f32.mxu0 %v1287
      %2852 = vmatmul.mubr.f32.gmra.mxu0 %v1015
      %v2853 = vpop.f32.mrf.mxu0
      %v2854 = vadd.f32 %v2629, %v2853
      %v2855 = vpop.f32.mrf.mxu0
      %2856 = vmatprep.mubr.f32.mxu0 %v1300
      %2857 = vmatmul.mubr.f32.gmra.mxu0 %v1017
      %v2858 = vpop.f32.mrf.mxu0
      %v2859 = vadd.f32 %v2634, %v2858
      %v2860 = vpop.f32.mrf.mxu0
      %2861 = vmatprep.mubr.f32.mxu0 %v1317
      %2862 = vmatmul.mubr.f32.gmra.mxu0 %v1020
      %v2863 = vpop.f32.mrf.mxu0
      %v2864 = vadd.f32 %v2639, %v2863
      %v2865 = vpop.f32.mrf.mxu0
      %2866 = vmatprep.mubr.f32.mxu0 %v1330
      %2867 = vmatmul.mubr.f32.gmra.mxu0 %v1022
      %v2868 = vpop.f32.mrf.mxu0
      %v2869 = vadd.f32 %v2644, %v2868
      %v2870 = vpop.f32.mrf.mxu0
      %2871 = vmatprep.mubr.f32.mxu0 %v1347
      %2872 = vmatmul.mubr.f32.gmra.mxu0 %v1025
      %v2873 = vpop.f32.mrf.mxu0
      %v2874 = vadd.f32 %v2649, %v2873
      %v2875 = vpop.f32.mrf.mxu0
      %2876 = vmatprep.mubr.f32.mxu0 %v1360
      %2877 = vmatmul.mubr.f32.gmra.mxu0 %v1027
      %v2878 = vpop.f32.mrf.mxu0
      %v2879 = vadd.f32 %v2654, %v2878
      %v2880 = vpop.f32.mrf.mxu0
      %2881 = vmatprep.mubr.f32.mxu0 %v1377
      %2882 = vmatmul.mubr.f32.gmra.mxu0 %v1030
      %v2883 = vpop.f32.mrf.mxu0
      %v2884 = vadd.f32 %v2659, %v2883
      %v2885 = vpop.f32.mrf.mxu0
      %2886 = vmatprep.mubr.f32.mxu0 %v1390
      %2887 = vmatmul.mubr.f32.gmra.mxu0 %v1032
      %v2888 = vpop.f32.mrf.mxu0
      %v2889 = vadd.f32 %v2664, %v2888
      %v2890 = vpop.f32.mrf.mxu0
      %2891 = vmatprep.mubr.f32.mxu0 %v1407
      %2892 = vmatmul.mubr.f32.gmra.mxu0 %v1035
      %v2893 = vpop.f32.mrf.mxu0
      %v2894 = vadd.f32 %v2669, %v2893
      %v2895 = vpop.f32.mrf.mxu0
      %2896 = vmatprep.mubr.f32.mxu0 %v1420
      %2897 = vmatmul.mubr.f32.gmra.mxu0 %v1037
      %v2898 = vpop.f32.mrf.mxu0
      %v2899 = vadd.f32 %v2674, %v2898
      %v2900 = vpop.f32.mrf.mxu0
      %2901 = vmatprep.mubr.f32.mxu0 %v1437
      %2902 = vmatmul.mubr.f32.gmra.mxu0 %v1040
      %v2903 = vpop.f32.mrf.mxu0
      %v2904 = vadd.f32 %v2679, %v2903
      %v2905 = vpop.f32.mrf.mxu0
      %2906 = vmatprep.mubr.f32.mxu0 %v1450
      %2907 = vmatmul.mubr.f32.gmra.mxu0 %v1042
      %v2908 = vpop.f32.mrf.mxu0
      %v2909 = vadd.f32 %v2684, %v2908
      %v2910 = vpop.f32.mrf.mxu0
      %2911 = vmatprep.mubr.f32.mxu0 %v1467
      %2912 = vmatmul.mubr.f32.gmra.mxu0 %v1045
      %v2913 = vpop.f32.mrf.mxu0
      %v2914 = vadd.f32 %v2689, %v2913
      %v2915 = vpop.f32.mrf.mxu0
      %2916 = vmatprep.mubr.f32.mxu0 %v1480
      %2917 = vmatmul.mubr.f32.gmra.mxu0 %v1047
      %v2918 = vpop.f32.mrf.mxu0
      %v2919 = vadd.f32 %v2694, %v2918
      %v2920 = vpop.f32.mrf.mxu0
      %2921 = vmatprep.mubr.f32.mxu0 %v1497
      %2922 = vmatmul.mubr.f32.gmra.mxu0 %v1050
      %v2923 = vpop.f32.mrf.mxu0
      %v2924 = vadd.f32 %v2699, %v2923
      %v2925 = vpop.f32.mrf.mxu0
      %2926 = vmatprep.mubr.f32.mxu0 %v1510
      %2927 = vmatmul.mubr.f32.gmra.mxu0 %v1052
      %v2928 = vpop.f32.mrf.mxu0
      %v2929 = vadd.f32 %v2704, %v2928
      %v2930 = vpop.f32.mrf.mxu0
      %2931 = vmatprep.mubr.f32.mxu0 %v1527
      %2932 = vmatmul.mubr.f32.gmra.mxu0 %v1055
      %v2933 = vpop.f32.mrf.mxu0
      %v2934 = vadd.f32 %v2709, %v2933
      %v2935 = vpop.f32.mrf.mxu0
      %2936 = vmatprep.mubr.f32.mxu0 %v1540
      %2937 = vmatmul.mubr.f32.gmra.mxu0 %v1057
      %v2938 = vpop.f32.mrf.mxu0
      %v2939 = vadd.f32 %v2714, %v2938
      %v2940 = vpop.f32.mrf.mxu0
      %2941 = vmatprep.mubr.f32.mxu0 %v1557
      %2942 = vmatmul.mubr.f32.gmra.mxu0 %v1060
      %v2943 = vpop.f32.mrf.mxu0
      %v2944 = vadd.f32 %v2719, %v2943
      %v2945 = vpop.f32.mrf.mxu0
      %2946 = vmatprep.mubr.f32.mxu0 %v1570
      %2947 = vmatmul.mubr.f32.gmra.mxu0 %v1062
      %v2948 = vpop.f32.mrf.mxu0
      %v2949 = vadd.f32 %v2724, %v2948
      %v2950 = vpop.f32.mrf.mxu0
      %2951 = vmatprep.mubr.f32.mxu0 %v1587
      %2952 = vmatmul.mubr.f32.gmra.mxu0 %v1065
      %v2953 = vpop.f32.mrf.mxu0
      %v2954 = vadd.f32 %v2729, %v2953
      %v2955 = vpop.f32.mrf.mxu0
      %2956 = vmatprep.mubr.f32.mxu0 %v1600
      %2957 = vmatmul.mubr.f32.gmra.mxu0 %v1067
      %v2958 = vpop.f32.mrf.mxu0
      %v2959 = vadd.f32 %v2734, %v2958
      %v2960 = vpop.f32.mrf.mxu0
      %2961 = vmatprep.mubr.f32.mxu0 %v1617
      %2962 = vmatmul.mubr.f32.gmra.mxu0 %v1070
      %v2963 = vpop.f32.mrf.mxu0
      %v2964 = vadd.f32 %v2739, %v2963
      %v2965 = vpop.f32.mrf.mxu0
      %2966 = vmatprep.mubr.f32.mxu0 %v1630
      %2967 = vmatmul.mubr.f32.gmra.mxu0 %v1072
      %v2968 = vpop.f32.mrf.mxu0
      %v2969 = vadd.f32 %v2744, %v2968
      %v2970 = vpop.f32.mrf.mxu0
      %2971 = vdwg.mxu0
      %2972 = vmatprep.subr.mxu0 0.0
      %2973 = vmatpush1.msra.mxu0 %v2064
      %2974 = vmatprep.subr.mxu0 0.0
      %2975 = vmatpush1.msra.mxu0 %v2063
      %2976 = vmatprep.subr.mxu0 0.0
      %2977 = vmatpush1.msra.mxu0 %v2062
      %2978 = vmatprep.subr.mxu0 0.0
      %2979 = vmatpush1.msra.mxu0 %v2061
      %2980 = vmatprep.subr.mxu0 0.0
      %2981 = vmatpush1.msra.mxu0 %v2060
      %2982 = vmatprep.subr.mxu0 0.0
      %2983 = vmatpush1.msra.mxu0 %v2059
      %2984 = vmatprep.subr.mxu0 0.0
      %2985 = vmatpush1.msra.mxu0 %v2058
      %2986 = vmatprep.subr.mxu0 0.0
      %2987 = vmatpush1.msra.mxu0 %v2057
      %2988 = vmatprep.subr.mxu0 0.0
      %2989 = vmatpush1.msra.mxu0 %v2056
      %2990 = vmatprep.subr.mxu0 0.0
      %2991 = vmatpush1.msra.mxu0 %v2055
      %2992 = vmatprep.subr.mxu0 0.0
      %2993 = vmatpush1.msra.mxu0 %v2054
      %2994 = vmatprep.subr.mxu0 0.0
      %2995 = vmatpush1.msra.mxu0 %v2053
      %2996 = vmatprep.subr.mxu0 0.0
      %2997 = vmatpush1.msra.mxu0 %v2052
      %2998 = vmatprep.subr.mxu0 0.0
      %2999 = vmatpush1.msra.mxu0 %v2051
      %3000 = vmatprep.subr.mxu0 0.0
      %3001 = vmatpush1.msra.mxu0 %v2050
      %3002 = vmatprep.subr.mxu0 0.0
      %3003 = vmatpush1.msra.mxu0 %v2049
      %3004 = vmatprep.subr.mxu0 0.0
      %3005 = vmatpush2.msra.mxu0 0.0
      %3006 = vmatprep.subr.mxu0 0.0
      %3007 = vmatpush2.msra.mxu0 0.0
      %3008 = vmatprep.subr.mxu0 0.0
      %3009 = vmatpush2.msra.mxu0 0.0
      %3010 = vmatprep.subr.mxu0 0.0
      %3011 = vmatpush2.msra.mxu0 0.0
      %3012 = vmatprep.subr.mxu0 0.0
      %3013 = vmatpush2.msra.mxu0 0.0
      %3014 = vmatprep.subr.mxu0 0.0
      %3015 = vmatpush2.msra.mxu0 0.0
      %3016 = vmatprep.subr.mxu0 0.0
      %3017 = vmatpush2.msra.mxu0 0.0
      %3018 = vmatprep.subr.mxu0 0.0
      %3019 = vmatpush2.msra.mxu0 0.0
      %3020 = vmatprep.subr.mxu0 0.0
      %3021 = vmatpush2.msra.mxu0 0.0
      %3022 = vmatprep.subr.mxu0 0.0
      %3023 = vmatpush2.msra.mxu0 0.0
      %3024 = vmatprep.subr.mxu0 0.0
      %3025 = vmatpush2.msra.mxu0 0.0
      %3026 = vmatprep.subr.mxu0 0.0
      %3027 = vmatpush2.msra.mxu0 0.0
      %3028 = vmatprep.subr.mxu0 0.0
      %3029 = vmatpush2.msra.mxu0 0.0
      %3030 = vmatprep.subr.mxu0 0.0
      %3031 = vmatpush2.msra.mxu0 0.0
      %3032 = vmatprep.subr.mxu0 0.0
      %3033 = vmatpush2.msra.mxu0 0.0
      %3034 = vmatprep.subr.mxu0 0.0
      %3035 = vmatpush2.msra.mxu0 0.0
      %3036 = vmatprep.mubr.f32.mxu0 0.0
      %3037 = vmatmul.mubr.f32.gmra.mxu0 %v1170
      %v3038 = vpop.f32.mrf.mxu0
      %v3039 = vadd.f32 %v2814, %v3038
      %v3040 = vpop.f32.mrf.mxu0
      %3041 = vmatprep.mubr.f32.mxu0 0.0
      %3042 = vmatmul.mubr.f32.gmra.mxu0 %v1182
      %v3043 = vpop.f32.mrf.mxu0
      %v3044 = vadd.f32 %v2819, %v3043
      %v3045 = vpop.f32.mrf.mxu0
      %3046 = vmatprep.mubr.f32.mxu0 0.0
      %3047 = vmatmul.mubr.f32.gmra.mxu0 %v1200
      %v3048 = vpop.f32.mrf.mxu0
      %v3049 = vadd.f32 %v2824, %v3048
      %v3050 = vpop.f32.mrf.mxu0
      %3051 = vmatprep.mubr.f32.mxu0 0.0
      %3052 = vmatmul.mubr.f32.gmra.mxu0 %v1212
      %v3053 = vpop.f32.mrf.mxu0
      %v3054 = vadd.f32 %v2829, %v3053
      %v3055 = vpop.f32.mrf.mxu0
      %3056 = vmatprep.mubr.f32.mxu0 0.0
      %3057 = vmatmul.mubr.f32.gmra.mxu0 %v1230
      %v3058 = vpop.f32.mrf.mxu0
      %v3059 = vadd.f32 %v2834, %v3058
      %v3060 = vpop.f32.mrf.mxu0
      %3061 = vmatprep.mubr.f32.mxu0 0.0
      %3062 = vmatmul.mubr.f32.gmra.mxu0 %v1242
      %v3063 = vpop.f32.mrf.mxu0
      %v3064 = vadd.f32 %v2839, %v3063
      %v3065 = vpop.f32.mrf.mxu0
      %3066 = vmatprep.mubr.f32.mxu0 0.0
      %3067 = vmatmul.mubr.f32.gmra.mxu0 %v1260
      %v3068 = vpop.f32.mrf.mxu0
      %v3069 = vadd.f32 %v2844, %v3068
      %v3070 = vpop.f32.mrf.mxu0
      %3071 = vmatprep.mubr.f32.mxu0 0.0
      %3072 = vmatmul.mubr.f32.gmra.mxu0 %v1272
      %v3073 = vpop.f32.mrf.mxu0
      %v3074 = vadd.f32 %v2849, %v3073
      %v3075 = vpop.f32.mrf.mxu0
      %3076 = vmatprep.mubr.f32.mxu0 0.0
      %3077 = vmatmul.mubr.f32.gmra.mxu0 %v1290
      %v3078 = vpop.f32.mrf.mxu0
      %v3079 = vadd.f32 %v2854, %v3078
      %v3080 = vpop.f32.mrf.mxu0
      %3081 = vmatprep.mubr.f32.mxu0 0.0
      %3082 = vmatmul.mubr.f32.gmra.mxu0 %v1302
      %v3083 = vpop.f32.mrf.mxu0
      %v3084 = vadd.f32 %v2859, %v3083
      %v3085 = vpop.f32.mrf.mxu0
      %3086 = vmatprep.mubr.f32.mxu0 0.0
      %3087 = vmatmul.mubr.f32.gmra.mxu0 %v1320
      %v3088 = vpop.f32.mrf.mxu0
      %v3089 = vadd.f32 %v2864, %v3088
      %v3090 = vpop.f32.mrf.mxu0
      %3091 = vmatprep.mubr.f32.mxu0 0.0
      %3092 = vmatmul.mubr.f32.gmra.mxu0 %v1332
      %v3093 = vpop.f32.mrf.mxu0
      %v3094 = vadd.f32 %v2869, %v3093
      %v3095 = vpop.f32.mrf.mxu0
      %3096 = vmatprep.mubr.f32.mxu0 0.0
      %3097 = vmatmul.mubr.f32.gmra.mxu0 %v1350
      %v3098 = vpop.f32.mrf.mxu0
      %v3099 = vadd.f32 %v2874, %v3098
      %v3100 = vpop.f32.mrf.mxu0
      %3101 = vmatprep.mubr.f32.mxu0 0.0
      %3102 = vmatmul.mubr.f32.gmra.mxu0 %v1362
      %v3103 = vpop.f32.mrf.mxu0
      %v3104 = vadd.f32 %v2879, %v3103
      %v3105 = vpop.f32.mrf.mxu0
      %3106 = vmatprep.mubr.f32.mxu0 0.0
      %3107 = vmatmul.mubr.f32.gmra.mxu0 %v1380
      %v3108 = vpop.f32.mrf.mxu0
      %v3109 = vadd.f32 %v2884, %v3108
      %v3110 = vpop.f32.mrf.mxu0
      %3111 = vmatprep.mubr.f32.mxu0 0.0
      %3112 = vmatmul.mubr.f32.gmra.mxu0 %v1392
      %v3113 = vpop.f32.mrf.mxu0
      %v3114 = vadd.f32 %v2889, %v3113
      %v3115 = vpop.f32.mrf.mxu0
      %3116 = vmatprep.mubr.f32.mxu0 0.0
      %3117 = vmatmul.mubr.f32.gmra.mxu0 %v1410
      %v3118 = vpop.f32.mrf.mxu0
      %v3119 = vadd.f32 %v2894, %v3118
      %v3120 = vpop.f32.mrf.mxu0
      %3121 = vmatprep.mubr.f32.mxu0 0.0
      %3122 = vmatmul.mubr.f32.gmra.mxu0 %v1422
      %v3123 = vpop.f32.mrf.mxu0
      %v3124 = vadd.f32 %v2899, %v3123
      %v3125 = vpop.f32.mrf.mxu0
      %3126 = vmatprep.mubr.f32.mxu0 0.0
      %3127 = vmatmul.mubr.f32.gmra.mxu0 %v1440
      %v3128 = vpop.f32.mrf.mxu0
      %v3129 = vadd.f32 %v2904, %v3128
      %v3130 = vpop.f32.mrf.mxu0
      %3131 = vmatprep.mubr.f32.mxu0 0.0
      %3132 = vmatmul.mubr.f32.gmra.mxu0 %v1452
      %v3133 = vpop.f32.mrf.mxu0
      %v3134 = vadd.f32 %v2909, %v3133
      %v3135 = vpop.f32.mrf.mxu0
      %3136 = vmatprep.mubr.f32.mxu0 0.0
      %3137 = vmatmul.mubr.f32.gmra.mxu0 %v1470
      %v3138 = vpop.f32.mrf.mxu0
      %v3139 = vadd.f32 %v2914, %v3138
      %v3140 = vpop.f32.mrf.mxu0
      %3141 = vmatprep.mubr.f32.mxu0 0.0
      %3142 = vmatmul.mubr.f32.gmra.mxu0 %v1482
      %v3143 = vpop.f32.mrf.mxu0
      %v3144 = vadd.f32 %v2919, %v3143
      %v3145 = vpop.f32.mrf.mxu0
      %3146 = vmatprep.mubr.f32.mxu0 0.0
      %3147 = vmatmul.mubr.f32.gmra.mxu0 %v1500
      %v3148 = vpop.f32.mrf.mxu0
      %v3149 = vadd.f32 %v2924, %v3148
      %v3150 = vpop.f32.mrf.mxu0
      %3151 = vmatprep.mubr.f32.mxu0 0.0
      %3152 = vmatmul.mubr.f32.gmra.mxu0 %v1512
      %v3153 = vpop.f32.mrf.mxu0
      %v3154 = vadd.f32 %v2929, %v3153
      %v3155 = vpop.f32.mrf.mxu0
      %3156 = vmatprep.mubr.f32.mxu0 0.0
      %3157 = vmatmul.mubr.f32.gmra.mxu0 %v1530
      %v3158 = vpop.f32.mrf.mxu0
      %v3159 = vadd.f32 %v2934, %v3158
      %v3160 = vpop.f32.mrf.mxu0
      %3161 = vmatprep.mubr.f32.mxu0 0.0
      %3162 = vmatmul.mubr.f32.gmra.mxu0 %v1542
      %v3163 = vpop.f32.mrf.mxu0
      %v3164 = vadd.f32 %v2939, %v3163
      %v3165 = vpop.f32.mrf.mxu0
      %3166 = vmatprep.mubr.f32.mxu0 0.0
      %3167 = vmatmul.mubr.f32.gmra.mxu0 %v1560
      %v3168 = vpop.f32.mrf.mxu0
      %v3169 = vadd.f32 %v2944, %v3168
      %v3170 = vpop.f32.mrf.mxu0
      %3171 = vmatprep.mubr.f32.mxu0 0.0
      %3172 = vmatmul.mubr.f32.gmra.mxu0 %v1572
      %v3173 = vpop.f32.mrf.mxu0
      %v3174 = vadd.f32 %v2949, %v3173
      %v3175 = vpop.f32.mrf.mxu0
      %3176 = vmatprep.mubr.f32.mxu0 0.0
      %3177 = vmatmul.mubr.f32.gmra.mxu0 %v1590
      %v3178 = vpop.f32.mrf.mxu0
      %v3179 = vadd.f32 %v2954, %v3178
      %v3180 = vpop.f32.mrf.mxu0
      %3181 = vmatprep.mubr.f32.mxu0 0.0
      %3182 = vmatmul.mubr.f32.gmra.mxu0 %v1602
      %v3183 = vpop.f32.mrf.mxu0
      %v3184 = vadd.f32 %v2959, %v3183
      %v3185 = vpop.f32.mrf.mxu0
      %3186 = vmatprep.mubr.f32.mxu0 0.0
      %3187 = vmatmul.mubr.f32.gmra.mxu0 %v1620
      %v3188 = vpop.f32.mrf.mxu0
      %v3189 = vadd.f32 %v2964, %v3188
      %v3190 = vpop.f32.mrf.mxu0
      %3191 = vmatprep.mubr.f32.mxu0 0.0
      %3192 = vmatmul.mubr.f32.gmra.mxu0 %v1632
      %v3193 = vpop.f32.mrf.mxu0
      %v3194 = vadd.f32 %v2969, %v3193
      %v3195 = vpop.f32.mrf.mxu0
      %3196 = vdwg.mxu0
      %v3197 = vmax.f32 %v3039, 0.0
      %v3198 = vmax.f32 %v3044, 0.0
      %v3199 = vmax.f32 %v3049, 0.0
      %v3200 = vmax.f32 %v3054, 0.0
      %v3201 = vmax.f32 %v3059, 0.0
      %v3202 = vmax.f32 %v3064, 0.0
      %v3203 = vmax.f32 %v3069, 0.0
      %v3204 = vmax.f32 %v3074, 0.0
      %v3205 = vmax.f32 %v3079, 0.0
      %v3206 = vmax.f32 %v3084, 0.0
      %v3207 = vmax.f32 %v3089, 0.0
      %v3208 = vmax.f32 %v3094, 0.0
      %v3209 = vmax.f32 %v3099, 0.0
      %v3210 = vmax.f32 %v3104, 0.0
      %v3211 = vmax.f32 %v3109, 0.0
      %v3212 = vmax.f32 %v3114, 0.0
      %v3213 = vmax.f32 %v3119, 0.0
      %v3214 = vmax.f32 %v3124, 0.0
      %v3215 = vmax.f32 %v3129, 0.0
      %v3216 = vmax.f32 %v3134, 0.0
      %v3217 = vmax.f32 %v3139, 0.0
      %v3218 = vmax.f32 %v3144, 0.0
      %v3219 = vmax.f32 %v3149, 0.0
      %v3220 = vmax.f32 %v3154, 0.0
      %v3221 = vmax.f32 %v3159, 0.0
      %v3222 = vmax.f32 %v3164, 0.0
      %v3223 = vmax.f32 %v3169, 0.0
      %v3224 = vmax.f32 %v3174, 0.0
      %v3225 = vmax.f32 %v3179, 0.0
      %v3226 = vmax.f32 %v3184, 0.0
      %v3227 = vmax.f32 %v3189, 0.0
      %v3228 = vmax.f32 %v3194, 0.0
      %3229 = vst [vmem:[#allocation2] sm:$0xff] %v3197
      %3230 = vst [vmem:[#allocation2 + $0x8] sm:$0xff] %v3198
      %3231 = vst [vmem:[#allocation2 + $0x10] sm:$0xff] %v3199
      %3232 = vst [vmem:[#allocation2 + $0x18] sm:$0xff] %v3200
      %3233 = vst [vmem:[#allocation2 + $0x20] sm:$0xff] %v3201
      %3234 = vst [vmem:[#allocation2 + $0x28] sm:$0xff] %v3202
      %3235 = vst [vmem:[#allocation2 + $0x30] sm:$0xff] %v3203
      %3236 = vst [vmem:[#allocation2 + $0x38] sm:$0xff] %v3204
      %3237 = vst [vmem:[#allocation2 + $0x40] sm:$0xff] %v3205
      %3238 = vst [vmem:[#allocation2 + $0x48] sm:$0xff] %v3206
      %3239 = vst [vmem:[#allocation2 + $0x50] sm:$0xff] %v3207
      %3240 = vst [vmem:[#allocation2 + $0x58] sm:$0xff] %v3208
      %3241 = vst [vmem:[#allocation2 + $0x60] sm:$0xff] %v3209
      %3242 = vst [vmem:[#allocation2 + $0x68] sm:$0xff] %v3210
      %3243 = vst [vmem:[#allocation2 + $0x70] sm:$0xff] %v3211
      %3244 = vst [vmem:[#allocation2 + $0x78] sm:$0xff] %v3212
      %3245 = vst [vmem:[#allocation2 + $0x80] sm:$0xff] %v3213
      %3246 = vst [vmem:[#allocation2 + $0x88] sm:$0xff] %v3214
      %3247 = vst [vmem:[#allocation2 + $0x90] sm:$0xff] %v3215
      %3248 = vst [vmem:[#allocation2 + $0x98] sm:$0xff] %v3216
      %3249 = vst [vmem:[#allocation2 + $0xa0] sm:$0xff] %v3217
      %3250 = vst [vmem:[#allocation2 + $0xa8] sm:$0xff] %v3218
      %3251 = vst [vmem:[#allocation2 + $0xb0] sm:$0xff] %v3219
      %3252 = vst [vmem:[#allocation2 + $0xb8] sm:$0xff] %v3220
      %3253 = vst [vmem:[#allocation2 + $0xc0] sm:$0xff] %v3221
      %3254 = vst [vmem:[#allocation2 + $0xc8] sm:$0xff] %v3222
      %3255 = vst [vmem:[#allocation2 + $0xd0] sm:$0xff] %v3223
      %3256 = vst [vmem:[#allocation2 + $0xd8] sm:$0xff] %v3224
      %3257 = vst [vmem:[#allocation2 + $0xe0] sm:$0xff] %v3225
      %3258 = vst [vmem:[#allocation2 + $0xe8] sm:$0xff] %v3226
      %3259 = vst [vmem:[#allocation2 + $0xf0] sm:$0xff] %v3227
      %3260 = vst [vmem:[#allocation2 + $0xf8] sm:$0xff] %v3228
      %v3261 = vadd.f32 %v3197, %v3198
      %v3262 = vadd.f32 %v3261, %v3199
      %v3263 = vadd.f32 %v3262, %v3200
      %v3264 = vadd.f32 %v3263, %v3201
      %v3265 = vadd.f32 %v3264, %v3202
      %v3266 = vadd.f32 %v3265, %v3203
      %v3267 = vadd.f32 %v3266, %v3204
      %v3268 = vadd.f32 %v3267, %v3205
      %v3269 = vadd.f32 %v3268, %v3206
      %v3270 = vadd.f32 %v3269, %v3207
      %v3271 = vadd.f32 %v3270, %v3208
      %v3272 = vadd.f32 %v3271, %v3209
      %v3273 = vadd.f32 %v3272, %v3210
      %v3274 = vadd.f32 %v3273, %v3211
      %v3275 = vadd.f32 %v3274, %v3212
      %v3276 = vadd.f32 %v3275, %v3213
      %v3277 = vadd.f32 %v3276, %v3214
      %v3278 = vadd.f32 %v3277, %v3215
      %v3279 = vadd.f32 %v3278, %v3216
      %v3280 = vadd.f32 %v3279, %v3217
      %v3281 = vadd.f32 %v3280, %v3218
      %v3282 = vadd.f32 %v3281, %v3219
      %v3283 = vadd.f32 %v3282, %v3220
      %v3284 = vadd.f32 %v3283, %v3221
      %v3285 = vadd.f32 %v3284, %v3222
      %v3286 = vadd.f32 %v3285, %v3223
      %v3287 = vadd.f32 %v3286, %v3224
      %v3288 = vadd.f32 %v3287, %v3225
      %v3289 = vadd.f32 %v3288, %v3226
      %v3290 = vadd.f32 %v3289, %v3227
      %v3291 = vadd.f32 %v3290, %v3228
      %v3292 = vrot.slane %v3291, 4
      %v3293 = vadd.f32 %v3291, %v3292
      %v3294 = vrot.slane %v3293, 2
      %v3295 = vadd.f32 %v3293, %v3294
      %v3296 = vrot.slane %v3295, 1
      %v3297 = vadd.f32 %v3295, %v3296
      %v3298 = vadd.f32 %v3297, 0.0
      %v3299 = vld [vmem:[%s369] sm:$0xff]
      %v3300 = vld [vmem:[%s369 + $0x8] sm:$0xff]
      %v3301 = vld [vmem:[%s369 + $0x10] sm:$0xf]
      %v3302 = vld [vmem:[%s369 + $0x18] sm:$0xff]
      %v3303 = vld [vmem:[%s369 + $0x20] sm:$0xff]
      %v3304 = vld [vmem:[%s369 + $0x28] sm:$0xf]
      %v3305 = vld [vmem:[%s369 + $0x30] sm:$0xff]
      %v3306 = vld [vmem:[%s369 + $0x38] sm:$0xff]
      %v3307 = vld [vmem:[%s369 + $0x40] sm:$0xf]
      %v3308 = vld [vmem:[%s369 + $0x48] sm:$0xff]
      %v3309 = vld [vmem:[%s369 + $0x50] sm:$0xff]
      %v3310 = vld [vmem:[%s369 + $0x58] sm:$0xf]
      %v3311 = vld [vmem:[%s369 + $0x60] sm:$0xff]
      %v3312 = vld [vmem:[%s369 + $0x68] sm:$0xff]
      %v3313 = vld [vmem:[%s369 + $0x70] sm:$0xf]
      %v3314 = vld [vmem:[%s369 + $0x78] sm:$0xff]
      %v3315 = vld [vmem:[%s369 + $0x80] sm:$0xff]
      %v3316 = vld [vmem:[%s369 + $0x88] sm:$0xf]
      %v3317 = vld [vmem:[%s369 + $0x90] sm:$0xff]
      %v3318 = vld [vmem:[%s369 + $0x98] sm:$0xff]
      %v3319 = vld [vmem:[%s369 + $0xa0] sm:$0xf]
      %v3320 = vld [vmem:[%s369 + $0xa8] sm:$0xff]
      %v3321 = vld [vmem:[%s369 + $0xb0] sm:$0xff]
      %v3322 = vld [vmem:[%s369 + $0xb8] sm:$0xf]
      %v3323 = vld [vmem:[%s369 + $0xc0] sm:$0xff]
      %v3324 = vld [vmem:[%s369 + $0xc8] sm:$0xff]
      %v3325 = vld [vmem:[%s369 + $0xd0] sm:$0xf]
      %v3326 = vld [vmem:[%s369 + $0xd8] sm:$0xff]
      %v3327 = vld [vmem:[%s369 + $0xe0] sm:$0xff]
      %v3328 = vld [vmem:[%s369 + $0xe8] sm:$0xf]
      %v3329 = vld [vmem:[%s369 + $0xf0] sm:$0xff]
      %v3330 = vld [vmem:[%s369 + $0xf8] sm:$0xff]
      %v3331 = vld [vmem:[%s369 + $0x100] sm:$0xf]
      %v3332 = vld [vmem:[%s369 + $0x108] sm:$0xff]
      %v3333 = vld [vmem:[%s369 + $0x110] sm:$0xff]
      %v3334 = vld [vmem:[%s369 + $0x118] sm:$0xf]
      %v3335 = vld [vmem:[%s369 + $0x120] sm:$0xff]
      %v3336 = vld [vmem:[%s369 + $0x128] sm:$0xff]
      %v3337 = vld [vmem:[%s369 + $0x130] sm:$0xf]
      %v3338 = vld [vmem:[%s369 + $0x138] sm:$0xff]
      %v3339 = vld [vmem:[%s369 + $0x140] sm:$0xff]
      %v3340 = vld [vmem:[%s369 + $0x148] sm:$0xf]
      %v3341 = vld [vmem:[%s369 + $0x150] sm:$0xff]
      %v3342 = vld [vmem:[%s369 + $0x158] sm:$0xff]
      %v3343 = vld [vmem:[%s369 + $0x160] sm:$0xf]
      %v3344 = vld [vmem:[%s369 + $0x168] sm:$0xff]
      %v3345 = vld [vmem:[%s369 + $0x170] sm:$0xff]
      %v3346 = vld [vmem:[%s369 + $0x178] sm:$0xf]
      %v3347 = vld [vmem:[%s429] sm:$0xff]
      %v3348 = vld [vmem:[%s429 + $0x8] sm:$0xff]
      %v3349 = vld [vmem:[%s429 + $0x10] sm:$0xf]
      %v3350 = vld [vmem:[%s429 + $0x18] sm:$0xff]
      %v3351 = vld [vmem:[%s429 + $0x20] sm:$0xff]
      %v3352 = vld [vmem:[%s429 + $0x28] sm:$0xf]
      %v3353 = vld [vmem:[%s429 + $0x30] sm:$0xff]
      %v3354 = vld [vmem:[%s429 + $0x38] sm:$0xff]
      %v3355 = vld [vmem:[%s429 + $0x40] sm:$0xf]
      %v3356 = vld [vmem:[%s429 + $0x48] sm:$0xff]
      %v3357 = vld [vmem:[%s429 + $0x50] sm:$0xff]
      %v3358 = vld [vmem:[%s429 + $0x58] sm:$0xf]
      %v3359 = vld [vmem:[%s429 + $0x60] sm:$0xff]
      %v3360 = vld [vmem:[%s429 + $0x68] sm:$0xff]
      %v3361 = vld [vmem:[%s429 + $0x70] sm:$0xf]
      %v3362 = vld [vmem:[%s429 + $0x78] sm:$0xff]
      %v3363 = vld [vmem:[%s429 + $0x80] sm:$0xff]
      %v3364 = vld [vmem:[%s429 + $0x88] sm:$0xf]
      %v3365 = vld [vmem:[%s429 + $0x90] sm:$0xff]
      %v3366 = vld [vmem:[%s429 + $0x98] sm:$0xff]
      %v3367 = vld [vmem:[%s429 + $0xa0] sm:$0xf]
      %v3368 = vld [vmem:[%s429 + $0xa8] sm:$0xff]
      %v3369 = vld [vmem:[%s429 + $0xb0] sm:$0xff]
      %v3370 = vld [vmem:[%s429 + $0xb8] sm:$0xf]
      %v3371 = vld [vmem:[%s429 + $0xc0] sm:$0xff]
      %v3372 = vld [vmem:[%s429 + $0xc8] sm:$0xff]
      %v3373 = vld [vmem:[%s429 + $0xd0] sm:$0xf]
      %v3374 = vld [vmem:[%s429 + $0xd8] sm:$0xff]
      %v3375 = vld [vmem:[%s429 + $0xe0] sm:$0xff]
      %v3376 = vld [vmem:[%s429 + $0xe8] sm:$0xf]
      %v3377 = vld [vmem:[%s429 + $0xf0] sm:$0xff]
      %v3378 = vld [vmem:[%s429 + $0xf8] sm:$0xff]
      %v3379 = vld [vmem:[%s429 + $0x100] sm:$0xf]
      %v3380 = vld [vmem:[%s429 + $0x108] sm:$0xff]
      %v3381 = vld [vmem:[%s429 + $0x110] sm:$0xff]
      %v3382 = vld [vmem:[%s429 + $0x118] sm:$0xf]
      %v3383 = vld [vmem:[%s429 + $0x120] sm:$0xff]
      %v3384 = vld [vmem:[%s429 + $0x128] sm:$0xff]
      %v3385 = vld [vmem:[%s429 + $0x130] sm:$0xf]
      %v3386 = vld [vmem:[%s429 + $0x138] sm:$0xff]
      %v3387 = vld [vmem:[%s429 + $0x140] sm:$0xff]
      %v3388 = vld [vmem:[%s429 + $0x148] sm:$0xf]
      %v3389 = vld [vmem:[%s429 + $0x150] sm:$0xff]
      %v3390 = vld [vmem:[%s429 + $0x158] sm:$0xff]
      %v3391 = vld [vmem:[%s429 + $0x160] sm:$0xf]
      %v3392 = vld [vmem:[%s429 + $0x168] sm:$0xff]
      %v3393 = vld [vmem:[%s429 + $0x170] sm:$0xff]
      %v3394 = vld [vmem:[%s429 + $0x178] sm:$0xf]
      %s3395 = scalar_lea.vmem %s369, 96
      %v3396 = vld [vmem:[%s3395] sm:$0xff]
      %v3397 = vld [vmem:[%s3395 + $0x8] sm:$0xff]
      %v3398 = vld [vmem:[%s3395 + $0x10] sm:$0xf]
      %v3399 = vld [vmem:[%s3395 + $0x18] sm:$0xff]
      %v3400 = vld [vmem:[%s3395 + $0x20] sm:$0xff]
      %v3401 = vld [vmem:[%s3395 + $0x28] sm:$0xf]
      %v3402 = vld [vmem:[%s3395 + $0x30] sm:$0xff]
      %v3403 = vld [vmem:[%s3395 + $0x38] sm:$0xff]
      %v3404 = vld [vmem:[%s3395 + $0x40] sm:$0xf]
      %v3405 = vld [vmem:[%s3395 + $0x48] sm:$0xff]
      %v3406 = vld [vmem:[%s3395 + $0x50] sm:$0xff]
      %v3407 = vld [vmem:[%s3395 + $0x58] sm:$0xf]
      %v3408 = vld [vmem:[%s3395 + $0x60] sm:$0xff]
      %v3409 = vld [vmem:[%s3395 + $0x68] sm:$0xff]
      %v3410 = vld [vmem:[%s3395 + $0x70] sm:$0xf]
      %v3411 = vld [vmem:[%s3395 + $0x78] sm:$0xff]
      %v3412 = vld [vmem:[%s3395 + $0x80] sm:$0xff]
      %v3413 = vld [vmem:[%s3395 + $0x88] sm:$0xf]
      %v3414 = vld [vmem:[%s3395 + $0x90] sm:$0xff]
      %v3415 = vld [vmem:[%s3395 + $0x98] sm:$0xff]
      %v3416 = vld [vmem:[%s3395 + $0xa0] sm:$0xf]
      %v3417 = vld [vmem:[%s3395 + $0xa8] sm:$0xff]
      %v3418 = vld [vmem:[%s3395 + $0xb0] sm:$0xff]
      %v3419 = vld [vmem:[%s3395 + $0xb8] sm:$0xf]
      %v3420 = vld [vmem:[%s3395 + $0xc0] sm:$0xff]
      %v3421 = vld [vmem:[%s3395 + $0xc8] sm:$0xff]
      %v3422 = vld [vmem:[%s3395 + $0xd0] sm:$0xf]
      %v3423 = vld [vmem:[%s3395 + $0xd8] sm:$0xff]
      %v3424 = vld [vmem:[%s3395 + $0xe0] sm:$0xff]
      %v3425 = vld [vmem:[%s3395 + $0xe8] sm:$0xf]
      %v3426 = vld [vmem:[%s3395 + $0xf0] sm:$0xff]
      %v3427 = vld [vmem:[%s3395 + $0xf8] sm:$0xff]
      %v3428 = vld [vmem:[%s3395 + $0x100] sm:$0xf]
      %v3429 = vld [vmem:[%s3395 + $0x108] sm:$0xff]
      %v3430 = vld [vmem:[%s3395 + $0x110] sm:$0xff]
      %v3431 = vld [vmem:[%s3395 + $0x118] sm:$0xf]
      %v3432 = vld [vmem:[%s3395 + $0x120] sm:$0xff]
      %v3433 = vld [vmem:[%s3395 + $0x128] sm:$0xff]
      %v3434 = vld [vmem:[%s3395 + $0x130] sm:$0xf]
      %v3435 = vld [vmem:[%s3395 + $0x138] sm:$0xff]
      %v3436 = vld [vmem:[%s3395 + $0x140] sm:$0xff]
      %v3437 = vld [vmem:[%s3395 + $0x148] sm:$0xf]
      %v3438 = vld [vmem:[%s3395 + $0x150] sm:$0xff]
      %v3439 = vld [vmem:[%s3395 + $0x158] sm:$0xff]
      %v3440 = vld [vmem:[%s3395 + $0x160] sm:$0xf]
      %v3441 = vld [vmem:[%s3395 + $0x168] sm:$0xff]
      %v3442 = vld [vmem:[%s3395 + $0x170] sm:$0xff]
      %v3443 = vld [vmem:[%s3395 + $0x178] sm:$0xf]
      %v3492 = vrot.slane %v3299, 2
      %v3493 = vrot.slane %v3300, 2
      %v3494 = vsel %vm656, %v3492, %v3493
      %v3495 = vrot.slane %v3301, 2
      %v3496 = vsel %vm656, %v3493, %v3495
      %v3497 = vrot.slane %v3302, 2
      %v3498 = vrot.slane %v3303, 2
      %v3499 = vsel %vm656, %v3497, %v3498
      %v3500 = vrot.slane %v3304, 2
      %v3501 = vsel %vm656, %v3498, %v3500
      %v3502 = vrot.slane %v3305, 2
      %v3503 = vrot.slane %v3306, 2
      %v3504 = vsel %vm656, %v3502, %v3503
      %v3505 = vrot.slane %v3307, 2
      %v3506 = vsel %vm656, %v3503, %v3505
      %v3507 = vrot.slane %v3308, 2
      %v3508 = vrot.slane %v3309, 2
      %v3509 = vsel %vm656, %v3507, %v3508
      %v3510 = vrot.slane %v3310, 2
      %v3511 = vsel %vm656, %v3508, %v3510
      %v3512 = vrot.slane %v3311, 2
      %v3513 = vrot.slane %v3312, 2
      %v3514 = vsel %vm656, %v3512, %v3513
      %v3515 = vrot.slane %v3313, 2
      %v3516 = vsel %vm656, %v3513, %v3515
      %v3517 = vrot.slane %v3314, 2
      %v3518 = vrot.slane %v3315, 2
      %v3519 = vsel %vm656, %v3517, %v3518
      %v3520 = vrot.slane %v3316, 2
      %v3521 = vsel %vm656, %v3518, %v3520
      %v3522 = vrot.slane %v3317, 2
      %v3523 = vrot.slane %v3318, 2
      %v3524 = vsel %vm656, %v3522, %v3523
      %v3525 = vrot.slane %v3319, 2
      %v3526 = vsel %vm656, %v3523, %v3525
      %v3527 = vrot.slane %v3320, 2
      %v3528 = vrot.slane %v3321, 2
      %v3529 = vsel %vm656, %v3527, %v3528
      %v3530 = vrot.slane %v3322, 2
      %v3531 = vsel %vm656, %v3528, %v3530
      %v3532 = vrot.slane %v3323, 2
      %v3533 = vrot.slane %v3324, 2
      %v3534 = vsel %vm656, %v3532, %v3533
      %v3535 = vrot.slane %v3325, 2
      %v3536 = vsel %vm656, %v3533, %v3535
      %v3537 = vrot.slane %v3326, 2
      %v3538 = vrot.slane %v3327, 2
      %v3539 = vsel %vm656, %v3537, %v3538
      %v3540 = vrot.slane %v3328, 2
      %v3541 = vsel %vm656, %v3538, %v3540
      %v3542 = vrot.slane %v3329, 2
      %v3543 = vrot.slane %v3330, 2
      %v3544 = vsel %vm656, %v3542, %v3543
      %v3545 = vrot.slane %v3331, 2
      %v3546 = vsel %vm656, %v3543, %v3545
      %v3547 = vrot.slane %v3332, 2
      %v3548 = vrot.slane %v3333, 2
      %v3549 = vsel %vm656, %v3547, %v3548
      %v3550 = vrot.slane %v3334, 2
      %v3551 = vsel %vm656, %v3548, %v3550
      %v3552 = vrot.slane %v3335, 2
      %v3553 = vrot.slane %v3336, 2
      %v3554 = vsel %vm656, %v3552, %v3553
      %v3555 = vrot.slane %v3337, 2
      %v3556 = vsel %vm656, %v3553, %v3555
      %v3557 = vrot.slane %v3338, 2
      %v3558 = vrot.slane %v3339, 2
      %v3559 = vsel %vm656, %v3557, %v3558
      %v3560 = vrot.slane %v3340, 2
      %v3561 = vsel %vm656, %v3558, %v3560
      %v3562 = vrot.slane %v3341, 2
      %v3563 = vrot.slane %v3342, 2
      %v3564 = vsel %vm656, %v3562, %v3563
      %v3565 = vrot.slane %v3343, 2
      %v3566 = vsel %vm656, %v3563, %v3565
      %v3567 = vrot.slane %v3344, 2
      %v3568 = vrot.slane %v3345, 2
      %v3569 = vsel %vm656, %v3567, %v3568
      %v3570 = vrot.slane %v3346, 2
      %v3571 = vsel %vm656, %v3568, %v3570
      %vm3604 = vcmask 1043456
      %v3605 = vrot.slane %v3299, 4
      %v3606 = vrot.slane %v3300, 4
      %v3607 = vsel %vm3604, %v3605, %v3606
      %v3608 = vrot.slane %v3301, 4
      %v3609 = vsel %vm3604, %v3606, %v3608
      %v3610 = vrot.slane %v3302, 4
      %v3611 = vrot.slane %v3303, 4
      %v3612 = vsel %vm3604, %v3610, %v3611
      %v3613 = vrot.slane %v3304, 4
      %v3614 = vsel %vm3604, %v3611, %v3613
      %v3615 = vrot.slane %v3305, 4
      %v3616 = vrot.slane %v3306, 4
      %v3617 = vsel %vm3604, %v3615, %v3616
      %v3618 = vrot.slane %v3307, 4
      %v3619 = vsel %vm3604, %v3616, %v3618
      %v3620 = vrot.slane %v3308, 4
      %v3621 = vrot.slane %v3309, 4
      %v3622 = vsel %vm3604, %v3620, %v3621
      %v3623 = vrot.slane %v3310, 4
      %v3624 = vsel %vm3604, %v3621, %v3623
      %v3625 = vrot.slane %v3311, 4
      %v3626 = vrot.slane %v3312, 4
      %v3627 = vsel %vm3604, %v3625, %v3626
      %v3628 = vrot.slane %v3313, 4
      %v3629 = vsel %vm3604, %v3626, %v3628
      %v3630 = vrot.slane %v3314, 4
      %v3631 = vrot.slane %v3315, 4
      %v3632 = vsel %vm3604, %v3630, %v3631
      %v3633 = vrot.slane %v3316, 4
      %v3634 = vsel %vm3604, %v3631, %v3633
      %v3635 = vrot.slane %v3317, 4
      %v3636 = vrot.slane %v3318, 4
      %v3637 = vsel %vm3604, %v3635, %v3636
      %v3638 = vrot.slane %v3319, 4
      %v3639 = vsel %vm3604, %v3636, %v3638
      %v3640 = vrot.slane %v3320, 4
      %v3641 = vrot.slane %v3321, 4
      %v3642 = vsel %vm3604, %v3640, %v3641
      %v3643 = vrot.slane %v3322, 4
      %v3644 = vsel %vm3604, %v3641, %v3643
      %v3645 = vrot.slane %v3323, 4
      %v3646 = vrot.slane %v3324, 4
      %v3647 = vsel %vm3604, %v3645, %v3646
      %v3648 = vrot.slane %v3325, 4
      %v3649 = vsel %vm3604, %v3646, %v3648
      %v3650 = vrot.slane %v3326, 4
      %v3651 = vrot.slane %v3327, 4
      %v3652 = vsel %vm3604, %v3650, %v3651
      %v3653 = vrot.slane %v3328, 4
      %v3654 = vsel %vm3604, %v3651, %v3653
      %v3655 = vrot.slane %v3329, 4
      %v3656 = vrot.slane %v3330, 4
      %v3657 = vsel %vm3604, %v3655, %v3656
      %v3658 = vrot.slane %v3331, 4
      %v3659 = vsel %vm3604, %v3656, %v3658
      %v3660 = vrot.slane %v3332, 4
      %v3661 = vrot.slane %v3333, 4
      %v3662 = vsel %vm3604, %v3660, %v3661
      %v3663 = vrot.slane %v3334, 4
      %v3664 = vsel %vm3604, %v3661, %v3663
      %v3665 = vrot.slane %v3335, 4
      %v3666 = vrot.slane %v3336, 4
      %v3667 = vsel %vm3604, %v3665, %v3666
      %v3668 = vrot.slane %v3337, 4
      %v3669 = vsel %vm3604, %v3666, %v3668
      %v3670 = vrot.slane %v3338, 4
      %v3671 = vrot.slane %v3339, 4
      %v3672 = vsel %vm3604, %v3670, %v3671
      %v3673 = vrot.slane %v3340, 4
      %v3674 = vsel %vm3604, %v3671, %v3673
      %v3675 = vrot.slane %v3341, 4
      %v3676 = vrot.slane %v3342, 4
      %v3677 = vsel %vm3604, %v3675, %v3676
      %v3678 = vrot.slane %v3343, 4
      %v3679 = vsel %vm3604, %v3676, %v3678
      %v3680 = vrot.slane %v3344, 4
      %v3681 = vrot.slane %v3345, 4
      %v3682 = vsel %vm3604, %v3680, %v3681
      %v3683 = vrot.slane %v3346, 4
      %v3684 = vsel %vm3604, %v3681, %v3683
      %v3765 = vrot.slane %v3347, 2
      %v3766 = vrot.slane %v3348, 2
      %v3767 = vsel %vm656, %v3765, %v3766
      %v3768 = vrot.slane %v3349, 2
      %v3769 = vsel %vm656, %v3766, %v3768
      %v3770 = vrot.slane %v3350, 2
      %v3771 = vrot.slane %v3351, 2
      %v3772 = vsel %vm656, %v3770, %v3771
      %v3773 = vrot.slane %v3352, 2
      %v3774 = vsel %vm656, %v3771, %v3773
      %v3775 = vrot.slane %v3353, 2
      %v3776 = vrot.slane %v3354, 2
      %v3777 = vsel %vm656, %v3775, %v3776
      %v3778 = vrot.slane %v3355, 2
      %v3779 = vsel %vm656, %v3776, %v3778
      %v3780 = vrot.slane %v3356, 2
      %v3781 = vrot.slane %v3357, 2
      %v3782 = vsel %vm656, %v3780, %v3781
      %v3783 = vrot.slane %v3358, 2
      %v3784 = vsel %vm656, %v3781, %v3783
      %v3785 = vrot.slane %v3359, 2
      %v3786 = vrot.slane %v3360, 2
      %v3787 = vsel %vm656, %v3785, %v3786
      %v3788 = vrot.slane %v3361, 2
      %v3789 = vsel %vm656, %v3786, %v3788
      %v3790 = vrot.slane %v3362, 2
      %v3791 = vrot.slane %v3363, 2
      %v3792 = vsel %vm656, %v3790, %v3791
      %v3793 = vrot.slane %v3364, 2
      %v3794 = vsel %vm656, %v3791, %v3793
      %v3795 = vrot.slane %v3365, 2
      %v3796 = vrot.slane %v3366, 2
      %v3797 = vsel %vm656, %v3795, %v3796
      %v3798 = vrot.slane %v3367, 2
      %v3799 = vsel %vm656, %v3796, %v3798
      %v3800 = vrot.slane %v3368, 2
      %v3801 = vrot.slane %v3369, 2
      %v3802 = vsel %vm656, %v3800, %v3801
      %v3803 = vrot.slane %v3370, 2
      %v3804 = vsel %vm656, %v3801, %v3803
      %v3805 = vrot.slane %v3371, 2
      %v3806 = vrot.slane %v3372, 2
      %v3807 = vsel %vm656, %v3805, %v3806
      %v3808 = vrot.slane %v3373, 2
      %v3809 = vsel %vm656, %v3806, %v3808
      %v3810 = vrot.slane %v3374, 2
      %v3811 = vrot.slane %v3375, 2
      %v3812 = vsel %vm656, %v3810, %v3811
      %v3813 = vrot.slane %v3376, 2
      %v3814 = vsel %vm656, %v3811, %v3813
      %v3815 = vrot.slane %v3377, 2
      %v3816 = vrot.slane %v3378, 2
      %v3817 = vsel %vm656, %v3815, %v3816
      %v3818 = vrot.slane %v3379, 2
      %v3819 = vsel %vm656, %v3816, %v3818
      %v3820 = vrot.slane %v3380, 2
      %v3821 = vrot.slane %v3381, 2
      %v3822 = vsel %vm656, %v3820, %v3821
      %v3823 = vrot.slane %v3382, 2
      %v3824 = vsel %vm656, %v3821, %v3823
      %v3825 = vrot.slane %v3383, 2
      %v3826 = vrot.slane %v3384, 2
      %v3827 = vsel %vm656, %v3825, %v3826
      %v3828 = vrot.slane %v3385, 2
      %v3829 = vsel %vm656, %v3826, %v3828
      %v3830 = vrot.slane %v3386, 2
      %v3831 = vrot.slane %v3387, 2
      %v3832 = vsel %vm656, %v3830, %v3831
      %v3833 = vrot.slane %v3388, 2
      %v3834 = vsel %vm656, %v3831, %v3833
      %v3835 = vrot.slane %v3389, 2
      %v3836 = vrot.slane %v3390, 2
      %v3837 = vsel %vm656, %v3835, %v3836
      %v3838 = vrot.slane %v3391, 2
      %v3839 = vsel %vm656, %v3836, %v3838
      %v3840 = vrot.slane %v3392, 2
      %v3841 = vrot.slane %v3393, 2
      %v3842 = vsel %vm656, %v3840, %v3841
      %v3843 = vrot.slane %v3394, 2
      %v3844 = vsel %vm656, %v3841, %v3843
      %v3877 = vrot.slane %v3347, 4
      %v3878 = vrot.slane %v3348, 4
      %v3879 = vsel %vm3604, %v3877, %v3878
      %v3880 = vrot.slane %v3349, 4
      %v3881 = vsel %vm3604, %v3878, %v3880
      %v3882 = vrot.slane %v3350, 4
      %v3883 = vrot.slane %v3351, 4
      %v3884 = vsel %vm3604, %v3882, %v3883
      %v3885 = vrot.slane %v3352, 4
      %v3886 = vsel %vm3604, %v3883, %v3885
      %v3887 = vrot.slane %v3353, 4
      %v3888 = vrot.slane %v3354, 4
      %v3889 = vsel %vm3604, %v3887, %v3888
      %v3890 = vrot.slane %v3355, 4
      %v3891 = vsel %vm3604, %v3888, %v3890
      %v3892 = vrot.slane %v3356, 4
      %v3893 = vrot.slane %v3357, 4
      %v3894 = vsel %vm3604, %v3892, %v3893
      %v3895 = vrot.slane %v3358, 4
      %v3896 = vsel %vm3604, %v3893, %v3895
      %v3897 = vrot.slane %v3359, 4
      %v3898 = vrot.slane %v3360, 4
      %v3899 = vsel %vm3604, %v3897, %v3898
      %v3900 = vrot.slane %v3361, 4
      %v3901 = vsel %vm3604, %v3898, %v3900
      %v3902 = vrot.slane %v3362, 4
      %v3903 = vrot.slane %v3363, 4
      %v3904 = vsel %vm3604, %v3902, %v3903
      %v3905 = vrot.slane %v3364, 4
      %v3906 = vsel %vm3604, %v3903, %v3905
      %v3907 = vrot.slane %v3365, 4
      %v3908 = vrot.slane %v3366, 4
      %v3909 = vsel %vm3604, %v3907, %v3908
      %v3910 = vrot.slane %v3367, 4
      %v3911 = vsel %vm3604, %v3908, %v3910
      %v3912 = vrot.slane %v3368, 4
      %v3913 = vrot.slane %v3369, 4
      %v3914 = vsel %vm3604, %v3912, %v3913
      %v3915 = vrot.slane %v3370, 4
      %v3916 = vsel %vm3604, %v3913, %v3915
      %v3917 = vrot.slane %v3371, 4
      %v3918 = vrot.slane %v3372, 4
      %v3919 = vsel %vm3604, %v3917, %v3918
      %v3920 = vrot.slane %v3373, 4
      %v3921 = vsel %vm3604, %v3918, %v3920
      %v3922 = vrot.slane %v3374, 4
      %v3923 = vrot.slane %v3375, 4
      %v3924 = vsel %vm3604, %v3922, %v3923
      %v3925 = vrot.slane %v3376, 4
      %v3926 = vsel %vm3604, %v3923, %v3925
      %v3927 = vrot.slane %v3377, 4
      %v3928 = vrot.slane %v3378, 4
      %v3929 = vsel %vm3604, %v3927, %v3928
      %v3930 = vrot.slane %v3379, 4
      %v3931 = vsel %vm3604, %v3928, %v3930
      %v3932 = vrot.slane %v3380, 4
      %v3933 = vrot.slane %v3381, 4
      %v3934 = vsel %vm3604, %v3932, %v3933
      %v3935 = vrot.slane %v3382, 4
      %v3936 = vsel %vm3604, %v3933, %v3935
      %v3937 = vrot.slane %v3383, 4
      %v3938 = vrot.slane %v3384, 4
      %v3939 = vsel %vm3604, %v3937, %v3938
      %v3940 = vrot.slane %v3385, 4
      %v3941 = vsel %vm3604, %v3938, %v3940
      %v3942 = vrot.slane %v3386, 4
      %v3943 = vrot.slane %v3387, 4
      %v3944 = vsel %vm3604, %v3942, %v3943
      %v3945 = vrot.slane %v3388, 4
      %v3946 = vsel %vm3604, %v3943, %v3945
      %v3947 = vrot.slane %v3389, 4
      %v3948 = vrot.slane %v3390, 4
      %v3949 = vsel %vm3604, %v3947, %v3948
      %v3950 = vrot.slane %v3391, 4
      %v3951 = vsel %vm3604, %v3948, %v3950
      %v3952 = vrot.slane %v3392, 4
      %v3953 = vrot.slane %v3393, 4
      %v3954 = vsel %vm3604, %v3952, %v3953
      %v3955 = vrot.slane %v3394, 4
      %v3956 = vsel %vm3604, %v3953, %v3955
      %v4037 = vrot.slane %v3396, 2
      %v4038 = vrot.slane %v3397, 2
      %v4039 = vsel %vm656, %v4037, %v4038
      %v4040 = vrot.slane %v3398, 2
      %v4041 = vsel %vm656, %v4038, %v4040
      %v4042 = vrot.slane %v3399, 2
      %v4043 = vrot.slane %v3400, 2
      %v4044 = vsel %vm656, %v4042, %v4043
      %v4045 = vrot.slane %v3401, 2
      %v4046 = vsel %vm656, %v4043, %v4045
      %v4047 = vrot.slane %v3402, 2
      %v4048 = vrot.slane %v3403, 2
      %v4049 = vsel %vm656, %v4047, %v4048
      %v4050 = vrot.slane %v3404, 2
      %v4051 = vsel %vm656, %v4048, %v4050
      %v4052 = vrot.slane %v3405, 2
      %v4053 = vrot.slane %v3406, 2
      %v4054 = vsel %vm656, %v4052, %v4053
      %v4055 = vrot.slane %v3407, 2
      %v4056 = vsel %vm656, %v4053, %v4055
      %v4057 = vrot.slane %v3408, 2
      %v4058 = vrot.slane %v3409, 2
      %v4059 = vsel %vm656, %v4057, %v4058
      %v4060 = vrot.slane %v3410, 2
      %v4061 = vsel %vm656, %v4058, %v4060
      %v4062 = vrot.slane %v3411, 2
      %v4063 = vrot.slane %v3412, 2
      %v4064 = vsel %vm656, %v4062, %v4063
      %v4065 = vrot.slane %v3413, 2
      %v4066 = vsel %vm656, %v4063, %v4065
      %v4067 = vrot.slane %v3414, 2
      %v4068 = vrot.slane %v3415, 2
      %v4069 = vsel %vm656, %v4067, %v4068
      %v4070 = vrot.slane %v3416, 2
      %v4071 = vsel %vm656, %v4068, %v4070
      %v4072 = vrot.slane %v3417, 2
      %v4073 = vrot.slane %v3418, 2
      %v4074 = vsel %vm656, %v4072, %v4073
      %v4075 = vrot.slane %v3419, 2
      %v4076 = vsel %vm656, %v4073, %v4075
      %v4077 = vrot.slane %v3420, 2
      %v4078 = vrot.slane %v3421, 2
      %v4079 = vsel %vm656, %v4077, %v4078
      %v4080 = vrot.slane %v3422, 2
      %v4081 = vsel %vm656, %v4078, %v4080
      %v4082 = vrot.slane %v3423, 2
      %v4083 = vrot.slane %v3424, 2
      %v4084 = vsel %vm656, %v4082, %v4083
      %v4085 = vrot.slane %v3425, 2
      %v4086 = vsel %vm656, %v4083, %v4085
      %v4087 = vrot.slane %v3426, 2
      %v4088 = vrot.slane %v3427, 2
      %v4089 = vsel %vm656, %v4087, %v4088
      %v4090 = vrot.slane %v3428, 2
      %v4091 = vsel %vm656, %v4088, %v4090
      %v4092 = vrot.slane %v3429, 2
      %v4093 = vrot.slane %v3430, 2
      %v4094 = vsel %vm656, %v4092, %v4093
      %v4095 = vrot.slane %v3431, 2
      %v4096 = vsel %vm656, %v4093, %v4095
      %v4097 = vrot.slane %v3432, 2
      %v4098 = vrot.slane %v3433, 2
      %v4099 = vsel %vm656, %v4097, %v4098
      %v4100 = vrot.slane %v3434, 2
      %v4101 = vsel %vm656, %v4098, %v4100
      %v4102 = vrot.slane %v3435, 2
      %v4103 = vrot.slane %v3436, 2
      %v4104 = vsel %vm656, %v4102, %v4103
      %v4105 = vrot.slane %v3437, 2
      %v4106 = vsel %vm656, %v4103, %v4105
      %v4107 = vrot.slane %v3438, 2
      %v4108 = vrot.slane %v3439, 2
      %v4109 = vsel %vm656, %v4107, %v4108
      %v4110 = vrot.slane %v3440, 2
      %v4111 = vsel %vm656, %v4108, %v4110
      %v4112 = vrot.slane %v3441, 2
      %v4113 = vrot.slane %v3442, 2
      %v4114 = vsel %vm656, %v4112, %v4113
      %v4115 = vrot.slane %v3443, 2
      %v4116 = vsel %vm656, %v4113, %v4115
      %v4149 = vrot.slane %v3396, 4
      %v4150 = vrot.slane %v3397, 4
      %v4151 = vsel %vm3604, %v4149, %v4150
      %v4152 = vrot.slane %v3398, 4
      %v4153 = vsel %vm3604, %v4150, %v4152
      %v4154 = vrot.slane %v3399, 4
      %v4155 = vrot.slane %v3400, 4
      %v4156 = vsel %vm3604, %v4154, %v4155
      %v4157 = vrot.slane %v3401, 4
      %v4158 = vsel %vm3604, %v4155, %v4157
      %v4159 = vrot.slane %v3402, 4
      %v4160 = vrot.slane %v3403, 4
      %v4161 = vsel %vm3604, %v4159, %v4160
      %v4162 = vrot.slane %v3404, 4
      %v4163 = vsel %vm3604, %v4160, %v4162
      %v4164 = vrot.slane %v3405, 4
      %v4165 = vrot.slane %v3406, 4
      %v4166 = vsel %vm3604, %v4164, %v4165
      %v4167 = vrot.slane %v3407, 4
      %v4168 = vsel %vm3604, %v4165, %v4167
      %v4169 = vrot.slane %v3408, 4
      %v4170 = vrot.slane %v3409, 4
      %v4171 = vsel %vm3604, %v4169, %v4170
      %v4172 = vrot.slane %v3410, 4
      %v4173 = vsel %vm3604, %v4170, %v4172
      %v4174 = vrot.slane %v3411, 4
      %v4175 = vrot.slane %v3412, 4
      %v4176 = vsel %vm3604, %v4174, %v4175
      %v4177 = vrot.slane %v3413, 4
      %v4178 = vsel %vm3604, %v4175, %v4177
      %v4179 = vrot.slane %v3414, 4
      %v4180 = vrot.slane %v3415, 4
      %v4181 = vsel %vm3604, %v4179, %v4180
      %v4182 = vrot.slane %v3416, 4
      %v4183 = vsel %vm3604, %v4180, %v4182
      %v4184 = vrot.slane %v3417, 4
      %v4185 = vrot.slane %v3418, 4
      %v4186 = vsel %vm3604, %v4184, %v4185
      %v4187 = vrot.slane %v3419, 4
      %v4188 = vsel %vm3604, %v4185, %v4187
      %v4189 = vrot.slane %v3420, 4
      %v4190 = vrot.slane %v3421, 4
      %v4191 = vsel %vm3604, %v4189, %v4190
      %v4192 = vrot.slane %v3422, 4
      %v4193 = vsel %vm3604, %v4190, %v4192
      %v4194 = vrot.slane %v3423, 4
      %v4195 = vrot.slane %v3424, 4
      %v4196 = vsel %vm3604, %v4194, %v4195
      %v4197 = vrot.slane %v3425, 4
      %v4198 = vsel %vm3604, %v4195, %v4197
      %v4199 = vrot.slane %v3426, 4
      %v4200 = vrot.slane %v3427, 4
      %v4201 = vsel %vm3604, %v4199, %v4200
      %v4202 = vrot.slane %v3428, 4
      %v4203 = vsel %vm3604, %v4200, %v4202
      %v4204 = vrot.slane %v3429, 4
      %v4205 = vrot.slane %v3430, 4
      %v4206 = vsel %vm3604, %v4204, %v4205
      %v4207 = vrot.slane %v3431, 4
      %v4208 = vsel %vm3604, %v4205, %v4207
      %v4209 = vrot.slane %v3432, 4
      %v4210 = vrot.slane %v3433, 4
      %v4211 = vsel %vm3604, %v4209, %v4210
      %v4212 = vrot.slane %v3434, 4
      %v4213 = vsel %vm3604, %v4210, %v4212
      %v4214 = vrot.slane %v3435, 4
      %v4215 = vrot.slane %v3436, 4
      %v4216 = vsel %vm3604, %v4214, %v4215
      %v4217 = vrot.slane %v3437, 4
      %v4218 = vsel %vm3604, %v4215, %v4217
      %v4219 = vrot.slane %v3438, 4
      %v4220 = vrot.slane %v3439, 4
      %v4221 = vsel %vm3604, %v4219, %v4220
      %v4222 = vrot.slane %v3440, 4
      %v4223 = vsel %vm3604, %v4220, %v4222
      %v4224 = vrot.slane %v3441, 4
      %v4225 = vrot.slane %v3442, 4
      %v4226 = vsel %vm3604, %v4224, %v4225
      %v4227 = vrot.slane %v3443, 4
      %v4228 = vsel %vm3604, %v4225, %v4227
      %s4261 = scalar_lea.vmem %s1, 1152
      %v4262 = vld [vmem:[%s4261] sm:$0xff]
      %v4263 = vld [vmem:[%s4261 + $0x8] sm:$0xff]
      %v4264 = vld [vmem:[%s4261 + $0x10] sm:$0xff]
      %v4265 = vld [vmem:[%s4261 + $0x18] sm:$0xff]
      %v4266 = vld [vmem:[%s4261 + $0x20] sm:$0xff]
      %v4267 = vld [vmem:[%s4261 + $0x28] sm:$0xff]
      %v4268 = vld [vmem:[%s4261 + $0x30] sm:$0xff]
      %v4269 = vld [vmem:[%s4261 + $0x38] sm:$0xff]
      %v4270 = vld [vmem:[%s4261 + $0x40] sm:$0xff]
      %v4271 = vld [vmem:[%s4261 + $0x48] sm:$0xff]
      %v4272 = vld [vmem:[%s4261 + $0x50] sm:$0xff]
      %v4273 = vld [vmem:[%s4261 + $0x58] sm:$0xff]
      %v4274 = vld [vmem:[%s4261 + $0x60] sm:$0xff]
      %v4275 = vld [vmem:[%s4261 + $0x68] sm:$0xff]
      %v4276 = vld [vmem:[%s4261 + $0x70] sm:$0xff]
      %v4277 = vld [vmem:[%s4261 + $0x78] sm:$0xff]
      %v4278 = vld [vmem:[%s4261 + $0x80] sm:$0xff]
      %v4279 = vld [vmem:[%s4261 + $0x88] sm:$0xff]
      %v4280 = vld [vmem:[%s4261 + $0x90] sm:$0xff]
      %v4281 = vld [vmem:[%s4261 + $0x98] sm:$0xff]
      %v4282 = vld [vmem:[%s4261 + $0xa0] sm:$0xff]
      %v4283 = vld [vmem:[%s4261 + $0xa8] sm:$0xff]
      %v4284 = vld [vmem:[%s4261 + $0xb0] sm:$0xff]
      %v4285 = vld [vmem:[%s4261 + $0xb8] sm:$0xff]
      %v4286 = vld [vmem:[%s4261 + $0xc0] sm:$0xff]
      %v4287 = vld [vmem:[%s4261 + $0xc8] sm:$0xff]
      %v4288 = vld [vmem:[%s4261 + $0xd0] sm:$0xff]
      %v4289 = vld [vmem:[%s4261 + $0xd8] sm:$0xff]
      %v4290 = vld [vmem:[%s4261 + $0xe0] sm:$0xff]
      %v4291 = vld [vmem:[%s4261 + $0xe8] sm:$0xff]
      %v4292 = vld [vmem:[%s4261 + $0xf0] sm:$0xff]
      %v4293 = vld [vmem:[%s4261 + $0xf8] sm:$0xff]
      %v4294 = vld [vmem:[%s4261 + $0x100] sm:$0xff]
      %v4295 = vld [vmem:[%s4261 + $0x108] sm:$0xff]
      %v4296 = vld [vmem:[%s4261 + $0x110] sm:$0xff]
      %v4297 = vld [vmem:[%s4261 + $0x118] sm:$0xff]
      %v4298 = vld [vmem:[%s4261 + $0x120] sm:$0xff]
      %v4299 = vld [vmem:[%s4261 + $0x128] sm:$0xff]
      %v4300 = vld [vmem:[%s4261 + $0x130] sm:$0xff]
      %v4301 = vld [vmem:[%s4261 + $0x138] sm:$0xff]
      %v4302 = vld [vmem:[%s4261 + $0x140] sm:$0xff]
      %v4303 = vld [vmem:[%s4261 + $0x148] sm:$0xff]
      %v4304 = vld [vmem:[%s4261 + $0x150] sm:$0xff]
      %v4305 = vld [vmem:[%s4261 + $0x158] sm:$0xff]
      %v4306 = vld [vmem:[%s4261 + $0x160] sm:$0xff]
      %v4307 = vld [vmem:[%s4261 + $0x168] sm:$0xff]
      %v4308 = vld [vmem:[%s4261 + $0x170] sm:$0xff]
      %v4309 = vld [vmem:[%s4261 + $0x178] sm:$0xff]
      %v4310 = vld [vmem:[%s4261 + $0x180] sm:$0xff]
      %v4311 = vld [vmem:[%s4261 + $0x188] sm:$0xff]
      %v4312 = vld [vmem:[%s4261 + $0x190] sm:$0xff]
      %v4313 = vld [vmem:[%s4261 + $0x198] sm:$0xff]
      %v4314 = vld [vmem:[%s4261 + $0x1a0] sm:$0xff]
      %v4315 = vld [vmem:[%s4261 + $0x1a8] sm:$0xff]
      %v4316 = vld [vmem:[%s4261 + $0x1b0] sm:$0xff]
      %v4317 = vld [vmem:[%s4261 + $0x1b8] sm:$0xff]
      %v4318 = vld [vmem:[%s4261 + $0x1c0] sm:$0xff]
      %v4319 = vld [vmem:[%s4261 + $0x1c8] sm:$0xff]
      %v4320 = vld [vmem:[%s4261 + $0x1d0] sm:$0xff]
      %v4321 = vld [vmem:[%s4261 + $0x1d8] sm:$0xff]
      %v4322 = vld [vmem:[%s4261 + $0x1e0] sm:$0xff]
      %v4323 = vld [vmem:[%s4261 + $0x1e8] sm:$0xff]
      %v4324 = vld [vmem:[%s4261 + $0x1f0] sm:$0xff]
      %v4325 = vld [vmem:[%s4261 + $0x1f8] sm:$0xff]
      %v4326 = vld [vmem:[%s4261 + $0x200] sm:$0xff]
      %v4327 = vld [vmem:[%s4261 + $0x208] sm:$0xff]
      %v4328 = vld [vmem:[%s4261 + $0x210] sm:$0xff]
      %v4329 = vld [vmem:[%s4261 + $0x218] sm:$0xff]
      %v4330 = vld [vmem:[%s4261 + $0x220] sm:$0xff]
      %v4331 = vld [vmem:[%s4261 + $0x228] sm:$0xff]
      %v4332 = vld [vmem:[%s4261 + $0x230] sm:$0xff]
      %v4333 = vld [vmem:[%s4261 + $0x238] sm:$0xff]
      %v4334 = vld [vmem:[%s4261 + $0x240] sm:$0xff]
      %v4335 = vld [vmem:[%s4261 + $0x248] sm:$0xff]
      %v4336 = vld [vmem:[%s4261 + $0x250] sm:$0xff]
      %v4337 = vld [vmem:[%s4261 + $0x258] sm:$0xff]
      %v4338 = vld [vmem:[%s4261 + $0x260] sm:$0xff]
      %v4339 = vld [vmem:[%s4261 + $0x268] sm:$0xff]
      %v4340 = vld [vmem:[%s4261 + $0x270] sm:$0xff]
      %v4341 = vld [vmem:[%s4261 + $0x278] sm:$0xff]
      %v4342 = vld [vmem:[%s4261 + $0x280] sm:$0xff]
      %v4343 = vld [vmem:[%s4261 + $0x288] sm:$0xff]
      %v4344 = vld [vmem:[%s4261 + $0x290] sm:$0xff]
      %v4345 = vld [vmem:[%s4261 + $0x298] sm:$0xff]
      %v4346 = vld [vmem:[%s4261 + $0x2a0] sm:$0xff]
      %v4347 = vld [vmem:[%s4261 + $0x2a8] sm:$0xff]
      %v4348 = vld [vmem:[%s4261 + $0x2b0] sm:$0xff]
      %v4349 = vld [vmem:[%s4261 + $0x2b8] sm:$0xff]
      %v4350 = vld [vmem:[%s4261 + $0x2c0] sm:$0xff]
      %v4351 = vld [vmem:[%s4261 + $0x2c8] sm:$0xff]
      %v4352 = vld [vmem:[%s4261 + $0x2d0] sm:$0xff]
      %v4353 = vld [vmem:[%s4261 + $0x2d8] sm:$0xff]
      %v4354 = vld [vmem:[%s4261 + $0x2e0] sm:$0xff]
      %v4355 = vld [vmem:[%s4261 + $0x2e8] sm:$0xff]
      %v4356 = vld [vmem:[%s4261 + $0x2f0] sm:$0xff]
      %v4357 = vld [vmem:[%s4261 + $0x2f8] sm:$0xff]
      %v4358 = vld [vmem:[%s4261 + $0x300] sm:$0xff]
      %v4359 = vld [vmem:[%s4261 + $0x308] sm:$0xff]
      %v4360 = vld [vmem:[%s4261 + $0x310] sm:$0xff]
      %v4361 = vld [vmem:[%s4261 + $0x318] sm:$0xff]
      %v4362 = vld [vmem:[%s4261 + $0x320] sm:$0xff]
      %v4363 = vld [vmem:[%s4261 + $0x328] sm:$0xff]
      %v4364 = vld [vmem:[%s4261 + $0x330] sm:$0xff]
      %v4365 = vld [vmem:[%s4261 + $0x338] sm:$0xff]
      %v4366 = vld [vmem:[%s4261 + $0x340] sm:$0xff]
      %v4367 = vld [vmem:[%s4261 + $0x348] sm:$0xff]
      %v4368 = vld [vmem:[%s4261 + $0x350] sm:$0xff]
      %v4369 = vld [vmem:[%s4261 + $0x358] sm:$0xff]
      %v4370 = vld [vmem:[%s4261 + $0x360] sm:$0xff]
      %v4371 = vld [vmem:[%s4261 + $0x368] sm:$0xff]
      %v4372 = vld [vmem:[%s4261 + $0x370] sm:$0xff]
      %v4373 = vld [vmem:[%s4261 + $0x378] sm:$0xff]
      %v4374 = vld [vmem:[%s4261 + $0x380] sm:$0xff]
      %v4375 = vld [vmem:[%s4261 + $0x388] sm:$0xff]
      %v4376 = vld [vmem:[%s4261 + $0x390] sm:$0xff]
      %v4377 = vld [vmem:[%s4261 + $0x398] sm:$0xff]
      %v4378 = vld [vmem:[%s4261 + $0x3a0] sm:$0xff]
      %v4379 = vld [vmem:[%s4261 + $0x3a8] sm:$0xff]
      %v4380 = vld [vmem:[%s4261 + $0x3b0] sm:$0xff]
      %v4381 = vld [vmem:[%s4261 + $0x3b8] sm:$0xff]
      %v4382 = vld [vmem:[%s4261 + $0x3c0] sm:$0xff]
      %v4383 = vld [vmem:[%s4261 + $0x3c8] sm:$0xff]
      %v4384 = vld [vmem:[%s4261 + $0x3d0] sm:$0xff]
      %v4385 = vld [vmem:[%s4261 + $0x3d8] sm:$0xff]
      %v4386 = vld [vmem:[%s4261 + $0x3e0] sm:$0xff]
      %v4387 = vld [vmem:[%s4261 + $0x3e8] sm:$0xff]
      %v4388 = vld [vmem:[%s4261 + $0x3f0] sm:$0xff]
      %v4389 = vld [vmem:[%s4261 + $0x3f8] sm:$0xff]
      %v4390 = vld [vmem:[%s4261 + $0x400] sm:$0xff]
      %v4391 = vld [vmem:[%s4261 + $0x408] sm:$0xff]
      %v4392 = vld [vmem:[%s4261 + $0x410] sm:$0xff]
      %v4393 = vld [vmem:[%s4261 + $0x418] sm:$0xff]
      %v4394 = vld [vmem:[%s4261 + $0x420] sm:$0xff]
      %v4395 = vld [vmem:[%s4261 + $0x428] sm:$0xff]
      %v4396 = vld [vmem:[%s4261 + $0x430] sm:$0xff]
      %v4397 = vld [vmem:[%s4261 + $0x438] sm:$0xff]
      %v4398 = vld [vmem:[%s4261 + $0x440] sm:$0xff]
      %v4399 = vld [vmem:[%s4261 + $0x448] sm:$0xff]
      %v4400 = vld [vmem:[%s4261 + $0x450] sm:$0xff]
      %v4401 = vld [vmem:[%s4261 + $0x458] sm:$0xff]
      %v4402 = vld [vmem:[%s4261 + $0x460] sm:$0xff]
      %v4403 = vld [vmem:[%s4261 + $0x468] sm:$0xff]
      %v4404 = vld [vmem:[%s4261 + $0x470] sm:$0xff]
      %v4405 = vld [vmem:[%s4261 + $0x478] sm:$0xff]
      %s4406 = scalar_lea.vmem %s2, 1
      %v4407 = vld [vmem:[%s4406] sm:$0x1]
      %v4409 = vlaneseq
      %v4410 = vshrl.u32 %v4409, 7
      %v4411 = vsub.s32 0, %v4410
      %v4412 = vrot.slane %v4407, %v4411
      %4414 = vmatprep.subr.mxu0 0.0
      %4415 = vmatpush1.msra.mxu0 %v4277
      %4416 = vmatprep.subr.mxu0 0.0
      %4417 = vmatpush1.msra.mxu0 %v4276
      %4418 = vmatprep.subr.mxu0 0.0
      %4419 = vmatpush1.msra.mxu0 %v4275
      %4420 = vmatprep.subr.mxu0 0.0
      %4421 = vmatpush1.msra.mxu0 %v4274
      %4422 = vmatprep.subr.mxu0 0.0
      %4423 = vmatpush1.msra.mxu0 %v4273
      %4424 = vmatprep.subr.mxu0 0.0
      %4425 = vmatpush1.msra.mxu0 %v4272
      %4426 = vmatprep.subr.mxu0 0.0
      %4427 = vmatpush1.msra.mxu0 %v4271
      %4428 = vmatprep.subr.mxu0 0.0
      %4429 = vmatpush1.msra.mxu0 %v4270
      %4430 = vmatprep.subr.mxu0 0.0
      %4431 = vmatpush1.msra.mxu0 %v4269
      %4432 = vmatprep.subr.mxu0 0.0
      %4433 = vmatpush1.msra.mxu0 %v4268
      %4434 = vmatprep.subr.mxu0 0.0
      %4435 = vmatpush1.msra.mxu0 %v4267
      %4436 = vmatprep.subr.mxu0 0.0
      %4437 = vmatpush1.msra.mxu0 %v4266
      %4438 = vmatprep.subr.mxu0 0.0
      %4439 = vmatpush1.msra.mxu0 %v4265
      %4440 = vmatprep.subr.mxu0 0.0
      %4441 = vmatpush1.msra.mxu0 %v4264
      %4442 = vmatprep.subr.mxu0 0.0
      %4443 = vmatpush1.msra.mxu0 %v4263
      %4444 = vmatprep.subr.mxu0 0.0
      %4445 = vmatpush1.msra.mxu0 %v4262
      %4446 = vmatprep.subr.mxu0 0.0
      %4447 = vmatpush2.msra.mxu0 %v4293
      %4448 = vmatprep.subr.mxu0 0.0
      %4449 = vmatpush2.msra.mxu0 %v4292
      %4450 = vmatprep.subr.mxu0 0.0
      %4451 = vmatpush2.msra.mxu0 %v4291
      %4452 = vmatprep.subr.mxu0 0.0
      %4453 = vmatpush2.msra.mxu0 %v4290
      %4454 = vmatprep.subr.mxu0 0.0
      %4455 = vmatpush2.msra.mxu0 %v4289
      %4456 = vmatprep.subr.mxu0 0.0
      %4457 = vmatpush2.msra.mxu0 %v4288
      %4458 = vmatprep.subr.mxu0 0.0
      %4459 = vmatpush2.msra.mxu0 %v4287
      %4460 = vmatprep.subr.mxu0 0.0
      %4461 = vmatpush2.msra.mxu0 %v4286
      %4462 = vmatprep.subr.mxu0 0.0
      %4463 = vmatpush2.msra.mxu0 %v4285
      %4464 = vmatprep.subr.mxu0 0.0
      %4465 = vmatpush2.msra.mxu0 %v4284
      %4466 = vmatprep.subr.mxu0 0.0
      %4467 = vmatpush2.msra.mxu0 %v4283
      %4468 = vmatprep.subr.mxu0 0.0
      %4469 = vmatpush2.msra.mxu0 %v4282
      %4470 = vmatprep.subr.mxu0 0.0
      %4471 = vmatpush2.msra.mxu0 %v4281
      %4472 = vmatprep.subr.mxu0 0.0
      %4473 = vmatpush2.msra.mxu0 %v4280
      %4474 = vmatprep.subr.mxu0 0.0
      %4475 = vmatpush2.msra.mxu0 %v4279
      %4476 = vmatprep.subr.mxu0 0.0
      %4477 = vmatpush2.msra.mxu0 %v4278
      %4478 = vmatprep.mubr.f32.mxu0 %v3494
      %4479 = vmatmul.mubr.f32.gmra.mxu0 %v3299
      %v4480 = vpop.f32.mrf.mxu0
      %v4481 = vadd.f32 %v4412, %v4480
      %v4482 = vpop.f32.mrf.mxu0
      %4483 = vmatprep.mubr.f32.mxu0 %v3496
      %4484 = vmatmul.mubr.f32.gmra.mxu0 %v3300
      %v4485 = vpop.f32.mrf.mxu0
      %v4486 = vadd.f32 %v4412, %v4485
      %v4487 = vpop.f32.mrf.mxu0
      %4488 = vmatprep.mubr.f32.mxu0 %v3499
      %4489 = vmatmul.mubr.f32.gmra.mxu0 %v3302
      %v4490 = vpop.f32.mrf.mxu0
      %v4491 = vadd.f32 %v4412, %v4490
      %v4492 = vpop.f32.mrf.mxu0
      %4493 = vmatprep.mubr.f32.mxu0 %v3501
      %4494 = vmatmul.mubr.f32.gmra.mxu0 %v3303
      %v4495 = vpop.f32.mrf.mxu0
      %v4496 = vadd.f32 %v4412, %v4495
      %v4497 = vpop.f32.mrf.mxu0
      %4498 = vmatprep.mubr.f32.mxu0 %v3504
      %4499 = vmatmul.mubr.f32.gmra.mxu0 %v3305
      %v4500 = vpop.f32.mrf.mxu0
      %v4501 = vadd.f32 %v4412, %v4500
      %v4502 = vpop.f32.mrf.mxu0
      %4503 = vmatprep.mubr.f32.mxu0 %v3506
      %4504 = vmatmul.mubr.f32.gmra.mxu0 %v3306
      %v4505 = vpop.f32.mrf.mxu0
      %v4506 = vadd.f32 %v4412, %v4505
      %v4507 = vpop.f32.mrf.mxu0
      %4508 = vmatprep.mubr.f32.mxu0 %v3509
      %4509 = vmatmul.mubr.f32.gmra.mxu0 %v3308
      %v4510 = vpop.f32.mrf.mxu0
      %v4511 = vadd.f32 %v4412, %v4510
      %v4512 = vpop.f32.mrf.mxu0
      %4513 = vmatprep.mubr.f32.mxu0 %v3511
      %4514 = vmatmul.mubr.f32.gmra.mxu0 %v3309
      %v4515 = vpop.f32.mrf.mxu0
      %v4516 = vadd.f32 %v4412, %v4515
      %v4517 = vpop.f32.mrf.mxu0
      %4518 = vmatprep.mubr.f32.mxu0 %v3514
      %4519 = vmatmul.mubr.f32.gmra.mxu0 %v3311
      %v4520 = vpop.f32.mrf.mxu0
      %v4521 = vadd.f32 %v4412, %v4520
      %v4522 = vpop.f32.mrf.mxu0
      %4523 = vmatprep.mubr.f32.mxu0 %v3516
      %4524 = vmatmul.mubr.f32.gmra.mxu0 %v3312
      %v4525 = vpop.f32.mrf.mxu0
      %v4526 = vadd.f32 %v4412, %v4525
      %v4527 = vpop.f32.mrf.mxu0
      %4528 = vmatprep.mubr.f32.mxu0 %v3519
      %4529 = vmatmul.mubr.f32.gmra.mxu0 %v3314
      %v4530 = vpop.f32.mrf.mxu0
      %v4531 = vadd.f32 %v4412, %v4530
      %v4532 = vpop.f32.mrf.mxu0
      %4533 = vmatprep.mubr.f32.mxu0 %v3521
      %4534 = vmatmul.mubr.f32.gmra.mxu0 %v3315
      %v4535 = vpop.f32.mrf.mxu0
      %v4536 = vadd.f32 %v4412, %v4535
      %v4537 = vpop.f32.mrf.mxu0
      %4538 = vmatprep.mubr.f32.mxu0 %v3524
      %4539 = vmatmul.mubr.f32.gmra.mxu0 %v3317
      %v4540 = vpop.f32.mrf.mxu0
      %v4541 = vadd.f32 %v4412, %v4540
      %v4542 = vpop.f32.mrf.mxu0
      %4543 = vmatprep.mubr.f32.mxu0 %v3526
      %4544 = vmatmul.mubr.f32.gmra.mxu0 %v3318
      %v4545 = vpop.f32.mrf.mxu0
      %v4546 = vadd.f32 %v4412, %v4545
      %v4547 = vpop.f32.mrf.mxu0
      %4548 = vmatprep.mubr.f32.mxu0 %v3529
      %4549 = vmatmul.mubr.f32.gmra.mxu0 %v3320
      %v4550 = vpop.f32.mrf.mxu0
      %v4551 = vadd.f32 %v4412, %v4550
      %v4552 = vpop.f32.mrf.mxu0
      %4553 = vmatprep.mubr.f32.mxu0 %v3531
      %4554 = vmatmul.mubr.f32.gmra.mxu0 %v3321
      %v4555 = vpop.f32.mrf.mxu0
      %v4556 = vadd.f32 %v4412, %v4555
      %v4557 = vpop.f32.mrf.mxu0
      %4558 = vmatprep.mubr.f32.mxu0 %v3534
      %4559 = vmatmul.mubr.f32.gmra.mxu0 %v3323
      %v4560 = vpop.f32.mrf.mxu0
      %v4561 = vadd.f32 %v4412, %v4560
      %v4562 = vpop.f32.mrf.mxu0
      %4563 = vmatprep.mubr.f32.mxu0 %v3536
      %4564 = vmatmul.mubr.f32.gmra.mxu0 %v3324
      %v4565 = vpop.f32.mrf.mxu0
      %v4566 = vadd.f32 %v4412, %v4565
      %v4567 = vpop.f32.mrf.mxu0
      %4568 = vmatprep.mubr.f32.mxu0 %v3539
      %4569 = vmatmul.mubr.f32.gmra.mxu0 %v3326
      %v4570 = vpop.f32.mrf.mxu0
      %v4571 = vadd.f32 %v4412, %v4570
      %v4572 = vpop.f32.mrf.mxu0
      %4573 = vmatprep.mubr.f32.mxu0 %v3541
      %4574 = vmatmul.mubr.f32.gmra.mxu0 %v3327
      %v4575 = vpop.f32.mrf.mxu0
      %v4576 = vadd.f32 %v4412, %v4575
      %v4577 = vpop.f32.mrf.mxu0
      %4578 = vmatprep.mubr.f32.mxu0 %v3544
      %4579 = vmatmul.mubr.f32.gmra.mxu0 %v3329
      %v4580 = vpop.f32.mrf.mxu0
      %v4581 = vadd.f32 %v4412, %v4580
      %v4582 = vpop.f32.mrf.mxu0
      %4583 = vmatprep.mubr.f32.mxu0 %v3546
      %4584 = vmatmul.mubr.f32.gmra.mxu0 %v3330
      %v4585 = vpop.f32.mrf.mxu0
      %v4586 = vadd.f32 %v4412, %v4585
      %v4587 = vpop.f32.mrf.mxu0
      %4588 = vmatprep.mubr.f32.mxu0 %v3549
      %4589 = vmatmul.mubr.f32.gmra.mxu0 %v3332
      %v4590 = vpop.f32.mrf.mxu0
      %v4591 = vadd.f32 %v4412, %v4590
      %v4592 = vpop.f32.mrf.mxu0
      %4593 = vmatprep.mubr.f32.mxu0 %v3551
      %4594 = vmatmul.mubr.f32.gmra.mxu0 %v3333
      %v4595 = vpop.f32.mrf.mxu0
      %v4596 = vadd.f32 %v4412, %v4595
      %v4597 = vpop.f32.mrf.mxu0
      %4598 = vmatprep.mubr.f32.mxu0 %v3554
      %4599 = vmatmul.mubr.f32.gmra.mxu0 %v3335
      %v4600 = vpop.f32.mrf.mxu0
      %v4601 = vadd.f32 %v4412, %v4600
      %v4602 = vpop.f32.mrf.mxu0
      %4603 = vmatprep.mubr.f32.mxu0 %v3556
      %4604 = vmatmul.mubr.f32.gmra.mxu0 %v3336
      %v4605 = vpop.f32.mrf.mxu0
      %v4606 = vadd.f32 %v4412, %v4605
      %v4607 = vpop.f32.mrf.mxu0
      %4608 = vmatprep.mubr.f32.mxu0 %v3559
      %4609 = vmatmul.mubr.f32.gmra.mxu0 %v3338
      %v4610 = vpop.f32.mrf.mxu0
      %v4611 = vadd.f32 %v4412, %v4610
      %v4612 = vpop.f32.mrf.mxu0
      %4613 = vmatprep.mubr.f32.mxu0 %v3561
      %4614 = vmatmul.mubr.f32.gmra.mxu0 %v3339
      %v4615 = vpop.f32.mrf.mxu0
      %v4616 = vadd.f32 %v4412, %v4615
      %v4617 = vpop.f32.mrf.mxu0
      %4618 = vmatprep.mubr.f32.mxu0 %v3564
      %4619 = vmatmul.mubr.f32.gmra.mxu0 %v3341
      %v4620 = vpop.f32.mrf.mxu0
      %v4621 = vadd.f32 %v4412, %v4620
      %v4622 = vpop.f32.mrf.mxu0
      %4623 = vmatprep.mubr.f32.mxu0 %v3566
      %4624 = vmatmul.mubr.f32.gmra.mxu0 %v3342
      %v4625 = vpop.f32.mrf.mxu0
      %v4626 = vadd.f32 %v4412, %v4625
      %v4627 = vpop.f32.mrf.mxu0
      %4628 = vmatprep.mubr.f32.mxu0 %v3569
      %4629 = vmatmul.mubr.f32.gmra.mxu0 %v3344
      %v4630 = vpop.f32.mrf.mxu0
      %v4631 = vadd.f32 %v4412, %v4630
      %v4632 = vpop.f32.mrf.mxu0
      %4633 = vmatprep.mubr.f32.mxu0 %v3571
      %4634 = vmatmul.mubr.f32.gmra.mxu0 %v3345
      %v4635 = vpop.f32.mrf.mxu0
      %v4636 = vadd.f32 %v4412, %v4635
      %v4637 = vpop.f32.mrf.mxu0
      %4638 = vdwg.mxu0
      %4639 = vmatprep.subr.mxu0 0.0
      %4640 = vmatpush1.msra.mxu0 %v4309
      %4641 = vmatprep.subr.mxu0 0.0
      %4642 = vmatpush1.msra.mxu0 %v4308
      %4643 = vmatprep.subr.mxu0 0.0
      %4644 = vmatpush1.msra.mxu0 %v4307
      %4645 = vmatprep.subr.mxu0 0.0
      %4646 = vmatpush1.msra.mxu0 %v4306
      %4647 = vmatprep.subr.mxu0 0.0
      %4648 = vmatpush1.msra.mxu0 %v4305
      %4649 = vmatprep.subr.mxu0 0.0
      %4650 = vmatpush1.msra.mxu0 %v4304
      %4651 = vmatprep.subr.mxu0 0.0
      %4652 = vmatpush1.msra.mxu0 %v4303
      %4653 = vmatprep.subr.mxu0 0.0
      %4654 = vmatpush1.msra.mxu0 %v4302
      %4655 = vmatprep.subr.mxu0 0.0
      %4656 = vmatpush1.msra.mxu0 %v4301
      %4657 = vmatprep.subr.mxu0 0.0
      %4658 = vmatpush1.msra.mxu0 %v4300
      %4659 = vmatprep.subr.mxu0 0.0
      %4660 = vmatpush1.msra.mxu0 %v4299
      %4661 = vmatprep.subr.mxu0 0.0
      %4662 = vmatpush1.msra.mxu0 %v4298
      %4663 = vmatprep.subr.mxu0 0.0
      %4664 = vmatpush1.msra.mxu0 %v4297
      %4665 = vmatprep.subr.mxu0 0.0
      %4666 = vmatpush1.msra.mxu0 %v4296
      %4667 = vmatprep.subr.mxu0 0.0
      %4668 = vmatpush1.msra.mxu0 %v4295
      %4669 = vmatprep.subr.mxu0 0.0
      %4670 = vmatpush1.msra.mxu0 %v4294
      %4671 = vmatprep.subr.mxu0 0.0
      %4672 = vmatpush2.msra.mxu0 %v4325
      %4673 = vmatprep.subr.mxu0 0.0
      %4674 = vmatpush2.msra.mxu0 %v4324
      %4675 = vmatprep.subr.mxu0 0.0
      %4676 = vmatpush2.msra.mxu0 %v4323
      %4677 = vmatprep.subr.mxu0 0.0
      %4678 = vmatpush2.msra.mxu0 %v4322
      %4679 = vmatprep.subr.mxu0 0.0
      %4680 = vmatpush2.msra.mxu0 %v4321
      %4681 = vmatprep.subr.mxu0 0.0
      %4682 = vmatpush2.msra.mxu0 %v4320
      %4683 = vmatprep.subr.mxu0 0.0
      %4684 = vmatpush2.msra.mxu0 %v4319
      %4685 = vmatprep.subr.mxu0 0.0
      %4686 = vmatpush2.msra.mxu0 %v4318
      %4687 = vmatprep.subr.mxu0 0.0
      %4688 = vmatpush2.msra.mxu0 %v4317
      %4689 = vmatprep.subr.mxu0 0.0
      %4690 = vmatpush2.msra.mxu0 %v4316
      %4691 = vmatprep.subr.mxu0 0.0
      %4692 = vmatpush2.msra.mxu0 %v4315
      %4693 = vmatprep.subr.mxu0 0.0
      %4694 = vmatpush2.msra.mxu0 %v4314
      %4695 = vmatprep.subr.mxu0 0.0
      %4696 = vmatpush2.msra.mxu0 %v4313
      %4697 = vmatprep.subr.mxu0 0.0
      %4698 = vmatpush2.msra.mxu0 %v4312
      %4699 = vmatprep.subr.mxu0 0.0
      %4700 = vmatpush2.msra.mxu0 %v4311
      %4701 = vmatprep.subr.mxu0 0.0
      %4702 = vmatpush2.msra.mxu0 %v4310
      %4703 = vmatprep.mubr.f32.mxu0 %v3347
      %4704 = vmatmul.mubr.f32.gmra.mxu0 %v3607
      %v4705 = vpop.f32.mrf.mxu0
      %v4706 = vadd.f32 %v4481, %v4705
      %v4707 = vpop.f32.mrf.mxu0
      %4708 = vmatprep.mubr.f32.mxu0 %v3348
      %4709 = vmatmul.mubr.f32.gmra.mxu0 %v3609
      %v4710 = vpop.f32.mrf.mxu0
      %v4711 = vadd.f32 %v4486, %v4710
      %v4712 = vpop.f32.mrf.mxu0
      %4713 = vmatprep.mubr.f32.mxu0 %v3350
      %4714 = vmatmul.mubr.f32.gmra.mxu0 %v3612
      %v4715 = vpop.f32.mrf.mxu0
      %v4716 = vadd.f32 %v4491, %v4715
      %v4717 = vpop.f32.mrf.mxu0
      %4718 = vmatprep.mubr.f32.mxu0 %v3351
      %4719 = vmatmul.mubr.f32.gmra.mxu0 %v3614
      %v4720 = vpop.f32.mrf.mxu0
      %v4721 = vadd.f32 %v4496, %v4720
      %v4722 = vpop.f32.mrf.mxu0
      %4723 = vmatprep.mubr.f32.mxu0 %v3353
      %4724 = vmatmul.mubr.f32.gmra.mxu0 %v3617
      %v4725 = vpop.f32.mrf.mxu0
      %v4726 = vadd.f32 %v4501, %v4725
      %v4727 = vpop.f32.mrf.mxu0
      %4728 = vmatprep.mubr.f32.mxu0 %v3354
      %4729 = vmatmul.mubr.f32.gmra.mxu0 %v3619
      %v4730 = vpop.f32.mrf.mxu0
      %v4731 = vadd.f32 %v4506, %v4730
      %v4732 = vpop.f32.mrf.mxu0
      %4733 = vmatprep.mubr.f32.mxu0 %v3356
      %4734 = vmatmul.mubr.f32.gmra.mxu0 %v3622
      %v4735 = vpop.f32.mrf.mxu0
      %v4736 = vadd.f32 %v4511, %v4735
      %v4737 = vpop.f32.mrf.mxu0
      %4738 = vmatprep.mubr.f32.mxu0 %v3357
      %4739 = vmatmul.mubr.f32.gmra.mxu0 %v3624
      %v4740 = vpop.f32.mrf.mxu0
      %v4741 = vadd.f32 %v4516, %v4740
      %v4742 = vpop.f32.mrf.mxu0
      %4743 = vmatprep.mubr.f32.mxu0 %v3359
      %4744 = vmatmul.mubr.f32.gmra.mxu0 %v3627
      %v4745 = vpop.f32.mrf.mxu0
      %v4746 = vadd.f32 %v4521, %v4745
      %v4747 = vpop.f32.mrf.mxu0
      %4748 = vmatprep.mubr.f32.mxu0 %v3360
      %4749 = vmatmul.mubr.f32.gmra.mxu0 %v3629
      %v4750 = vpop.f32.mrf.mxu0
      %v4751 = vadd.f32 %v4526, %v4750
      %v4752 = vpop.f32.mrf.mxu0
      %4753 = vmatprep.mubr.f32.mxu0 %v3362
      %4754 = vmatmul.mubr.f32.gmra.mxu0 %v3632
      %v4755 = vpop.f32.mrf.mxu0
      %v4756 = vadd.f32 %v4531, %v4755
      %v4757 = vpop.f32.mrf.mxu0
      %4758 = vmatprep.mubr.f32.mxu0 %v3363
      %4759 = vmatmul.mubr.f32.gmra.mxu0 %v3634
      %v4760 = vpop.f32.mrf.mxu0
      %v4761 = vadd.f32 %v4536, %v4760
      %v4762 = vpop.f32.mrf.mxu0
      %4763 = vmatprep.mubr.f32.mxu0 %v3365
      %4764 = vmatmul.mubr.f32.gmra.mxu0 %v3637
      %v4765 = vpop.f32.mrf.mxu0
      %v4766 = vadd.f32 %v4541, %v4765
      %v4767 = vpop.f32.mrf.mxu0
      %4768 = vmatprep.mubr.f32.mxu0 %v3366
      %4769 = vmatmul.mubr.f32.gmra.mxu0 %v3639
      %v4770 = vpop.f32.mrf.mxu0
      %v4771 = vadd.f32 %v4546, %v4770
      %v4772 = vpop.f32.mrf.mxu0
      %4773 = vmatprep.mubr.f32.mxu0 %v3368
      %4774 = vmatmul.mubr.f32.gmra.mxu0 %v3642
      %v4775 = vpop.f32.mrf.mxu0
      %v4776 = vadd.f32 %v4551, %v4775
      %v4777 = vpop.f32.mrf.mxu0
      %4778 = vmatprep.mubr.f32.mxu0 %v3369
      %4779 = vmatmul.mubr.f32.gmra.mxu0 %v3644
      %v4780 = vpop.f32.mrf.mxu0
      %v4781 = vadd.f32 %v4556, %v4780
      %v4782 = vpop.f32.mrf.mxu0
      %4783 = vmatprep.mubr.f32.mxu0 %v3371
      %4784 = vmatmul.mubr.f32.gmra.mxu0 %v3647
      %v4785 = vpop.f32.mrf.mxu0
      %v4786 = vadd.f32 %v4561, %v4785
      %v4787 = vpop.f32.mrf.mxu0
      %4788 = vmatprep.mubr.f32.mxu0 %v3372
      %4789 = vmatmul.mubr.f32.gmra.mxu0 %v3649
      %v4790 = vpop.f32.mrf.mxu0
      %v4791 = vadd.f32 %v4566, %v4790
      %v4792 = vpop.f32.mrf.mxu0
      %4793 = vmatprep.mubr.f32.mxu0 %v3374
      %4794 = vmatmul.mubr.f32.gmra.mxu0 %v3652
      %v4795 = vpop.f32.mrf.mxu0
      %v4796 = vadd.f32 %v4571, %v4795
      %v4797 = vpop.f32.mrf.mxu0
      %4798 = vmatprep.mubr.f32.mxu0 %v3375
      %4799 = vmatmul.mubr.f32.gmra.mxu0 %v3654
      %v4800 = vpop.f32.mrf.mxu0
      %v4801 = vadd.f32 %v4576, %v4800
      %v4802 = vpop.f32.mrf.mxu0
      %4803 = vmatprep.mubr.f32.mxu0 %v3377
      %4804 = vmatmul.mubr.f32.gmra.mxu0 %v3657
      %v4805 = vpop.f32.mrf.mxu0
      %v4806 = vadd.f32 %v4581, %v4805
      %v4807 = vpop.f32.mrf.mxu0
      %4808 = vmatprep.mubr.f32.mxu0 %v3378
      %4809 = vmatmul.mubr.f32.gmra.mxu0 %v3659
      %v4810 = vpop.f32.mrf.mxu0
      %v4811 = vadd.f32 %v4586, %v4810
      %v4812 = vpop.f32.mrf.mxu0
      %4813 = vmatprep.mubr.f32.mxu0 %v3380
      %4814 = vmatmul.mubr.f32.gmra.mxu0 %v3662
      %v4815 = vpop.f32.mrf.mxu0
      %v4816 = vadd.f32 %v4591, %v4815
      %v4817 = vpop.f32.mrf.mxu0
      %4818 = vmatprep.mubr.f32.mxu0 %v3381
      %4819 = vmatmul.mubr.f32.gmra.mxu0 %v3664
      %v4820 = vpop.f32.mrf.mxu0
      %v4821 = vadd.f32 %v4596, %v4820
      %v4822 = vpop.f32.mrf.mxu0
      %4823 = vmatprep.mubr.f32.mxu0 %v3383
      %4824 = vmatmul.mubr.f32.gmra.mxu0 %v3667
      %v4825 = vpop.f32.mrf.mxu0
      %v4826 = vadd.f32 %v4601, %v4825
      %v4827 = vpop.f32.mrf.mxu0
      %4828 = vmatprep.mubr.f32.mxu0 %v3384
      %4829 = vmatmul.mubr.f32.gmra.mxu0 %v3669
      %v4830 = vpop.f32.mrf.mxu0
      %v4831 = vadd.f32 %v4606, %v4830
      %v4832 = vpop.f32.mrf.mxu0
      %4833 = vmatprep.mubr.f32.mxu0 %v3386
      %4834 = vmatmul.mubr.f32.gmra.mxu0 %v3672
      %v4835 = vpop.f32.mrf.mxu0
      %v4836 = vadd.f32 %v4611, %v4835
      %v4837 = vpop.f32.mrf.mxu0
      %4838 = vmatprep.mubr.f32.mxu0 %v3387
      %4839 = vmatmul.mubr.f32.gmra.mxu0 %v3674
      %v4840 = vpop.f32.mrf.mxu0
      %v4841 = vadd.f32 %v4616, %v4840
      %v4842 = vpop.f32.mrf.mxu0
      %4843 = vmatprep.mubr.f32.mxu0 %v3389
      %4844 = vmatmul.mubr.f32.gmra.mxu0 %v3677
      %v4845 = vpop.f32.mrf.mxu0
      %v4846 = vadd.f32 %v4621, %v4845
      %v4847 = vpop.f32.mrf.mxu0
      %4848 = vmatprep.mubr.f32.mxu0 %v3390
      %4849 = vmatmul.mubr.f32.gmra.mxu0 %v3679
      %v4850 = vpop.f32.mrf.mxu0
      %v4851 = vadd.f32 %v4626, %v4850
      %v4852 = vpop.f32.mrf.mxu0
      %4853 = vmatprep.mubr.f32.mxu0 %v3392
      %4854 = vmatmul.mubr.f32.gmra.mxu0 %v3682
      %v4855 = vpop.f32.mrf.mxu0
      %v4856 = vadd.f32 %v4631, %v4855
      %v4857 = vpop.f32.mrf.mxu0
      %4858 = vmatprep.mubr.f32.mxu0 %v3393
      %4859 = vmatmul.mubr.f32.gmra.mxu0 %v3684
      %v4860 = vpop.f32.mrf.mxu0
      %v4861 = vadd.f32 %v4636, %v4860
      %v4862 = vpop.f32.mrf.mxu0
      %4863 = vdwg.mxu0
      %4864 = vmatprep.subr.mxu0 0.0
      %4865 = vmatpush1.msra.mxu0 %v4341
      %4866 = vmatprep.subr.mxu0 0.0
      %4867 = vmatpush1.msra.mxu0 %v4340
      %4868 = vmatprep.subr.mxu0 0.0
      %4869 = vmatpush1.msra.mxu0 %v4339
      %4870 = vmatprep.subr.mxu0 0.0
      %4871 = vmatpush1.msra.mxu0 %v4338
      %4872 = vmatprep.subr.mxu0 0.0
      %4873 = vmatpush1.msra.mxu0 %v4337
      %4874 = vmatprep.subr.mxu0 0.0
      %4875 = vmatpush1.msra.mxu0 %v4336
      %4876 = vmatprep.subr.mxu0 0.0
      %4877 = vmatpush1.msra.mxu0 %v4335
      %4878 = vmatprep.subr.mxu0 0.0
      %4879 = vmatpush1.msra.mxu0 %v4334
      %4880 = vmatprep.subr.mxu0 0.0
      %4881 = vmatpush1.msra.mxu0 %v4333
      %4882 = vmatprep.subr.mxu0 0.0
      %4883 = vmatpush1.msra.mxu0 %v4332
      %4884 = vmatprep.subr.mxu0 0.0
      %4885 = vmatpush1.msra.mxu0 %v4331
      %4886 = vmatprep.subr.mxu0 0.0
      %4887 = vmatpush1.msra.mxu0 %v4330
      %4888 = vmatprep.subr.mxu0 0.0
      %4889 = vmatpush1.msra.mxu0 %v4329
      %4890 = vmatprep.subr.mxu0 0.0
      %4891 = vmatpush1.msra.mxu0 %v4328
      %4892 = vmatprep.subr.mxu0 0.0
      %4893 = vmatpush1.msra.mxu0 %v4327
      %4894 = vmatprep.subr.mxu0 0.0
      %4895 = vmatpush1.msra.mxu0 %v4326
      %4896 = vmatprep.subr.mxu0 0.0
      %4897 = vmatpush2.msra.mxu0 %v4357
      %4898 = vmatprep.subr.mxu0 0.0
      %4899 = vmatpush2.msra.mxu0 %v4356
      %4900 = vmatprep.subr.mxu0 0.0
      %4901 = vmatpush2.msra.mxu0 %v4355
      %4902 = vmatprep.subr.mxu0 0.0
      %4903 = vmatpush2.msra.mxu0 %v4354
      %4904 = vmatprep.subr.mxu0 0.0
      %4905 = vmatpush2.msra.mxu0 %v4353
      %4906 = vmatprep.subr.mxu0 0.0
      %4907 = vmatpush2.msra.mxu0 %v4352
      %4908 = vmatprep.subr.mxu0 0.0
      %4909 = vmatpush2.msra.mxu0 %v4351
      %4910 = vmatprep.subr.mxu0 0.0
      %4911 = vmatpush2.msra.mxu0 %v4350
      %4912 = vmatprep.subr.mxu0 0.0
      %4913 = vmatpush2.msra.mxu0 %v4349
      %4914 = vmatprep.subr.mxu0 0.0
      %4915 = vmatpush2.msra.mxu0 %v4348
      %4916 = vmatprep.subr.mxu0 0.0
      %4917 = vmatpush2.msra.mxu0 %v4347
      %4918 = vmatprep.subr.mxu0 0.0
      %4919 = vmatpush2.msra.mxu0 %v4346
      %4920 = vmatprep.subr.mxu0 0.0
      %4921 = vmatpush2.msra.mxu0 %v4345
      %4922 = vmatprep.subr.mxu0 0.0
      %4923 = vmatpush2.msra.mxu0 %v4344
      %4924 = vmatprep.subr.mxu0 0.0
      %4925 = vmatpush2.msra.mxu0 %v4343
      %4926 = vmatprep.subr.mxu0 0.0
      %4927 = vmatpush2.msra.mxu0 %v4342
      %4928 = vmatprep.mubr.f32.mxu0 %v3879
      %4929 = vmatmul.mubr.f32.gmra.mxu0 %v3767
      %v4930 = vpop.f32.mrf.mxu0
      %v4931 = vadd.f32 %v4706, %v4930
      %v4932 = vpop.f32.mrf.mxu0
      %4933 = vmatprep.mubr.f32.mxu0 %v3881
      %4934 = vmatmul.mubr.f32.gmra.mxu0 %v3769
      %v4935 = vpop.f32.mrf.mxu0
      %v4936 = vadd.f32 %v4711, %v4935
      %v4937 = vpop.f32.mrf.mxu0
      %4938 = vmatprep.mubr.f32.mxu0 %v3884
      %4939 = vmatmul.mubr.f32.gmra.mxu0 %v3772
      %v4940 = vpop.f32.mrf.mxu0
      %v4941 = vadd.f32 %v4716, %v4940
      %v4942 = vpop.f32.mrf.mxu0
      %4943 = vmatprep.mubr.f32.mxu0 %v3886
      %4944 = vmatmul.mubr.f32.gmra.mxu0 %v3774
      %v4945 = vpop.f32.mrf.mxu0
      %v4946 = vadd.f32 %v4721, %v4945
      %v4947 = vpop.f32.mrf.mxu0
      %4948 = vmatprep.mubr.f32.mxu0 %v3889
      %4949 = vmatmul.mubr.f32.gmra.mxu0 %v3777
      %v4950 = vpop.f32.mrf.mxu0
      %v4951 = vadd.f32 %v4726, %v4950
      %v4952 = vpop.f32.mrf.mxu0
      %4953 = vmatprep.mubr.f32.mxu0 %v3891
      %4954 = vmatmul.mubr.f32.gmra.mxu0 %v3779
      %v4955 = vpop.f32.mrf.mxu0
      %v4956 = vadd.f32 %v4731, %v4955
      %v4957 = vpop.f32.mrf.mxu0
      %4958 = vmatprep.mubr.f32.mxu0 %v3894
      %4959 = vmatmul.mubr.f32.gmra.mxu0 %v3782
      %v4960 = vpop.f32.mrf.mxu0
      %v4961 = vadd.f32 %v4736, %v4960
      %v4962 = vpop.f32.mrf.mxu0
      %4963 = vmatprep.mubr.f32.mxu0 %v3896
      %4964 = vmatmul.mubr.f32.gmra.mxu0 %v3784
      %v4965 = vpop.f32.mrf.mxu0
      %v4966 = vadd.f32 %v4741, %v4965
      %v4967 = vpop.f32.mrf.mxu0
      %4968 = vmatprep.mubr.f32.mxu0 %v3899
      %4969 = vmatmul.mubr.f32.gmra.mxu0 %v3787
      %v4970 = vpop.f32.mrf.mxu0
      %v4971 = vadd.f32 %v4746, %v4970
      %v4972 = vpop.f32.mrf.mxu0
      %4973 = vmatprep.mubr.f32.mxu0 %v3901
      %4974 = vmatmul.mubr.f32.gmra.mxu0 %v3789
      %v4975 = vpop.f32.mrf.mxu0
      %v4976 = vadd.f32 %v4751, %v4975
      %v4977 = vpop.f32.mrf.mxu0
      %4978 = vmatprep.mubr.f32.mxu0 %v3904
      %4979 = vmatmul.mubr.f32.gmra.mxu0 %v3792
      %v4980 = vpop.f32.mrf.mxu0
      %v4981 = vadd.f32 %v4756, %v4980
      %v4982 = vpop.f32.mrf.mxu0
      %4983 = vmatprep.mubr.f32.mxu0 %v3906
      %4984 = vmatmul.mubr.f32.gmra.mxu0 %v3794
      %v4985 = vpop.f32.mrf.mxu0
      %v4986 = vadd.f32 %v4761, %v4985
      %v4987 = vpop.f32.mrf.mxu0
      %4988 = vmatprep.mubr.f32.mxu0 %v3909
      %4989 = vmatmul.mubr.f32.gmra.mxu0 %v3797
      %v4990 = vpop.f32.mrf.mxu0
      %v4991 = vadd.f32 %v4766, %v4990
      %v4992 = vpop.f32.mrf.mxu0
      %4993 = vmatprep.mubr.f32.mxu0 %v3911
      %4994 = vmatmul.mubr.f32.gmra.mxu0 %v3799
      %v4995 = vpop.f32.mrf.mxu0
      %v4996 = vadd.f32 %v4771, %v4995
      %v4997 = vpop.f32.mrf.mxu0
      %4998 = vmatprep.mubr.f32.mxu0 %v3914
      %4999 = vmatmul.mubr.f32.gmra.mxu0 %v3802
      %v5000 = vpop.f32.mrf.mxu0
      %v5001 = vadd.f32 %v4776, %v5000
      %v5002 = vpop.f32.mrf.mxu0
      %5003 = vmatprep.mubr.f32.mxu0 %v3916
      %5004 = vmatmul.mubr.f32.gmra.mxu0 %v3804
      %v5005 = vpop.f32.mrf.mxu0
      %v5006 = vadd.f32 %v4781, %v5005
      %v5007 = vpop.f32.mrf.mxu0
      %5008 = vmatprep.mubr.f32.mxu0 %v3919
      %5009 = vmatmul.mubr.f32.gmra.mxu0 %v3807
      %v5010 = vpop.f32.mrf.mxu0
      %v5011 = vadd.f32 %v4786, %v5010
      %v5012 = vpop.f32.mrf.mxu0
      %5013 = vmatprep.mubr.f32.mxu0 %v3921
      %5014 = vmatmul.mubr.f32.gmra.mxu0 %v3809
      %v5015 = vpop.f32.mrf.mxu0
      %v5016 = vadd.f32 %v4791, %v5015
      %v5017 = vpop.f32.mrf.mxu0
      %5018 = vmatprep.mubr.f32.mxu0 %v3924
      %5019 = vmatmul.mubr.f32.gmra.mxu0 %v3812
      %v5020 = vpop.f32.mrf.mxu0
      %v5021 = vadd.f32 %v4796, %v5020
      %v5022 = vpop.f32.mrf.mxu0
      %5023 = vmatprep.mubr.f32.mxu0 %v3926
      %5024 = vmatmul.mubr.f32.gmra.mxu0 %v3814
      %v5025 = vpop.f32.mrf.mxu0
      %v5026 = vadd.f32 %v4801, %v5025
      %v5027 = vpop.f32.mrf.mxu0
      %5028 = vmatprep.mubr.f32.mxu0 %v3929
      %5029 = vmatmul.mubr.f32.gmra.mxu0 %v3817
      %v5030 = vpop.f32.mrf.mxu0
      %v5031 = vadd.f32 %v4806, %v5030
      %v5032 = vpop.f32.mrf.mxu0
      %5033 = vmatprep.mubr.f32.mxu0 %v3931
      %5034 = vmatmul.mubr.f32.gmra.mxu0 %v3819
      %v5035 = vpop.f32.mrf.mxu0
      %v5036 = vadd.f32 %v4811, %v5035
      %v5037 = vpop.f32.mrf.mxu0
      %5038 = vmatprep.mubr.f32.mxu0 %v3934
      %5039 = vmatmul.mubr.f32.gmra.mxu0 %v3822
      %v5040 = vpop.f32.mrf.mxu0
      %v5041 = vadd.f32 %v4816, %v5040
      %v5042 = vpop.f32.mrf.mxu0
      %5043 = vmatprep.mubr.f32.mxu0 %v3936
      %5044 = vmatmul.mubr.f32.gmra.mxu0 %v3824
      %v5045 = vpop.f32.mrf.mxu0
      %v5046 = vadd.f32 %v4821, %v5045
      %v5047 = vpop.f32.mrf.mxu0
      %5048 = vmatprep.mubr.f32.mxu0 %v3939
      %5049 = vmatmul.mubr.f32.gmra.mxu0 %v3827
      %v5050 = vpop.f32.mrf.mxu0
      %v5051 = vadd.f32 %v4826, %v5050
      %v5052 = vpop.f32.mrf.mxu0
      %5053 = vmatprep.mubr.f32.mxu0 %v3941
      %5054 = vmatmul.mubr.f32.gmra.mxu0 %v3829
      %v5055 = vpop.f32.mrf.mxu0
      %v5056 = vadd.f32 %v4831, %v5055
      %v5057 = vpop.f32.mrf.mxu0
      %5058 = vmatprep.mubr.f32.mxu0 %v3944
      %5059 = vmatmul.mubr.f32.gmra.mxu0 %v3832
      %v5060 = vpop.f32.mrf.mxu0
      %v5061 = vadd.f32 %v4836, %v5060
      %v5062 = vpop.f32.mrf.mxu0
      %5063 = vmatprep.mubr.f32.mxu0 %v3946
      %5064 = vmatmul.mubr.f32.gmra.mxu0 %v3834
      %v5065 = vpop.f32.mrf.mxu0
      %v5066 = vadd.f32 %v4841, %v5065
      %v5067 = vpop.f32.mrf.mxu0
      %5068 = vmatprep.mubr.f32.mxu0 %v3949
      %5069 = vmatmul.mubr.f32.gmra.mxu0 %v3837
      %v5070 = vpop.f32.mrf.mxu0
      %v5071 = vadd.f32 %v4846, %v5070
      %v5072 = vpop.f32.mrf.mxu0
      %5073 = vmatprep.mubr.f32.mxu0 %v3951
      %5074 = vmatmul.mubr.f32.gmra.mxu0 %v3839
      %v5075 = vpop.f32.mrf.mxu0
      %v5076 = vadd.f32 %v4851, %v5075
      %v5077 = vpop.f32.mrf.mxu0
      %5078 = vmatprep.mubr.f32.mxu0 %v3954
      %5079 = vmatmul.mubr.f32.gmra.mxu0 %v3842
      %v5080 = vpop.f32.mrf.mxu0
      %v5081 = vadd.f32 %v4856, %v5080
      %v5082 = vpop.f32.mrf.mxu0
      %5083 = vmatprep.mubr.f32.mxu0 %v3956
      %5084 = vmatmul.mubr.f32.gmra.mxu0 %v3844
      %v5085 = vpop.f32.mrf.mxu0
      %v5086 = vadd.f32 %v4861, %v5085
      %v5087 = vpop.f32.mrf.mxu0
      %5088 = vdwg.mxu0
      %5089 = vmatprep.subr.mxu0 0.0
      %5090 = vmatpush1.msra.mxu0 %v4373
      %5091 = vmatprep.subr.mxu0 0.0
      %5092 = vmatpush1.msra.mxu0 %v4372
      %5093 = vmatprep.subr.mxu0 0.0
      %5094 = vmatpush1.msra.mxu0 %v4371
      %5095 = vmatprep.subr.mxu0 0.0
      %5096 = vmatpush1.msra.mxu0 %v4370
      %5097 = vmatprep.subr.mxu0 0.0
      %5098 = vmatpush1.msra.mxu0 %v4369
      %5099 = vmatprep.subr.mxu0 0.0
      %5100 = vmatpush1.msra.mxu0 %v4368
      %5101 = vmatprep.subr.mxu0 0.0
      %5102 = vmatpush1.msra.mxu0 %v4367
      %5103 = vmatprep.subr.mxu0 0.0
      %5104 = vmatpush1.msra.mxu0 %v4366
      %5105 = vmatprep.subr.mxu0 0.0
      %5106 = vmatpush1.msra.mxu0 %v4365
      %5107 = vmatprep.subr.mxu0 0.0
      %5108 = vmatpush1.msra.mxu0 %v4364
      %5109 = vmatprep.subr.mxu0 0.0
      %5110 = vmatpush1.msra.mxu0 %v4363
      %5111 = vmatprep.subr.mxu0 0.0
      %5112 = vmatpush1.msra.mxu0 %v4362
      %5113 = vmatprep.subr.mxu0 0.0
      %5114 = vmatpush1.msra.mxu0 %v4361
      %5115 = vmatprep.subr.mxu0 0.0
      %5116 = vmatpush1.msra.mxu0 %v4360
      %5117 = vmatprep.subr.mxu0 0.0
      %5118 = vmatpush1.msra.mxu0 %v4359
      %5119 = vmatprep.subr.mxu0 0.0
      %5120 = vmatpush1.msra.mxu0 %v4358
      %5121 = vmatprep.subr.mxu0 0.0
      %5122 = vmatpush2.msra.mxu0 %v4389
      %5123 = vmatprep.subr.mxu0 0.0
      %5124 = vmatpush2.msra.mxu0 %v4388
      %5125 = vmatprep.subr.mxu0 0.0
      %5126 = vmatpush2.msra.mxu0 %v4387
      %5127 = vmatprep.subr.mxu0 0.0
      %5128 = vmatpush2.msra.mxu0 %v4386
      %5129 = vmatprep.subr.mxu0 0.0
      %5130 = vmatpush2.msra.mxu0 %v4385
      %5131 = vmatprep.subr.mxu0 0.0
      %5132 = vmatpush2.msra.mxu0 %v4384
      %5133 = vmatprep.subr.mxu0 0.0
      %5134 = vmatpush2.msra.mxu0 %v4383
      %5135 = vmatprep.subr.mxu0 0.0
      %5136 = vmatpush2.msra.mxu0 %v4382
      %5137 = vmatprep.subr.mxu0 0.0
      %5138 = vmatpush2.msra.mxu0 %v4381
      %5139 = vmatprep.subr.mxu0 0.0
      %5140 = vmatpush2.msra.mxu0 %v4380
      %5141 = vmatprep.subr.mxu0 0.0
      %5142 = vmatpush2.msra.mxu0 %v4379
      %5143 = vmatprep.subr.mxu0 0.0
      %5144 = vmatpush2.msra.mxu0 %v4378
      %5145 = vmatprep.subr.mxu0 0.0
      %5146 = vmatpush2.msra.mxu0 %v4377
      %5147 = vmatprep.subr.mxu0 0.0
      %5148 = vmatpush2.msra.mxu0 %v4376
      %5149 = vmatprep.subr.mxu0 0.0
      %5150 = vmatpush2.msra.mxu0 %v4375
      %5151 = vmatprep.subr.mxu0 0.0
      %5152 = vmatpush2.msra.mxu0 %v4374
      %5153 = vmatprep.mubr.f32.mxu0 %v4039
      %5154 = vmatmul.mubr.f32.gmra.mxu0 %v3396
      %v5155 = vpop.f32.mrf.mxu0
      %v5156 = vadd.f32 %v4931, %v5155
      %v5157 = vpop.f32.mrf.mxu0
      %5158 = vmatprep.mubr.f32.mxu0 %v4041
      %5159 = vmatmul.mubr.f32.gmra.mxu0 %v3397
      %v5160 = vpop.f32.mrf.mxu0
      %v5161 = vadd.f32 %v4936, %v5160
      %v5162 = vpop.f32.mrf.mxu0
      %5163 = vmatprep.mubr.f32.mxu0 %v4044
      %5164 = vmatmul.mubr.f32.gmra.mxu0 %v3399
      %v5165 = vpop.f32.mrf.mxu0
      %v5166 = vadd.f32 %v4941, %v5165
      %v5167 = vpop.f32.mrf.mxu0
      %5168 = vmatprep.mubr.f32.mxu0 %v4046
      %5169 = vmatmul.mubr.f32.gmra.mxu0 %v3400
      %v5170 = vpop.f32.mrf.mxu0
      %v5171 = vadd.f32 %v4946, %v5170
      %v5172 = vpop.f32.mrf.mxu0
      %5173 = vmatprep.mubr.f32.mxu0 %v4049
      %5174 = vmatmul.mubr.f32.gmra.mxu0 %v3402
      %v5175 = vpop.f32.mrf.mxu0
      %v5176 = vadd.f32 %v4951, %v5175
      %v5177 = vpop.f32.mrf.mxu0
      %5178 = vmatprep.mubr.f32.mxu0 %v4051
      %5179 = vmatmul.mubr.f32.gmra.mxu0 %v3403
      %v5180 = vpop.f32.mrf.mxu0
      %v5181 = vadd.f32 %v4956, %v5180
      %v5182 = vpop.f32.mrf.mxu0
      %5183 = vmatprep.mubr.f32.mxu0 %v4054
      %5184 = vmatmul.mubr.f32.gmra.mxu0 %v3405
      %v5185 = vpop.f32.mrf.mxu0
      %v5186 = vadd.f32 %v4961, %v5185
      %v5187 = vpop.f32.mrf.mxu0
      %5188 = vmatprep.mubr.f32.mxu0 %v4056
      %5189 = vmatmul.mubr.f32.gmra.mxu0 %v3406
      %v5190 = vpop.f32.mrf.mxu0
      %v5191 = vadd.f32 %v4966, %v5190
      %v5192 = vpop.f32.mrf.mxu0
      %5193 = vmatprep.mubr.f32.mxu0 %v4059
      %5194 = vmatmul.mubr.f32.gmra.mxu0 %v3408
      %v5195 = vpop.f32.mrf.mxu0
      %v5196 = vadd.f32 %v4971, %v5195
      %v5197 = vpop.f32.mrf.mxu0
      %5198 = vmatprep.mubr.f32.mxu0 %v4061
      %5199 = vmatmul.mubr.f32.gmra.mxu0 %v3409
      %v5200 = vpop.f32.mrf.mxu0
      %v5201 = vadd.f32 %v4976, %v5200
      %v5202 = vpop.f32.mrf.mxu0
      %5203 = vmatprep.mubr.f32.mxu0 %v4064
      %5204 = vmatmul.mubr.f32.gmra.mxu0 %v3411
      %v5205 = vpop.f32.mrf.mxu0
      %v5206 = vadd.f32 %v4981, %v5205
      %v5207 = vpop.f32.mrf.mxu0
      %5208 = vmatprep.mubr.f32.mxu0 %v4066
      %5209 = vmatmul.mubr.f32.gmra.mxu0 %v3412
      %v5210 = vpop.f32.mrf.mxu0
      %v5211 = vadd.f32 %v4986, %v5210
      %v5212 = vpop.f32.mrf.mxu0
      %5213 = vmatprep.mubr.f32.mxu0 %v4069
      %5214 = vmatmul.mubr.f32.gmra.mxu0 %v3414
      %v5215 = vpop.f32.mrf.mxu0
      %v5216 = vadd.f32 %v4991, %v5215
      %v5217 = vpop.f32.mrf.mxu0
      %5218 = vmatprep.mubr.f32.mxu0 %v4071
      %5219 = vmatmul.mubr.f32.gmra.mxu0 %v3415
      %v5220 = vpop.f32.mrf.mxu0
      %v5221 = vadd.f32 %v4996, %v5220
      %v5222 = vpop.f32.mrf.mxu0
      %5223 = vmatprep.mubr.f32.mxu0 %v4074
      %5224 = vmatmul.mubr.f32.gmra.mxu0 %v3417
      %v5225 = vpop.f32.mrf.mxu0
      %v5226 = vadd.f32 %v5001, %v5225
      %v5227 = vpop.f32.mrf.mxu0
      %5228 = vmatprep.mubr.f32.mxu0 %v4076
      %5229 = vmatmul.mubr.f32.gmra.mxu0 %v3418
      %v5230 = vpop.f32.mrf.mxu0
      %v5231 = vadd.f32 %v5006, %v5230
      %v5232 = vpop.f32.mrf.mxu0
      %5233 = vmatprep.mubr.f32.mxu0 %v4079
      %5234 = vmatmul.mubr.f32.gmra.mxu0 %v3420
      %v5235 = vpop.f32.mrf.mxu0
      %v5236 = vadd.f32 %v5011, %v5235
      %v5237 = vpop.f32.mrf.mxu0
      %5238 = vmatprep.mubr.f32.mxu0 %v4081
      %5239 = vmatmul.mubr.f32.gmra.mxu0 %v3421
      %v5240 = vpop.f32.mrf.mxu0
      %v5241 = vadd.f32 %v5016, %v5240
      %v5242 = vpop.f32.mrf.mxu0
      %5243 = vmatprep.mubr.f32.mxu0 %v4084
      %5244 = vmatmul.mubr.f32.gmra.mxu0 %v3423
      %v5245 = vpop.f32.mrf.mxu0
      %v5246 = vadd.f32 %v5021, %v5245
      %v5247 = vpop.f32.mrf.mxu0
      %5248 = vmatprep.mubr.f32.mxu0 %v4086
      %5249 = vmatmul.mubr.f32.gmra.mxu0 %v3424
      %v5250 = vpop.f32.mrf.mxu0
      %v5251 = vadd.f32 %v5026, %v5250
      %v5252 = vpop.f32.mrf.mxu0
      %5253 = vmatprep.mubr.f32.mxu0 %v4089
      %5254 = vmatmul.mubr.f32.gmra.mxu0 %v3426
      %v5255 = vpop.f32.mrf.mxu0
      %v5256 = vadd.f32 %v5031, %v5255
      %v5257 = vpop.f32.mrf.mxu0
      %5258 = vmatprep.mubr.f32.mxu0 %v4091
      %5259 = vmatmul.mubr.f32.gmra.mxu0 %v3427
      %v5260 = vpop.f32.mrf.mxu0
      %v5261 = vadd.f32 %v5036, %v5260
      %v5262 = vpop.f32.mrf.mxu0
      %5263 = vmatprep.mubr.f32.mxu0 %v4094
      %5264 = vmatmul.mubr.f32.gmra.mxu0 %v3429
      %v5265 = vpop.f32.mrf.mxu0
      %v5266 = vadd.f32 %v5041, %v5265
      %v5267 = vpop.f32.mrf.mxu0
      %5268 = vmatprep.mubr.f32.mxu0 %v4096
      %5269 = vmatmul.mubr.f32.gmra.mxu0 %v3430
      %v5270 = vpop.f32.mrf.mxu0
      %v5271 = vadd.f32 %v5046, %v5270
      %v5272 = vpop.f32.mrf.mxu0
      %5273 = vmatprep.mubr.f32.mxu0 %v4099
      %5274 = vmatmul.mubr.f32.gmra.mxu0 %v3432
      %v5275 = vpop.f32.mrf.mxu0
      %v5276 = vadd.f32 %v5051, %v5275
      %v5277 = vpop.f32.mrf.mxu0
      %5278 = vmatprep.mubr.f32.mxu0 %v4101
      %5279 = vmatmul.mubr.f32.gmra.mxu0 %v3433
      %v5280 = vpop.f32.mrf.mxu0
      %v5281 = vadd.f32 %v5056, %v5280
      %v5282 = vpop.f32.mrf.mxu0
      %5283 = vmatprep.mubr.f32.mxu0 %v4104
      %5284 = vmatmul.mubr.f32.gmra.mxu0 %v3435
      %v5285 = vpop.f32.mrf.mxu0
      %v5286 = vadd.f32 %v5061, %v5285
      %v5287 = vpop.f32.mrf.mxu0
      %5288 = vmatprep.mubr.f32.mxu0 %v4106
      %5289 = vmatmul.mubr.f32.gmra.mxu0 %v3436
      %v5290 = vpop.f32.mrf.mxu0
      %v5291 = vadd.f32 %v5066, %v5290
      %v5292 = vpop.f32.mrf.mxu0
      %5293 = vmatprep.mubr.f32.mxu0 %v4109
      %5294 = vmatmul.mubr.f32.gmra.mxu0 %v3438
      %v5295 = vpop.f32.mrf.mxu0
      %v5296 = vadd.f32 %v5071, %v5295
      %v5297 = vpop.f32.mrf.mxu0
      %5298 = vmatprep.mubr.f32.mxu0 %v4111
      %5299 = vmatmul.mubr.f32.gmra.mxu0 %v3439
      %v5300 = vpop.f32.mrf.mxu0
      %v5301 = vadd.f32 %v5076, %v5300
      %v5302 = vpop.f32.mrf.mxu0
      %5303 = vmatprep.mubr.f32.mxu0 %v4114
      %5304 = vmatmul.mubr.f32.gmra.mxu0 %v3441
      %v5305 = vpop.f32.mrf.mxu0
      %v5306 = vadd.f32 %v5081, %v5305
      %v5307 = vpop.f32.mrf.mxu0
      %5308 = vmatprep.mubr.f32.mxu0 %v4116
      %5309 = vmatmul.mubr.f32.gmra.mxu0 %v3442
      %v5310 = vpop.f32.mrf.mxu0
      %v5311 = vadd.f32 %v5086, %v5310
      %v5312 = vpop.f32.mrf.mxu0
      %5313 = vdwg.mxu0
      %5314 = vmatprep.subr.mxu0 0.0
      %5315 = vmatpush1.msra.mxu0 %v4405
      %5316 = vmatprep.subr.mxu0 0.0
      %5317 = vmatpush1.msra.mxu0 %v4404
      %5318 = vmatprep.subr.mxu0 0.0
      %5319 = vmatpush1.msra.mxu0 %v4403
      %5320 = vmatprep.subr.mxu0 0.0
      %5321 = vmatpush1.msra.mxu0 %v4402
      %5322 = vmatprep.subr.mxu0 0.0
      %5323 = vmatpush1.msra.mxu0 %v4401
      %5324 = vmatprep.subr.mxu0 0.0
      %5325 = vmatpush1.msra.mxu0 %v4400
      %5326 = vmatprep.subr.mxu0 0.0
      %5327 = vmatpush1.msra.mxu0 %v4399
      %5328 = vmatprep.subr.mxu0 0.0
      %5329 = vmatpush1.msra.mxu0 %v4398
      %5330 = vmatprep.subr.mxu0 0.0
      %5331 = vmatpush1.msra.mxu0 %v4397
      %5332 = vmatprep.subr.mxu0 0.0
      %5333 = vmatpush1.msra.mxu0 %v4396
      %5334 = vmatprep.subr.mxu0 0.0
      %5335 = vmatpush1.msra.mxu0 %v4395
      %5336 = vmatprep.subr.mxu0 0.0
      %5337 = vmatpush1.msra.mxu0 %v4394
      %5338 = vmatprep.subr.mxu0 0.0
      %5339 = vmatpush1.msra.mxu0 %v4393
      %5340 = vmatprep.subr.mxu0 0.0
      %5341 = vmatpush1.msra.mxu0 %v4392
      %5342 = vmatprep.subr.mxu0 0.0
      %5343 = vmatpush1.msra.mxu0 %v4391
      %5344 = vmatprep.subr.mxu0 0.0
      %5345 = vmatpush1.msra.mxu0 %v4390
      %5346 = vmatprep.subr.mxu0 0.0
      %5347 = vmatpush2.msra.mxu0 0.0
      %5348 = vmatprep.subr.mxu0 0.0
      %5349 = vmatpush2.msra.mxu0 0.0
      %5350 = vmatprep.subr.mxu0 0.0
      %5351 = vmatpush2.msra.mxu0 0.0
      %5352 = vmatprep.subr.mxu0 0.0
      %5353 = vmatpush2.msra.mxu0 0.0
      %5354 = vmatprep.subr.mxu0 0.0
      %5355 = vmatpush2.msra.mxu0 0.0
      %5356 = vmatprep.subr.mxu0 0.0
      %5357 = vmatpush2.msra.mxu0 0.0
      %5358 = vmatprep.subr.mxu0 0.0
      %5359 = vmatpush2.msra.mxu0 0.0
      %5360 = vmatprep.subr.mxu0 0.0
      %5361 = vmatpush2.msra.mxu0 0.0
      %5362 = vmatprep.subr.mxu0 0.0
      %5363 = vmatpush2.msra.mxu0 0.0
      %5364 = vmatprep.subr.mxu0 0.0
      %5365 = vmatpush2.msra.mxu0 0.0
      %5366 = vmatprep.subr.mxu0 0.0
      %5367 = vmatpush2.msra.mxu0 0.0
      %5368 = vmatprep.subr.mxu0 0.0
      %5369 = vmatpush2.msra.mxu0 0.0
      %5370 = vmatprep.subr.mxu0 0.0
      %5371 = vmatpush2.msra.mxu0 0.0
      %5372 = vmatprep.subr.mxu0 0.0
      %5373 = vmatpush2.msra.mxu0 0.0
      %5374 = vmatprep.subr.mxu0 0.0
      %5375 = vmatpush2.msra.mxu0 0.0
      %5376 = vmatprep.subr.mxu0 0.0
      %5377 = vmatpush2.msra.mxu0 0.0
      %5378 = vmatprep.mubr.f32.mxu0 0.0
      %5379 = vmatmul.mubr.f32.gmra.mxu0 %v4151
      %v5380 = vpop.f32.mrf.mxu0
      %v5381 = vadd.f32 %v5156, %v5380
      %v5382 = vpop.f32.mrf.mxu0
      %5383 = vmatprep.mubr.f32.mxu0 0.0
      %5384 = vmatmul.mubr.f32.gmra.mxu0 %v4153
      %v5385 = vpop.f32.mrf.mxu0
      %v5386 = vadd.f32 %v5161, %v5385
      %v5387 = vpop.f32.mrf.mxu0
      %5388 = vmatprep.mubr.f32.mxu0 0.0
      %5389 = vmatmul.mubr.f32.gmra.mxu0 %v4156
      %v5390 = vpop.f32.mrf.mxu0
      %v5391 = vadd.f32 %v5166, %v5390
      %v5392 = vpop.f32.mrf.mxu0
      %5393 = vmatprep.mubr.f32.mxu0 0.0
      %5394 = vmatmul.mubr.f32.gmra.mxu0 %v4158
      %v5395 = vpop.f32.mrf.mxu0
      %v5396 = vadd.f32 %v5171, %v5395
      %v5397 = vpop.f32.mrf.mxu0
      %5398 = vmatprep.mubr.f32.mxu0 0.0
      %5399 = vmatmul.mubr.f32.gmra.mxu0 %v4161
      %v5400 = vpop.f32.mrf.mxu0
      %v5401 = vadd.f32 %v5176, %v5400
      %v5402 = vpop.f32.mrf.mxu0
      %5403 = vmatprep.mubr.f32.mxu0 0.0
      %5404 = vmatmul.mubr.f32.gmra.mxu0 %v4163
      %v5405 = vpop.f32.mrf.mxu0
      %v5406 = vadd.f32 %v5181, %v5405
      %v5407 = vpop.f32.mrf.mxu0
      %5408 = vmatprep.mubr.f32.mxu0 0.0
      %5409 = vmatmul.mubr.f32.gmra.mxu0 %v4166
      %v5410 = vpop.f32.mrf.mxu0
      %v5411 = vadd.f32 %v5186, %v5410
      %v5412 = vpop.f32.mrf.mxu0
      %5413 = vmatprep.mubr.f32.mxu0 0.0
      %5414 = vmatmul.mubr.f32.gmra.mxu0 %v4168
      %v5415 = vpop.f32.mrf.mxu0
      %v5416 = vadd.f32 %v5191, %v5415
      %v5417 = vpop.f32.mrf.mxu0
      %5418 = vmatprep.mubr.f32.mxu0 0.0
      %5419 = vmatmul.mubr.f32.gmra.mxu0 %v4171
      %v5420 = vpop.f32.mrf.mxu0
      %v5421 = vadd.f32 %v5196, %v5420
      %v5422 = vpop.f32.mrf.mxu0
      %5423 = vmatprep.mubr.f32.mxu0 0.0
      %5424 = vmatmul.mubr.f32.gmra.mxu0 %v4173
      %v5425 = vpop.f32.mrf.mxu0
      %v5426 = vadd.f32 %v5201, %v5425
      %v5427 = vpop.f32.mrf.mxu0
      %5428 = vmatprep.mubr.f32.mxu0 0.0
      %5429 = vmatmul.mubr.f32.gmra.mxu0 %v4176
      %v5430 = vpop.f32.mrf.mxu0
      %v5431 = vadd.f32 %v5206, %v5430
      %v5432 = vpop.f32.mrf.mxu0
      %5433 = vmatprep.mubr.f32.mxu0 0.0
      %5434 = vmatmul.mubr.f32.gmra.mxu0 %v4178
      %v5435 = vpop.f32.mrf.mxu0
      %v5436 = vadd.f32 %v5211, %v5435
      %v5437 = vpop.f32.mrf.mxu0
      %5438 = vmatprep.mubr.f32.mxu0 0.0
      %5439 = vmatmul.mubr.f32.gmra.mxu0 %v4181
      %v5440 = vpop.f32.mrf.mxu0
      %v5441 = vadd.f32 %v5216, %v5440
      %v5442 = vpop.f32.mrf.mxu0
      %5443 = vmatprep.mubr.f32.mxu0 0.0
      %5444 = vmatmul.mubr.f32.gmra.mxu0 %v4183
      %v5445 = vpop.f32.mrf.mxu0
      %v5446 = vadd.f32 %v5221, %v5445
      %v5447 = vpop.f32.mrf.mxu0
      %5448 = vmatprep.mubr.f32.mxu0 0.0
      %5449 = vmatmul.mubr.f32.gmra.mxu0 %v4186
      %v5450 = vpop.f32.mrf.mxu0
      %v5451 = vadd.f32 %v5226, %v5450
      %v5452 = vpop.f32.mrf.mxu0
      %5453 = vmatprep.mubr.f32.mxu0 0.0
      %5454 = vmatmul.mubr.f32.gmra.mxu0 %v4188
      %v5455 = vpop.f32.mrf.mxu0
      %v5456 = vadd.f32 %v5231, %v5455
      %v5457 = vpop.f32.mrf.mxu0
      %5458 = vmatprep.mubr.f32.mxu0 0.0
      %5459 = vmatmul.mubr.f32.gmra.mxu0 %v4191
      %v5460 = vpop.f32.mrf.mxu0
      %v5461 = vadd.f32 %v5236, %v5460
      %v5462 = vpop.f32.mrf.mxu0
      %5463 = vmatprep.mubr.f32.mxu0 0.0
      %5464 = vmatmul.mubr.f32.gmra.mxu0 %v4193
      %v5465 = vpop.f32.mrf.mxu0
      %v5466 = vadd.f32 %v5241, %v5465
      %v5467 = vpop.f32.mrf.mxu0
      %5468 = vmatprep.mubr.f32.mxu0 0.0
      %5469 = vmatmul.mubr.f32.gmra.mxu0 %v4196
      %v5470 = vpop.f32.mrf.mxu0
      %v5471 = vadd.f32 %v5246, %v5470
      %v5472 = vpop.f32.mrf.mxu0
      %5473 = vmatprep.mubr.f32.mxu0 0.0
      %5474 = vmatmul.mubr.f32.gmra.mxu0 %v4198
      %v5475 = vpop.f32.mrf.mxu0
      %v5476 = vadd.f32 %v5251, %v5475
      %v5477 = vpop.f32.mrf.mxu0
      %5478 = vmatprep.mubr.f32.mxu0 0.0
      %5479 = vmatmul.mubr.f32.gmra.mxu0 %v4201
      %v5480 = vpop.f32.mrf.mxu0
      %v5481 = vadd.f32 %v5256, %v5480
      %v5482 = vpop.f32.mrf.mxu0
      %5483 = vmatprep.mubr.f32.mxu0 0.0
      %5484 = vmatmul.mubr.f32.gmra.mxu0 %v4203
      %v5485 = vpop.f32.mrf.mxu0
      %v5486 = vadd.f32 %v5261, %v5485
      %v5487 = vpop.f32.mrf.mxu0
      %5488 = vmatprep.mubr.f32.mxu0 0.0
      %5489 = vmatmul.mubr.f32.gmra.mxu0 %v4206
      %v5490 = vpop.f32.mrf.mxu0
      %v5491 = vadd.f32 %v5266, %v5490
      %v5492 = vpop.f32.mrf.mxu0
      %5493 = vmatprep.mubr.f32.mxu0 0.0
      %5494 = vmatmul.mubr.f32.gmra.mxu0 %v4208
      %v5495 = vpop.f32.mrf.mxu0
      %v5496 = vadd.f32 %v5271, %v5495
      %v5497 = vpop.f32.mrf.mxu0
      %5498 = vmatprep.mubr.f32.mxu0 0.0
      %5499 = vmatmul.mubr.f32.gmra.mxu0 %v4211
      %v5500 = vpop.f32.mrf.mxu0
      %v5501 = vadd.f32 %v5276, %v5500
      %v5502 = vpop.f32.mrf.mxu0
      %5503 = vmatprep.mubr.f32.mxu0 0.0
      %5504 = vmatmul.mubr.f32.gmra.mxu0 %v4213
      %v5505 = vpop.f32.mrf.mxu0
      %v5506 = vadd.f32 %v5281, %v5505
      %v5507 = vpop.f32.mrf.mxu0
      %5508 = vmatprep.mubr.f32.mxu0 0.0
      %5509 = vmatmul.mubr.f32.gmra.mxu0 %v4216
      %v5510 = vpop.f32.mrf.mxu0
      %v5511 = vadd.f32 %v5286, %v5510
      %v5512 = vpop.f32.mrf.mxu0
      %5513 = vmatprep.mubr.f32.mxu0 0.0
      %5514 = vmatmul.mubr.f32.gmra.mxu0 %v4218
      %v5515 = vpop.f32.mrf.mxu0
      %v5516 = vadd.f32 %v5291, %v5515
      %v5517 = vpop.f32.mrf.mxu0
      %5518 = vmatprep.mubr.f32.mxu0 0.0
      %5519 = vmatmul.mubr.f32.gmra.mxu0 %v4221
      %v5520 = vpop.f32.mrf.mxu0
      %v5521 = vadd.f32 %v5296, %v5520
      %v5522 = vpop.f32.mrf.mxu0
      %5523 = vmatprep.mubr.f32.mxu0 0.0
      %5524 = vmatmul.mubr.f32.gmra.mxu0 %v4223
      %v5525 = vpop.f32.mrf.mxu0
      %v5526 = vadd.f32 %v5301, %v5525
      %v5527 = vpop.f32.mrf.mxu0
      %5528 = vmatprep.mubr.f32.mxu0 0.0
      %5529 = vmatmul.mubr.f32.gmra.mxu0 %v4226
      %v5530 = vpop.f32.mrf.mxu0
      %v5531 = vadd.f32 %v5306, %v5530
      %v5532 = vpop.f32.mrf.mxu0
      %5533 = vmatprep.mubr.f32.mxu0 0.0
      %5534 = vmatmul.mubr.f32.gmra.mxu0 %v4228
      %v5535 = vpop.f32.mrf.mxu0
      %v5536 = vadd.f32 %v5311, %v5535
      %v5537 = vpop.f32.mrf.mxu0
      %5538 = vdwg.mxu0
      %v5539 = vmax.f32 %v5381, 0.0
      %v5540 = vmax.f32 %v5386, 0.0
      %v5541 = vmax.f32 %v5391, 0.0
      %v5542 = vmax.f32 %v5396, 0.0
      %v5543 = vmax.f32 %v5401, 0.0
      %v5544 = vmax.f32 %v5406, 0.0
      %v5545 = vmax.f32 %v5411, 0.0
      %v5546 = vmax.f32 %v5416, 0.0
      %v5547 = vmax.f32 %v5421, 0.0
      %v5548 = vmax.f32 %v5426, 0.0
      %v5549 = vmax.f32 %v5431, 0.0
      %v5550 = vmax.f32 %v5436, 0.0
      %v5551 = vmax.f32 %v5441, 0.0
      %v5552 = vmax.f32 %v5446, 0.0
      %v5553 = vmax.f32 %v5451, 0.0
      %v5554 = vmax.f32 %v5456, 0.0
      %v5555 = vmax.f32 %v5461, 0.0
      %v5556 = vmax.f32 %v5466, 0.0
      %v5557 = vmax.f32 %v5471, 0.0
      %v5558 = vmax.f32 %v5476, 0.0
      %v5559 = vmax.f32 %v5481, 0.0
      %v5560 = vmax.f32 %v5486, 0.0
      %v5561 = vmax.f32 %v5491, 0.0
      %v5562 = vmax.f32 %v5496, 0.0
      %v5563 = vmax.f32 %v5501, 0.0
      %v5564 = vmax.f32 %v5506, 0.0
      %v5565 = vmax.f32 %v5511, 0.0
      %v5566 = vmax.f32 %v5516, 0.0
      %v5567 = vmax.f32 %v5521, 0.0
      %v5568 = vmax.f32 %v5526, 0.0
      %v5569 = vmax.f32 %v5531, 0.0
      %v5570 = vmax.f32 %v5536, 0.0
      %s5571 = scalar_lea.vmem [#allocation2], 256
      %5572 = vst [vmem:[%s5571] sm:$0xff] %v5539
      %5573 = vst [vmem:[%s5571 + $0x8] sm:$0xff] %v5540
      %5574 = vst [vmem:[%s5571 + $0x10] sm:$0xff] %v5541
      %5575 = vst [vmem:[%s5571 + $0x18] sm:$0xff] %v5542
      %5576 = vst [vmem:[%s5571 + $0x20] sm:$0xff] %v5543
      %5577 = vst [vmem:[%s5571 + $0x28] sm:$0xff] %v5544
      %5578 = vst [vmem:[%s5571 + $0x30] sm:$0xff] %v5545
      %5579 = vst [vmem:[%s5571 + $0x38] sm:$0xff] %v5546
      %5580 = vst [vmem:[%s5571 + $0x40] sm:$0xff] %v5547
      %5581 = vst [vmem:[%s5571 + $0x48] sm:$0xff] %v5548
      %5582 = vst [vmem:[%s5571 + $0x50] sm:$0xff] %v5549
      %5583 = vst [vmem:[%s5571 + $0x58] sm:$0xff] %v5550
      %5584 = vst [vmem:[%s5571 + $0x60] sm:$0xff] %v5551
      %5585 = vst [vmem:[%s5571 + $0x68] sm:$0xff] %v5552
      %5586 = vst [vmem:[%s5571 + $0x70] sm:$0xff] %v5553
      %5587 = vst [vmem:[%s5571 + $0x78] sm:$0xff] %v5554
      %5588 = vst [vmem:[%s5571 + $0x80] sm:$0xff] %v5555
      %5589 = vst [vmem:[%s5571 + $0x88] sm:$0xff] %v5556
      %5590 = vst [vmem:[%s5571 + $0x90] sm:$0xff] %v5557
      %5591 = vst [vmem:[%s5571 + $0x98] sm:$0xff] %v5558
      %5592 = vst [vmem:[%s5571 + $0xa0] sm:$0xff] %v5559
      %5593 = vst [vmem:[%s5571 + $0xa8] sm:$0xff] %v5560
      %5594 = vst [vmem:[%s5571 + $0xb0] sm:$0xff] %v5561
      %5595 = vst [vmem:[%s5571 + $0xb8] sm:$0xff] %v5562
      %5596 = vst [vmem:[%s5571 + $0xc0] sm:$0xff] %v5563
      %5597 = vst [vmem:[%s5571 + $0xc8] sm:$0xff] %v5564
      %5598 = vst [vmem:[%s5571 + $0xd0] sm:$0xff] %v5565
      %5599 = vst [vmem:[%s5571 + $0xd8] sm:$0xff] %v5566
      %5600 = vst [vmem:[%s5571 + $0xe0] sm:$0xff] %v5567
      %5601 = vst [vmem:[%s5571 + $0xe8] sm:$0xff] %v5568
      %5602 = vst [vmem:[%s5571 + $0xf0] sm:$0xff] %v5569
      %5603 = vst [vmem:[%s5571 + $0xf8] sm:$0xff] %v5570
      %v5604 = vadd.f32 %v5539, %v5540
      %v5605 = vadd.f32 %v5604, %v5541
      %v5606 = vadd.f32 %v5605, %v5542
      %v5607 = vadd.f32 %v5606, %v5543
      %v5608 = vadd.f32 %v5607, %v5544
      %v5609 = vadd.f32 %v5608, %v5545
      %v5610 = vadd.f32 %v5609, %v5546
      %v5611 = vadd.f32 %v5610, %v5547
      %v5612 = vadd.f32 %v5611, %v5548
      %v5613 = vadd.f32 %v5612, %v5549
      %v5614 = vadd.f32 %v5613, %v5550
      %v5615 = vadd.f32 %v5614, %v5551
      %v5616 = vadd.f32 %v5615, %v5552
      %v5617 = vadd.f32 %v5616, %v5553
      %v5618 = vadd.f32 %v5617, %v5554
      %v5619 = vadd.f32 %v5618, %v5555
      %v5620 = vadd.f32 %v5619, %v5556
      %v5621 = vadd.f32 %v5620, %v5557
      %v5622 = vadd.f32 %v5621, %v5558
      %v5623 = vadd.f32 %v5622, %v5559
      %v5624 = vadd.f32 %v5623, %v5560
      %v5625 = vadd.f32 %v5624, %v5561
      %v5626 = vadd.f32 %v5625, %v5562
      %v5627 = vadd.f32 %v5626, %v5563
      %v5628 = vadd.f32 %v5627, %v5564
      %v5629 = vadd.f32 %v5628, %v5565
      %v5630 = vadd.f32 %v5629, %v5566
      %v5631 = vadd.f32 %v5630, %v5567
      %v5632 = vadd.f32 %v5631, %v5568
      %v5633 = vadd.f32 %v5632, %v5569
      %v5634 = vadd.f32 %v5633, %v5570
      %v5635 = vrot.slane %v5634, 4
      %v5636 = vadd.f32 %v5634, %v5635
      %v5637 = vrot.slane %v5636, 2
      %v5638 = vadd.f32 %v5636, %v5637
      %v5639 = vrot.slane %v5638, 1
      %v5640 = vadd.f32 %v5638, %v5639
      %v5641 = vadd.f32 %v3298, %v5640
      %v5642 = vmul.f32 %v5641, 0.00390625
      %v5643 = vld [vmem:[%s3] sm:$0xff]
      %v5644 = vld [vmem:[%s3 + $0x8] sm:$0xff]
      %v5645 = vld [vmem:[%s3 + $0x10] sm:$0xff]
      %v5646 = vld [vmem:[%s3 + $0x18] sm:$0xff]
      %v5647 = vld [vmem:[%s3 + $0x20] sm:$0xff]
      %v5648 = vld [vmem:[%s3 + $0x28] sm:$0xff]
      %v5649 = vld [vmem:[%s3 + $0x30] sm:$0xff]
      %v5650 = vld [vmem:[%s3 + $0x38] sm:$0xff]
      %v5651 = vld [vmem:[%s3 + $0x40] sm:$0xff]
      %v5652 = vld [vmem:[%s3 + $0x48] sm:$0xff]
      %v5653 = vld [vmem:[%s3 + $0x50] sm:$0xff]
      %v5654 = vld [vmem:[%s3 + $0x58] sm:$0xff]
      %v5655 = vld [vmem:[%s3 + $0x60] sm:$0xff]
      %v5656 = vld [vmem:[%s3 + $0x68] sm:$0xff]
      %v5657 = vld [vmem:[%s3 + $0x70] sm:$0xff]
      %v5658 = vld [vmem:[%s3 + $0x78] sm:$0xff]
      %v5659 = vld [vmem:[%s4] sm:$0x1]
      %5660 = vmatprep.subr.mxu0 0.0
      %5661 = vmatpush1.msra.mxu0 %v5658
      %5662 = vmatprep.subr.mxu0 0.0
      %5663 = vmatpush1.msra.mxu0 %v5657
      %5664 = vmatprep.subr.mxu0 0.0
      %5665 = vmatpush1.msra.mxu0 %v5656
      %5666 = vmatprep.subr.mxu0 0.0
      %5667 = vmatpush1.msra.mxu0 %v5655
      %5668 = vmatprep.subr.mxu0 0.0
      %5669 = vmatpush1.msra.mxu0 %v5654
      %5670 = vmatprep.subr.mxu0 0.0
      %5671 = vmatpush1.msra.mxu0 %v5653
      %5672 = vmatprep.subr.mxu0 0.0
      %5673 = vmatpush1.msra.mxu0 %v5652
      %5674 = vmatprep.subr.mxu0 0.0
      %5675 = vmatpush1.msra.mxu0 %v5651
      %5676 = vmatprep.subr.mxu0 0.0
      %5677 = vmatpush1.msra.mxu0 %v5650
      %5678 = vmatprep.subr.mxu0 0.0
      %5679 = vmatpush1.msra.mxu0 %v5649
      %5680 = vmatprep.subr.mxu0 0.0
      %5681 = vmatpush1.msra.mxu0 %v5648
      %5682 = vmatprep.subr.mxu0 0.0
      %5683 = vmatpush1.msra.mxu0 %v5647
      %5684 = vmatprep.subr.mxu0 0.0
      %5685 = vmatpush1.msra.mxu0 %v5646
      %5686 = vmatprep.subr.mxu0 0.0
      %5687 = vmatpush1.msra.mxu0 %v5645
      %5688 = vmatprep.subr.mxu0 0.0
      %5689 = vmatpush1.msra.mxu0 %v5644
      %5690 = vmatprep.subr.mxu0 0.0
      %5691 = vmatpush1.msra.mxu0 %v5643
      %5692 = vmatprep.subr.mxu0 0.0
      %5693 = vmatpush2.msra.mxu0 0.0
      %5694 = vmatprep.subr.mxu0 0.0
      %5695 = vmatpush2.msra.mxu0 0.0
      %5696 = vmatprep.subr.mxu0 0.0
      %5697 = vmatpush2.msra.mxu0 0.0
      %5698 = vmatprep.subr.mxu0 0.0
      %5699 = vmatpush2.msra.mxu0 0.0
      %5700 = vmatprep.subr.mxu0 0.0
      %5701 = vmatpush2.msra.mxu0 0.0
      %5702 = vmatprep.subr.mxu0 0.0
      %5703 = vmatpush2.msra.mxu0 0.0
      %5704 = vmatprep.subr.mxu0 0.0
      %5705 = vmatpush2.msra.mxu0 0.0
      %5706 = vmatprep.subr.mxu0 0.0
      %5707 = vmatpush2.msra.mxu0 0.0
      %5708 = vmatprep.subr.mxu0 0.0
      %5709 = vmatpush2.msra.mxu0 0.0
      %5710 = vmatprep.subr.mxu0 0.0
      %5711 = vmatpush2.msra.mxu0 0.0
      %5712 = vmatprep.subr.mxu0 0.0
      %5713 = vmatpush2.msra.mxu0 0.0
      %5714 = vmatprep.subr.mxu0 0.0
      %5715 = vmatpush2.msra.mxu0 0.0
      %5716 = vmatprep.subr.mxu0 0.0
      %5717 = vmatpush2.msra.mxu0 0.0
      %5718 = vmatprep.subr.mxu0 0.0
      %5719 = vmatpush2.msra.mxu0 0.0
      %5720 = vmatprep.subr.mxu0 0.0
      %5721 = vmatpush2.msra.mxu0 0.0
      %5722 = vmatprep.subr.mxu0 0.0
      %5723 = vmatpush2.msra.mxu0 0.0
      %5724 = vmatprep.mubr.f32.mxu0 0.0
      %5725 = vmatmul.mubr.f32.gmra.mxu0 %v5642
      %v5726 = vpop.f32.mrf.mxu0
      %v5727 = vadd.f32 %v5659, %v5726
      %v5728 = vpop.f32.mrf.mxu0
      %5729 = vdwg.mxu0
      %v5730 = vmax.f32 %v5727, 0.0
      %v5731 = vld [vmem:[%s5] sm:$0xff]
      %v5732 = vld [vmem:[%s5 + $0x8] sm:$0xff]
      %v5733 = vld [vmem:[%s5 + $0x10] sm:$0xff]
      %v5734 = vld [vmem:[%s5 + $0x18] sm:$0xff]
      %v5735 = vld [vmem:[%s6] sm:$0x1]
      %vm5736 = vcmask 261120
      %v5738 = vsel %vm5736, %v5730, 0
      %5740 = vmatprep.subr.mxu0 0.0
      %5741 = vmatpush1.msra.mxu0 0.0
      %5742 = vmatprep.subr.mxu0 0.0
      %5743 = vmatpush1.msra.mxu0 0.0
      %5744 = vmatprep.subr.mxu0 0.0
      %5745 = vmatpush1.msra.mxu0 0.0
      %5746 = vmatprep.subr.mxu0 0.0
      %5747 = vmatpush1.msra.mxu0 0.0
      %5748 = vmatprep.subr.mxu0 0.0
      %5749 = vmatpush1.msra.mxu0 0.0
      %5750 = vmatprep.subr.mxu0 0.0
      %5751 = vmatpush1.msra.mxu0 0.0
      %5752 = vmatprep.subr.mxu0 0.0
      %5753 = vmatpush1.msra.mxu0 0.0
      %5754 = vmatprep.subr.mxu0 0.0
      %5755 = vmatpush1.msra.mxu0 0.0
      %5756 = vmatprep.subr.mxu0 0.0
      %5757 = vmatpush1.msra.mxu0 0.0
      %5758 = vmatprep.subr.mxu0 0.0
      %5759 = vmatpush1.msra.mxu0 0.0
      %5760 = vmatprep.subr.mxu0 0.0
      %5761 = vmatpush1.msra.mxu0 0.0
      %5762 = vmatprep.subr.mxu0 0.0
      %5763 = vmatpush1.msra.mxu0 0.0
      %5764 = vmatprep.subr.mxu0 0.0
      %5765 = vmatpush1.msra.mxu0 %v5734
      %5766 = vmatprep.subr.mxu0 0.0
      %5767 = vmatpush1.msra.mxu0 %v5733
      %5768 = vmatprep.subr.mxu0 0.0
      %5769 = vmatpush1.msra.mxu0 %v5732
      %5770 = vmatprep.subr.mxu0 0.0
      %5771 = vmatpush1.msra.mxu0 %v5731
      %5772 = vmatprep.subr.mxu0 0.0
      %5773 = vmatpush2.msra.mxu0 0.0
      %5774 = vmatprep.subr.mxu0 0.0
      %5775 = vmatpush2.msra.mxu0 0.0
      %5776 = vmatprep.subr.mxu0 0.0
      %5777 = vmatpush2.msra.mxu0 0.0
      %5778 = vmatprep.subr.mxu0 0.0
      %5779 = vmatpush2.msra.mxu0 0.0
      %5780 = vmatprep.subr.mxu0 0.0
      %5781 = vmatpush2.msra.mxu0 0.0
      %5782 = vmatprep.subr.mxu0 0.0
      %5783 = vmatpush2.msra.mxu0 0.0
      %5784 = vmatprep.subr.mxu0 0.0
      %5785 = vmatpush2.msra.mxu0 0.0
      %5786 = vmatprep.subr.mxu0 0.0
      %5787 = vmatpush2.msra.mxu0 0.0
      %5788 = vmatprep.subr.mxu0 0.0
      %5789 = vmatpush2.msra.mxu0 0.0
      %5790 = vmatprep.subr.mxu0 0.0
      %5791 = vmatpush2.msra.mxu0 0.0
      %5792 = vmatprep.subr.mxu0 0.0
      %5793 = vmatpush2.msra.mxu0 0.0
      %5794 = vmatprep.subr.mxu0 0.0
      %5795 = vmatpush2.msra.mxu0 0.0
      %5796 = vmatprep.subr.mxu0 0.0
      %5797 = vmatpush2.msra.mxu0 0.0
      %5798 = vmatprep.subr.mxu0 0.0
      %5799 = vmatpush2.msra.mxu0 0.0
      %5800 = vmatprep.subr.mxu0 0.0
      %5801 = vmatpush2.msra.mxu0 0.0
      %5802 = vmatprep.subr.mxu0 0.0
      %5803 = vmatpush2.msra.mxu0 0.0
      %5804 = vmatprep.mubr.f32.mxu0 0.0
      %5805 = vmatmul.mubr.f32.gmra.mxu0 %v5738
      %v5806 = vpop.f32.mrf.mxu0
      %v5807 = vadd.f32 %v5735, %v5806
      %v5808 = vpop.f32.mrf.mxu0
      %5809 = vdwg.mxu0
      %s5810 = scalar_lea.vmem %s5, 32
      %v5811 = vld [vmem:[%s5810] sm:$0xff]
      %v5812 = vld [vmem:[%s5810 + $0x8] sm:$0xff]
      %v5813 = vld [vmem:[%s5810 + $0x10] sm:$0xff]
      %v5814 = vld [vmem:[%s5810 + $0x18] sm:$0xff]
      %s5815 = scalar_lea.vmem %s6, 1
      %v5816 = vld [vmem:[%s5815] sm:$0x1]
      %5817 = vmatprep.subr.mxu0 0.0
      %5818 = vmatpush1.msra.mxu0 0.0
      %5819 = vmatprep.subr.mxu0 0.0
      %5820 = vmatpush1.msra.mxu0 0.0
      %5821 = vmatprep.subr.mxu0 0.0
      %5822 = vmatpush1.msra.mxu0 0.0
      %5823 = vmatprep.subr.mxu0 0.0
      %5824 = vmatpush1.msra.mxu0 0.0
      %5825 = vmatprep.subr.mxu0 0.0
      %5826 = vmatpush1.msra.mxu0 0.0
      %5827 = vmatprep.subr.mxu0 0.0
      %5828 = vmatpush1.msra.mxu0 0.0
      %5829 = vmatprep.subr.mxu0 0.0
      %5830 = vmatpush1.msra.mxu0 0.0
      %5831 = vmatprep.subr.mxu0 0.0
      %5832 = vmatpush1.msra.mxu0 0.0
      %5833 = vmatprep.subr.mxu0 0.0
      %5834 = vmatpush1.msra.mxu0 0.0
      %5835 = vmatprep.subr.mxu0 0.0
      %5836 = vmatpush1.msra.mxu0 0.0
      %5837 = vmatprep.subr.mxu0 0.0
      %5838 = vmatpush1.msra.mxu0 0.0
      %5839 = vmatprep.subr.mxu0 0.0
      %5840 = vmatpush1.msra.mxu0 0.0
      %5841 = vmatprep.subr.mxu0 0.0
      %5842 = vmatpush1.msra.mxu0 %v5814
      %5843 = vmatprep.subr.mxu0 0.0
      %5844 = vmatpush1.msra.mxu0 %v5813
      %5845 = vmatprep.subr.mxu0 0.0
      %5846 = vmatpush1.msra.mxu0 %v5812
      %5847 = vmatprep.subr.mxu0 0.0
      %5848 = vmatpush1.msra.mxu0 %v5811
      %5849 = vmatprep.subr.mxu0 0.0
      %5850 = vmatpush2.msra.mxu0 0.0
      %5851 = vmatprep.subr.mxu0 0.0
      %5852 = vmatpush2.msra.mxu0 0.0
      %5853 = vmatprep.subr.mxu0 0.0
      %5854 = vmatpush2.msra.mxu0 0.0
      %5855 = vmatprep.subr.mxu0 0.0
      %5856 = vmatpush2.msra.mxu0 0.0
      %5857 = vmatprep.subr.mxu0 0.0
      %5858 = vmatpush2.msra.mxu0 0.0
      %5859 = vmatprep.subr.mxu0 0.0
      %5860 = vmatpush2.msra.mxu0 0.0
      %5861 = vmatprep.subr.mxu0 0.0
      %5862 = vmatpush2.msra.mxu0 0.0
      %5863 = vmatprep.subr.mxu0 0.0
      %5864 = vmatpush2.msra.mxu0 0.0
      %5865 = vmatprep.subr.mxu0 0.0
      %5866 = vmatpush2.msra.mxu0 0.0
      %5867 = vmatprep.subr.mxu0 0.0
      %5868 = vmatpush2.msra.mxu0 0.0
      %5869 = vmatprep.subr.mxu0 0.0
      %5870 = vmatpush2.msra.mxu0 0.0
      %5871 = vmatprep.subr.mxu0 0.0
      %5872 = vmatpush2.msra.mxu0 0.0
      %5873 = vmatprep.subr.mxu0 0.0
      %5874 = vmatpush2.msra.mxu0 0.0
      %5875 = vmatprep.subr.mxu0 0.0
      %5876 = vmatpush2.msra.mxu0 0.0
      %5877 = vmatprep.subr.mxu0 0.0
      %5878 = vmatpush2.msra.mxu0 0.0
      %5879 = vmatprep.subr.mxu0 0.0
      %5880 = vmatpush2.msra.mxu0 0.0
      %5881 = vmatprep.mubr.f32.mxu0 0.0
      %5882 = vmatmul.mubr.f32.gmra.mxu0 %v5738
      %v5883 = vpop.f32.mrf.mxu0
      %v5884 = vadd.f32 %v5816, %v5883
      %v5885 = vpop.f32.mrf.mxu0
      %5886 = vdwg.mxu0
      %v5887 = vmax.f32 %v5807, %v5884
      %v5888 = vsub.f32 %v5807, %v5887
      %v5889 = vmul.f32 %v5888, 1.442695
      %v5890 = vpow.pop %v5889
      %v5891 = vsub.f32 %v5884, %v5887
      %v5892 = vmul.f32 %v5891, 1.442695
      %v5893 = vpow.pop %v5892
      %v5894 = vadd.f32 %v5890, %v5893
      %v5895 = vrcp.pop %v5894
      %v5896 = vmul.f32 1.0, %v5895
      %v5897 = vld [vmem:[#allocation2] sm:$0xff]
      %v5898 = vld [vmem:[#allocation2 + $0x8] sm:$0xff]
      %v5899 = vld [vmem:[#allocation2 + $0x10] sm:$0xff]
      %v5900 = vld [vmem:[#allocation2 + $0x18] sm:$0xff]
      %v5901 = vld [vmem:[#allocation2 + $0x20] sm:$0xff]
      %v5902 = vld [vmem:[#allocation2 + $0x28] sm:$0xff]
      %v5903 = vld [vmem:[#allocation2 + $0x30] sm:$0xff]
      %v5904 = vld [vmem:[#allocation2 + $0x38] sm:$0xff]
      %v5905 = vld [vmem:[#allocation2 + $0x40] sm:$0xff]
      %v5906 = vld [vmem:[#allocation2 + $0x48] sm:$0xff]
      %v5907 = vld [vmem:[#allocation2 + $0x50] sm:$0xff]
      %v5908 = vld [vmem:[#allocation2 + $0x58] sm:$0xff]
      %v5909 = vld [vmem:[#allocation2 + $0x60] sm:$0xff]
      %v5910 = vld [vmem:[#allocation2 + $0x68] sm:$0xff]
      %v5911 = vld [vmem:[#allocation2 + $0x70] sm:$0xff]
      %v5912 = vld [vmem:[#allocation2 + $0x78] sm:$0xff]
      %v5913 = vld [vmem:[#allocation2 + $0x80] sm:$0xff]
      %v5914 = vld [vmem:[#allocation2 + $0x88] sm:$0xff]
      %v5915 = vld [vmem:[#allocation2 + $0x90] sm:$0xff]
      %v5916 = vld [vmem:[#allocation2 + $0x98] sm:$0xff]
      %v5917 = vld [vmem:[#allocation2 + $0xa0] sm:$0xff]
      %v5918 = vld [vmem:[#allocation2 + $0xa8] sm:$0xff]
      %v5919 = vld [vmem:[#allocation2 + $0xb0] sm:$0xff]
      %v5920 = vld [vmem:[#allocation2 + $0xb8] sm:$0xff]
      %v5921 = vld [vmem:[#allocation2 + $0xc0] sm:$0xff]
      %v5922 = vld [vmem:[#allocation2 + $0xc8] sm:$0xff]
      %v5923 = vld [vmem:[#allocation2 + $0xd0] sm:$0xff]
      %v5924 = vld [vmem:[#allocation2 + $0xd8] sm:$0xff]
      %v5925 = vld [vmem:[#allocation2 + $0xe0] sm:$0xff]
      %v5926 = vld [vmem:[#allocation2 + $0xe8] sm:$0xff]
      %v5927 = vld [vmem:[#allocation2 + $0xf0] sm:$0xff]
      %v5928 = vld [vmem:[#allocation2 + $0xf8] sm:$0xff]
      %v5929 = vmul.f32 %v5890, %v5896
      %v5930 = vlaneseq
      %v5931 = vshrl.u32 %v5930, 7
      %v5932 = vsub.s32 0, %v5931
      %v5933 = vrot.slane %v5929, %v5932
      %v5934 = vmul.f32 %v5897, %v5933
      %v5935 = vmul.f32 %v5898, %v5933
      %v5936 = vmul.f32 %v5899, %v5933
      %v5937 = vmul.f32 %v5900, %v5933
      %v5938 = vmul.f32 %v5901, %v5933
      %v5939 = vmul.f32 %v5902, %v5933
      %v5940 = vmul.f32 %v5903, %v5933
      %v5941 = vmul.f32 %v5904, %v5933
      %v5942 = vmul.f32 %v5905, %v5933
      %v5943 = vmul.f32 %v5906, %v5933
      %v5944 = vmul.f32 %v5907, %v5933
      %v5945 = vmul.f32 %v5908, %v5933
      %v5946 = vmul.f32 %v5909, %v5933
      %v5947 = vmul.f32 %v5910, %v5933
      %v5948 = vmul.f32 %v5911, %v5933
      %v5949 = vmul.f32 %v5912, %v5933
      %v5950 = vmul.f32 %v5913, %v5933
      %v5951 = vmul.f32 %v5914, %v5933
      %v5952 = vmul.f32 %v5915, %v5933
      %v5953 = vmul.f32 %v5916, %v5933
      %v5954 = vmul.f32 %v5917, %v5933
      %v5955 = vmul.f32 %v5918, %v5933
      %v5956 = vmul.f32 %v5919, %v5933
      %v5957 = vmul.f32 %v5920, %v5933
      %v5958 = vmul.f32 %v5921, %v5933
      %v5959 = vmul.f32 %v5922, %v5933
      %v5960 = vmul.f32 %v5923, %v5933
      %v5961 = vmul.f32 %v5924, %v5933
      %v5962 = vmul.f32 %v5925, %v5933
      %v5963 = vmul.f32 %v5926, %v5933
      %v5964 = vmul.f32 %v5927, %v5933
      %v5965 = vmul.f32 %v5928, %v5933
      %v5966 = vld [vmem:[%s5571] sm:$0xff]
      %v5967 = vld [vmem:[%s5571 + $0x8] sm:$0xff]
      %v5968 = vld [vmem:[%s5571 + $0x10] sm:$0xff]
      %v5969 = vld [vmem:[%s5571 + $0x18] sm:$0xff]
      %v5970 = vld [vmem:[%s5571 + $0x20] sm:$0xff]
      %v5971 = vld [vmem:[%s5571 + $0x28] sm:$0xff]
      %v5972 = vld [vmem:[%s5571 + $0x30] sm:$0xff]
      %v5973 = vld [vmem:[%s5571 + $0x38] sm:$0xff]
      %v5974 = vld [vmem:[%s5571 + $0x40] sm:$0xff]
      %v5975 = vld [vmem:[%s5571 + $0x48] sm:$0xff]
      %v5976 = vld [vmem:[%s5571 + $0x50] sm:$0xff]
      %v5977 = vld [vmem:[%s5571 + $0x58] sm:$0xff]
      %v5978 = vld [vmem:[%s5571 + $0x60] sm:$0xff]
      %v5979 = vld [vmem:[%s5571 + $0x68] sm:$0xff]
      %v5980 = vld [vmem:[%s5571 + $0x70] sm:$0xff]
      %v5981 = vld [vmem:[%s5571 + $0x78] sm:$0xff]
      %v5982 = vld [vmem:[%s5571 + $0x80] sm:$0xff]
      %v5983 = vld [vmem:[%s5571 + $0x88] sm:$0xff]
      %v5984 = vld [vmem:[%s5571 + $0x90] sm:$0xff]
      %v5985 = vld [vmem:[%s5571 + $0x98] sm:$0xff]
      %v5986 = vld [vmem:[%s5571 + $0xa0] sm:$0xff]
      %v5987 = vld [vmem:[%s5571 + $0xa8] sm:$0xff]
      %v5988 = vld [vmem:[%s5571 + $0xb0] sm:$0xff]
      %v5989 = vld [vmem:[%s5571 + $0xb8] sm:$0xff]
      %v5990 = vld [vmem:[%s5571 + $0xc0] sm:$0xff]
      %v5991 = vld [vmem:[%s5571 + $0xc8] sm:$0xff]
      %v5992 = vld [vmem:[%s5571 + $0xd0] sm:$0xff]
      %v5993 = vld [vmem:[%s5571 + $0xd8] sm:$0xff]
      %v5994 = vld [vmem:[%s5571 + $0xe0] sm:$0xff]
      %v5995 = vld [vmem:[%s5571 + $0xe8] sm:$0xff]
      %v5996 = vld [vmem:[%s5571 + $0xf0] sm:$0xff]
      %v5997 = vld [vmem:[%s5571 + $0xf8] sm:$0xff]
      %v5998 = vmul.f32 %v5893, %v5896
      %v5999 = vlaneseq
      %v6000 = vshrl.u32 %v5999, 7
      %v6001 = vsub.s32 0, %v6000
      %v6002 = vrot.slane %v5998, %v6001
      %v6003 = vmul.f32 %v5966, %v6002
      %v6004 = vmul.f32 %v5967, %v6002
      %v6005 = vmul.f32 %v5968, %v6002
      %v6006 = vmul.f32 %v5969, %v6002
      %v6007 = vmul.f32 %v5970, %v6002
      %v6008 = vmul.f32 %v5971, %v6002
      %v6009 = vmul.f32 %v5972, %v6002
      %v6010 = vmul.f32 %v5973, %v6002
      %v6011 = vmul.f32 %v5974, %v6002
      %v6012 = vmul.f32 %v5975, %v6002
      %v6013 = vmul.f32 %v5976, %v6002
      %v6014 = vmul.f32 %v5977, %v6002
      %v6015 = vmul.f32 %v5978, %v6002
      %v6016 = vmul.f32 %v5979, %v6002
      %v6017 = vmul.f32 %v5980, %v6002
      %v6018 = vmul.f32 %v5981, %v6002
      %v6019 = vmul.f32 %v5982, %v6002
      %v6020 = vmul.f32 %v5983, %v6002
      %v6021 = vmul.f32 %v5984, %v6002
      %v6022 = vmul.f32 %v5985, %v6002
      %v6023 = vmul.f32 %v5986, %v6002
      %v6024 = vmul.f32 %v5987, %v6002
      %v6025 = vmul.f32 %v5988, %v6002
      %v6026 = vmul.f32 %v5989, %v6002
      %v6027 = vmul.f32 %v5990, %v6002
      %v6028 = vmul.f32 %v5991, %v6002
      %v6029 = vmul.f32 %v5992, %v6002
      %v6030 = vmul.f32 %v5993, %v6002
      %v6031 = vmul.f32 %v5994, %v6002
      %v6032 = vmul.f32 %v5995, %v6002
      %v6033 = vmul.f32 %v5996, %v6002
      %v6034 = vmul.f32 %v5997, %v6002
      %v6035 = vadd.f32 %v5934, %v6003
      %v6036 = vadd.f32 %v5935, %v6004
      %v6037 = vadd.f32 %v5936, %v6005
      %v6038 = vadd.f32 %v5937, %v6006
      %v6039 = vadd.f32 %v5938, %v6007
      %v6040 = vadd.f32 %v5939, %v6008
      %v6041 = vadd.f32 %v5940, %v6009
      %v6042 = vadd.f32 %v5941, %v6010
      %v6043 = vadd.f32 %v5942, %v6011
      %v6044 = vadd.f32 %v5943, %v6012
      %v6045 = vadd.f32 %v5944, %v6013
      %v6046 = vadd.f32 %v5945, %v6014
      %v6047 = vadd.f32 %v5946, %v6015
      %v6048 = vadd.f32 %v5947, %v6016
      %v6049 = vadd.f32 %v5948, %v6017
      %v6050 = vadd.f32 %v5949, %v6018
      %v6051 = vadd.f32 %v5950, %v6019
      %v6052 = vadd.f32 %v5951, %v6020
      %v6053 = vadd.f32 %v5952, %v6021
      %v6054 = vadd.f32 %v5953, %v6022
      %v6055 = vadd.f32 %v5954, %v6023
      %v6056 = vadd.f32 %v5955, %v6024
      %v6057 = vadd.f32 %v5956, %v6025
      %v6058 = vadd.f32 %v5957, %v6026
      %v6059 = vadd.f32 %v5958, %v6027
      %v6060 = vadd.f32 %v5959, %v6028
      %v6061 = vadd.f32 %v5960, %v6029
      %v6062 = vadd.f32 %v5961, %v6030
      %v6063 = vadd.f32 %v5962, %v6031
      %v6064 = vadd.f32 %v5963, %v6032
      %v6065 = vadd.f32 %v5964, %v6033
      %v6066 = vadd.f32 %v5965, %v6034
      %v6067 = vld [vmem:[%s7] sm:$0xff]
      %v6068 = vld [vmem:[%s7 + $0x8] sm:$0xff]
      %v6069 = vld [vmem:[%s7 + $0x10] sm:$0xff]
      %v6070 = vld [vmem:[%s7 + $0x18] sm:$0xff]
      %v6071 = vld [vmem:[%s7 + $0x20] sm:$0xff]
      %v6072 = vld [vmem:[%s7 + $0x28] sm:$0xff]
      %v6073 = vld [vmem:[%s7 + $0x30] sm:$0xff]
      %v6074 = vld [vmem:[%s7 + $0x38] sm:$0xff]
      %v6075 = vld [vmem:[%s7 + $0x40] sm:$0xff]
      %v6076 = vld [vmem:[%s7 + $0x48] sm:$0xff]
      %v6077 = vld [vmem:[%s7 + $0x50] sm:$0xff]
      %v6078 = vld [vmem:[%s7 + $0x58] sm:$0xff]
      %v6079 = vld [vmem:[%s7 + $0x60] sm:$0xff]
      %v6080 = vld [vmem:[%s7 + $0x68] sm:$0xff]
      %v6081 = vld [vmem:[%s7 + $0x70] sm:$0xff]
      %v6082 = vld [vmem:[%s7 + $0x78] sm:$0xff]
      %v6083 = vld [vmem:[%s8] sm:$0x1]
      %v6085 = vlaneseq
      %v6086 = vshrl.u32 %v6085, 7
      %v6087 = vsub.s32 0, %v6086
      %v6088 = vrot.slane %v6083, %v6087
      %6090 = vmatprep.subr.mxu0 0.0
      %6091 = vmatpush1.msra.mxu0 %v6082
      %6092 = vmatprep.subr.mxu0 0.0
      %6093 = vmatpush1.msra.mxu0 %v6081
      %6094 = vmatprep.subr.mxu0 0.0
      %6095 = vmatpush1.msra.mxu0 %v6080
      %6096 = vmatprep.subr.mxu0 0.0
      %6097 = vmatpush1.msra.mxu0 %v6079
      %6098 = vmatprep.subr.mxu0 0.0
      %6099 = vmatpush1.msra.mxu0 %v6078
      %6100 = vmatprep.subr.mxu0 0.0
      %6101 = vmatpush1.msra.mxu0 %v6077
      %6102 = vmatprep.subr.mxu0 0.0
      %6103 = vmatpush1.msra.mxu0 %v6076
      %6104 = vmatprep.subr.mxu0 0.0
      %6105 = vmatpush1.msra.mxu0 %v6075
      %6106 = vmatprep.subr.mxu0 0.0
      %6107 = vmatpush1.msra.mxu0 %v6074
      %6108 = vmatprep.subr.mxu0 0.0
      %6109 = vmatpush1.msra.mxu0 %v6073
      %6110 = vmatprep.subr.mxu0 0.0
      %6111 = vmatpush1.msra.mxu0 %v6072
      %6112 = vmatprep.subr.mxu0 0.0
      %6113 = vmatpush1.msra.mxu0 %v6071
      %6114 = vmatprep.subr.mxu0 0.0
      %6115 = vmatpush1.msra.mxu0 %v6070
      %6116 = vmatprep.subr.mxu0 0.0
      %6117 = vmatpush1.msra.mxu0 %v6069
      %6118 = vmatprep.subr.mxu0 0.0
      %6119 = vmatpush1.msra.mxu0 %v6068
      %6120 = vmatprep.subr.mxu0 0.0
      %6121 = vmatpush1.msra.mxu0 %v6067
      %6122 = vmatprep.subr.mxu0 0.0
      %6123 = vmatpush2.msra.mxu0 0.0
      %6124 = vmatprep.subr.mxu0 0.0
      %6125 = vmatpush2.msra.mxu0 0.0
      %6126 = vmatprep.subr.mxu0 0.0
      %6127 = vmatpush2.msra.mxu0 0.0
      %6128 = vmatprep.subr.mxu0 0.0
      %6129 = vmatpush2.msra.mxu0 0.0
      %6130 = vmatprep.subr.mxu0 0.0
      %6131 = vmatpush2.msra.mxu0 0.0
      %6132 = vmatprep.subr.mxu0 0.0
      %6133 = vmatpush2.msra.mxu0 0.0
      %6134 = vmatprep.subr.mxu0 0.0
      %6135 = vmatpush2.msra.mxu0 0.0
      %6136 = vmatprep.subr.mxu0 0.0
      %6137 = vmatpush2.msra.mxu0 0.0
      %6138 = vmatprep.subr.mxu0 0.0
      %6139 = vmatpush2.msra.mxu0 0.0
      %6140 = vmatprep.subr.mxu0 0.0
      %6141 = vmatpush2.msra.mxu0 0.0
      %6142 = vmatprep.subr.mxu0 0.0
      %6143 = vmatpush2.msra.mxu0 0.0
      %6144 = vmatprep.subr.mxu0 0.0
      %6145 = vmatpush2.msra.mxu0 0.0
      %6146 = vmatprep.subr.mxu0 0.0
      %6147 = vmatpush2.msra.mxu0 0.0
      %6148 = vmatprep.subr.mxu0 0.0
      %6149 = vmatpush2.msra.mxu0 0.0
      %6150 = vmatprep.subr.mxu0 0.0
      %6151 = vmatpush2.msra.mxu0 0.0
      %6152 = vmatprep.subr.mxu0 0.0
      %6153 = vmatpush2.msra.mxu0 0.0
      %6154 = vmatprep.mubr.f32.mxu0 0.0
      %6155 = vmatmul.mubr.f32.gmra.mxu0 %v6035
      %v6156 = vpop.f32.mrf.mxu0
      %v6157 = vadd.f32 %v6088, %v6156
      %v6158 = vpop.f32.mrf.mxu0
      %6159 = vmatprep.mubr.f32.mxu0 0.0
      %6160 = vmatmul.mubr.f32.gmra.mxu0 %v6036
      %v6161 = vpop.f32.mrf.mxu0
      %v6162 = vadd.f32 %v6088, %v6161
      %v6163 = vpop.f32.mrf.mxu0
      %6164 = vmatprep.mubr.f32.mxu0 0.0
      %6165 = vmatmul.mubr.f32.gmra.mxu0 %v6037
      %v6166 = vpop.f32.mrf.mxu0
      %v6167 = vadd.f32 %v6088, %v6166
      %v6168 = vpop.f32.mrf.mxu0
      %6169 = vmatprep.mubr.f32.mxu0 0.0
      %6170 = vmatmul.mubr.f32.gmra.mxu0 %v6038
      %v6171 = vpop.f32.mrf.mxu0
      %v6172 = vadd.f32 %v6088, %v6171
      %v6173 = vpop.f32.mrf.mxu0
      %6174 = vmatprep.mubr.f32.mxu0 0.0
      %6175 = vmatmul.mubr.f32.gmra.mxu0 %v6039
      %v6176 = vpop.f32.mrf.mxu0
      %v6177 = vadd.f32 %v6088, %v6176
      %v6178 = vpop.f32.mrf.mxu0
      %6179 = vmatprep.mubr.f32.mxu0 0.0
      %6180 = vmatmul.mubr.f32.gmra.mxu0 %v6040
      %v6181 = vpop.f32.mrf.mxu0
      %v6182 = vadd.f32 %v6088, %v6181
      %v6183 = vpop.f32.mrf.mxu0
      %6184 = vmatprep.mubr.f32.mxu0 0.0
      %6185 = vmatmul.mubr.f32.gmra.mxu0 %v6041
      %v6186 = vpop.f32.mrf.mxu0
      %v6187 = vadd.f32 %v6088, %v6186
      %v6188 = vpop.f32.mrf.mxu0
      %6189 = vmatprep.mubr.f32.mxu0 0.0
      %6190 = vmatmul.mubr.f32.gmra.mxu0 %v6042
      %v6191 = vpop.f32.mrf.mxu0
      %v6192 = vadd.f32 %v6088, %v6191
      %v6193 = vpop.f32.mrf.mxu0
      %6194 = vmatprep.mubr.f32.mxu0 0.0
      %6195 = vmatmul.mubr.f32.gmra.mxu0 %v6043
      %v6196 = vpop.f32.mrf.mxu0
      %v6197 = vadd.f32 %v6088, %v6196
      %v6198 = vpop.f32.mrf.mxu0
      %6199 = vmatprep.mubr.f32.mxu0 0.0
      %6200 = vmatmul.mubr.f32.gmra.mxu0 %v6044
      %v6201 = vpop.f32.mrf.mxu0
      %v6202 = vadd.f32 %v6088, %v6201
      %v6203 = vpop.f32.mrf.mxu0
      %6204 = vmatprep.mubr.f32.mxu0 0.0
      %6205 = vmatmul.mubr.f32.gmra.mxu0 %v6045
      %v6206 = vpop.f32.mrf.mxu0
      %v6207 = vadd.f32 %v6088, %v6206
      %v6208 = vpop.f32.mrf.mxu0
      %6209 = vmatprep.mubr.f32.mxu0 0.0
      %6210 = vmatmul.mubr.f32.gmra.mxu0 %v6046
      %v6211 = vpop.f32.mrf.mxu0
      %v6212 = vadd.f32 %v6088, %v6211
      %v6213 = vpop.f32.mrf.mxu0
      %6214 = vmatprep.mubr.f32.mxu0 0.0
      %6215 = vmatmul.mubr.f32.gmra.mxu0 %v6047
      %v6216 = vpop.f32.mrf.mxu0
      %v6217 = vadd.f32 %v6088, %v6216
      %v6218 = vpop.f32.mrf.mxu0
      %6219 = vmatprep.mubr.f32.mxu0 0.0
      %6220 = vmatmul.mubr.f32.gmra.mxu0 %v6048
      %v6221 = vpop.f32.mrf.mxu0
      %v6222 = vadd.f32 %v6088, %v6221
      %v6223 = vpop.f32.mrf.mxu0
      %6224 = vmatprep.mubr.f32.mxu0 0.0
      %6225 = vmatmul.mubr.f32.gmra.mxu0 %v6049
      %v6226 = vpop.f32.mrf.mxu0
      %v6227 = vadd.f32 %v6088, %v6226
      %v6228 = vpop.f32.mrf.mxu0
      %6229 = vmatprep.mubr.f32.mxu0 0.0
      %6230 = vmatmul.mubr.f32.gmra.mxu0 %v6050
      %v6231 = vpop.f32.mrf.mxu0
      %v6232 = vadd.f32 %v6088, %v6231
      %v6233 = vpop.f32.mrf.mxu0
      %6234 = vmatprep.mubr.f32.mxu0 0.0
      %6235 = vmatmul.mubr.f32.gmra.mxu0 %v6051
      %v6236 = vpop.f32.mrf.mxu0
      %v6237 = vadd.f32 %v6088, %v6236
      %v6238 = vpop.f32.mrf.mxu0
      %6239 = vmatprep.mubr.f32.mxu0 0.0
      %6240 = vmatmul.mubr.f32.gmra.mxu0 %v6052
      %v6241 = vpop.f32.mrf.mxu0
      %v6242 = vadd.f32 %v6088, %v6241
      %v6243 = vpop.f32.mrf.mxu0
      %6244 = vmatprep.mubr.f32.mxu0 0.0
      %6245 = vmatmul.mubr.f32.gmra.mxu0 %v6053
      %v6246 = vpop.f32.mrf.mxu0
      %v6247 = vadd.f32 %v6088, %v6246
      %v6248 = vpop.f32.mrf.mxu0
      %6249 = vmatprep.mubr.f32.mxu0 0.0
      %6250 = vmatmul.mubr.f32.gmra.mxu0 %v6054
      %v6251 = vpop.f32.mrf.mxu0
      %v6252 = vadd.f32 %v6088, %v6251
      %v6253 = vpop.f32.mrf.mxu0
      %6254 = vmatprep.mubr.f32.mxu0 0.0
      %6255 = vmatmul.mubr.f32.gmra.mxu0 %v6055
      %v6256 = vpop.f32.mrf.mxu0
      %v6257 = vadd.f32 %v6088, %v6256
      %v6258 = vpop.f32.mrf.mxu0
      %6259 = vmatprep.mubr.f32.mxu0 0.0
      %6260 = vmatmul.mubr.f32.gmra.mxu0 %v6056
      %v6261 = vpop.f32.mrf.mxu0
      %v6262 = vadd.f32 %v6088, %v6261
      %v6263 = vpop.f32.mrf.mxu0
      %6264 = vmatprep.mubr.f32.mxu0 0.0
      %6265 = vmatmul.mubr.f32.gmra.mxu0 %v6057
      %v6266 = vpop.f32.mrf.mxu0
      %v6267 = vadd.f32 %v6088, %v6266
      %v6268 = vpop.f32.mrf.mxu0
      %6269 = vmatprep.mubr.f32.mxu0 0.0
      %6270 = vmatmul.mubr.f32.gmra.mxu0 %v6058
      %v6271 = vpop.f32.mrf.mxu0
      %v6272 = vadd.f32 %v6088, %v6271
      %v6273 = vpop.f32.mrf.mxu0
      %6274 = vmatprep.mubr.f32.mxu0 0.0
      %6275 = vmatmul.mubr.f32.gmra.mxu0 %v6059
      %v6276 = vpop.f32.mrf.mxu0
      %v6277 = vadd.f32 %v6088, %v6276
      %v6278 = vpop.f32.mrf.mxu0
      %6279 = vmatprep.mubr.f32.mxu0 0.0
      %6280 = vmatmul.mubr.f32.gmra.mxu0 %v6060
      %v6281 = vpop.f32.mrf.mxu0
      %v6282 = vadd.f32 %v6088, %v6281
      %v6283 = vpop.f32.mrf.mxu0
      %6284 = vmatprep.mubr.f32.mxu0 0.0
      %6285 = vmatmul.mubr.f32.gmra.mxu0 %v6061
      %v6286 = vpop.f32.mrf.mxu0
      %v6287 = vadd.f32 %v6088, %v6286
      %v6288 = vpop.f32.mrf.mxu0
      %6289 = vmatprep.mubr.f32.mxu0 0.0
      %6290 = vmatmul.mubr.f32.gmra.mxu0 %v6062
      %v6291 = vpop.f32.mrf.mxu0
      %v6292 = vadd.f32 %v6088, %v6291
      %v6293 = vpop.f32.mrf.mxu0
      %6294 = vmatprep.mubr.f32.mxu0 0.0
      %6295 = vmatmul.mubr.f32.gmra.mxu0 %v6063
      %v6296 = vpop.f32.mrf.mxu0
      %v6297 = vadd.f32 %v6088, %v6296
      %v6298 = vpop.f32.mrf.mxu0
      %6299 = vmatprep.mubr.f32.mxu0 0.0
      %6300 = vmatmul.mubr.f32.gmra.mxu0 %v6064
      %v6301 = vpop.f32.mrf.mxu0
      %v6302 = vadd.f32 %v6088, %v6301
      %v6303 = vpop.f32.mrf.mxu0
      %6304 = vmatprep.mubr.f32.mxu0 0.0
      %6305 = vmatmul.mubr.f32.gmra.mxu0 %v6065
      %v6306 = vpop.f32.mrf.mxu0
      %v6307 = vadd.f32 %v6088, %v6306
      %v6308 = vpop.f32.mrf.mxu0
      %6309 = vmatprep.mubr.f32.mxu0 0.0
      %6310 = vmatmul.mubr.f32.gmra.mxu0 %v6066
      %v6311 = vpop.f32.mrf.mxu0
      %v6312 = vadd.f32 %v6088, %v6311
      %v6313 = vpop.f32.mrf.mxu0
      %6314 = vdwg.mxu0
      %v6315 = vld [vmem:[%s374] sm:$0xff]
      %v6316 = vld [vmem:[%s374 + $0x8] sm:$0xff]
      %v6317 = vld [vmem:[%s374 + $0x10] sm:$0xff]
      %v6318 = vld [vmem:[%s374 + $0x18] sm:$0xff]
      %v6319 = vld [vmem:[%s374 + $0x20] sm:$0xff]
      %v6320 = vld [vmem:[%s374 + $0x28] sm:$0xff]
      %v6321 = vld [vmem:[%s374 + $0x30] sm:$0xff]
      %v6322 = vld [vmem:[%s374 + $0x38] sm:$0xff]
      %v6323 = vld [vmem:[%s374 + $0x40] sm:$0xff]
      %v6324 = vld [vmem:[%s374 + $0x48] sm:$0xff]
      %v6325 = vld [vmem:[%s374 + $0x50] sm:$0xff]
      %v6326 = vld [vmem:[%s374 + $0x58] sm:$0xff]
      %v6327 = vld [vmem:[%s374 + $0x60] sm:$0xff]
      %v6328 = vld [vmem:[%s374 + $0x68] sm:$0xff]
      %v6329 = vld [vmem:[%s374 + $0x70] sm:$0xff]
      %v6330 = vld [vmem:[%s374 + $0x78] sm:$0xff]
      %v6331 = vld [vmem:[%s374 + $0x80] sm:$0xff]
      %v6332 = vld [vmem:[%s374 + $0x88] sm:$0xff]
      %v6333 = vld [vmem:[%s374 + $0x90] sm:$0xff]
      %v6334 = vld [vmem:[%s374 + $0x98] sm:$0xff]
      %v6335 = vld [vmem:[%s374 + $0xa0] sm:$0xff]
      %v6336 = vld [vmem:[%s374 + $0xa8] sm:$0xff]
      %v6337 = vld [vmem:[%s374 + $0xb0] sm:$0xff]
      %v6338 = vld [vmem:[%s374 + $0xb8] sm:$0xff]
      %v6339 = vld [vmem:[%s374 + $0xc0] sm:$0xff]
      %v6340 = vld [vmem:[%s374 + $0xc8] sm:$0xff]
      %v6341 = vld [vmem:[%s374 + $0xd0] sm:$0xff]
      %v6342 = vld [vmem:[%s374 + $0xd8] sm:$0xff]
      %v6343 = vld [vmem:[%s374 + $0xe0] sm:$0xff]
      %v6344 = vld [vmem:[%s374 + $0xe8] sm:$0xff]
      %v6345 = vld [vmem:[%s374 + $0xf0] sm:$0xff]
      %v6346 = vld [vmem:[%s374 + $0xf8] sm:$0xff]
      %v6347 = vadd.f32 %v6157, %v6315
      %v6348 = vadd.f32 %v6162, %v6316
      %v6349 = vadd.f32 %v6167, %v6317
      %v6350 = vadd.f32 %v6172, %v6318
      %v6351 = vadd.f32 %v6177, %v6319
      %v6352 = vadd.f32 %v6182, %v6320
      %v6353 = vadd.f32 %v6187, %v6321
      %v6354 = vadd.f32 %v6192, %v6322
      %v6355 = vadd.f32 %v6197, %v6323
      %v6356 = vadd.f32 %v6202, %v6324
      %v6357 = vadd.f32 %v6207, %v6325
      %v6358 = vadd.f32 %v6212, %v6326
      %v6359 = vadd.f32 %v6217, %v6327
      %v6360 = vadd.f32 %v6222, %v6328
      %v6361 = vadd.f32 %v6227, %v6329
      %v6362 = vadd.f32 %v6232, %v6330
      %v6363 = vadd.f32 %v6237, %v6331
      %v6364 = vadd.f32 %v6242, %v6332
      %v6365 = vadd.f32 %v6247, %v6333
      %v6366 = vadd.f32 %v6252, %v6334
      %v6367 = vadd.f32 %v6257, %v6335
      %v6368 = vadd.f32 %v6262, %v6336
      %v6369 = vadd.f32 %v6267, %v6337
      %v6370 = vadd.f32 %v6272, %v6338
      %v6371 = vadd.f32 %v6277, %v6339
      %v6372 = vadd.f32 %v6282, %v6340
      %v6373 = vadd.f32 %v6287, %v6341
      %v6374 = vadd.f32 %v6292, %v6342
      %v6375 = vadd.f32 %v6297, %v6343
      %v6376 = vadd.f32 %v6302, %v6344
      %v6377 = vadd.f32 %v6307, %v6345
      %v6378 = vadd.f32 %v6312, %v6346
      %v6379 = vmax.f32 %v6347, 0.0
      %v6380 = vmax.f32 %v6348, 0.0
      %v6381 = vmax.f32 %v6349, 0.0
      %v6382 = vmax.f32 %v6350, 0.0
      %v6383 = vmax.f32 %v6351, 0.0
      %v6384 = vmax.f32 %v6352, 0.0
      %v6385 = vmax.f32 %v6353, 0.0
      %v6386 = vmax.f32 %v6354, 0.0
      %v6387 = vmax.f32 %v6355, 0.0
      %v6388 = vmax.f32 %v6356, 0.0
      %v6389 = vmax.f32 %v6357, 0.0
      %v6390 = vmax.f32 %v6358, 0.0
      %v6391 = vmax.f32 %v6359, 0.0
      %v6392 = vmax.f32 %v6360, 0.0
      %v6393 = vmax.f32 %v6361, 0.0
      %v6394 = vmax.f32 %v6362, 0.0
      %v6395 = vmax.f32 %v6363, 0.0
      %v6396 = vmax.f32 %v6364, 0.0
      %v6397 = vmax.f32 %v6365, 0.0
      %v6398 = vmax.f32 %v6366, 0.0
      %v6399 = vmax.f32 %v6367, 0.0
      %v6400 = vmax.f32 %v6368, 0.0
      %v6401 = vmax.f32 %v6369, 0.0
      %v6402 = vmax.f32 %v6370, 0.0
      %v6403 = vmax.f32 %v6371, 0.0
      %v6404 = vmax.f32 %v6372, 0.0
      %v6405 = vmax.f32 %v6373, 0.0
      %v6406 = vmax.f32 %v6374, 0.0
      %v6407 = vmax.f32 %v6375, 0.0
      %v6408 = vmax.f32 %v6376, 0.0
      %v6409 = vmax.f32 %v6377, 0.0
      %v6410 = vmax.f32 %v6378, 0.0
      %6411 = vst [vmem:[%s379] sm:$0xff] %v6379
      %6412 = vst [vmem:[%s379 + $0x8] sm:$0xff] %v6380
      %6413 = vst [vmem:[%s379 + $0x10] sm:$0xff] %v6381
      %6414 = vst [vmem:[%s379 + $0x18] sm:$0xff] %v6382
      %6415 = vst [vmem:[%s379 + $0x20] sm:$0xff] %v6383
      %6416 = vst [vmem:[%s379 + $0x28] sm:$0xff] %v6384
      %6417 = vst [vmem:[%s379 + $0x30] sm:$0xff] %v6385
      %6418 = vst [vmem:[%s379 + $0x38] sm:$0xff] %v6386
      %6419 = vst [vmem:[%s379 + $0x40] sm:$0xff] %v6387
      %6420 = vst [vmem:[%s379 + $0x48] sm:$0xff] %v6388
      %6421 = vst [vmem:[%s379 + $0x50] sm:$0xff] %v6389
      %6422 = vst [vmem:[%s379 + $0x58] sm:$0xff] %v6390
      %6423 = vst [vmem:[%s379 + $0x60] sm:$0xff] %v6391
      %6424 = vst [vmem:[%s379 + $0x68] sm:$0xff] %v6392
      %6425 = vst [vmem:[%s379 + $0x70] sm:$0xff] %v6393
      %6426 = vst [vmem:[%s379 + $0x78] sm:$0xff] %v6394
      %6427 = vst [vmem:[%s379 + $0x80] sm:$0xff] %v6395
      %6428 = vst [vmem:[%s379 + $0x88] sm:$0xff] %v6396
      %6429 = vst [vmem:[%s379 + $0x90] sm:$0xff] %v6397
      %6430 = vst [vmem:[%s379 + $0x98] sm:$0xff] %v6398
      %6431 = vst [vmem:[%s379 + $0xa0] sm:$0xff] %v6399
      %6432 = vst [vmem:[%s379 + $0xa8] sm:$0xff] %v6400
      %6433 = vst [vmem:[%s379 + $0xb0] sm:$0xff] %v6401
      %6434 = vst [vmem:[%s379 + $0xb8] sm:$0xff] %v6402
      %6435 = vst [vmem:[%s379 + $0xc0] sm:$0xff] %v6403
      %6436 = vst [vmem:[%s379 + $0xc8] sm:$0xff] %v6404
      %6437 = vst [vmem:[%s379 + $0xd0] sm:$0xff] %v6405
      %6438 = vst [vmem:[%s379 + $0xd8] sm:$0xff] %v6406
      %6439 = vst [vmem:[%s379 + $0xe0] sm:$0xff] %v6407
      %6440 = vst [vmem:[%s379 + $0xe8] sm:$0xff] %v6408
      %6441 = vst [vmem:[%s379 + $0xf0] sm:$0xff] %v6409
      %6442 = vst [vmem:[%s379 + $0xf8] sm:$0xff] %v6410
      %p6443 = scmp.lt.s32.totalorder %s21, 1
      %s6444 = scalar_select %p6443, %s21, 1
      %s6445 = smul.addr %s6444, 32
      %s6446 = smul.addr %s6445, 8
      %s6447 = scalar_lea.vmem %s10, %s6446
      // Predicated region
      $region61: #{_lambda_.3} parent=59 // pred_check
        %p6448 = pneg %p259
      $region62: #{_lambda_.3} parent=59 // pred_check_branch
        %6450 = sbr.rel (%p6448) target = $region64
      $region63: #{_lambda_.3} parent=59 // pred_region
        _
      $region64: #{_lambda_.3} parent=59 // pred_fallthru
        _
    $region60: #{_lambda_.3} parent=5 // pred_fallthru
      _
    %p6451 = scmp.le.s32.totalorder 2, %s16
    // Predicated region
    $region65: #{_lambda_.3} parent=5 // pred_check
      %p6452 = pneg %p6451
    $region66: #{_lambda_.3} parent=5 // pred_check_branch
      %6454 = sbr.rel (%p6452) target = $region68
    $region67: #{_lambda_.3} parent=5 // pred_region
      %s6455 = ssub.s32 %s16, 2
      // Predicated region
      $region69: #{_lambda_.3} parent=67 // pred_check
        %p6456 = pneg %p265
      $region70: #{_lambda_.3} parent=67 // pred_check_branch
        %6458 = sbr.rel (%p6456) target = $region72
      $region71: #{_lambda_.3} parent=67 // pred_region
        %p6459 = scmp.lt.s32.totalorder %s22, 1
        %s6460 = scalar_select %p6459, %s22, 1
        %s6461 = smul.addr %s6460, 32
        %s6462 = smul.addr %s6461, 8
        %s6463 = scalar_lea.vmem %s10, %s6462
      $region72: #{_lambda_.3} parent=67 // pred_fallthru
        _
    $region68: #{_lambda_.3} parent=5 // pred_fallthru
      _
  $region6: #{_lambda_.3} parent=0 // loop_footer
    %s20 = sadd.s32 1, %s16
  $region7: #{_lambda_.3} parent=0 // loop_footer_branch
    %15 = sbr.rel target = $region3
  $region8: #{_lambda_.3} parent=0 // loop_exit
    _

</llo_original>
